<compile_context>
chip_gen: v7x
topology: tpu7x:2x2x1
jax: 0.10.0
libtpu: 0.0.40
codegen_flags: <defaults>
</compile_context>

<pallas_src>
import functools

import jax
import jax.numpy as jnp
from jax import lax
from jax.experimental import pallas as pl
from jax.experimental.pallas import tpu as pltpu

EPS = 1e-5
LANE = 128
SUBLANE = 8
CHUNK = 512                          # output-chunk width (multiple of LANE)
MATMUL_DTYPE = jnp.bfloat16          # bf16 inputs, f32 MXU accumulation


def _ceil_div(a, b):
    return -(-a // b)


def _round_up(a, b):
    return _ceil_div(a, b) * b


def _default_vmem_limit():
    # Review item 9: derive the scoped-VMEM limit per generation instead of a
    # fixed constant; stay well under v7x's 64 MiB physical VMEM.
    try:
        info = pltpu.get_tpu_info()
        cap = getattr(info, "vmem_capacity_bytes", None)
        if cap:
            return int(min(100 * 1024 * 1024, cap * 3 // 4))
    except Exception:
        pass
    return 48 * 1024 * 1024


VMEM_LIMIT = _default_vmem_limit()


# ---------------------------------------------------------------------------
# Pallas kernels
# ---------------------------------------------------------------------------


def _conv_tapfold_kernel(xa_ref, xb_ref, w_ref, scale_ref, bias_ref, o_ref,
                         *, shifts, relu):
    """One output chunk of a fused direct conv on a flat image.

    xa_ref:    (1, Cpp, chunk)      current chunk window of the flat image
    xb_ref:    (1, Cpp, chunk)      next chunk window (halo; max shift <= chunk)
    w_ref:     (Coutp, T*Cpp)       tap-folded weight matrix
    scale_ref: (Coutp, 1)           folded BatchNorm scale
    bias_ref:  (Coutp, 1)           folded BatchNorm/conv bias
    o_ref:     (1, Coutp, chunk)    this chunk's (lane-dense) output rows

    All T tap slices are STATIC lane slices of the concatenated 2*chunk window;
    they are stacked along the sublane axis into one (T*Cpp, chunk) RHS so the
    whole chunk is a single large-K MXU matmul (review item 1).
    """
    chunk = xa_ref.shape[2]
    xw = jnp.concatenate([xa_ref[0], xb_ref[0]], axis=-1)          # (Cpp, 2*chunk)
    xs = jnp.concatenate([xw[:, sh:sh + chunk] for sh in shifts], axis=0)
    acc = jnp.dot(w_ref[...], xs, preferred_element_type=jnp.float32)
    y = acc * scale_ref[...] + bias_ref[...]
    if relu:
        y = jnp.maximum(y, 0.0)
    o_ref[0, :, :] = y.astype(o_ref.dtype)


def _maxpool_flat_kernel(x_ref, o_ref, *, wsp):
    """MaxPool2d(3, stride=2) on stride-2 phase-decomposed, flattened planes.

    x_ref: (4, 1, C, Lp)     four phase planes of one image, flattened row-major
    o_ref: (1, C, MpoolP)    full-width pooled rows (cols >= PW are garbage)
    """
    mpoolp = o_ref.shape[2]
    res = None
    for di in range(3):
        p, a = di % 2, di // 2          # di = 2*a + p
        for dj in range(3):
            q, b = dj % 2, dj // 2      # dj = 2*b + q
            sh = a * wsp + b
            cand = x_ref[2 * p + q, 0, :, sh:sh + mpoolp]
            res = cand if res is None else jnp.maximum(res, cand)
    o_ref[0, :, :] = res


# ---------------------------------------------------------------------------
# Fused conv core on the flat layout (+ NCHW wrapper)
# ---------------------------------------------------------------------------


def _conv_flat(xe, wrow, oh, w, bias=None, bn=None, stride=1, relu=False,
               out_dtype=jnp.float32, chain_out=False):
    """Fused Conv2d(+BN+ReLU) on a row-major flattened (phase-collapsed) image.

    xe:    (N, C_flat, L) flat input; rows have stride `wrow` lanes.  Channels
           beyond the meaningful stride**2*Cin ones must be zero (true both
           for jnp.pad-built inputs and for this function's own outputs).
    oh:    number of valid output rows.  The output keeps row stride `wrow`;
           columns >= OW of each row are garbage that the caller slices off
           (valid outputs of a chained consumer provably never read them).
    chain_out: allocate one extra (unwritten) halo chunk so the next chained
           conv can consume this output zero-copy.
    Returns (out, coutp): out is (N, coutp, out_len) with dtype `out_dtype`,
    channels on sublanes and the flattened spatial on lanes (lane-dense).
    """
    N = xe.shape[0]
    Cout, Cin, KH, KW = w.shape
    s = stride
    KHs, KWs = _ceil_div(KH, s), _ceil_div(KW, s)
    shifts = tuple(a * wrow + b for a in range(KHs) for b in range(KWs))
    T = len(shifts)
    max_shift = shifts[-1]
    cpe = s * s * Cin
    cpp = _round_up(cpe, SUBLANE)
    coutp = _round_up(Cout, SUBLANE)
    assert xe.shape[1] <= cpp

    mfull = oh * wrow
    chunk = max(CHUNK, _round_up(max_shift + 1, LANE))
    assert max_shift < chunk
    nchunks = _ceil_div(mfull, chunk)
    need_len = (nchunks + 1) * chunk          # +1: halo window of the last chunk

    # Glue: cast to bf16 and pad channels / tail (no-op for chained inputs).
    xf = xe if xe.dtype == MATMUL_DTYPE else xe.astype(MATMUL_DTYPE)
    pad_ch = cpp - xf.shape[1]
    pad_len = max(0, need_len - xf.shape[2])
    if pad_ch or pad_len:
        xf = jnp.pad(xf, ((0, 0), (0, pad_ch), (0, pad_len)))

    # Tap-folded weight matrix (review item 1): column index = tap*cpp + chan,
    # matching the kernel's sublane-stacked RHS.  Phase/tap ordering is
    # identical to the validated v2 re-tiling.
    wpad = jnp.pad(w, ((0, 0), (0, 0), (0, KHs * s - KH), (0, KWs * s - KW)))
    wr = wpad.reshape(Cout, Cin, KHs, s, KWs, s)
    wt = jnp.transpose(wr, (2, 4, 0, 3, 5, 1)).reshape(T, Cout, cpe)
    wt = jnp.pad(wt, ((0, 0), (0, coutp - Cout), (0, cpp - cpe)))
    wt = jnp.transpose(wt, (1, 0, 2)).reshape(coutp, T * cpp).astype(MATMUL_DTYPE)
    # TODO(synk): at full channel widths (Coutp ~ 512-768) tile Coutp and
    # single-buffer this constant block (pl.Buffered(1)) for v7x's 64 MiB VMEM.

    # Folded BatchNorm affine (f32 epilogue, per review correctness note).
    if bias is None:
        bias = jnp.zeros((Cout,), jnp.float32)
    if bn is not None:
        gamma, beta, mean, var = bn
        scale = gamma / jnp.sqrt(var + EPS)
        eff_bias = (bias - mean) * scale + beta
    else:
        scale = jnp.ones((Cout,), jnp.float32)
        eff_bias = bias
    scale = jnp.pad(scale, (0, coutp - Cout)).reshape(coutp, 1).astype(jnp.float32)
    eff_bias = jnp.pad(eff_bias, (0, coutp - Cout)).reshape(coutp, 1).astype(jnp.float32)

    out_len = (nchunks + (1 if chain_out else 0)) * chunk

    out = pl.pallas_call(
        functools.partial(_conv_tapfold_kernel, shifts=shifts, relu=relu),
        out_shape=jax.ShapeDtypeStruct((N, coutp, out_len), out_dtype),
        grid=(N, nchunks),
        in_specs=[
            pl.BlockSpec((1, cpp, chunk), lambda n, c: (n, 0, c)),       # chunk c
            pl.BlockSpec((1, cpp, chunk), lambda n, c: (n, 0, c + 1)),   # halo c+1
            pl.BlockSpec((coutp, T * cpp), lambda n, c: (0, 0)),         # weights
            pl.BlockSpec((coutp, 1), lambda n, c: (0, 0)),               # scale
            pl.BlockSpec((coutp, 1), lambda n, c: (0, 0)),               # bias
        ],
        out_specs=pl.BlockSpec((1, coutp, chunk), lambda n, c: (n, 0, c)),
        compiler_params=pltpu.CompilerParams(
            dimension_semantics=("parallel", "parallel"),
            vmem_limit_bytes=VMEM_LIMIT,
        ),
    )(xf, xf, wt, scale, eff_bias)
    return out, coutp


def conv2d(x, w, bias=None, bn=None, stride=1, relu=False):
    """PyTorch-semantics Conv2d (VALID) + folded BN + optional ReLU -> NCHW."""
    N, Cin, H, W = x.shape
    Cout, _, KH, KW = w.shape
    s = stride
    OH = (H - KH) // s + 1
    OW = (W - KW) // s + 1
    Hs, Ws = _ceil_div(H, s), _ceil_div(W, s)

    if s == 1:
        xe = x.reshape(N, Cin, H * W)                   # free metadata reshape
    else:
        # Stride collapse: phase-decompose so the core runs stride-1 taps.
        phases = []
        for p_ in range(s):
            for q_ in range(s):
                ph = x[:, :, p_::s, q_::s]
                ph = jnp.pad(ph, ((0, 0), (0, 0),
                                  (0, Hs - ph.shape[2]), (0, Ws - ph.shape[3])))
                phases.append(ph)
        xe = jnp.concatenate(phases, axis=1).reshape(N, s * s * Cin, Hs * Ws)

    out, _ = _conv_flat(xe, Ws, OH, w, bias, bn, s, relu,
                        out_dtype=jnp.float32, chain_out=False)
    # (Cout, OH, Ws)[..., :OW] is already channel-major NCHW -> just slice.
    return out[:, :Cout, :OH * Ws].reshape(N, Cout, OH, Ws)[:, :, :, :OW]


def maxpool3x3s2(x):
    """MaxPool2d(kernel=3, stride=2), VALID padding, NCHW (Pallas kernel)."""
    # TODO(synk): could be fused into the preceding conv's chunk epilogue to
    # avoid the phase-stack HBM pass (review item 10); kept standalone here.
    N, C, H, W = x.shape
    PH = (H - 3) // 2 + 1
    PW = (W - 3) // 2 + 1
    Hs, Ws = _ceil_div(H, 2), _ceil_div(W, 2)

    phases = []
    for p in range(2):
        for q in range(2):
            ph = x[:, :, p::2, q::2]
            ph = jnp.pad(ph, ((0, 0), (0, 0),
                              (0, Hs - ph.shape[2]), (0, Ws - ph.shape[3])))
            phases.append(ph.reshape(N, C, Hs * Ws))
    xp = jnp.stack(phases, axis=0)                      # (4, N, C, Hs*Ws): a 1x copy

    Mpool = PH * Ws
    MpoolP = _round_up(Mpool, LANE)
    max_shift = Ws + 1
    Lp = _round_up(max(Hs * Ws, max_shift + MpoolP), LANE)
    xp = jnp.pad(xp, ((0, 0), (0, 0), (0, 0), (0, Lp - Hs * Ws)))

    out = pl.pallas_call(
        functools.partial(_maxpool_flat_kernel, wsp=Ws),
        out_shape=jax.ShapeDtypeStruct((N, C, MpoolP), jnp.float32),
        grid=(N,),
        in_specs=[pl.BlockSpec((4, 1, C, Lp), lambda n: (0, n, 0, 0))],
        out_specs=pl.BlockSpec((1, C, MpoolP), lambda n: (n, 0, 0)),
        compiler_params=pltpu.CompilerParams(
            dimension_semantics=("parallel",),
            vmem_limit_bytes=VMEM_LIMIT,
        ),
    )(xp)
    return out[:, :, :Mpool].reshape(N, C, PH, Ws)[:, :, :, :PW]


# ---------------------------------------------------------------------------
# Tiny tail convs -> XLA (M<=98, Cout<=8; pallas_call fixed overhead exceeds
# the useful work).
# ---------------------------------------------------------------------------


def _conv_xla(x, w, b=None, stride=1):
    out = lax.conv_general_dilated(
        x, w, (stride, stride), "VALID",
        dimension_numbers=("NCHW", "OIHW", "NCHW"))
    if b is not None:
        out = out + b.reshape(1, -1, 1, 1)
    return out


# ---------------------------------------------------------------------------
# SiamRPNBIG forward (down-scaled channel widths)
# ---------------------------------------------------------------------------

C1, C2, C3 = 8, 16, 16          # original: 192, 512, 768
FEAT_IN = C2                    # original: 512
FEATURE_OUT = 16                # original: 512
ANCHOR = 2                      # original: 5
KS = 4                          # template-kernel spatial size (as in temple())


def siamrpn_forward(params, x):
    p = params
    # featureExtract head: NCHW materialised only at the pool boundaries.
    h = conv2d(x, p["fe1_w"], p["fe1_b"], bn=p["fe1_bn"], stride=2, relu=True)
    h = maxpool3x3s2(h)
    h = conv2d(h, p["fe2_w"], p["fe2_b"], bn=p["fe2_bn"], relu=True)
    h = maxpool3x3s2(h)

    # fe3 -> fe4 -> fe5 -> merged r2/cls2 stay in the flat bf16 layout
    # (review item 6): no per-layer slice/reshape/pad round trips.
    N, C, H3, W3 = h.shape
    xe = h.reshape(N, C, H3 * W3)
    o, _ = _conv_flat(xe, W3, H3 - 2, p["fe3_w"], p["fe3_b"], p["fe3_bn"],
                      1, True, out_dtype=MATMUL_DTYPE, chain_out=True)
    o, _ = _conv_flat(o, W3, H3 - 4, p["fe4_w"], p["fe4_b"], p["fe4_bn"],
                      1, True, out_dtype=MATMUL_DTYPE, chain_out=True)
    o, _ = _conv_flat(o, W3, H3 - 6, p["fe5_w"], p["fe5_b"], p["fe5_bn"],
                      1, False, out_dtype=MATMUL_DTYPE, chain_out=True)

    # conv_r2 / conv_cls2 share the same input x_f -> one fused conv, split after.
    w_rc = jnp.concatenate([p["r2_w"], p["cls2_w"]], axis=0)
    b_rc = jnp.concatenate([p["r2_b"], p["cls2_b"]], axis=0)
    o, _ = _conv_flat(o, W3, H3 - 8, w_rc, b_rc, None,
                      1, False, out_dtype=jnp.float32, chain_out=False)
    OHrc, OWrc = H3 - 8, W3 - 8
    rc = o[:, :2 * FEATURE_OUT, :OHrc * W3].reshape(
        N, 2 * FEATURE_OUT, OHrc, W3)[:, :, :, :OWrc]
    r = rc[:, :FEATURE_OUT]
    c = rc[:, FEATURE_OUT:]

    # TODO(synk): r1_kernel / cls1_kernel are runtime state produced by
    # temple()/kernel() in the PyTorch module; here they are deterministic
    # parameters with the correct shapes.
    r = _conv_xla(r, p["r1_kernel"])                    # F.conv2d(., r1_kernel)
    r = _conv_xla(r, p["adj_w"], p["adj_b"])            # regress_adjust (1x1)
    c = _conv_xla(c, p["cls1_kernel"])                  # F.conv2d(., cls1_kernel)
    return r, c


# ---------------------------------------------------------------------------
# Pure-JAX reference (for correctness check).  The feature-extract convs apply
# the SAME bf16 input quantisation as the kernels (f32 accumulation), so the
# comparison validates the kernel math apples-to-apples at 1e-3 tolerance.
# ---------------------------------------------------------------------------


def _q(a):
    return a.astype(jnp.bfloat16).astype(jnp.float32)


def _conv_q_ref(x, w, b=None, stride=1):
    out = lax.conv_general_dilated(
        _q(x), _q(w), (stride, stride), "VALID",
        dimension_numbers=("NCHW", "OIHW", "NCHW"),
        precision=lax.Precision.HIGHEST)
    if b is not None:
        out = out + b.reshape(1, -1, 1, 1)
    return out


def _bn_ref(x, bn):
    g, be, m, v = bn
    s = (g / jnp.sqrt(v + EPS)).reshape(1, -1, 1, 1)
    return (x - m.reshape(1, -1, 1, 1)) * s + be.reshape(1, -1, 1, 1)


def _pool_ref(x):
    return lax.reduce_window(x, -jnp.inf, lax.max, (1, 1, 3, 3), (1, 1, 2, 2), "VALID")


def siamrpn_forward_ref(params, x):
    p = params

    def cbr(h, w, b, bn, stride=1, relu=True):
        h = _bn_ref(_conv_q_ref(h, w, b, stride), bn)
        return jnp.maximum(h, 0.0) if relu else h

    h = cbr(x, p["fe1_w"], p["fe1_b"], p["fe1_bn"], 2, True)
    h = _pool_ref(h)
    h = cbr(h, p["fe2_w"], p["fe2_b"], p["fe2_bn"], 1, True)
    h = _pool_ref(h)
    h = cbr(h, p["fe3_w"], p["fe3_b"], p["fe3_bn"], 1, True)
    h = cbr(h, p["fe4_w"], p["fe4_b"], p["fe4_bn"], 1, True)
    x_f = cbr(h, p["fe5_w"], p["fe5_b"], p["fe5_bn"], 1, False)
    r = _conv_q_ref(x_f, p["r2_w"], p["r2_b"])
    r = _conv_xla(r, p["r1_kernel"])
    r = _conv_xla(r, p["adj_w"], p["adj_b"])
    c = _conv_q_ref(x_f, p["cls2_w"], p["cls2_b"])
    c = _conv_xla(c, p["cls1_kernel"])
    return r, c


# ---------------------------------------------------------------------------
# Deterministic parameter initialization
# ---------------------------------------------------------------------------


def init_params(key):
    def conv_init(k, cout, cin, kh, kw):
        kw_, kb_ = jax.random.split(k)
        fan_in = cin * kh * kw
        w = jax.random.normal(kw_, (cout, cin, kh, kw), jnp.float32) / jnp.sqrt(fan_in)
        b = 0.1 * jax.random.normal(kb_, (cout,), jnp.float32)
        return w, b

    def bn_init(k, c):
        k1, k2, k3, k4 = jax.random.split(k, 4)
        gamma = (1.0 + 0.1 * jax.random.normal(k1, (c,))).astype(jnp.float32)
        beta = (0.1 * jax.random.normal(k2, (c,))).astype(jnp.float32)
        mean = (0.1 * jax.random.normal(k3, (c,))).astype(jnp.float32)
        var = (0.5 + jnp.abs(jax.random.normal(k4, (c,)))).astype(jnp.float32)
        return (gamma, beta, mean, var)

    ks = jax.random.split(key, 16)
    p = {}
    p["fe1_w"], p["fe1_b"] = conv_init(ks[0], C1, 3, 11, 11)
    p["fe1_bn"] = bn_init(ks[1], C1)
    p["fe2_w"], p["fe2_b"] = conv_init(ks[2], C2, C1, 5, 5)
    p["fe2_bn"] = bn_init(ks[3], C2)
    p["fe3_w"], p["fe3_b"] = conv_init(ks[4], C3, C2, 3, 3)
    p["fe3_bn"] = bn_init(ks[5], C3)
    p["fe4_w"], p["fe4_b"] = conv_init(ks[6], C3, C3, 3, 3)
    p["fe4_bn"] = bn_init(ks[7], C3)
    p["fe5_w"], p["fe5_b"] = conv_init(ks[8], C2, C3, 3, 3)
    p["fe5_bn"] = bn_init(ks[9], C2)
    p["r2_w"], p["r2_b"] = conv_init(ks[10], FEATURE_OUT, FEAT_IN, 3, 3)
    p["cls2_w"], p["cls2_b"] = conv_init(ks[11], FEATURE_OUT, FEAT_IN, 3, 3)
    p["adj_w"], p["adj_b"] = conv_init(ks[12], 4 * ANCHOR, 4 * ANCHOR, 1, 1)
    # Template kernels normally produced by temple()/kernel(); deterministic here.
    p["r1_kernel"] = jax.random.normal(
        ks[13], (4 * ANCHOR, FEATURE_OUT, KS, KS), jnp.float32) / jnp.sqrt(FEATURE_OUT * KS * KS)
    p["cls1_kernel"] = jax.random.normal(
        ks[14], (2 * ANCHOR, FEATURE_OUT, KS, KS), jnp.float32) / jnp.sqrt(FEATURE_OUT * KS * KS)
    return p


# ---------------------------------------------------------------------------


if __name__ == "__main__":
    key = jax.random.PRNGKey(0)
    kx, kp = jax.random.split(key)
    params = init_params(kp)

    # Smallest-ish input that survives the stride-2 conv + two pools + five 3x3
    # convs + head convs + 4x4 cross-correlation of this architecture.
    x = jax.random.normal(kx, (2, 3, 143, 143), jnp.float32)

    fwd = jax.jit(siamrpn_forward)
    r_out, c_out = fwd(params, x)
    jax.block_until_ready((r_out, c_out))

    r_ref, c_ref = siamrpn_forward_ref(params, x)

    assert r_out.shape == (2, 4 * ANCHOR, 3, 3), r_out.shape
    assert c_out.shape == (2, 2 * ANCHOR, 3, 3), c_out.shape
    assert jnp.allclose(r_out, r_ref, rtol=1e-3, atol=1e-3)
    assert jnp.allclose(c_out, c_ref, rtol=1e-3, atol=1e-3)

    print("KERNEL_OK")
</pallas_src>

<mosaic_0001>
module attributes {stable_mosaic.version = 11 : i64} {
  func.func @_conv_tapfold_kernel(%arg0: i32, %arg1: i32, %arg2: memref<1x16x512xbf16, #tpu.memory_space<vmem>>, %arg3: memref<1x16x512xbf16, #tpu.memory_space<vmem>>, %arg4: memref<8x576xbf16, #tpu.memory_space<vmem>>, %arg5: memref<8x1xf32, #tpu.memory_space<vmem>>, %arg6: memref<8x1xf32, #tpu.memory_space<vmem>>, %arg7: memref<1x8x512xf32, #tpu.memory_space<vmem>>) attributes {dimension_semantics = [#tpu.dimension_semantics<parallel>, #tpu.dimension_semantics<parallel>], iteration_bounds = array<i64: 2, 10>, scalar_prefetch = 0 : i64, scratch_operands = 0 : i64, tpu.core_type = #tpu.core_type<tc>, window_params = [{transform_indices = @transform_0, window_bounds = array<i64: 1, 16, 512>}, {transform_indices = @transform_1, window_bounds = array<i64: 1, 16, 512>}, {pipeline_mode = #tpu.pipeline_mode<synchronous>, transform_indices = @transform_2, window_bounds = array<i64: 8, 576>}, {pipeline_mode = #tpu.pipeline_mode<synchronous>, transform_indices = @transform_3, window_bounds = array<i64: 8, 1>}, {pipeline_mode = #tpu.pipeline_mode<synchronous>, transform_indices = @transform_4, window_bounds = array<i64: 8, 1>}, {transform_indices = @transform_5, window_bounds = array<i64: 1, 8, 512>}]} {
    %c0 = arith.constant 0 : index
    %c0_0 = arith.constant 0 : index
    %c0_1 = arith.constant 0 : index
    %0 = vector.load %arg2[%c0, %c0_0, %c0_1] : memref<1x16x512xbf16, #tpu.memory_space<vmem>>, vector<1x16x512xbf16>
    %1 = vector.shape_cast %0 : vector<1x16x512xbf16> to vector<16x512xbf16>
    %c0_2 = arith.constant 0 : index
    %c0_3 = arith.constant 0 : index
    %c0_4 = arith.constant 0 : index
    %2 = vector.load %arg3[%c0_2, %c0_3, %c0_4] : memref<1x16x512xbf16, #tpu.memory_space<vmem>>, vector<1x16x512xbf16>
    %3 = vector.shape_cast %2 : vector<1x16x512xbf16> to vector<16x512xbf16>
    %4 = tpu.concatenate %1, %3 in 1 : vector<16x512xbf16>, vector<16x512xbf16> -> vector<16x1024xbf16>
    %5 = vector.extract_strided_slice %4 {offsets = [0, 0], sizes = [16, 512], strides = [1, 1]} : vector<16x1024xbf16> to vector<16x512xbf16>
    %6 = vector.extract_strided_slice %4 {offsets = [0, 1], sizes = [16, 512], strides = [1, 1]} : vector<16x1024xbf16> to vector<16x512xbf16>
    %7 = vector.extract_strided_slice %4 {offsets = [0, 2], sizes = [16, 512], strides = [1, 1]} : vector<16x1024xbf16> to vector<16x512xbf16>
    %8 = vector.extract_strided_slice %4 {offsets = [0, 3], sizes = [16, 512], strides = [1, 1]} : vector<16x1024xbf16> to vector<16x512xbf16>
    %9 = vector.extract_strided_slice %4 {offsets = [0, 4], sizes = [16, 512], strides = [1, 1]} : vector<16x1024xbf16> to vector<16x512xbf16>
    %10 = vector.extract_strided_slice %4 {offsets = [0, 5], sizes = [16, 512], strides = [1, 1]} : vector<16x1024xbf16> to vector<16x512xbf16>
    %11 = vector.extract_strided_slice %4 {offsets = [0, 72], sizes = [16, 512], strides = [1, 1]} : vector<16x1024xbf16> to vector<16x512xbf16>
    %12 = vector.extract_strided_slice %4 {offsets = [0, 73], sizes = [16, 512], strides = [1, 1]} : vector<16x1024xbf16> to vector<16x512xbf16>
    %13 = vector.extract_strided_slice %4 {offsets = [0, 74], sizes = [16, 512], strides = [1, 1]} : vector<16x1024xbf16> to vector<16x512xbf16>
    %14 = vector.extract_strided_slice %4 {offsets = [0, 75], sizes = [16, 512], strides = [1, 1]} : vector<16x1024xbf16> to vector<16x512xbf16>
    %15 = vector.extract_strided_slice %4 {offsets = [0, 76], sizes = [16, 512], strides = [1, 1]} : vector<16x1024xbf16> to vector<16x512xbf16>
    %16 = vector.extract_strided_slice %4 {offsets = [0, 77], sizes = [16, 512], strides = [1, 1]} : vector<16x1024xbf16> to vector<16x512xbf16>
    %17 = vector.extract_strided_slice %4 {offsets = [0, 144], sizes = [16, 512], strides = [1, 1]} : vector<16x1024xbf16> to vector<16x512xbf16>
    %18 = vector.extract_strided_slice %4 {offsets = [0, 145], sizes = [16, 512], strides = [1, 1]} : vector<16x1024xbf16> to vector<16x512xbf16>
    %19 = vector.extract_strided_slice %4 {offsets = [0, 146], sizes = [16, 512], strides = [1, 1]} : vector<16x1024xbf16> to vector<16x512xbf16>
    %20 = vector.extract_strided_slice %4 {offsets = [0, 147], sizes = [16, 512], strides = [1, 1]} : vector<16x1024xbf16> to vector<16x512xbf16>
    %21 = vector.extract_strided_slice %4 {offsets = [0, 148], sizes = [16, 512], strides = [1, 1]} : vector<16x1024xbf16> to vector<16x512xbf16>
    %22 = vector.extract_strided_slice %4 {offsets = [0, 149], sizes = [16, 512], strides = [1, 1]} : vector<16x1024xbf16> to vector<16x512xbf16>
    %23 = vector.extract_strided_slice %4 {offsets = [0, 216], sizes = [16, 512], strides = [1, 1]} : vector<16x1024xbf16> to vector<16x512xbf16>
    %24 = vector.extract_strided_slice %4 {offsets = [0, 217], sizes = [16, 512], strides = [1, 1]} : vector<16x1024xbf16> to vector<16x512xbf16>
    %25 = vector.extract_strided_slice %4 {offsets = [0, 218], sizes = [16, 512], strides = [1, 1]} : vector<16x1024xbf16> to vector<16x512xbf16>
    %26 = vector.extract_strided_slice %4 {offsets = [0, 219], sizes = [16, 512], strides = [1, 1]} : vector<16x1024xbf16> to vector<16x512xbf16>
    %27 = vector.extract_strided_slice %4 {offsets = [0, 220], sizes = [16, 512], strides = [1, 1]} : vector<16x1024xbf16> to vector<16x512xbf16>
    %28 = vector.extract_strided_slice %4 {offsets = [0, 221], sizes = [16, 512], strides = [1, 1]} : vector<16x1024xbf16> to vector<16x512xbf16>
    %29 = vector.extract_strided_slice %4 {offsets = [0, 288], sizes = [16, 512], strides = [1, 1]} : vector<16x1024xbf16> to vector<16x512xbf16>
    %30 = vector.extract_strided_slice %4 {offsets = [0, 289], sizes = [16, 512], strides = [1, 1]} : vector<16x1024xbf16> to vector<16x512xbf16>
    %31 = vector.extract_strided_slice %4 {offsets = [0, 290], sizes = [16, 512], strides = [1, 1]} : vector<16x1024xbf16> to vector<16x512xbf16>
    %32 = vector.extract_strided_slice %4 {offsets = [0, 291], sizes = [16, 512], strides = [1, 1]} : vector<16x1024xbf16> to vector<16x512xbf16>
    %33 = vector.extract_strided_slice %4 {offsets = [0, 292], sizes = [16, 512], strides = [1, 1]} : vector<16x1024xbf16> to vector<16x512xbf16>
    %34 = vector.extract_strided_slice %4 {offsets = [0, 293], sizes = [16, 512], strides = [1, 1]} : vector<16x1024xbf16> to vector<16x512xbf16>
    %35 = vector.extract_strided_slice %4 {offsets = [0, 360], sizes = [16, 512], strides = [1, 1]} : vector<16x1024xbf16> to vector<16x512xbf16>
    %36 = vector.extract_strided_slice %4 {offsets = [0, 361], sizes = [16, 512], strides = [1, 1]} : vector<16x1024xbf16> to vector<16x512xbf16>
    %37 = vector.extract_strided_slice %4 {offsets = [0, 362], sizes = [16, 512], strides = [1, 1]} : vector<16x1024xbf16> to vector<16x512xbf16>
    %38 = vector.extract_strided_slice %4 {offsets = [0, 363], sizes = [16, 512], strides = [1, 1]} : vector<16x1024xbf16> to vector<16x512xbf16>
    %39 = vector.extract_strided_slice %4 {offsets = [0, 364], sizes = [16, 512], strides = [1, 1]} : vector<16x1024xbf16> to vector<16x512xbf16>
    %40 = vector.extract_strided_slice %4 {offsets = [0, 365], sizes = [16, 512], strides = [1, 1]} : vector<16x1024xbf16> to vector<16x512xbf16>
    %41 = tpu.concatenate %5, %6, %7, %8, %9, %10, %11, %12, %13, %14, %15, %16, %17, %18, %19, %20 in 0 : vector<16x512xbf16>, vector<16x512xbf16>, vector<16x512xbf16>, vector<16x512xbf16>, vector<16x512xbf16>, vector<16x512xbf16>, vector<16x512xbf16>, vector<16x512xbf16>, vector<16x512xbf16>, vector<16x512xbf16>, vector<16x512xbf16>, vector<16x512xbf16>, vector<16x512xbf16>, vector<16x512xbf16>, vector<16x512xbf16>, vector<16x512xbf16> -> vector<256x512xbf16>
    %42 = tpu.concatenate %21, %22, %23, %24, %25, %26, %27, %28, %29, %30, %31, %32, %33, %34, %35, %36 in 0 : vector<16x512xbf16>, vector<16x512xbf16>, vector<16x512xbf16>, vector<16x512xbf16>, vector<16x512xbf16>, vector<16x512xbf16>, vector<16x512xbf16>, vector<16x512xbf16>, vector<16x512xbf16>, vector<16x512xbf16>, vector<16x512xbf16>, vector<16x512xbf16>, vector<16x512xbf16>, vector<16x512xbf16>, vector<16x512xbf16>, vector<16x512xbf16> -> vector<256x512xbf16>
    %43 = tpu.concatenate %37, %38, %39, %40 in 0 : vector<16x512xbf16>, vector<16x512xbf16>, vector<16x512xbf16>, vector<16x512xbf16> -> vector<64x512xbf16>
    %44 = tpu.concatenate %41, %42, %43 in 0 : vector<256x512xbf16>, vector<256x512xbf16>, vector<64x512xbf16> -> vector<576x512xbf16>
    %c0_5 = arith.constant 0 : index
    %c0_6 = arith.constant 0 : index
    %45 = vector.load %arg4[%c0_5, %c0_6] : memref<8x576xbf16, #tpu.memory_space<vmem>>, vector<8x576xbf16>
    %cst = arith.constant dense<0.000000e+00> : vector<8x512xf32>
    %46 = tpu.matmul %45, %44, %cst {dimension_numbers = #tpu.dot_dimension_numbers<[1], [0], [0], [1], [0, 0, 1, 1], [], []>} : vector<8x576xbf16>, vector<576x512xbf16>, vector<8x512xf32> -> vector<8x512xf32>
    %c0_7 = arith.constant 0 : index
    %c0_8 = arith.constant 0 : index
    %47 = vector.load %arg5[%c0_7, %c0_8] : memref<8x1xf32, #tpu.memory_space<vmem>>, vector<8x1xf32>
    %48 = vector.broadcast %47 : vector<8x1xf32> to vector<8x512xf32>
    %49 = arith.mulf %46, %48 : vector<8x512xf32>
    %c0_9 = arith.constant 0 : index
    %c0_10 = arith.constant 0 : index
    %50 = vector.load %arg6[%c0_9, %c0_10] : memref<8x1xf32, #tpu.memory_space<vmem>>, vector<8x1xf32>
    %51 = vector.broadcast %50 : vector<8x1xf32> to vector<8x512xf32>
    %52 = arith.addf %49, %51 : vector<8x512xf32>
    %cst_11 = arith.constant 0.000000e+00 : f32
    %53 = vector.broadcast %cst_11 : f32 to vector<8x512xf32>
    %54 = arith.maximumf %52, %53 : vector<8x512xf32>
    %c0_12 = arith.constant 0 : index
    %c0_13 = arith.constant 0 : index
    %c0_14 = arith.constant 0 : index
    %55 = vector.load %arg7[%c0_12, %c0_13, %c0_14] : memref<1x8x512xf32, #tpu.memory_space<vmem>>, vector<1x8x512xf32>
    %56 = vector.shape_cast %55 : vector<1x8x512xf32> to vector<8x512xf32>
    %57 = vector.shape_cast %54 : vector<8x512xf32> to vector<1x8x512xf32>
    tpu.vector_store %arg7[%c0_12, %c0_13, %c0_14], %57 {strides = array<i32>} : memref<1x8x512xf32, #tpu.memory_space<vmem>>, vector<1x8x512xf32>,
    return
  }
  func.func @transform_0(%arg0: i32, %arg1: i32) -> (i32, i32, i32) {
    %c0_i32 = arith.constant 0 : i32
    %c0_i32_0 = arith.constant 0 : i32
    return %arg0, %c0_i32, %arg1 : i32, i32, i32
  }
  func.func @transform_1(%arg0: i32, %arg1: i32) -> (i32, i32, i32) {
    %c1_i32 = arith.constant 1 : i32
    %0 = arith.addi %arg1, %c1_i32 : i32
    %c0_i32 = arith.constant 0 : i32
    %c0_i32_0 = arith.constant 0 : i32
    return %arg0, %c0_i32, %0 : i32, i32, i32
  }
  func.func @transform_2(%arg0: i32, %arg1: i32) -> (i32, i32) {
    %c0_i32 = arith.constant 0 : i32
    %c0_i32_0 = arith.constant 0 : i32
    %c0_i32_1 = arith.constant 0 : i32
    return %c0_i32, %c0_i32_0 : i32, i32
  }
  func.func @transform_3(%arg0: i32, %arg1: i32) -> (i32, i32) {
    %c0_i32 = arith.constant 0 : i32
    %c0_i32_0 = arith.constant 0 : i32
    %c0_i32_1 = arith.constant 0 : i32
    return %c0_i32, %c0_i32_0 : i32, i32
  }
  func.func @transform_4(%arg0: i32, %arg1: i32) -> (i32, i32) {
    %c0_i32 = arith.constant 0 : i32
    %c0_i32_0 = arith.constant 0 : i32
    %c0_i32_1 = arith.constant 0 : i32
    return %c0_i32, %c0_i32_0 : i32, i32
  }
  func.func @transform_5(%arg0: i32, %arg1: i32) -> (i32, i32, i32) {
    %c0_i32 = arith.constant 0 : i32
    %c0_i32_0 = arith.constant 0 : i32
    return %arg0, %c0_i32, %arg1 : i32, i32, i32
  }
}

module attributes {stable_mosaic.version = 11 : i64} {
  func.func @_maxpool_flat_kernel(%arg0: i32, %arg1: memref<4x1x8x1280xf32, #tpu.memory_space<vmem>>, %arg2: memref<1x8x1152xf32, #tpu.memory_space<vmem>>) attributes {dimension_semantics = [#tpu.dimension_semantics<parallel>], iteration_bounds = array<i64: 2>, scalar_prefetch = 0 : i64, scratch_operands = 0 : i64, tpu.core_type = #tpu.core_type<tc>, window_params = [{transform_indices = @transform_0, window_bounds = array<i64: 4, 1, 8, 1280>}, {transform_indices = @transform_1, window_bounds = array<i64: 1, 8, 1152>}]} {
    %c0 = arith.constant 0 : index
    %c0_0 = arith.constant 0 : index
    %c0_1 = arith.constant 0 : index
    %c0_2 = arith.constant 0 : index
    %0 = vector.load %arg1[%c0, %c0_0, %c0_1, %c0_2] : memref<4x1x8x1280xf32, #tpu.memory_space<vmem>>, vector<1x1x8x1152xf32>
    %1 = vector.shape_cast %0 : vector<1x1x8x1152xf32> to vector<8x1152xf32>
    %c1 = arith.constant 1 : index
    %c0_3 = arith.constant 0 : index
    %c0_4 = arith.constant 0 : index
    %c0_5 = arith.constant 0 : index
    %2 = vector.load %arg1[%c1, %c0_3, %c0_4, %c0_5] : memref<4x1x8x1280xf32, #tpu.memory_space<vmem>>, vector<1x1x8x1152xf32>
    %3 = vector.shape_cast %2 : vector<1x1x8x1152xf32> to vector<8x1152xf32>
    %4 = arith.maximumf %1, %3 : vector<8x1152xf32>
    %c0_6 = arith.constant 0 : index
    %c0_7 = arith.constant 0 : index
    %c0_8 = arith.constant 0 : index
    %c1_9 = arith.constant 1 : index
    %5 = vector.load %arg1[%c0_6, %c0_7, %c0_8, %c1_9] : memref<4x1x8x1280xf32, #tpu.memory_space<vmem>>, vector<1x1x8x1152xf32>
    %6 = vector.shape_cast %5 : vector<1x1x8x1152xf32> to vector<8x1152xf32>
    %7 = arith.maximumf %4, %6 : vector<8x1152xf32>
    %c2 = arith.constant 2 : index
    %c0_10 = arith.constant 0 : index
    %c0_11 = arith.constant 0 : index
    %c0_12 = arith.constant 0 : index
    %8 = vector.load %arg1[%c2, %c0_10, %c0_11, %c0_12] : memref<4x1x8x1280xf32, #tpu.memory_space<vmem>>, vector<1x1x8x1152xf32>
    %9 = vector.shape_cast %8 : vector<1x1x8x1152xf32> to vector<8x1152xf32>
    %10 = arith.maximumf %7, %9 : vector<8x1152xf32>
    %c3 = arith.constant 3 : index
    %c0_13 = arith.constant 0 : index
    %c0_14 = arith.constant 0 : index
    %c0_15 = arith.constant 0 : index
    %11 = vector.load %arg1[%c3, %c0_13, %c0_14, %c0_15] : memref<4x1x8x1280xf32, #tpu.memory_space<vmem>>, vector<1x1x8x1152xf32>
    %12 = vector.shape_cast %11 : vector<1x1x8x1152xf32> to vector<8x1152xf32>
    %13 = arith.maximumf %10, %12 : vector<8x1152xf32>
    %c2_16 = arith.constant 2 : index
    %c0_17 = arith.constant 0 : index
    %c0_18 = arith.constant 0 : index
    %c1_19 = arith.constant 1 : index
    %14 = vector.load %arg1[%c2_16, %c0_17, %c0_18, %c1_19] : memref<4x1x8x1280xf32, #tpu.memory_space<vmem>>, vector<1x1x8x1152xf32>
    %15 = vector.shape_cast %14 : vector<1x1x8x1152xf32> to vector<8x1152xf32>
    %16 = arith.maximumf %13, %15 : vector<8x1152xf32>
    %c0_20 = arith.constant 0 : index
    %c0_21 = arith.constant 0 : index
    %c0_22 = arith.constant 0 : index
    %c34 = arith.constant 34 : index
    %17 = vector.load %arg1[%c0_20, %c0_21, %c0_22, %c34] : memref<4x1x8x1280xf32, #tpu.memory_space<vmem>>, vector<1x1x8x1152xf32>
    %18 = vector.shape_cast %17 : vector<1x1x8x1152xf32> to vector<8x1152xf32>
    %19 = arith.maximumf %16, %18 : vector<8x1152xf32>
    %c1_23 = arith.constant 1 : index
    %c0_24 = arith.constant 0 : index
    %c0_25 = arith.constant 0 : index
    %c34_26 = arith.constant 34 : index
    %20 = vector.load %arg1[%c1_23, %c0_24, %c0_25, %c34_26] : memref<4x1x8x1280xf32, #tpu.memory_space<vmem>>, vector<1x1x8x1152xf32>
    %21 = vector.shape_cast %20 : vector<1x1x8x1152xf32> to vector<8x1152xf32>
    %22 = arith.maximumf %19, %21 : vector<8x1152xf32>
    %c0_27 = arith.constant 0 : index
    %c0_28 = arith.constant 0 : index
    %c0_29 = arith.constant 0 : index
    %c35 = arith.constant 35 : index
    %23 = vector.load %arg1[%c0_27, %c0_28, %c0_29, %c35] : memref<4x1x8x1280xf32, #tpu.memory_space<vmem>>, vector<1x1x8x1152xf32>
    %24 = vector.shape_cast %23 : vector<1x1x8x1152xf32> to vector<8x1152xf32>
    %25 = arith.maximumf %22, %24 : vector<8x1152xf32>
    %c0_30 = arith.constant 0 : index
    %c0_31 = arith.constant 0 : index
    %c0_32 = arith.constant 0 : index
    %26 = vector.load %arg2[%c0_30, %c0_31, %c0_32] : memref<1x8x1152xf32, #tpu.memory_space<vmem>>, vector<1x8x1152xf32>
    %27 = vector.shape_cast %26 : vector<1x8x1152xf32> to vector<8x1152xf32>
    %28 = vector.shape_cast %25 : vector<8x1152xf32> to vector<1x8x1152xf32>
    tpu.vector_store %arg2[%c0_30, %c0_31, %c0_32], %28 {strides = array<i32>} : memref<1x8x1152xf32, #tpu.memory_space<vmem>>, vector<1x8x1152xf32>,
    return
  }
  func.func @transform_0(%arg0: i32) -> (i32, i32, i32, i32) {
    %c0_i32 = arith.constant 0 : i32
    %c0_i32_0 = arith.constant 0 : i32
    %c0_i32_1 = arith.constant 0 : i32
    %c0_i32_2 = arith.constant 0 : i32
    return %c0_i32, %arg0, %c0_i32_0, %c0_i32_1 : i32, i32, i32, i32
  }
  func.func @transform_1(%arg0: i32) -> (i32, i32, i32) {
    %c0_i32 = arith.constant 0 : i32
    %c0_i32_0 = arith.constant 0 : i32
    %c0_i32_1 = arith.constant 0 : i32
    return %arg0, %c0_i32, %c0_i32_0 : i32, i32, i32
  }
}

module attributes {stable_mosaic.version = 11 : i64} {
  func.func @_conv_tapfold_kernel(%arg0: i32, %arg1: i32, %arg2: memref<1x8x512xbf16, #tpu.memory_space<vmem>>, %arg3: memref<1x8x512xbf16, #tpu.memory_space<vmem>>, %arg4: memref<16x200xbf16, #tpu.memory_space<vmem>>, %arg5: memref<16x1xf32, #tpu.memory_space<vmem>>, %arg6: memref<16x1xf32, #tpu.memory_space<vmem>>, %arg7: memref<1x16x512xf32, #tpu.memory_space<vmem>>) attributes {dimension_semantics = [#tpu.dimension_semantics<parallel>, #tpu.dimension_semantics<parallel>], iteration_bounds = array<i64: 2, 2>, scalar_prefetch = 0 : i64, scratch_operands = 0 : i64, tpu.core_type = #tpu.core_type<tc>, window_params = [{transform_indices = @transform_0, window_bounds = array<i64: 1, 8, 512>}, {transform_indices = @transform_1, window_bounds = array<i64: 1, 8, 512>}, {pipeline_mode = #tpu.pipeline_mode<synchronous>, transform_indices = @transform_2, window_bounds = array<i64: 16, 200>}, {pipeline_mode = #tpu.pipeline_mode<synchronous>, transform_indices = @transform_3, window_bounds = array<i64: 16, 1>}, {pipeline_mode = #tpu.pipeline_mode<synchronous>, transform_indices = @transform_4, window_bounds = array<i64: 16, 1>}, {transform_indices = @transform_5, window_bounds = array<i64: 1, 16, 512>}]} {
    %c0 = arith.constant 0 : index
    %c0_0 = arith.constant 0 : index
    %c0_1 = arith.constant 0 : index
    %0 = vector.load %arg2[%c0, %c0_0, %c0_1] : memref<1x8x512xbf16, #tpu.memory_space<vmem>>, vector<1x8x512xbf16>
    %1 = vector.shape_cast %0 : vector<1x8x512xbf16> to vector<8x512xbf16>
    %c0_2 = arith.constant 0 : index
    %c0_3 = arith.constant 0 : index
    %c0_4 = arith.constant 0 : index
    %2 = vector.load %arg3[%c0_2, %c0_3, %c0_4] : memref<1x8x512xbf16, #tpu.memory_space<vmem>>, vector<1x8x512xbf16>
    %3 = vector.shape_cast %2 : vector<1x8x512xbf16> to vector<8x512xbf16>
    %4 = tpu.concatenate %1, %3 in 1 : vector<8x512xbf16>, vector<8x512xbf16> -> vector<8x1024xbf16>
    %5 = vector.extract_strided_slice %4 {offsets = [0, 0], sizes = [8, 512], strides = [1, 1]} : vector<8x1024xbf16> to vector<8x512xbf16>
    %6 = vector.extract_strided_slice %4 {offsets = [0, 1], sizes = [8, 512], strides = [1, 1]} : vector<8x1024xbf16> to vector<8x512xbf16>
    %7 = vector.extract_strided_slice %4 {offsets = [0, 2], sizes = [8, 512], strides = [1, 1]} : vector<8x1024xbf16> to vector<8x512xbf16>
    %8 = vector.extract_strided_slice %4 {offsets = [0, 3], sizes = [8, 512], strides = [1, 1]} : vector<8x1024xbf16> to vector<8x512xbf16>
    %9 = vector.extract_strided_slice %4 {offsets = [0, 4], sizes = [8, 512], strides = [1, 1]} : vector<8x1024xbf16> to vector<8x512xbf16>
    %10 = vector.extract_strided_slice %4 {offsets = [0, 33], sizes = [8, 512], strides = [1, 1]} : vector<8x1024xbf16> to vector<8x512xbf16>
    %11 = vector.extract_strided_slice %4 {offsets = [0, 34], sizes = [8, 512], strides = [1, 1]} : vector<8x1024xbf16> to vector<8x512xbf16>
    %12 = vector.extract_strided_slice %4 {offsets = [0, 35], sizes = [8, 512], strides = [1, 1]} : vector<8x1024xbf16> to vector<8x512xbf16>
    %13 = vector.extract_strided_slice %4 {offsets = [0, 36], sizes = [8, 512], strides = [1, 1]} : vector<8x1024xbf16> to vector<8x512xbf16>
    %14 = vector.extract_strided_slice %4 {offsets = [0, 37], sizes = [8, 512], strides = [1, 1]} : vector<8x1024xbf16> to vector<8x512xbf16>
    %15 = vector.extract_strided_slice %4 {offsets = [0, 66], sizes = [8, 512], strides = [1, 1]} : vector<8x1024xbf16> to vector<8x512xbf16>
    %16 = vector.extract_strided_slice %4 {offsets = [0, 67], sizes = [8, 512], strides = [1, 1]} : vector<8x1024xbf16> to vector<8x512xbf16>
    %17 = vector.extract_strided_slice %4 {offsets = [0, 68], sizes = [8, 512], strides = [1, 1]} : vector<8x1024xbf16> to vector<8x512xbf16>
    %18 = vector.extract_strided_slice %4 {offsets = [0, 69], sizes = [8, 512], strides = [1, 1]} : vector<8x1024xbf16> to vector<8x512xbf16>
    %19 = vector.extract_strided_slice %4 {offsets = [0, 70], sizes = [8, 512], strides = [1, 1]} : vector<8x1024xbf16> to vector<8x512xbf16>
    %20 = vector.extract_strided_slice %4 {offsets = [0, 99], sizes = [8, 512], strides = [1, 1]} : vector<8x1024xbf16> to vector<8x512xbf16>
    %21 = vector.extract_strided_slice %4 {offsets = [0, 100], sizes = [8, 512], strides = [1, 1]} : vector<8x1024xbf16> to vector<8x512xbf16>
    %22 = vector.extract_strided_slice %4 {offsets = [0, 101], sizes = [8, 512], strides = [1, 1]} : vector<8x1024xbf16> to vector<8x512xbf16>
    %23 = vector.extract_strided_slice %4 {offsets = [0, 102], sizes = [8, 512], strides = [1, 1]} : vector<8x1024xbf16> to vector<8x512xbf16>
    %24 = vector.extract_strided_slice %4 {offsets = [0, 103], sizes = [8, 512], strides = [1, 1]} : vector<8x1024xbf16> to vector<8x512xbf16>
    %25 = vector.extract_strided_slice %4 {offsets = [0, 132], sizes = [8, 512], strides = [1, 1]} : vector<8x1024xbf16> to vector<8x512xbf16>
    %26 = vector.extract_strided_slice %4 {offsets = [0, 133], sizes = [8, 512], strides = [1, 1]} : vector<8x1024xbf16> to vector<8x512xbf16>
    %27 = vector.extract_strided_slice %4 {offsets = [0, 134], sizes = [8, 512], strides = [1, 1]} : vector<8x1024xbf16> to vector<8x512xbf16>
    %28 = vector.extract_strided_slice %4 {offsets = [0, 135], sizes = [8, 512], strides = [1, 1]} : vector<8x1024xbf16> to vector<8x512xbf16>
    %29 = vector.extract_strided_slice %4 {offsets = [0, 136], sizes = [8, 512], strides = [1, 1]} : vector<8x1024xbf16> to vector<8x512xbf16>
    %30 = tpu.concatenate %5, %6, %7, %8, %9, %10, %11, %12, %13, %14, %15, %16, %17, %18, %19, %20 in 0 : vector<8x512xbf16>, vector<8x512xbf16>, vector<8x512xbf16>, vector<8x512xbf16>, vector<8x512xbf16>, vector<8x512xbf16>, vector<8x512xbf16>, vector<8x512xbf16>, vector<8x512xbf16>, vector<8x512xbf16>, vector<8x512xbf16>, vector<8x512xbf16>, vector<8x512xbf16>, vector<8x512xbf16>, vector<8x512xbf16>, vector<8x512xbf16> -> vector<128x512xbf16>
    %31 = tpu.concatenate %21, %22, %23, %24, %25, %26, %27, %28, %29 in 0 : vector<8x512xbf16>, vector<8x512xbf16>, vector<8x512xbf16>, vector<8x512xbf16>, vector<8x512xbf16>, vector<8x512xbf16>, vector<8x512xbf16>, vector<8x512xbf16>, vector<8x512xbf16> -> vector<72x512xbf16>
    %32 = tpu.concatenate %30, %31 in 0 : vector<128x512xbf16>, vector<72x512xbf16> -> vector<200x512xbf16>
    %c0_5 = arith.constant 0 : index
    %c0_6 = arith.constant 0 : index
    %33 = vector.load %arg4[%c0_5, %c0_6] : memref<16x200xbf16, #tpu.memory_space<vmem>>, vector<16x200xbf16>
    %cst = arith.constant dense<0.000000e+00> : vector<16x512xf32>
    %34 = tpu.matmul %33, %32, %cst {dimension_numbers = #tpu.dot_dimension_numbers<[1], [0], [0], [1], [0, 0, 1, 1], [], []>} : vector<16x200xbf16>, vector<200x512xbf16>, vector<16x512xf32> -> vector<16x512xf32>
    %c0_7 = arith.constant 0 : index
    %c0_8 = arith.constant 0 : index
    %35 = vector.load %arg5[%c0_7, %c0_8] : memref<16x1xf32, #tpu.memory_space<vmem>>, vector<16x1xf32>
    %36 = vector.broadcast %35 : vector<16x1xf32> to vector<16x512xf32>
    %37 = arith.mulf %34, %36 : vector<16x512xf32>
    %c0_9 = arith.constant 0 : index
    %c0_10 = arith.constant 0 : index
    %38 = vector.load %arg6[%c0_9, %c0_10] : memref<16x1xf32, #tpu.memory_space<vmem>>, vector<16x1xf32>
    %39 = vector.broadcast %38 : vector<16x1xf32> to vector<16x512xf32>
    %40 = arith.addf %37, %39 : vector<16x512xf32>
    %cst_11 = arith.constant 0.000000e+00 : f32
    %41 = vector.broadcast %cst_11 : f32 to vector<16x512xf32>
    %42 = arith.maximumf %40, %41 : vector<16x512xf32>
    %c0_12 = arith.constant 0 : index
    %c0_13 = arith.constant 0 : index
    %c0_14 = arith.constant 0 : index
    %43 = vector.load %arg7[%c0_12, %c0_13, %c0_14] : memref<1x16x512xf32, #tpu.memory_space<vmem>>, vector<1x16x512xf32>
    %44 = vector.shape_cast %43 : vector<1x16x512xf32> to vector<16x512xf32>
    %45 = vector.shape_cast %42 : vector<16x512xf32> to vector<1x16x512xf32>
    tpu.vector_store %arg7[%c0_12, %c0_13, %c0_14], %45 {strides = array<i32>} : memref<1x16x512xf32, #tpu.memory_space<vmem>>, vector<1x16x512xf32>,
    return
  }
  func.func @transform_0(%arg0: i32, %arg1: i32) -> (i32, i32, i32) {
    %c0_i32 = arith.constant 0 : i32
    %c0_i32_0 = arith.constant 0 : i32
    return %arg0, %c0_i32, %arg1 : i32, i32, i32
  }
  func.func @transform_1(%arg0: i32, %arg1: i32) -> (i32, i32, i32) {
    %c1_i32 = arith.constant 1 : i32
    %0 = arith.addi %arg1, %c1_i32 : i32
    %c0_i32 = arith.constant 0 : i32
    %c0_i32_0 = arith.constant 0 : i32
    return %arg0, %c0_i32, %0 : i32, i32, i32
  }
  func.func @transform_2(%arg0: i32, %arg1: i32) -> (i32, i32) {
    %c0_i32 = arith.constant 0 : i32
    %c0_i32_0 = arith.constant 0 : i32
    %c0_i32_1 = arith.constant 0 : i32
    return %c0_i32, %c0_i32_0 : i32, i32
  }
  func.func @transform_3(%arg0: i32, %arg1: i32) -> (i32, i32) {
    %c0_i32 = arith.constant 0 : i32
    %c0_i32_0 = arith.constant 0 : i32
    %c0_i32_1 = arith.constant 0 : i32
    return %c0_i32, %c0_i32_0 : i32, i32
  }
  func.func @transform_4(%arg0: i32, %arg1: i32) -> (i32, i32) {
    %c0_i32 = arith.constant 0 : i32
    %c0_i32_0 = arith.constant 0 : i32
    %c0_i32_1 = arith.constant 0 : i32
    return %c0_i32, %c0_i32_0 : i32, i32
  }
  func.func @transform_5(%arg0: i32, %arg1: i32) -> (i32, i32, i32) {
    %c0_i32 = arith.constant 0 : i32
    %c0_i32_0 = arith.constant 0 : i32
    return %arg0, %c0_i32, %arg1 : i32, i32, i32
  }
}

module attributes {stable_mosaic.version = 11 : i64} {
  func.func @_maxpool_flat_kernel(%arg0: i32, %arg1: memref<4x1x16x384xf32, #tpu.memory_space<vmem>>, %arg2: memref<1x16x256xf32, #tpu.memory_space<vmem>>) attributes {dimension_semantics = [#tpu.dimension_semantics<parallel>], iteration_bounds = array<i64: 2>, scalar_prefetch = 0 : i64, scratch_operands = 0 : i64, tpu.core_type = #tpu.core_type<tc>, window_params = [{transform_indices = @transform_0, window_bounds = array<i64: 4, 1, 16, 384>}, {transform_indices = @transform_1, window_bounds = array<i64: 1, 16, 256>}]} {
    %c0 = arith.constant 0 : index
    %c0_0 = arith.constant 0 : index
    %c0_1 = arith.constant 0 : index
    %c0_2 = arith.constant 0 : index
    %0 = vector.load %arg1[%c0, %c0_0, %c0_1, %c0_2] : memref<4x1x16x384xf32, #tpu.memory_space<vmem>>, vector<1x1x16x256xf32>
    %1 = vector.shape_cast %0 : vector<1x1x16x256xf32> to vector<16x256xf32>
    %c1 = arith.constant 1 : index
    %c0_3 = arith.constant 0 : index
    %c0_4 = arith.constant 0 : index
    %c0_5 = arith.constant 0 : index
    %2 = vector.load %arg1[%c1, %c0_3, %c0_4, %c0_5] : memref<4x1x16x384xf32, #tpu.memory_space<vmem>>, vector<1x1x16x256xf32>
    %3 = vector.shape_cast %2 : vector<1x1x16x256xf32> to vector<16x256xf32>
    %4 = arith.maximumf %1, %3 : vector<16x256xf32>
    %c0_6 = arith.constant 0 : index
    %c0_7 = arith.constant 0 : index
    %c0_8 = arith.constant 0 : index
    %c1_9 = arith.constant 1 : index
    %5 = vector.load %arg1[%c0_6, %c0_7, %c0_8, %c1_9] : memref<4x1x16x384xf32, #tpu.memory_space<vmem>>, vector<1x1x16x256xf32>
    %6 = vector.shape_cast %5 : vector<1x1x16x256xf32> to vector<16x256xf32>
    %7 = arith.maximumf %4, %6 : vector<16x256xf32>
    %c2 = arith.constant 2 : index
    %c0_10 = arith.constant 0 : index
    %c0_11 = arith.constant 0 : index
    %c0_12 = arith.constant 0 : index
    %8 = vector.load %arg1[%c2, %c0_10, %c0_11, %c0_12] : memref<4x1x16x384xf32, #tpu.memory_space<vmem>>, vector<1x1x16x256xf32>
    %9 = vector.shape_cast %8 : vector<1x1x16x256xf32> to vector<16x256xf32>
    %10 = arith.maximumf %7, %9 : vector<16x256xf32>
    %c3 = arith.constant 3 : index
    %c0_13 = arith.constant 0 : index
    %c0_14 = arith.constant 0 : index
    %c0_15 = arith.constant 0 : index
    %11 = vector.load %arg1[%c3, %c0_13, %c0_14, %c0_15] : memref<4x1x16x384xf32, #tpu.memory_space<vmem>>, vector<1x1x16x256xf32>
    %12 = vector.shape_cast %11 : vector<1x1x16x256xf32> to vector<16x256xf32>
    %13 = arith.maximumf %10, %12 : vector<16x256xf32>
    %c2_16 = arith.constant 2 : index
    %c0_17 = arith.constant 0 : index
    %c0_18 = arith.constant 0 : index
    %c1_19 = arith.constant 1 : index
    %14 = vector.load %arg1[%c2_16, %c0_17, %c0_18, %c1_19] : memref<4x1x16x384xf32, #tpu.memory_space<vmem>>, vector<1x1x16x256xf32>
    %15 = vector.shape_cast %14 : vector<1x1x16x256xf32> to vector<16x256xf32>
    %16 = arith.maximumf %13, %15 : vector<16x256xf32>
    %c0_20 = arith.constant 0 : index
    %c0_21 = arith.constant 0 : index
    %c0_22 = arith.constant 0 : index
    %c15 = arith.constant 15 : index
    %17 = vector.load %arg1[%c0_20, %c0_21, %c0_22, %c15] : memref<4x1x16x384xf32, #tpu.memory_space<vmem>>, vector<1x1x16x256xf32>
    %18 = vector.shape_cast %17 : vector<1x1x16x256xf32> to vector<16x256xf32>
    %19 = arith.maximumf %16, %18 : vector<16x256xf32>
    %c1_23 = arith.constant 1 : index
    %c0_24 = arith.constant 0 : index
    %c0_25 = arith.constant 0 : index
    %c15_26 = arith.constant 15 : index
    %20 = vector.load %arg1[%c1_23, %c0_24, %c0_25, %c15_26] : memref<4x1x16x384xf32, #tpu.memory_space<vmem>>, vector<1x1x16x256xf32>
    %21 = vector.shape_cast %20 : vector<1x1x16x256xf32> to vector<16x256xf32>
    %22 = arith.maximumf %19, %21 : vector<16x256xf32>
    %c0_27 = arith.constant 0 : index
    %c0_28 = arith.constant 0 : index
    %c0_29 = arith.constant 0 : index
    %c16 = arith.constant 16 : index
    %23 = vector.load %arg1[%c0_27, %c0_28, %c0_29, %c16] : memref<4x1x16x384xf32, #tpu.memory_space<vmem>>, vector<1x1x16x256xf32>
    %24 = vector.shape_cast %23 : vector<1x1x16x256xf32> to vector<16x256xf32>
    %25 = arith.maximumf %22, %24 : vector<16x256xf32>
    %c0_30 = arith.constant 0 : index
    %c0_31 = arith.constant 0 : index
    %c0_32 = arith.constant 0 : index
    %26 = vector.load %arg2[%c0_30, %c0_31, %c0_32] : memref<1x16x256xf32, #tpu.memory_space<vmem>>, vector<1x16x256xf32>
    %27 = vector.shape_cast %26 : vector<1x16x256xf32> to vector<16x256xf32>
    %28 = vector.shape_cast %25 : vector<16x256xf32> to vector<1x16x256xf32>
    tpu.vector_store %arg2[%c0_30, %c0_31, %c0_32], %28 {strides = array<i32>} : memref<1x16x256xf32, #tpu.memory_space<vmem>>, vector<1x16x256xf32>,
    return
  }
  func.func @transform_0(%arg0: i32) -> (i32, i32, i32, i32) {
    %c0_i32 = arith.constant 0 : i32
    %c0_i32_0 = arith.constant 0 : i32
    %c0_i32_1 = arith.constant 0 : i32
    %c0_i32_2 = arith.constant 0 : i32
    return %c0_i32, %arg0, %c0_i32_0, %c0_i32_1 : i32, i32, i32, i32
  }
  func.func @transform_1(%arg0: i32) -> (i32, i32, i32) {
    %c0_i32 = arith.constant 0 : i32
    %c0_i32_0 = arith.constant 0 : i32
    %c0_i32_1 = arith.constant 0 : i32
    return %arg0, %c0_i32, %c0_i32_0 : i32, i32, i32
  }
}

module attributes {stable_mosaic.version = 11 : i64} {
  func.func @_conv_tapfold_kernel(%arg0: i32, %arg1: i32, %arg2: memref<1x16x512xbf16, #tpu.memory_space<vmem>>, %arg3: memref<1x16x512xbf16, #tpu.memory_space<vmem>>, %arg4: memref<16x144xbf16, #tpu.memory_space<vmem>>, %arg5: memref<16x1xf32, #tpu.memory_space<vmem>>, %arg6: memref<16x1xf32, #tpu.memory_space<vmem>>, %arg7: memref<1x16x512xbf16, #tpu.memory_space<vmem>>) attributes {dimension_semantics = [#tpu.dimension_semantics<parallel>, #tpu.dimension_semantics<parallel>], iteration_bounds = array<i64: 2, 1>, scalar_prefetch = 0 : i64, scratch_operands = 0 : i64, tpu.core_type = #tpu.core_type<tc>, window_params = [{transform_indices = @transform_0, window_bounds = array<i64: 1, 16, 512>}, {transform_indices = @transform_1, window_bounds = array<i64: 1, 16, 512>}, {pipeline_mode = #tpu.pipeline_mode<synchronous>, transform_indices = @transform_2, window_bounds = array<i64: 16, 144>}, {pipeline_mode = #tpu.pipeline_mode<synchronous>, transform_indices = @transform_3, window_bounds = array<i64: 16, 1>}, {pipeline_mode = #tpu.pipeline_mode<synchronous>, transform_indices = @transform_4, window_bounds = array<i64: 16, 1>}, {transform_indices = @transform_5, window_bounds = array<i64: 1, 16, 512>}]} {
    %c0 = arith.constant 0 : index
    %c0_0 = arith.constant 0 : index
    %c0_1 = arith.constant 0 : index
    %0 = vector.load %arg2[%c0, %c0_0, %c0_1] : memref<1x16x512xbf16, #tpu.memory_space<vmem>>, vector<1x16x512xbf16>
    %1 = vector.shape_cast %0 : vector<1x16x512xbf16> to vector<16x512xbf16>
    %c0_2 = arith.constant 0 : index
    %c0_3 = arith.constant 0 : index
    %c0_4 = arith.constant 0 : index
    %2 = vector.load %arg3[%c0_2, %c0_3, %c0_4] : memref<1x16x512xbf16, #tpu.memory_space<vmem>>, vector<1x16x512xbf16>
    %3 = vector.shape_cast %2 : vector<1x16x512xbf16> to vector<16x512xbf16>
    %4 = tpu.concatenate %1, %3 in 1 : vector<16x512xbf16>, vector<16x512xbf16> -> vector<16x1024xbf16>
    %5 = vector.extract_strided_slice %4 {offsets = [0, 0], sizes = [16, 512], strides = [1, 1]} : vector<16x1024xbf16> to vector<16x512xbf16>
    %6 = vector.extract_strided_slice %4 {offsets = [0, 1], sizes = [16, 512], strides = [1, 1]} : vector<16x1024xbf16> to vector<16x512xbf16>
    %7 = vector.extract_strided_slice %4 {offsets = [0, 2], sizes = [16, 512], strides = [1, 1]} : vector<16x1024xbf16> to vector<16x512xbf16>
    %8 = vector.extract_strided_slice %4 {offsets = [0, 14], sizes = [16, 512], strides = [1, 1]} : vector<16x1024xbf16> to vector<16x512xbf16>
    %9 = vector.extract_strided_slice %4 {offsets = [0, 15], sizes = [16, 512], strides = [1, 1]} : vector<16x1024xbf16> to vector<16x512xbf16>
    %10 = vector.extract_strided_slice %4 {offsets = [0, 16], sizes = [16, 512], strides = [1, 1]} : vector<16x1024xbf16> to vector<16x512xbf16>
    %11 = vector.extract_strided_slice %4 {offsets = [0, 28], sizes = [16, 512], strides = [1, 1]} : vector<16x1024xbf16> to vector<16x512xbf16>
    %12 = vector.extract_strided_slice %4 {offsets = [0, 29], sizes = [16, 512], strides = [1, 1]} : vector<16x1024xbf16> to vector<16x512xbf16>
    %13 = vector.extract_strided_slice %4 {offsets = [0, 30], sizes = [16, 512], strides = [1, 1]} : vector<16x1024xbf16> to vector<16x512xbf16>
    %14 = tpu.concatenate %5, %6, %7, %8, %9, %10, %11, %12, %13 in 0 : vector<16x512xbf16>, vector<16x512xbf16>, vector<16x512xbf16>, vector<16x512xbf16>, vector<16x512xbf16>, vector<16x512xbf16>, vector<16x512xbf16>, vector<16x512xbf16>, vector<16x512xbf16> -> vector<144x512xbf16>
    %c0_5 = arith.constant 0 : index
    %c0_6 = arith.constant 0 : index
    %15 = vector.load %arg4[%c0_5, %c0_6] : memref<16x144xbf16, #tpu.memory_space<vmem>>, vector<16x144xbf16>
    %cst = arith.constant dense<0.000000e+00> : vector<16x512xf32>
    %16 = tpu.matmul %15, %14, %cst {dimension_numbers = #tpu.dot_dimension_numbers<[1], [0], [0], [1], [0, 0, 1, 1], [], []>} : vector<16x144xbf16>, vector<144x512xbf16>, vector<16x512xf32> -> vector<16x512xf32>
    %c0_7 = arith.constant 0 : index
    %c0_8 = arith.constant 0 : index
    %17 = vector.load %arg5[%c0_7, %c0_8] : memref<16x1xf32, #tpu.memory_space<vmem>>, vector<16x1xf32>
    %18 = vector.broadcast %17 : vector<16x1xf32> to vector<16x512xf32>
    %19 = arith.mulf %16, %18 : vector<16x512xf32>
    %c0_9 = arith.constant 0 : index
    %c0_10 = arith.constant 0 : index
    %20 = vector.load %arg6[%c0_9, %c0_10] : memref<16x1xf32, #tpu.memory_space<vmem>>, vector<16x1xf32>
    %21 = vector.broadcast %20 : vector<16x1xf32> to vector<16x512xf32>
    %22 = arith.addf %19, %21 : vector<16x512xf32>
    %cst_11 = arith.constant 0.000000e+00 : f32
    %23 = vector.broadcast %cst_11 : f32 to vector<16x512xf32>
    %24 = arith.maximumf %22, %23 : vector<16x512xf32>
    %25 = arith.truncf %24 : vector<16x512xf32> to vector<16x512xbf16>
    %c0_12 = arith.constant 0 : index
    %c0_13 = arith.constant 0 : index
    %c0_14 = arith.constant 0 : index
    %26 = vector.load %arg7[%c0_12, %c0_13, %c0_14] : memref<1x16x512xbf16, #tpu.memory_space<vmem>>, vector<1x16x512xbf16>
    %27 = vector.shape_cast %26 : vector<1x16x512xbf16> to vector<16x512xbf16>
    %28 = vector.shape_cast %25 : vector<16x512xbf16> to vector<1x16x512xbf16>
    tpu.vector_store %arg7[%c0_12, %c0_13, %c0_14], %28 {strides = array<i32>} : memref<1x16x512xbf16, #tpu.memory_space<vmem>>, vector<1x16x512xbf16>,
    return
  }
  func.func @transform_0(%arg0: i32, %arg1: i32) -> (i32, i32, i32) {
    %c0_i32 = arith.constant 0 : i32
    %c0_i32_0 = arith.constant 0 : i32
    return %arg0, %c0_i32, %arg1 : i32, i32, i32
  }
  func.func @transform_1(%arg0: i32, %arg1: i32) -> (i32, i32, i32) {
    %c1_i32 = arith.constant 1 : i32
    %0 = arith.addi %arg1, %c1_i32 : i32
    %c0_i32 = arith.constant 0 : i32
    %c0_i32_0 = arith.constant 0 : i32
    return %arg0, %c0_i32, %0 : i32, i32, i32
  }
  func.func @transform_2(%arg0: i32, %arg1: i32) -> (i32, i32) {
    %c0_i32 = arith.constant 0 : i32
    %c0_i32_0 = arith.constant 0 : i32
    %c0_i32_1 = arith.constant 0 : i32
    return %c0_i32, %c0_i32_0 : i32, i32
  }
  func.func @transform_3(%arg0: i32, %arg1: i32) -> (i32, i32) {
    %c0_i32 = arith.constant 0 : i32
    %c0_i32_0 = arith.constant 0 : i32
    %c0_i32_1 = arith.constant 0 : i32
    return %c0_i32, %c0_i32_0 : i32, i32
  }
  func.func @transform_4(%arg0: i32, %arg1: i32) -> (i32, i32) {
    %c0_i32 = arith.constant 0 : i32
    %c0_i32_0 = arith.constant 0 : i32
    %c0_i32_1 = arith.constant 0 : i32
    return %c0_i32, %c0_i32_0 : i32, i32
  }
  func.func @transform_5(%arg0: i32, %arg1: i32) -> (i32, i32, i32) {
    %c0_i32 = arith.constant 0 : i32
    %c0_i32_0 = arith.constant 0 : i32
    return %arg0, %c0_i32, %arg1 : i32, i32, i32
  }
}

module attributes {stable_mosaic.version = 11 : i64} {
  func.func @_conv_tapfold_kernel(%arg0: i32, %arg1: i32, %arg2: memref<1x16x512xbf16, #tpu.memory_space<vmem>>, %arg3: memref<1x16x512xbf16, #tpu.memory_space<vmem>>, %arg4: memref<16x144xbf16, #tpu.memory_space<vmem>>, %arg5: memref<16x1xf32, #tpu.memory_space<vmem>>, %arg6: memref<16x1xf32, #tpu.memory_space<vmem>>, %arg7: memref<1x16x512xbf16, #tpu.memory_space<vmem>>) attributes {dimension_semantics = [#tpu.dimension_semantics<parallel>, #tpu.dimension_semantics<parallel>], iteration_bounds = array<i64: 2, 1>, scalar_prefetch = 0 : i64, scratch_operands = 0 : i64, tpu.core_type = #tpu.core_type<tc>, window_params = [{transform_indices = @transform_0, window_bounds = array<i64: 1, 16, 512>}, {transform_indices = @transform_1, window_bounds = array<i64: 1, 16, 512>}, {pipeline_mode = #tpu.pipeline_mode<synchronous>, transform_indices = @transform_2, window_bounds = array<i64: 16, 144>}, {pipeline_mode = #tpu.pipeline_mode<synchronous>, transform_indices = @transform_3, window_bounds = array<i64: 16, 1>}, {pipeline_mode = #tpu.pipeline_mode<synchronous>, transform_indices = @transform_4, window_bounds = array<i64: 16, 1>}, {transform_indices = @transform_5, window_bounds = array<i64: 1, 16, 512>}]} {
    %c0 = arith.constant 0 : index
    %c0_0 = arith.constant 0 : index
    %c0_1 = arith.constant 0 : index
    %0 = vector.load %arg2[%c0, %c0_0, %c0_1] : memref<1x16x512xbf16, #tpu.memory_space<vmem>>, vector<1x16x512xbf16>
    %1 = vector.shape_cast %0 : vector<1x16x512xbf16> to vector<16x512xbf16>
    %c0_2 = arith.constant 0 : index
    %c0_3 = arith.constant 0 : index
    %c0_4 = arith.constant 0 : index
    %2 = vector.load %arg3[%c0_2, %c0_3, %c0_4] : memref<1x16x512xbf16, #tpu.memory_space<vmem>>, vector<1x16x512xbf16>
    %3 = vector.shape_cast %2 : vector<1x16x512xbf16> to vector<16x512xbf16>
    %4 = tpu.concatenate %1, %3 in 1 : vector<16x512xbf16>, vector<16x512xbf16> -> vector<16x1024xbf16>
    %5 = vector.extract_strided_slice %4 {offsets = [0, 0], sizes = [16, 512], strides = [1, 1]} : vector<16x1024xbf16> to vector<16x512xbf16>
    %6 = vector.extract_strided_slice %4 {offsets = [0, 1], sizes = [16, 512], strides = [1, 1]} : vector<16x1024xbf16> to vector<16x512xbf16>
    %7 = vector.extract_strided_slice %4 {offsets = [0, 2], sizes = [16, 512], strides = [1, 1]} : vector<16x1024xbf16> to vector<16x512xbf16>
    %8 = vector.extract_strided_slice %4 {offsets = [0, 14], sizes = [16, 512], strides = [1, 1]} : vector<16x1024xbf16> to vector<16x512xbf16>
    %9 = vector.extract_strided_slice %4 {offsets = [0, 15], sizes = [16, 512], strides = [1, 1]} : vector<16x1024xbf16> to vector<16x512xbf16>
    %10 = vector.extract_strided_slice %4 {offsets = [0, 16], sizes = [16, 512], strides = [1, 1]} : vector<16x1024xbf16> to vector<16x512xbf16>
    %11 = vector.extract_strided_slice %4 {offsets = [0, 28], sizes = [16, 512], strides = [1, 1]} : vector<16x1024xbf16> to vector<16x512xbf16>
    %12 = vector.extract_strided_slice %4 {offsets = [0, 29], sizes = [16, 512], strides = [1, 1]} : vector<16x1024xbf16> to vector<16x512xbf16>
    %13 = vector.extract_strided_slice %4 {offsets = [0, 30], sizes = [16, 512], strides = [1, 1]} : vector<16x1024xbf16> to vector<16x512xbf16>
    %14 = tpu.concatenate %5, %6, %7, %8, %9, %10, %11, %12, %13 in 0 : vector<16x512xbf16>, vector<16x512xbf16>, vector<16x512xbf16>, vector<16x512xbf16>, vector<16x512xbf16>, vector<16x512xbf16>, vector<16x512xbf16>, vector<16x512xbf16>, vector<16x512xbf16> -> vector<144x512xbf16>
    %c0_5 = arith.constant 0 : index
    %c0_6 = arith.constant 0 : index
    %15 = vector.load %arg4[%c0_5, %c0_6] : memref<16x144xbf16, #tpu.memory_space<vmem>>, vector<16x144xbf16>
    %cst = arith.constant dense<0.000000e+00> : vector<16x512xf32>
    %16 = tpu.matmul %15, %14, %cst {dimension_numbers = #tpu.dot_dimension_numbers<[1], [0], [0], [1], [0, 0, 1, 1], [], []>} : vector<16x144xbf16>, vector<144x512xbf16>, vector<16x512xf32> -> vector<16x512xf32>
    %c0_7 = arith.constant 0 : index
    %c0_8 = arith.constant 0 : index
    %17 = vector.load %arg5[%c0_7, %c0_8] : memref<16x1xf32, #tpu.memory_space<vmem>>, vector<16x1xf32>
    %18 = vector.broadcast %17 : vector<16x1xf32> to vector<16x512xf32>
    %19 = arith.mulf %16, %18 : vector<16x512xf32>
    %c0_9 = arith.constant 0 : index
    %c0_10 = arith.constant 0 : index
    %20 = vector.load %arg6[%c0_9, %c0_10] : memref<16x1xf32, #tpu.memory_space<vmem>>, vector<16x1xf32>
    %21 = vector.broadcast %20 : vector<16x1xf32> to vector<16x512xf32>
    %22 = arith.addf %19, %21 : vector<16x512xf32>
    %23 = arith.truncf %22 : vector<16x512xf32> to vector<16x512xbf16>
    %c0_11 = arith.constant 0 : index
    %c0_12 = arith.constant 0 : index
    %c0_13 = arith.constant 0 : index
    %24 = vector.load %arg7[%c0_11, %c0_12, %c0_13] : memref<1x16x512xbf16, #tpu.memory_space<vmem>>, vector<1x16x512xbf16>
    %25 = vector.shape_cast %24 : vector<1x16x512xbf16> to vector<16x512xbf16>
    %26 = vector.shape_cast %23 : vector<16x512xbf16> to vector<1x16x512xbf16>
    tpu.vector_store %arg7[%c0_11, %c0_12, %c0_13], %26 {strides = array<i32>} : memref<1x16x512xbf16, #tpu.memory_space<vmem>>, vector<1x16x512xbf16>,
    return
  }
  func.func @transform_0(%arg0: i32, %arg1: i32) -> (i32, i32, i32) {
    %c0_i32 = arith.constant 0 : i32
    %c0_i32_0 = arith.constant 0 : i32
    return %arg0, %c0_i32, %arg1 : i32, i32, i32
  }
  func.func @transform_1(%arg0: i32, %arg1: i32) -> (i32, i32, i32) {
    %c1_i32 = arith.constant 1 : i32
    %0 = arith.addi %arg1, %c1_i32 : i32
    %c0_i32 = arith.constant 0 : i32
    %c0_i32_0 = arith.constant 0 : i32
    return %arg0, %c0_i32, %0 : i32, i32, i32
  }
  func.func @transform_2(%arg0: i32, %arg1: i32) -> (i32, i32) {
    %c0_i32 = arith.constant 0 : i32
    %c0_i32_0 = arith.constant 0 : i32
    %c0_i32_1 = arith.constant 0 : i32
    return %c0_i32, %c0_i32_0 : i32, i32
  }
  func.func @transform_3(%arg0: i32, %arg1: i32) -> (i32, i32) {
    %c0_i32 = arith.constant 0 : i32
    %c0_i32_0 = arith.constant 0 : i32
    %c0_i32_1 = arith.constant 0 : i32
    return %c0_i32, %c0_i32_0 : i32, i32
  }
  func.func @transform_4(%arg0: i32, %arg1: i32) -> (i32, i32) {
    %c0_i32 = arith.constant 0 : i32
    %c0_i32_0 = arith.constant 0 : i32
    %c0_i32_1 = arith.constant 0 : i32
    return %c0_i32, %c0_i32_0 : i32, i32
  }
  func.func @transform_5(%arg0: i32, %arg1: i32) -> (i32, i32, i32) {
    %c0_i32 = arith.constant 0 : i32
    %c0_i32_0 = arith.constant 0 : i32
    return %arg0, %c0_i32, %arg1 : i32, i32, i32
  }
}

module attributes {stable_mosaic.version = 11 : i64} {
  func.func @_conv_tapfold_kernel(%arg0: i32, %arg1: i32, %arg2: memref<1x16x512xbf16, #tpu.memory_space<vmem>>, %arg3: memref<1x16x512xbf16, #tpu.memory_space<vmem>>, %arg4: memref<32x144xbf16, #tpu.memory_space<vmem>>, %arg5: memref<32x1xf32, #tpu.memory_space<vmem>>, %arg6: memref<32x1xf32, #tpu.memory_space<vmem>>, %arg7: memref<1x32x512xf32, #tpu.memory_space<vmem>>) attributes {dimension_semantics = [#tpu.dimension_semantics<parallel>, #tpu.dimension_semantics<parallel>], iteration_bounds = array<i64: 2, 1>, scalar_prefetch = 0 : i64, scratch_operands = 0 : i64, tpu.core_type = #tpu.core_type<tc>, window_params = [{transform_indices = @transform_0, window_bounds = array<i64: 1, 16, 512>}, {transform_indices = @transform_1, window_bounds = array<i64: 1, 16, 512>}, {pipeline_mode = #tpu.pipeline_mode<synchronous>, transform_indices = @transform_2, window_bounds = array<i64: 32, 144>}, {pipeline_mode = #tpu.pipeline_mode<synchronous>, transform_indices = @transform_3, window_bounds = array<i64: 32, 1>}, {pipeline_mode = #tpu.pipeline_mode<synchronous>, transform_indices = @transform_4, window_bounds = array<i64: 32, 1>}, {transform_indices = @transform_5, window_bounds = array<i64: 1, 32, 512>}]} {
    %c0 = arith.constant 0 : index
    %c0_0 = arith.constant 0 : index
    %c0_1 = arith.constant 0 : index
    %0 = vector.load %arg2[%c0, %c0_0, %c0_1] : memref<1x16x512xbf16, #tpu.memory_space<vmem>>, vector<1x16x512xbf16>
    %1 = vector.shape_cast %0 : vector<1x16x512xbf16> to vector<16x512xbf16>
    %c0_2 = arith.constant 0 : index
    %c0_3 = arith.constant 0 : index
    %c0_4 = arith.constant 0 : index
    %2 = vector.load %arg3[%c0_2, %c0_3, %c0_4] : memref<1x16x512xbf16, #tpu.memory_space<vmem>>, vector<1x16x512xbf16>
    %3 = vector.shape_cast %2 : vector<1x16x512xbf16> to vector<16x512xbf16>
    %4 = tpu.concatenate %1, %3 in 1 : vector<16x512xbf16>, vector<16x512xbf16> -> vector<16x1024xbf16>
    %5 = vector.extract_strided_slice %4 {offsets = [0, 0], sizes = [16, 512], strides = [1, 1]} : vector<16x1024xbf16> to vector<16x512xbf16>
    %6 = vector.extract_strided_slice %4 {offsets = [0, 1], sizes = [16, 512], strides = [1, 1]} : vector<16x1024xbf16> to vector<16x512xbf16>
    %7 = vector.extract_strided_slice %4 {offsets = [0, 2], sizes = [16, 512], strides = [1, 1]} : vector<16x1024xbf16> to vector<16x512xbf16>
    %8 = vector.extract_strided_slice %4 {offsets = [0, 14], sizes = [16, 512], strides = [1, 1]} : vector<16x1024xbf16> to vector<16x512xbf16>
    %9 = vector.extract_strided_slice %4 {offsets = [0, 15], sizes = [16, 512], strides = [1, 1]} : vector<16x1024xbf16> to vector<16x512xbf16>
    %10 = vector.extract_strided_slice %4 {offsets = [0, 16], sizes = [16, 512], strides = [1, 1]} : vector<16x1024xbf16> to vector<16x512xbf16>
    %11 = vector.extract_strided_slice %4 {offsets = [0, 28], sizes = [16, 512], strides = [1, 1]} : vector<16x1024xbf16> to vector<16x512xbf16>
    %12 = vector.extract_strided_slice %4 {offsets = [0, 29], sizes = [16, 512], strides = [1, 1]} : vector<16x1024xbf16> to vector<16x512xbf16>
    %13 = vector.extract_strided_slice %4 {offsets = [0, 30], sizes = [16, 512], strides = [1, 1]} : vector<16x1024xbf16> to vector<16x512xbf16>
    %14 = tpu.concatenate %5, %6, %7, %8, %9, %10, %11, %12, %13 in 0 : vector<16x512xbf16>, vector<16x512xbf16>, vector<16x512xbf16>, vector<16x512xbf16>, vector<16x512xbf16>, vector<16x512xbf16>, vector<16x512xbf16>, vector<16x512xbf16>, vector<16x512xbf16> -> vector<144x512xbf16>
    %c0_5 = arith.constant 0 : index
    %c0_6 = arith.constant 0 : index
    %15 = vector.load %arg4[%c0_5, %c0_6] : memref<32x144xbf16, #tpu.memory_space<vmem>>, vector<32x144xbf16>
    %cst = arith.constant dense<0.000000e+00> : vector<32x512xf32>
    %16 = tpu.matmul %15, %14, %cst {dimension_numbers = #tpu.dot_dimension_numbers<[1], [0], [0], [1], [0, 0, 1, 1], [], []>} : vector<32x144xbf16>, vector<144x512xbf16>, vector<32x512xf32> -> vector<32x512xf32>
    %c0_7 = arith.constant 0 : index
    %c0_8 = arith.constant 0 : index
    %17 = vector.load %arg5[%c0_7, %c0_8] : memref<32x1xf32, #tpu.memory_space<vmem>>, vector<32x1xf32>
    %18 = vector.broadcast %17 : vector<32x1xf32> to vector<32x512xf32>
    %19 = arith.mulf %16, %18 : vector<32x512xf32>
    %c0_9 = arith.constant 0 : index
    %c0_10 = arith.constant 0 : index
    %20 = vector.load %arg6[%c0_9, %c0_10] : memref<32x1xf32, #tpu.memory_space<vmem>>, vector<32x1xf32>
    %21 = vector.broadcast %20 : vector<32x1xf32> to vector<32x512xf32>
    %22 = arith.addf %19, %21 : vector<32x512xf32>
    %c0_11 = arith.constant 0 : index
    %c0_12 = arith.constant 0 : index
    %c0_13 = arith.constant 0 : index
    %23 = vector.load %arg7[%c0_11, %c0_12, %c0_13] : memref<1x32x512xf32, #tpu.memory_space<vmem>>, vector<1x32x512xf32>
    %24 = vector.shape_cast %23 : vector<1x32x512xf32> to vector<32x512xf32>
    %25 = vector.shape_cast %22 : vector<32x512xf32> to vector<1x32x512xf32>
    tpu.vector_store %arg7[%c0_11, %c0_12, %c0_13], %25 {strides = array<i32>} : memref<1x32x512xf32, #tpu.memory_space<vmem>>, vector<1x32x512xf32>,
    return
  }
  func.func @transform_0(%arg0: i32, %arg1: i32) -> (i32, i32, i32) {
    %c0_i32 = arith.constant 0 : i32
    %c0_i32_0 = arith.constant 0 : i32
    return %arg0, %c0_i32, %arg1 : i32, i32, i32
  }
  func.func @transform_1(%arg0: i32, %arg1: i32) -> (i32, i32, i32) {
    %c1_i32 = arith.constant 1 : i32
    %0 = arith.addi %arg1, %c1_i32 : i32
    %c0_i32 = arith.constant 0 : i32
    %c0_i32_0 = arith.constant 0 : i32
    return %arg0, %c0_i32, %0 : i32, i32, i32
  }
  func.func @transform_2(%arg0: i32, %arg1: i32) -> (i32, i32) {
    %c0_i32 = arith.constant 0 : i32
    %c0_i32_0 = arith.constant 0 : i32
    %c0_i32_1 = arith.constant 0 : i32
    return %c0_i32, %c0_i32_0 : i32, i32
  }
  func.func @transform_3(%arg0: i32, %arg1: i32) -> (i32, i32) {
    %c0_i32 = arith.constant 0 : i32
    %c0_i32_0 = arith.constant 0 : i32
    %c0_i32_1 = arith.constant 0 : i32
    return %c0_i32, %c0_i32_0 : i32, i32
  }
  func.func @transform_4(%arg0: i32, %arg1: i32) -> (i32, i32) {
    %c0_i32 = arith.constant 0 : i32
    %c0_i32_0 = arith.constant 0 : i32
    %c0_i32_1 = arith.constant 0 : i32
    return %c0_i32, %c0_i32_0 : i32, i32
  }
  func.func @transform_5(%arg0: i32, %arg1: i32) -> (i32, i32, i32) {
    %c0_i32 = arith.constant 0 : i32
    %c0_i32_0 = arith.constant 0 : i32
    return %arg0, %c0_i32, %arg1 : i32, i32, i32
  }
}

</mosaic_0001>

<llo_original>
// kernel: siamrpn_forward.8
$region0: #{siamrpn_forward.8}
  #allocation0 [shape = 'u32[]', space=smem, size = 0x4, offset = 0x4, fixed_abs, tag = 'smem constant byte address 0x4 - core index']
  #allocation1 [shape = 'u32[144,128]{1,0:T(1,128)}', space=vmem, size = 0x12000, scoped, tag = 'internal scratch']
  %s0 = inlined_call_operand.vmem [shape: bf16[2,16,5632], index: 0, kind: input, shape index: {}, may-alias: {0,1}]
  %s1 = inlined_call_operand.vmem [shape: bf16[2,16,5632], index: 1, kind: input, shape index: {}, may-alias: {0,1}]
  %s2 = inlined_call_operand.vmem [shape: bf16[8,576], index: 2, kind: input, shape index: {}]
  %s3 = inlined_call_operand.vmem [shape: f32[8,1], index: 3, kind: input, shape index: {}]
  %s4 = inlined_call_operand.vmem [shape: f32[8,1], index: 4, kind: input, shape index: {}]
  %s5 = inlined_call_operand.vmem [shape: f32[2,8,5120], index: 5, kind: output, shape index: {}]
  %s6 = sld [smem:[#allocation0]]
  $region99: #{siamrpn_forward.8} parent=0
    _
  %s8 = ssub.s32 1, %s6
  %s9 = scalar_select 0, %s8, %s6
  $region1: #{siamrpn_forward.8} parent=0
    #allocation2 [shape = 'u8[32768]{0}', space=vmem, size = 0x8000, scoped, tag = 'input window, operand 0']
    #allocation3 [shape = 'u8[32768]{0}', space=vmem, size = 0x8000, scoped, tag = 'input window, operand 1']
    loop: start=0, step=1, limit=22
    $region2: #{siamrpn_forward.8} parent=1 // loop_pre_header
      _
    $region3: #{siamrpn_forward.8} parent=1 // loop_header
      %s11 = sphi 0, %s15
      %p12 = scmp.ge.s32.totalorder %s11, 22
      %s18 = sphi 0, %s30
      %s19 = sphi 0, %s26
      %s20 = sphi 0, %s18
      %s21 = sphi 0, %s19
      %s22 = sphi 0, %s20
      %s23 = sphi 0, %s21
      %s35 = sphi 0, %s37
      %s38 = sphi 0, %s35
      %s39 = sphi 0, %s38
      %s55 = sphi 0, %s39
      %s65 = sphi 0, %s67
      %s68 = sphi 0, %s65
      %s69 = sphi 0, %s68
      %s85 = sphi 0, %s69
      %s89 = sphi 0, %s89
      %s91 = sphi 0, %s89
      %s92 = sphi 0, %s91
      %s106 = sphi 0, %s92
      %s110 = sphi 0, %s110
      %s112 = sphi 0, %s110
      %s113 = sphi 0, %s112
      %s127 = sphi 0, %s113
      %s131 = sphi 0, %s131
      %s133 = sphi 0, %s131
      %s134 = sphi 0, %s133
      %s148 = sphi 0, %s134
      %s156 = sphi 0, %s158
      %s159 = sphi 0, %s156
      %s160 = sphi 0, %s159
      %s176 = sphi 0, %s160
    $region4: #{siamrpn_forward.8} parent=1 // loop_header_branch
      %14 = sbr.rel (%p12) target = $region8
    $region5: #{siamrpn_forward.8} parent=1 // loop_body
      %s16 = ssub.s32 %s11, 1
      %s17 = ssub.s32 %s11, 2
      %s24 = sadd.s32 1, %s19
      %p25 = scmp.ge.s32.totalorder %s24, 10
      %s26 = scalar_select %p25, 0, %s24
      %s27 = sadd.s32 1, %s18
      %s28 = scalar_select %p25, %s27, %s18
      %p29 = scmp.ge.s32.totalorder %s28, 2
      %s30 = scalar_select %p29, 0, %s28
      %s31 = ssub.s32 %s18, %s30
      %s32 = ssub.s32 %s19, %s26
      %s33 = sor.u32 %s31, %s32
      %p34 = scmp.eq.s32.totalorder %s33, 0
      %s36 = sadd.s32 %s35, 1
      %s37 = scalar_select %p34, %s35, %s36
      %p40 = pneg %p34
      %p41 = scmp.eq.s32.totalorder %s11, 19
      %p42 = por %p40, %p41
      %p43 = scmp.ne.s32.totalorder %s35, %s38
      %p44 = scmp.eq.s32.totalorder %s11, 0
      %p45 = por %p43, %p44
      %p46 = scmp.ne.s32.totalorder %s35, %s38
      %p47 = scmp.eq.s32.totalorder %s16, 19
      %p48 = por %p46, %p47
      %p49 = scmp.ne.s32.totalorder %s38, %s39
      %p50 = scmp.eq.s32.totalorder %s16, 0
      %p51 = por %p49, %p50
      %p52 = scmp.ne.s32.totalorder %s38, %s39
      %p53 = scmp.eq.s32.totalorder %s17, 19
      %p54 = por %p52, %p53
      %p56 = scmp.ne.s32.totalorder %s39, %s55
      %p57 = scmp.eq.s32.totalorder %s17, 0
      %p58 = por %p56, %p57
      %s59 = sadd.s32 %s19, 1
      %s60 = sadd.s32 %s26, 1
      %s61 = ssub.s32 %s18, %s30
      %s62 = ssub.s32 %s59, %s60
      %s63 = sor.u32 %s61, %s62
      %p64 = scmp.eq.s32.totalorder %s63, 0
      %s66 = sadd.s32 %s65, 1
      %s67 = scalar_select %p64, %s65, %s66
      %p70 = pneg %p64
      %p71 = scmp.eq.s32.totalorder %s11, 19
      %p72 = por %p70, %p71
      %p73 = scmp.ne.s32.totalorder %s65, %s68
      %p74 = scmp.eq.s32.totalorder %s11, 0
      %p75 = por %p73, %p74
      %p76 = scmp.ne.s32.totalorder %s65, %s68
      %p77 = scmp.eq.s32.totalorder %s16, 19
      %p78 = por %p76, %p77
      %p79 = scmp.ne.s32.totalorder %s68, %s69
      %p80 = scmp.eq.s32.totalorder %s16, 0
      %p81 = por %p79, %p80
      %p82 = scmp.ne.s32.totalorder %s68, %s69
      %p83 = scmp.eq.s32.totalorder %s17, 19
      %p84 = por %p82, %p83
      %p86 = scmp.ne.s32.totalorder %s69, %s85
      %p87 = scmp.eq.s32.totalorder %s17, 0
      %p88 = por %p86, %p87
      %s90 = sadd.s32 %s89, 1
      %p93 = scmp.eq.s32.totalorder %s11, 19
      %p94 = scmp.ne.s32.totalorder %s89, %s91
      %p95 = scmp.eq.s32.totalorder %s11, 0
      %p96 = por %p94, %p95
      %p97 = scmp.ne.s32.totalorder %s89, %s91
      %p98 = scmp.eq.s32.totalorder %s16, 19
      %p99 = por %p97, %p98
      %p100 = scmp.ne.s32.totalorder %s91, %s92
      %p101 = scmp.eq.s32.totalorder %s16, 0
      %p102 = por %p100, %p101
      %p103 = scmp.ne.s32.totalorder %s91, %s92
      %p104 = scmp.eq.s32.totalorder %s17, 19
      %p105 = por %p103, %p104
      %p107 = scmp.ne.s32.totalorder %s92, %s106
      %p108 = scmp.eq.s32.totalorder %s17, 0
      %p109 = por %p107, %p108
      %s111 = sadd.s32 %s110, 1
      %p114 = scmp.eq.s32.totalorder %s11, 19
      %p115 = scmp.ne.s32.totalorder %s110, %s112
      %p116 = scmp.eq.s32.totalorder %s11, 0
      %p117 = por %p115, %p116
      %p118 = scmp.ne.s32.totalorder %s110, %s112
      %p119 = scmp.eq.s32.totalorder %s16, 19
      %p120 = por %p118, %p119
      %p121 = scmp.ne.s32.totalorder %s112, %s113
      %p122 = scmp.eq.s32.totalorder %s16, 0
      %p123 = por %p121, %p122
      %p124 = scmp.ne.s32.totalorder %s112, %s113
      %p125 = scmp.eq.s32.totalorder %s17, 19
      %p126 = por %p124, %p125
      %p128 = scmp.ne.s32.totalorder %s113, %s127
      %p129 = scmp.eq.s32.totalorder %s17, 0
      %p130 = por %p128, %p129
      %s132 = sadd.s32 %s131, 1
      %p135 = scmp.eq.s32.totalorder %s11, 19
      %p136 = scmp.ne.s32.totalorder %s131, %s133
      %p137 = scmp.eq.s32.totalorder %s11, 0
      %p138 = por %p136, %p137
      %p139 = scmp.ne.s32.totalorder %s131, %s133
      %p140 = scmp.eq.s32.totalorder %s16, 19
      %p141 = por %p139, %p140
      %p142 = scmp.ne.s32.totalorder %s133, %s134
      %p143 = scmp.eq.s32.totalorder %s16, 0
      %p144 = por %p142, %p143
      %p145 = scmp.ne.s32.totalorder %s133, %s134
      %p146 = scmp.eq.s32.totalorder %s17, 19
      %p147 = por %p145, %p146
      %p149 = scmp.ne.s32.totalorder %s134, %s148
      %p150 = scmp.eq.s32.totalorder %s17, 0
      %p151 = por %p149, %p150
      %s152 = ssub.s32 %s18, %s30
      %s153 = ssub.s32 %s19, %s26
      %s154 = sor.u32 %s152, %s153
      %p155 = scmp.eq.s32.totalorder %s154, 0
      %s157 = sadd.s32 %s156, 1
      %s158 = scalar_select %p155, %s156, %s157
      %p161 = pneg %p155
      %p162 = scmp.eq.s32.totalorder %s11, 19
      %p163 = por %p161, %p162
      %p164 = scmp.ne.s32.totalorder %s156, %s159
      %p165 = scmp.eq.s32.totalorder %s11, 0
      %p166 = por %p164, %p165
      %p167 = scmp.ne.s32.totalorder %s156, %s159
      %p168 = scmp.eq.s32.totalorder %s16, 19
      %p169 = por %p167, %p168
      %p170 = scmp.ne.s32.totalorder %s159, %s160
      %p171 = scmp.eq.s32.totalorder %s16, 0
      %p172 = por %p170, %p171
      %p173 = scmp.ne.s32.totalorder %s159, %s160
      %p174 = scmp.eq.s32.totalorder %s17, 19
      %p175 = por %p173, %p174
      %p177 = scmp.ne.s32.totalorder %s160, %s176
      %p178 = scmp.eq.s32.totalorder %s17, 0
      %p179 = por %p177, %p178
      %p180 = scmp.le.s32.totalorder 1, %s11
      %p181 = scmp.lt.s32.totalorder %s11, 21
      %p182 = pnand %p180, %p181
      %p183 = pneg %p182
      // Predicated region
      $region9: #{siamrpn_forward.8} parent=5 // pred_check
        _
      $region10: #{siamrpn_forward.8} parent=5 // pred_check_branch
        %185 = sbr.rel (%p182) target = $region12
      $region11: #{siamrpn_forward.8} parent=5 // pred_region
        %s186 = ssub.s32 %s11, 1
        // Predicated region
        $region13: #{siamrpn_forward.8} parent=11 // pred_check
          %p187 = pneg %p102
        $region14: #{siamrpn_forward.8} parent=11 // pred_check_branch
          %189 = sbr.rel (%p187) target = $region16
        $region15: #{siamrpn_forward.8} parent=11 // pred_region
          _
        $region16: #{siamrpn_forward.8} parent=11 // pred_fallthru
          _
        // Predicated region
        $region17: #{siamrpn_forward.8} parent=11 // pred_check
          %p190 = pneg %p123
        $region18: #{siamrpn_forward.8} parent=11 // pred_check_branch
          %192 = sbr.rel (%p190) target = $region20
        $region19: #{siamrpn_forward.8} parent=11 // pred_region
          _
        $region20: #{siamrpn_forward.8} parent=11 // pred_fallthru
          _
        // Predicated region
        $region21: #{siamrpn_forward.8} parent=11 // pred_check
          %p193 = pneg %p144
        $region22: #{siamrpn_forward.8} parent=11 // pred_check_branch
          %195 = sbr.rel (%p193) target = $region24
        $region23: #{siamrpn_forward.8} parent=11 // pred_region
          _
        $region24: #{siamrpn_forward.8} parent=11 // pred_fallthru
          _
      $region12: #{siamrpn_forward.8} parent=5 // pred_fallthru
        _
      %p196 = scmp.lt.s32.totalorder %s11, 20
      // Predicated region
      $region25: #{siamrpn_forward.8} parent=5 // pred_check
        %p197 = pneg %p196
      $region26: #{siamrpn_forward.8} parent=5 // pred_check_branch
        %199 = sbr.rel (%p197) target = $region28
      $region27: #{siamrpn_forward.8} parent=5 // pred_region
        // Predicated region
        $region29: #{siamrpn_forward.8} parent=27 // pred_check
          %p200 = pneg %p45
        $region30: #{siamrpn_forward.8} parent=27 // pred_check_branch
          %202 = sbr.rel (%p200) target = $region32
        $region31: #{siamrpn_forward.8} parent=27 // pred_region
          %s203 = sand.u32 %s35, 1
          %s204 = sand.u32 %s35, 1
          %s205 = smul.addr %s204, 32
          %s206 = scalar_lea.vmem [#allocation2], %s205
          %s207 = smul.u32 4, %s19
          %s208 = smul.addr %s18, 88
          %s209 = sadd.s32 %s207, %s208
          %s210 = smul.addr %s209, 4
          %s211 = scalar_lea.vmem %s0, %s210
          // Predicated region
          $region33: #{siamrpn_forward.8} parent=31 // pred_check
            _
          $region34: #{siamrpn_forward.8} parent=31 // pred_check_branch
            %213 = sbr.rel (0) target = $region36
          $region35: #{siamrpn_forward.8} parent=31 // pred_region
            // Predicated region
            $region37: #{siamrpn_forward.8} parent=35 // pred_check
              _
            $region38: #{siamrpn_forward.8} parent=35 // pred_check_branch
              %215 = sbr.rel (0) target = $region40
            $region39: #{siamrpn_forward.8} parent=35 // pred_region
              loop: start=0, step=1, limit=1
              $region41: #{siamrpn_forward.8} parent=39 // loop_pre_header
                _
              $region42: #{siamrpn_forward.8} parent=39 // loop_header
                %s217 = sphi 0, %s221
                %p218 = scmp.ge.s32.totalorder %s217, 1
                %s222 = sphi %s211, %s211
                %s223 = sphi %s206, %s206
              $region43: #{siamrpn_forward.8} parent=39 // loop_header_branch
                %220 = sbr.rel (%p218) target = $region47
              $region44: #{siamrpn_forward.8} parent=39 // loop_body
                %v224 = vld [vmem:[%s222] sm:$0xff]
                %225 = vst [vmem:[%s223] sm:$0xff] %v224
                %v226 = vld [vmem:[%s222 + $0x8] sm:$0xff]
                %227 = vst [vmem:[%s223 + $0x8] sm:$0xff] %v226
                %v228 = vld [vmem:[%s222 + $0xb0] sm:$0xff]
                %229 = vst [vmem:[%s223 + $0x10] sm:$0xff] %v228
                %v230 = vld [vmem:[%s222 + $0xb8] sm:$0xff]
                %231 = vst [vmem:[%s223 + $0x18] sm:$0xff] %v230
              $region45: #{siamrpn_forward.8} parent=39 // loop_footer
                %s221 = sadd.s32 1, %s217
              $region46: #{siamrpn_forward.8} parent=39 // loop_footer_branch
                %216 = sbr.rel target = $region42
              $region47: #{siamrpn_forward.8} parent=39 // loop_exit
                _
            $region40: #{siamrpn_forward.8} parent=35 // pred_fallthru
              _
            // Predicated region
            $region48: #{siamrpn_forward.8} parent=35 // pred_check
              _
            $region49: #{siamrpn_forward.8} parent=35 // pred_check_branch
              %233 = sbr.rel target = $region51
            $region50: #{siamrpn_forward.8} parent=35 // pred_region
              _
            $region51: #{siamrpn_forward.8} parent=35 // pred_fallthru
              _
          $region36: #{siamrpn_forward.8} parent=31 // pred_fallthru
            _
          %234 = vnop
        $region32: #{siamrpn_forward.8} parent=27 // pred_fallthru
          _
        // Predicated region
        $region52: #{siamrpn_forward.8} parent=27 // pred_check
          %p235 = pneg %p75
        $region53: #{siamrpn_forward.8} parent=27 // pred_check_branch
          %237 = sbr.rel (%p235) target = $region55
        $region54: #{siamrpn_forward.8} parent=27 // pred_region
          %s238 = sand.u32 %s65, 1
          %s239 = sand.u32 %s65, 1
          %s240 = smul.addr %s239, 32
          %s241 = scalar_lea.vmem [#allocation3], %s240
          %s242 = sadd.s32 %s19, 1
          %s243 = smul.u32 4, %s242
          %s244 = smul.addr %s18, 88
          %s245 = sadd.s32 %s243, %s244
          %s246 = smul.addr %s245, 4
          %s247 = scalar_lea.vmem %s1, %s246
          // Predicated region
          $region56: #{siamrpn_forward.8} parent=54 // pred_check
            _
          $region57: #{siamrpn_forward.8} parent=54 // pred_check_branch
            %249 = sbr.rel (0) target = $region59
          $region58: #{siamrpn_forward.8} parent=54 // pred_region
            // Predicated region
            $region60: #{siamrpn_forward.8} parent=58 // pred_check
              _
            $region61: #{siamrpn_forward.8} parent=58 // pred_check_branch
              %251 = sbr.rel (0) target = $region63
            $region62: #{siamrpn_forward.8} parent=58 // pred_region
              loop: start=0, step=1, limit=1
              $region64: #{siamrpn_forward.8} parent=62 // loop_pre_header
                _
              $region65: #{siamrpn_forward.8} parent=62 // loop_header
                %s253 = sphi 0, %s257
                %p254 = scmp.ge.s32.totalorder %s253, 1
                %s258 = sphi %s247, %s247
                %s259 = sphi %s241, %s241
              $region66: #{siamrpn_forward.8} parent=62 // loop_header_branch
                %256 = sbr.rel (%p254) target = $region70
              $region67: #{siamrpn_forward.8} parent=62 // loop_body
                %v260 = vld [vmem:[%s258] sm:$0xff]
                %261 = vst [vmem:[%s259] sm:$0xff] %v260
                %v262 = vld [vmem:[%s258 + $0x8] sm:$0xff]
                %263 = vst [vmem:[%s259 + $0x8] sm:$0xff] %v262
                %v264 = vld [vmem:[%s258 + $0xb0] sm:$0xff]
                %265 = vst [vmem:[%s259 + $0x10] sm:$0xff] %v264
                %v266 = vld [vmem:[%s258 + $0xb8] sm:$0xff]
                %267 = vst [vmem:[%s259 + $0x18] sm:$0xff] %v266
              $region68: #{siamrpn_forward.8} parent=62 // loop_footer
                %s257 = sadd.s32 1, %s253
              $region69: #{siamrpn_forward.8} parent=62 // loop_footer_branch
                %252 = sbr.rel target = $region65
              $region70: #{siamrpn_forward.8} parent=62 // loop_exit
                _
            $region63: #{siamrpn_forward.8} parent=58 // pred_fallthru
              _
            // Predicated region
            $region71: #{siamrpn_forward.8} parent=58 // pred_check
              _
            $region72: #{siamrpn_forward.8} parent=58 // pred_check_branch
              %269 = sbr.rel target = $region74
            $region73: #{siamrpn_forward.8} parent=58 // pred_region
              _
            $region74: #{siamrpn_forward.8} parent=58 // pred_fallthru
              _
          $region59: #{siamrpn_forward.8} parent=54 // pred_fallthru
            _
          %270 = vnop
        $region55: #{siamrpn_forward.8} parent=27 // pred_fallthru
          _
      $region28: #{siamrpn_forward.8} parent=5 // pred_fallthru
        _
      %p271 = scmp.le.s32.totalorder 1, %s11
      %p272 = scmp.lt.s32.totalorder %s11, 21
      %p273 = pnand %p271, %p272
      %p274 = pneg %p273
      // Predicated region
      $region75: #{siamrpn_forward.8} parent=5 // pred_check
        _
      $region76: #{siamrpn_forward.8} parent=5 // pred_check_branch
        %276 = sbr.rel (%p273) target = $region78
      $region77: #{siamrpn_forward.8} parent=5 // pred_region
        %s277 = ssub.s32 %s11, 1
        %s278 = sand.u32 %s38, 1
        %s279 = sand.u32 %s38, 1
        %s280 = smul.addr %s279, 32
        %s281 = scalar_lea.vmem [#allocation2], %s280
        // Predicated region
        $region79: #{siamrpn_forward.8} parent=77 // pred_check
          %p282 = pneg %p51
        $region80: #{siamrpn_forward.8} parent=77 // pred_check_branch
          %284 = sbr.rel (%p282) target = $region82
        $region81: #{siamrpn_forward.8} parent=77 // pred_region
          _
        $region82: #{siamrpn_forward.8} parent=77 // pred_fallthru
          _
        %s285 = sand.u32 %s68, 1
        %s286 = sand.u32 %s68, 1
        %s287 = smul.addr %s286, 32
        %s288 = scalar_lea.vmem [#allocation3], %s287
        // Predicated region
        $region83: #{siamrpn_forward.8} parent=77 // pred_check
          %p289 = pneg %p81
        $region84: #{siamrpn_forward.8} parent=77 // pred_check_branch
          %291 = sbr.rel (%p289) target = $region86
        $region85: #{siamrpn_forward.8} parent=77 // pred_region
          _
        $region86: #{siamrpn_forward.8} parent=77 // pred_fallthru
          _
        %s292 = sand.u32 %s38, 1
        %s293 = sand.u32 %s38, 1
        %s294 = smul.addr %s293, 32
        %s295 = scalar_lea.vmem [#allocation2], %s294
        %p296 = pneg %p51
        %p297 = pneg %p48
        %s298 = sand.u32 %s68, 1
        %s299 = sand.u32 %s68, 1
        %s300 = smul.addr %s299, 32
        %s301 = scalar_lea.vmem [#allocation3], %s300
        %p302 = pneg %p81
        %p303 = pneg %p78
        %p304 = pneg %p102
        %p305 = pneg %p99
        %p306 = pneg %p123
        %p307 = pneg %p120
        %p308 = pneg %p144
        %p309 = pneg %p141
        %p310 = pneg %p172
        %p311 = pneg %p169
        %s312 = smul.u32 4, %s21
        %p313 = scmp.lt.s32.totalorder %s20, 1
        %s314 = scalar_select %p313, %s20, 1
        %p315 = scmp.lt.s32.totalorder %s312, 39
        %s316 = scalar_select %p315, %s312, 39
        %s317 = smul.addr %s314, 40
        %s318 = sadd.s32 %s316, %s317
        %s319 = smul.addr %s318, 8
        %s320 = scalar_lea.vmem %s5, %s319
        %s321 = smul.u32 4, %s21
        %s322 = sadd.s32 %s21, 1
        %s323 = smul.u32 4, %s322
        %s324 = smul.u32 4, %s21
        %p325 = scmp.lt.s32.totalorder %s20, 1
        %s326 = scalar_select %p325, %s20, 1
        %p327 = scmp.lt.s32.totalorder %s324, 39
        %s328 = scalar_select %p327, %s324, 39
        %s329 = smul.addr %s326, 40
        %s330 = sadd.s32 %s328, %s329
        %s331 = smul.addr %s330, 8
        %s332 = scalar_lea.vmem %s5, %s331
        %s333 = smul.u32 4, %s21
        %v335 = vld [vmem:[%s281] sm:$0xff]
        %v336 = vld [vmem:[%s281 + $0x8] sm:$0xff]
        %v337 = vld [vmem:[%s281 + $0x10] sm:$0xff]
        %v338 = vld [vmem:[%s281 + $0x18] sm:$0xff]
        %v339 = vld [vmem:[%s288] sm:$0xff]
        %v340 = vld [vmem:[%s288 + $0x8] sm:$0xff]
        %v341 = vld [vmem:[%s288 + $0x10] sm:$0xff]
        %v342 = vld [vmem:[%s288 + $0x18] sm:$0xff]
        %v347 = vunpack.c.l.b16 %v335
        %v348 = vunpack.c.h.b16 %v335
        %v349 = vunpack.c.l.b16 %v336
        %v350 = vunpack.c.h.b16 %v336
        %v351 = vunpack.c.l.b16 %v337
        %v352 = vunpack.c.h.b16 %v337
        %v353 = vunpack.c.l.b16 %v338
        %v354 = vunpack.c.h.b16 %v338
        %v355 = vpack.c.b16 %v351, %v347
        %v356 = vpack.c.b16 %v352, %v348
        %v357 = vpack.c.b16 %v353, %v349
        %v358 = vpack.c.b16 %v354, %v350
        %v367 = vunpack.c.l.b16 %v339
        %v368 = vunpack.c.h.b16 %v339
        %v369 = vunpack.c.l.b16 %v340
        %v370 = vunpack.c.l.b16 %v341
        %v371 = vunpack.c.h.b16 %v341
        %v372 = vunpack.c.l.b16 %v342
        %v373 = vpack.c.b16 %v370, %v367
        %v374 = vpack.c.b16 %v371, %v368
        %v375 = vpack.c.b16 %v372, %v369
        %376 = vrot.lane.b32.xlu0 %v355, 127
        %v377 = vpop.permute.xlu0 %376
        %378 = vrot.lane.b32.xlu0 %v356, 127
        %v379 = vpop.permute.xlu0 %378
        %380 = vrot.lane.b32.xlu0 %v357, 127
        %v381 = vpop.permute.xlu0 %380
        %382 = vrot.lane.b32.xlu0 %v358, 127
        %v383 = vpop.permute.xlu0 %382
        %384 = vrot.lane.b32.xlu0 %v373, 127
        %v385 = vpop.permute.xlu0 %384
        %vm386 = vcmask 1039360
        %v387 = vsel %vm386, %v377, %v379
        %v388 = vsel %vm386, %v379, %v381
        %v389 = vsel %vm386, %v381, %v383
        %v390 = vsel %vm386, %v383, %v385
        %395 = vrot.lane.b32.xlu0 %v355, 126
        %v396 = vpop.permute.xlu0 %395
        %397 = vrot.lane.b32.xlu0 %v356, 126
        %v398 = vpop.permute.xlu0 %397
        %399 = vrot.lane.b32.xlu0 %v357, 126
        %v400 = vpop.permute.xlu0 %399
        %401 = vrot.lane.b32.xlu0 %v358, 126
        %v402 = vpop.permute.xlu0 %401
        %403 = vrot.lane.b32.xlu0 %v373, 126
        %v404 = vpop.permute.xlu0 %403
        %vm405 = vcmask 1031168
        %v406 = vsel %vm405, %v396, %v398
        %v407 = vsel %vm405, %v398, %v400
        %v408 = vsel %vm405, %v400, %v402
        %v409 = vsel %vm405, %v402, %v404
        %414 = vrot.lane.b32.xlu0 %v355, 125
        %v415 = vpop.permute.xlu0 %414
        %416 = vrot.lane.b32.xlu0 %v356, 125
        %v417 = vpop.permute.xlu0 %416
        %418 = vrot.lane.b32.xlu0 %v357, 125
        %v419 = vpop.permute.xlu0 %418
        %420 = vrot.lane.b32.xlu0 %v358, 125
        %v421 = vpop.permute.xlu0 %420
        %422 = vrot.lane.b32.xlu0 %v373, 125
        %v423 = vpop.permute.xlu0 %422
        %vm424 = vcmask 1022976
        %v425 = vsel %vm424, %v415, %v417
        %v426 = vsel %vm424, %v417, %v419
        %v427 = vsel %vm424, %v419, %v421
        %v428 = vsel %vm424, %v421, %v423
        %433 = vrot.lane.b32.xlu0 %v355, 124
        %v434 = vpop.permute.xlu0 %433
        %435 = vrot.lane.b32.xlu0 %v356, 124
        %v436 = vpop.permute.xlu0 %435
        %437 = vrot.lane.b32.xlu0 %v357, 124
        %v438 = vpop.permute.xlu0 %437
        %439 = vrot.lane.b32.xlu0 %v358, 124
        %v440 = vpop.permute.xlu0 %439
        %441 = vrot.lane.b32.xlu0 %v373, 124
        %v442 = vpop.permute.xlu0 %441
        %vm443 = vcmask 1014784
        %v444 = vsel %vm443, %v434, %v436
        %v445 = vsel %vm443, %v436, %v438
        %v446 = vsel %vm443, %v438, %v440
        %v447 = vsel %vm443, %v440, %v442
        %452 = vrot.lane.b32.xlu0 %v355, 123
        %v453 = vpop.permute.xlu0 %452
        %454 = vrot.lane.b32.xlu0 %v356, 123
        %v455 = vpop.permute.xlu0 %454
        %456 = vrot.lane.b32.xlu0 %v357, 123
        %v457 = vpop.permute.xlu0 %456
        %458 = vrot.lane.b32.xlu0 %v358, 123
        %v459 = vpop.permute.xlu0 %458
        %460 = vrot.lane.b32.xlu0 %v373, 123
        %v461 = vpop.permute.xlu0 %460
        %vm462 = vcmask 1006592
        %v463 = vsel %vm462, %v453, %v455
        %v464 = vsel %vm462, %v455, %v457
        %v465 = vsel %vm462, %v457, %v459
        %v466 = vsel %vm462, %v459, %v461
        %471 = vrot.lane.b32.xlu0 %v355, 56
        %v472 = vpop.permute.xlu0 %471
        %473 = vrot.lane.b32.xlu0 %v356, 56
        %v474 = vpop.permute.xlu0 %473
        %475 = vrot.lane.b32.xlu0 %v357, 56
        %v476 = vpop.permute.xlu0 %475
        %477 = vrot.lane.b32.xlu0 %v358, 56
        %v478 = vpop.permute.xlu0 %477
        %479 = vrot.lane.b32.xlu0 %v373, 56
        %v480 = vpop.permute.xlu0 %479
        %vm481 = vcmask 457728
        %v482 = vsel %vm481, %v472, %v474
        %v483 = vsel %vm481, %v474, %v476
        %v484 = vsel %vm481, %v476, %v478
        %v485 = vsel %vm481, %v478, %v480
        %490 = vrot.lane.b32.xlu0 %v355, 55
        %v491 = vpop.permute.xlu0 %490
        %492 = vrot.lane.b32.xlu0 %v356, 55
        %v493 = vpop.permute.xlu0 %492
        %494 = vrot.lane.b32.xlu0 %v357, 55
        %v495 = vpop.permute.xlu0 %494
        %496 = vrot.lane.b32.xlu0 %v358, 55
        %v497 = vpop.permute.xlu0 %496
        %498 = vrot.lane.b32.xlu0 %v373, 55
        %v499 = vpop.permute.xlu0 %498
        %vm500 = vcmask 449536
        %v501 = vsel %vm500, %v491, %v493
        %v502 = vsel %vm500, %v493, %v495
        %v503 = vsel %vm500, %v495, %v497
        %v504 = vsel %vm500, %v497, %v499
        %509 = vrot.lane.b32.xlu0 %v355, 54
        %v510 = vpop.permute.xlu0 %509
        %511 = vrot.lane.b32.xlu0 %v356, 54
        %v512 = vpop.permute.xlu0 %511
        %513 = vrot.lane.b32.xlu0 %v357, 54
        %v514 = vpop.permute.xlu0 %513
        %515 = vrot.lane.b32.xlu0 %v358, 54
        %v516 = vpop.permute.xlu0 %515
        %517 = vrot.lane.b32.xlu0 %v373, 54
        %v518 = vpop.permute.xlu0 %517
        %vm519 = vcmask 441344
        %v520 = vsel %vm519, %v510, %v512
        %v521 = vsel %vm519, %v512, %v514
        %v522 = vsel %vm519, %v514, %v516
        %v523 = vsel %vm519, %v516, %v518
        %528 = vrot.lane.b32.xlu0 %v355, 53
        %v529 = vpop.permute.xlu0 %528
        %530 = vrot.lane.b32.xlu0 %v356, 53
        %v531 = vpop.permute.xlu0 %530
        %532 = vrot.lane.b32.xlu0 %v357, 53
        %v533 = vpop.permute.xlu0 %532
        %534 = vrot.lane.b32.xlu0 %v358, 53
        %v535 = vpop.permute.xlu0 %534
        %536 = vrot.lane.b32.xlu0 %v373, 53
        %v537 = vpop.permute.xlu0 %536
        %vm538 = vcmask 433152
        %v539 = vsel %vm538, %v529, %v531
        %v540 = vsel %vm538, %v531, %v533
        %v541 = vsel %vm538, %v533, %v535
        %v542 = vsel %vm538, %v535, %v537
        %547 = vrot.lane.b32.xlu0 %v355, 52
        %v548 = vpop.permute.xlu0 %547
        %549 = vrot.lane.b32.xlu0 %v356, 52
        %v550 = vpop.permute.xlu0 %549
        %551 = vrot.lane.b32.xlu0 %v357, 52
        %v552 = vpop.permute.xlu0 %551
        %553 = vrot.lane.b32.xlu0 %v358, 52
        %v554 = vpop.permute.xlu0 %553
        %555 = vrot.lane.b32.xlu0 %v373, 52
        %v556 = vpop.permute.xlu0 %555
        %vm557 = vcmask 424960
        %v558 = vsel %vm557, %v548, %v550
        %v559 = vsel %vm557, %v550, %v552
        %v560 = vsel %vm557, %v552, %v554
        %v561 = vsel %vm557, %v554, %v556
        %566 = vrot.lane.b32.xlu0 %v355, 51
        %v567 = vpop.permute.xlu0 %566
        %568 = vrot.lane.b32.xlu0 %v356, 51
        %v569 = vpop.permute.xlu0 %568
        %570 = vrot.lane.b32.xlu0 %v357, 51
        %v571 = vpop.permute.xlu0 %570
        %572 = vrot.lane.b32.xlu0 %v358, 51
        %v573 = vpop.permute.xlu0 %572
        %574 = vrot.lane.b32.xlu0 %v373, 51
        %v575 = vpop.permute.xlu0 %574
        %vm576 = vcmask 416768
        %v577 = vsel %vm576, %v567, %v569
        %v578 = vsel %vm576, %v569, %v571
        %v579 = vsel %vm576, %v571, %v573
        %v580 = vsel %vm576, %v573, %v575
        %585 = vrot.lane.b32.xlu0 %v356, 112
        %v586 = vpop.permute.xlu0 %585
        %587 = vrot.lane.b32.xlu0 %v357, 112
        %v588 = vpop.permute.xlu0 %587
        %589 = vrot.lane.b32.xlu0 %v358, 112
        %v590 = vpop.permute.xlu0 %589
        %591 = vrot.lane.b32.xlu0 %v373, 112
        %v592 = vpop.permute.xlu0 %591
        %593 = vrot.lane.b32.xlu0 %v374, 112
        %v594 = vpop.permute.xlu0 %593
        %vm595 = vcmask 916480
        %v596 = vsel %vm595, %v586, %v588
        %v597 = vsel %vm595, %v588, %v590
        %v598 = vsel %vm595, %v590, %v592
        %v599 = vsel %vm595, %v592, %v594
        %604 = vrot.lane.b32.xlu0 %v356, 111
        %v605 = vpop.permute.xlu0 %604
        %606 = vrot.lane.b32.xlu0 %v357, 111
        %v607 = vpop.permute.xlu0 %606
        %608 = vrot.lane.b32.xlu0 %v358, 111
        %v609 = vpop.permute.xlu0 %608
        %610 = vrot.lane.b32.xlu0 %v373, 111
        %v611 = vpop.permute.xlu0 %610
        %612 = vrot.lane.b32.xlu0 %v374, 111
        %v613 = vpop.permute.xlu0 %612
        %vm614 = vcmask 908288
        %v615 = vsel %vm614, %v605, %v607
        %v616 = vsel %vm614, %v607, %v609
        %v617 = vsel %vm614, %v609, %v611
        %v618 = vsel %vm614, %v611, %v613
        %623 = vrot.lane.b32.xlu0 %v356, 110
        %v624 = vpop.permute.xlu0 %623
        %625 = vrot.lane.b32.xlu0 %v357, 110
        %v626 = vpop.permute.xlu0 %625
        %627 = vrot.lane.b32.xlu0 %v358, 110
        %v628 = vpop.permute.xlu0 %627
        %629 = vrot.lane.b32.xlu0 %v373, 110
        %v630 = vpop.permute.xlu0 %629
        %631 = vrot.lane.b32.xlu0 %v374, 110
        %v632 = vpop.permute.xlu0 %631
        %vm633 = vcmask 900096
        %v634 = vsel %vm633, %v624, %v626
        %v635 = vsel %vm633, %v626, %v628
        %v636 = vsel %vm633, %v628, %v630
        %v637 = vsel %vm633, %v630, %v632
        %642 = vrot.lane.b32.xlu0 %v356, 109
        %v643 = vpop.permute.xlu0 %642
        %644 = vrot.lane.b32.xlu0 %v357, 109
        %v645 = vpop.permute.xlu0 %644
        %646 = vrot.lane.b32.xlu0 %v358, 109
        %v647 = vpop.permute.xlu0 %646
        %648 = vrot.lane.b32.xlu0 %v373, 109
        %v649 = vpop.permute.xlu0 %648
        %650 = vrot.lane.b32.xlu0 %v374, 109
        %v651 = vpop.permute.xlu0 %650
        %vm652 = vcmask 891904
        %v653 = vsel %vm652, %v643, %v645
        %v654 = vsel %vm652, %v645, %v647
        %v655 = vsel %vm652, %v647, %v649
        %v656 = vsel %vm652, %v649, %v651
        %661 = vrot.lane.b32.xlu0 %v374, 127
        %v662 = vpop.permute.xlu0 %661
        %v663 = vsel %vm386, %v385, %v662
        %664 = vrot.lane.b32.xlu0 %v356, 60
        %v665 = vpop.permute.xlu0 %664
        %666 = vrot.lane.b32.xlu0 %v357, 60
        %v667 = vpop.permute.xlu0 %666
        %668 = vrot.lane.b32.xlu0 %v358, 60
        %v669 = vpop.permute.xlu0 %668
        %670 = vrot.lane.b32.xlu0 %v373, 60
        %v671 = vpop.permute.xlu0 %670
        %672 = vrot.lane.b32.xlu0 %v374, 60
        %v673 = vpop.permute.xlu0 %672
        %vm674 = vcmask 490496
        %v675 = vsel %vm674, %v665, %v667
        %v676 = vsel %vm674, %v667, %v669
        %v677 = vsel %vm674, %v669, %v671
        %v678 = vsel %vm674, %v671, %v673
        %679 = vrot.lane.b32.xlu0 %v356, 59
        %v680 = vpop.permute.xlu0 %679
        %681 = vrot.lane.b32.xlu0 %v357, 59
        %v682 = vpop.permute.xlu0 %681
        %683 = vrot.lane.b32.xlu0 %v358, 59
        %v684 = vpop.permute.xlu0 %683
        %685 = vrot.lane.b32.xlu0 %v373, 59
        %v686 = vpop.permute.xlu0 %685
        %687 = vrot.lane.b32.xlu0 %v374, 59
        %v688 = vpop.permute.xlu0 %687
        %vm689 = vcmask 482304
        %v690 = vsel %vm689, %v680, %v682
        %v691 = vsel %vm689, %v682, %v684
        %v692 = vsel %vm689, %v684, %v686
        %v693 = vsel %vm689, %v686, %v688
        %694 = vrot.lane.b32.xlu0 %v356, 58
        %v695 = vpop.permute.xlu0 %694
        %696 = vrot.lane.b32.xlu0 %v357, 58
        %v697 = vpop.permute.xlu0 %696
        %698 = vrot.lane.b32.xlu0 %v358, 58
        %v699 = vpop.permute.xlu0 %698
        %700 = vrot.lane.b32.xlu0 %v373, 58
        %v701 = vpop.permute.xlu0 %700
        %702 = vrot.lane.b32.xlu0 %v374, 58
        %v703 = vpop.permute.xlu0 %702
        %vm704 = vcmask 474112
        %v705 = vsel %vm704, %v695, %v697
        %v706 = vsel %vm704, %v697, %v699
        %v707 = vsel %vm704, %v699, %v701
        %v708 = vsel %vm704, %v701, %v703
        %709 = vrot.lane.b32.xlu0 %v356, 57
        %v710 = vpop.permute.xlu0 %709
        %711 = vrot.lane.b32.xlu0 %v357, 57
        %v712 = vpop.permute.xlu0 %711
        %713 = vrot.lane.b32.xlu0 %v358, 57
        %v714 = vpop.permute.xlu0 %713
        %715 = vrot.lane.b32.xlu0 %v373, 57
        %v716 = vpop.permute.xlu0 %715
        %717 = vrot.lane.b32.xlu0 %v374, 57
        %v718 = vpop.permute.xlu0 %717
        %vm719 = vcmask 465920
        %v720 = vsel %vm719, %v710, %v712
        %v721 = vsel %vm719, %v712, %v714
        %v722 = vsel %vm719, %v714, %v716
        %v723 = vsel %vm719, %v716, %v718
        %724 = vrot.lane.b32.xlu0 %v374, 56
        %v725 = vpop.permute.xlu0 %724
        %v726 = vsel %vm481, %v480, %v725
        %727 = vrot.lane.b32.xlu0 %v374, 55
        %v728 = vpop.permute.xlu0 %727
        %v729 = vsel %vm500, %v499, %v728
        %730 = vrot.lane.b32.xlu0 %v357, 116
        %v731 = vpop.permute.xlu0 %730
        %732 = vrot.lane.b32.xlu0 %v358, 116
        %v733 = vpop.permute.xlu0 %732
        %734 = vrot.lane.b32.xlu0 %v373, 116
        %v735 = vpop.permute.xlu0 %734
        %736 = vrot.lane.b32.xlu0 %v374, 116
        %v737 = vpop.permute.xlu0 %736
        %738 = vrot.lane.b32.xlu0 %v375, 116
        %v739 = vpop.permute.xlu0 %738
        %vm740 = vcmask 949248
        %v741 = vsel %vm740, %v731, %v733
        %v742 = vsel %vm740, %v733, %v735
        %v743 = vsel %vm740, %v735, %v737
        %v744 = vsel %vm740, %v737, %v739
        %745 = vrot.lane.b32.xlu0 %v357, 115
        %v746 = vpop.permute.xlu0 %745
        %747 = vrot.lane.b32.xlu0 %v358, 115
        %v748 = vpop.permute.xlu0 %747
        %749 = vrot.lane.b32.xlu0 %v373, 115
        %v750 = vpop.permute.xlu0 %749
        %751 = vrot.lane.b32.xlu0 %v374, 115
        %v752 = vpop.permute.xlu0 %751
        %753 = vrot.lane.b32.xlu0 %v375, 115
        %v754 = vpop.permute.xlu0 %753
        %vm755 = vcmask 941056
        %v756 = vsel %vm755, %v746, %v748
        %v757 = vsel %vm755, %v748, %v750
        %v758 = vsel %vm755, %v750, %v752
        %v759 = vsel %vm755, %v752, %v754
        %760 = vrot.lane.b32.xlu0 %v357, 114
        %v761 = vpop.permute.xlu0 %760
        %762 = vrot.lane.b32.xlu0 %v358, 114
        %v763 = vpop.permute.xlu0 %762
        %764 = vrot.lane.b32.xlu0 %v373, 114
        %v765 = vpop.permute.xlu0 %764
        %766 = vrot.lane.b32.xlu0 %v374, 114
        %v767 = vpop.permute.xlu0 %766
        %768 = vrot.lane.b32.xlu0 %v375, 114
        %v769 = vpop.permute.xlu0 %768
        %vm770 = vcmask 932864
        %v771 = vsel %vm770, %v761, %v763
        %v772 = vsel %vm770, %v763, %v765
        %v773 = vsel %vm770, %v765, %v767
        %v774 = vsel %vm770, %v767, %v769
        %775 = vrot.lane.b32.xlu0 %v357, 113
        %v776 = vpop.permute.xlu0 %775
        %777 = vrot.lane.b32.xlu0 %v358, 113
        %v778 = vpop.permute.xlu0 %777
        %779 = vrot.lane.b32.xlu0 %v373, 113
        %v780 = vpop.permute.xlu0 %779
        %781 = vrot.lane.b32.xlu0 %v374, 113
        %v782 = vpop.permute.xlu0 %781
        %783 = vrot.lane.b32.xlu0 %v375, 113
        %v784 = vpop.permute.xlu0 %783
        %vm785 = vcmask 924672
        %v786 = vsel %vm785, %v776, %v778
        %v787 = vsel %vm785, %v778, %v780
        %v788 = vsel %vm785, %v780, %v782
        %v789 = vsel %vm785, %v782, %v784
        %790 = vrot.lane.b32.xlu0 %v375, 112
        %v791 = vpop.permute.xlu0 %790
        %v792 = vsel %vm595, %v594, %v791
        %793 = vrot.lane.b32.xlu0 %v375, 111
        %v794 = vpop.permute.xlu0 %793
        %v795 = vsel %vm614, %v613, %v794
        %796 = vrot.lane.b32.xlu0 %v357, 44
        %v797 = vpop.permute.xlu0 %796
        %798 = vrot.lane.b32.xlu0 %v358, 44
        %v799 = vpop.permute.xlu0 %798
        %800 = vrot.lane.b32.xlu0 %v373, 44
        %v801 = vpop.permute.xlu0 %800
        %802 = vrot.lane.b32.xlu0 %v374, 44
        %v803 = vpop.permute.xlu0 %802
        %804 = vrot.lane.b32.xlu0 %v375, 44
        %v805 = vpop.permute.xlu0 %804
        %vm806 = vcmask 359424
        %v807 = vsel %vm806, %v797, %v799
        %v808 = vsel %vm806, %v799, %v801
        %v809 = vsel %vm806, %v801, %v803
        %v810 = vsel %vm806, %v803, %v805
        %811 = vrot.lane.b32.xlu0 %v357, 43
        %v812 = vpop.permute.xlu0 %811
        %813 = vrot.lane.b32.xlu0 %v358, 43
        %v814 = vpop.permute.xlu0 %813
        %815 = vrot.lane.b32.xlu0 %v373, 43
        %v816 = vpop.permute.xlu0 %815
        %817 = vrot.lane.b32.xlu0 %v374, 43
        %v818 = vpop.permute.xlu0 %817
        %819 = vrot.lane.b32.xlu0 %v375, 43
        %v820 = vpop.permute.xlu0 %819
        %vm821 = vcmask 351232
        %v822 = vsel %vm821, %v812, %v814
        %v823 = vsel %vm821, %v814, %v816
        %v824 = vsel %vm821, %v816, %v818
        %v825 = vsel %vm821, %v818, %v820
        %826 = vrot.lane.b32.xlu0 %v375, 127
        %v827 = vpop.permute.xlu0 %826
        %v828 = vsel %vm386, %v662, %v827
        %829 = vrot.lane.b32.xlu0 %v374, 126
        %v830 = vpop.permute.xlu0 %829
        %831 = vrot.lane.b32.xlu0 %v375, 126
        %v832 = vpop.permute.xlu0 %831
        %v833 = vsel %vm405, %v404, %v830
        %v834 = vsel %vm405, %v830, %v832
        %835 = vrot.lane.b32.xlu0 %v374, 125
        %v836 = vpop.permute.xlu0 %835
        %837 = vrot.lane.b32.xlu0 %v375, 125
        %v838 = vpop.permute.xlu0 %837
        %v839 = vsel %vm424, %v423, %v836
        %v840 = vsel %vm424, %v836, %v838
        %841 = vrot.lane.b32.xlu0 %v356, 108
        %v842 = vpop.permute.xlu0 %841
        %843 = vrot.lane.b32.xlu0 %v357, 108
        %v844 = vpop.permute.xlu0 %843
        %845 = vrot.lane.b32.xlu0 %v358, 108
        %v846 = vpop.permute.xlu0 %845
        %847 = vrot.lane.b32.xlu0 %v373, 108
        %v848 = vpop.permute.xlu0 %847
        %849 = vrot.lane.b32.xlu0 %v374, 108
        %v850 = vpop.permute.xlu0 %849
        %851 = vrot.lane.b32.xlu0 %v388, 108
        %v852 = vpop.permute.xlu0 %851
        %853 = vrot.lane.b32.xlu0 %v389, 108
        %v854 = vpop.permute.xlu0 %853
        %855 = vrot.lane.b32.xlu0 %v390, 108
        %v856 = vpop.permute.xlu0 %855
        %857 = vrot.lane.b32.xlu0 %v663, 108
        %v858 = vpop.permute.xlu0 %857
        %859 = vrot.lane.b32.xlu0 %v662, 108
        %v860 = vpop.permute.xlu0 %859
        %861 = vrot.lane.b32.xlu0 %v675, 108
        %v862 = vpop.permute.xlu0 %861
        %863 = vrot.lane.b32.xlu0 %v676, 108
        %v864 = vpop.permute.xlu0 %863
        %865 = vrot.lane.b32.xlu0 %v677, 108
        %v866 = vpop.permute.xlu0 %865
        %867 = vrot.lane.b32.xlu0 %v678, 108
        %v868 = vpop.permute.xlu0 %867
        %869 = vrot.lane.b32.xlu0 %v673, 108
        %v870 = vpop.permute.xlu0 %869
        %871 = vrot.lane.b32.xlu0 %v690, 108
        %v872 = vpop.permute.xlu0 %871
        %873 = vrot.lane.b32.xlu0 %v691, 108
        %v874 = vpop.permute.xlu0 %873
        %875 = vrot.lane.b32.xlu0 %v692, 108
        %v876 = vpop.permute.xlu0 %875
        %877 = vrot.lane.b32.xlu0 %v693, 108
        %v878 = vpop.permute.xlu0 %877
        %879 = vrot.lane.b32.xlu0 %v688, 108
        %v880 = vpop.permute.xlu0 %879
        %881 = vrot.lane.b32.xlu0 %v705, 108
        %v882 = vpop.permute.xlu0 %881
        %883 = vrot.lane.b32.xlu0 %v706, 108
        %v884 = vpop.permute.xlu0 %883
        %885 = vrot.lane.b32.xlu0 %v707, 108
        %v886 = vpop.permute.xlu0 %885
        %887 = vrot.lane.b32.xlu0 %v708, 108
        %v888 = vpop.permute.xlu0 %887
        %889 = vrot.lane.b32.xlu0 %v703, 108
        %v890 = vpop.permute.xlu0 %889
        %891 = vrot.lane.b32.xlu0 %v720, 108
        %v892 = vpop.permute.xlu0 %891
        %893 = vrot.lane.b32.xlu0 %v721, 108
        %v894 = vpop.permute.xlu0 %893
        %895 = vrot.lane.b32.xlu0 %v722, 108
        %v896 = vpop.permute.xlu0 %895
        %897 = vrot.lane.b32.xlu0 %v723, 108
        %v898 = vpop.permute.xlu0 %897
        %899 = vrot.lane.b32.xlu0 %v718, 108
        %v900 = vpop.permute.xlu0 %899
        %901 = vrot.lane.b32.xlu0 %v483, 108
        %v902 = vpop.permute.xlu0 %901
        %903 = vrot.lane.b32.xlu0 %v484, 108
        %v904 = vpop.permute.xlu0 %903
        %905 = vrot.lane.b32.xlu0 %v485, 108
        %v906 = vpop.permute.xlu0 %905
        %907 = vrot.lane.b32.xlu0 %v726, 108
        %v908 = vpop.permute.xlu0 %907
        %909 = vrot.lane.b32.xlu0 %v725, 108
        %v910 = vpop.permute.xlu0 %909
        %911 = vrot.lane.b32.xlu0 %v502, 108
        %v912 = vpop.permute.xlu0 %911
        %913 = vrot.lane.b32.xlu0 %v503, 108
        %v914 = vpop.permute.xlu0 %913
        %915 = vrot.lane.b32.xlu0 %v504, 108
        %v916 = vpop.permute.xlu0 %915
        %917 = vrot.lane.b32.xlu0 %v729, 108
        %v918 = vpop.permute.xlu0 %917
        %919 = vrot.lane.b32.xlu0 %v728, 108
        %v920 = vpop.permute.xlu0 %919
        %921 = vrot.lane.b32.xlu0 %v741, 108
        %v922 = vpop.permute.xlu0 %921
        %923 = vrot.lane.b32.xlu0 %v742, 108
        %v924 = vpop.permute.xlu0 %923
        %925 = vrot.lane.b32.xlu0 %v743, 108
        %v926 = vpop.permute.xlu0 %925
        %927 = vrot.lane.b32.xlu0 %v744, 108
        %v928 = vpop.permute.xlu0 %927
        %929 = vrot.lane.b32.xlu0 %v739, 108
        %v930 = vpop.permute.xlu0 %929
        %931 = vrot.lane.b32.xlu0 %v756, 108
        %v932 = vpop.permute.xlu0 %931
        %933 = vrot.lane.b32.xlu0 %v757, 108
        %v934 = vpop.permute.xlu0 %933
        %935 = vrot.lane.b32.xlu0 %v758, 108
        %v936 = vpop.permute.xlu0 %935
        %937 = vrot.lane.b32.xlu0 %v759, 108
        %v938 = vpop.permute.xlu0 %937
        %939 = vrot.lane.b32.xlu0 %v754, 108
        %v940 = vpop.permute.xlu0 %939
        %941 = vrot.lane.b32.xlu0 %v771, 108
        %v942 = vpop.permute.xlu0 %941
        %943 = vrot.lane.b32.xlu0 %v772, 108
        %v944 = vpop.permute.xlu0 %943
        %945 = vrot.lane.b32.xlu0 %v773, 108
        %v946 = vpop.permute.xlu0 %945
        %947 = vrot.lane.b32.xlu0 %v774, 108
        %v948 = vpop.permute.xlu0 %947
        %949 = vrot.lane.b32.xlu0 %v769, 108
        %v950 = vpop.permute.xlu0 %949
        %951 = vrot.lane.b32.xlu0 %v786, 108
        %v952 = vpop.permute.xlu0 %951
        %953 = vrot.lane.b32.xlu0 %v787, 108
        %v954 = vpop.permute.xlu0 %953
        %955 = vrot.lane.b32.xlu0 %v788, 108
        %v956 = vpop.permute.xlu0 %955
        %957 = vrot.lane.b32.xlu0 %v789, 108
        %v958 = vpop.permute.xlu0 %957
        %959 = vrot.lane.b32.xlu0 %v784, 108
        %v960 = vpop.permute.xlu0 %959
        %961 = vrot.lane.b32.xlu0 %v597, 108
        %v962 = vpop.permute.xlu0 %961
        %963 = vrot.lane.b32.xlu0 %v598, 108
        %v964 = vpop.permute.xlu0 %963
        %965 = vrot.lane.b32.xlu0 %v599, 108
        %v966 = vpop.permute.xlu0 %965
        %967 = vrot.lane.b32.xlu0 %v792, 108
        %v968 = vpop.permute.xlu0 %967
        %969 = vrot.lane.b32.xlu0 %v791, 108
        %v970 = vpop.permute.xlu0 %969
        %971 = vrot.lane.b32.xlu0 %v616, 108
        %v972 = vpop.permute.xlu0 %971
        %973 = vrot.lane.b32.xlu0 %v617, 108
        %v974 = vpop.permute.xlu0 %973
        %975 = vrot.lane.b32.xlu0 %v618, 108
        %v976 = vpop.permute.xlu0 %975
        %977 = vrot.lane.b32.xlu0 %v795, 108
        %v978 = vpop.permute.xlu0 %977
        %979 = vrot.lane.b32.xlu0 %v794, 108
        %v980 = vpop.permute.xlu0 %979
        %981 = vrot.lane.b32.xlu0 %v807, 108
        %v982 = vpop.permute.xlu0 %981
        %983 = vrot.lane.b32.xlu0 %v808, 108
        %v984 = vpop.permute.xlu0 %983
        %985 = vrot.lane.b32.xlu0 %v809, 108
        %v986 = vpop.permute.xlu0 %985
        %987 = vrot.lane.b32.xlu0 %v810, 108
        %v988 = vpop.permute.xlu0 %987
        %989 = vrot.lane.b32.xlu0 %v805, 108
        %v990 = vpop.permute.xlu0 %989
        %991 = vrot.lane.b32.xlu0 %v822, 108
        %v992 = vpop.permute.xlu0 %991
        %993 = vrot.lane.b32.xlu0 %v823, 108
        %v994 = vpop.permute.xlu0 %993
        %995 = vrot.lane.b32.xlu0 %v824, 108
        %v996 = vpop.permute.xlu0 %995
        %997 = vrot.lane.b32.xlu0 %v825, 108
        %v998 = vpop.permute.xlu0 %997
        %999 = vrot.lane.b32.xlu0 %v820, 108
        %v1000 = vpop.permute.xlu0 %999
        %vm1001 = vcmask 883712
        %v1002 = vsel %vm1001, %v842, %v844
        %v1003 = vsel %vm1001, %v844, %v846
        %v1004 = vsel %vm1001, %v846, %v848
        %v1005 = vsel %vm1001, %v848, %v850
        %v1006 = vsel %vm1001, %v852, %v854
        %v1007 = vsel %vm1001, %v854, %v856
        %v1008 = vsel %vm1001, %v856, %v858
        %v1009 = vsel %vm1001, %v858, %v860
        %v1010 = vsel %vm1001, %v862, %v864
        %v1011 = vsel %vm1001, %v864, %v866
        %v1012 = vsel %vm1001, %v866, %v868
        %v1013 = vsel %vm1001, %v868, %v870
        %v1014 = vsel %vm1001, %v872, %v874
        %v1015 = vsel %vm1001, %v874, %v876
        %v1016 = vsel %vm1001, %v876, %v878
        %v1017 = vsel %vm1001, %v878, %v880
        %v1018 = vsel %vm1001, %v882, %v884
        %v1019 = vsel %vm1001, %v884, %v886
        %v1020 = vsel %vm1001, %v886, %v888
        %v1021 = vsel %vm1001, %v888, %v890
        %v1022 = vsel %vm1001, %v892, %v894
        %v1023 = vsel %vm1001, %v894, %v896
        %v1024 = vsel %vm1001, %v896, %v898
        %v1025 = vsel %vm1001, %v898, %v900
        %v1026 = vsel %vm1001, %v902, %v904
        %v1027 = vsel %vm1001, %v904, %v906
        %v1028 = vsel %vm1001, %v906, %v908
        %v1029 = vsel %vm1001, %v908, %v910
        %v1030 = vsel %vm1001, %v912, %v914
        %v1031 = vsel %vm1001, %v914, %v916
        %v1032 = vsel %vm1001, %v916, %v918
        %v1033 = vsel %vm1001, %v918, %v920
        %v1034 = vsel %vm1001, %v922, %v924
        %v1035 = vsel %vm1001, %v924, %v926
        %v1036 = vsel %vm1001, %v926, %v928
        %v1037 = vsel %vm1001, %v928, %v930
        %v1038 = vsel %vm1001, %v932, %v934
        %v1039 = vsel %vm1001, %v934, %v936
        %v1040 = vsel %vm1001, %v936, %v938
        %v1041 = vsel %vm1001, %v938, %v940
        %v1042 = vsel %vm1001, %v942, %v944
        %v1043 = vsel %vm1001, %v944, %v946
        %v1044 = vsel %vm1001, %v946, %v948
        %v1045 = vsel %vm1001, %v948, %v950
        %v1046 = vsel %vm1001, %v952, %v954
        %v1047 = vsel %vm1001, %v954, %v956
        %v1048 = vsel %vm1001, %v956, %v958
        %v1049 = vsel %vm1001, %v958, %v960
        %v1050 = vsel %vm1001, %v962, %v964
        %v1051 = vsel %vm1001, %v964, %v966
        %v1052 = vsel %vm1001, %v966, %v968
        %v1053 = vsel %vm1001, %v968, %v970
        %v1054 = vsel %vm1001, %v972, %v974
        %v1055 = vsel %vm1001, %v974, %v976
        %v1056 = vsel %vm1001, %v976, %v978
        %v1057 = vsel %vm1001, %v978, %v980
        %v1058 = vsel %vm1001, %v982, %v984
        %v1059 = vsel %vm1001, %v984, %v986
        %v1060 = vsel %vm1001, %v986, %v988
        %v1061 = vsel %vm1001, %v988, %v990
        %v1062 = vsel %vm1001, %v992, %v994
        %v1063 = vsel %vm1001, %v994, %v996
        %v1064 = vsel %vm1001, %v996, %v998
        %v1065 = vsel %vm1001, %v998, %v1000
        %1130 = vrot.lane.b32.xlu0 %v357, 22
        %v1131 = vpop.permute.xlu0 %1130
        %1132 = vrot.lane.b32.xlu0 %v358, 22
        %v1133 = vpop.permute.xlu0 %1132
        %1134 = vrot.lane.b32.xlu0 %v373, 22
        %v1135 = vpop.permute.xlu0 %1134
        %1136 = vrot.lane.b32.xlu0 %v374, 22
        %v1137 = vpop.permute.xlu0 %1136
        %1138 = vrot.lane.b32.xlu0 %v375, 22
        %v1139 = vpop.permute.xlu0 %1138
        %1140 = vrot.lane.b32.xlu0 %v389, 22
        %v1141 = vpop.permute.xlu0 %1140
        %1142 = vrot.lane.b32.xlu0 %v390, 22
        %v1143 = vpop.permute.xlu0 %1142
        %1144 = vrot.lane.b32.xlu0 %v663, 22
        %v1145 = vpop.permute.xlu0 %1144
        %1146 = vrot.lane.b32.xlu0 %v828, 22
        %v1147 = vpop.permute.xlu0 %1146
        %1148 = vrot.lane.b32.xlu0 %v827, 22
        %v1149 = vpop.permute.xlu0 %1148
        %1150 = vrot.lane.b32.xlu0 %v408, 22
        %v1151 = vpop.permute.xlu0 %1150
        %1152 = vrot.lane.b32.xlu0 %v409, 22
        %v1153 = vpop.permute.xlu0 %1152
        %1154 = vrot.lane.b32.xlu0 %v833, 22
        %v1155 = vpop.permute.xlu0 %1154
        %1156 = vrot.lane.b32.xlu0 %v834, 22
        %v1157 = vpop.permute.xlu0 %1156
        %1158 = vrot.lane.b32.xlu0 %v832, 22
        %v1159 = vpop.permute.xlu0 %1158
        %1160 = vrot.lane.b32.xlu0 %v427, 22
        %v1161 = vpop.permute.xlu0 %1160
        %1162 = vrot.lane.b32.xlu0 %v428, 22
        %v1163 = vpop.permute.xlu0 %1162
        %1164 = vrot.lane.b32.xlu0 %v839, 22
        %v1165 = vpop.permute.xlu0 %1164
        %1166 = vrot.lane.b32.xlu0 %v840, 22
        %v1167 = vpop.permute.xlu0 %1166
        %1168 = vrot.lane.b32.xlu0 %v838, 22
        %v1169 = vpop.permute.xlu0 %1168
        %vm1170 = vcmask 179200
        %v1171 = vsel %vm1170, %v1131, %v1133
        %v1172 = vsel %vm1170, %v1133, %v1135
        %v1173 = vsel %vm1170, %v1135, %v1137
        %v1174 = vsel %vm1170, %v1137, %v1139
        %v1175 = vsel %vm1170, %v1141, %v1143
        %v1176 = vsel %vm1170, %v1143, %v1145
        %v1177 = vsel %vm1170, %v1145, %v1147
        %v1178 = vsel %vm1170, %v1147, %v1149
        %v1179 = vsel %vm1170, %v1151, %v1153
        %v1180 = vsel %vm1170, %v1153, %v1155
        %v1181 = vsel %vm1170, %v1155, %v1157
        %v1182 = vsel %vm1170, %v1157, %v1159
        %v1183 = vsel %vm1170, %v1161, %v1163
        %v1184 = vsel %vm1170, %v1163, %v1165
        %v1185 = vsel %vm1170, %v1165, %v1167
        %v1186 = vsel %vm1170, %v1167, %v1169
        %v1203 = vld [vmem:[%s2] sm:$0xff]
        %v1204 = vld [vmem:[%s2 + $0x8] sm:$0xff]
        %v1205 = vld [vmem:[%s2 + $0x10] sm:$0xf]
        %v1209 = vunpack.c.l.b16 %v1203
        %v1210 = vunpack.c.h.b16 %v1203
        %v1211 = vunpack.c.l.b16 %v1204
        %v1212 = vunpack.c.h.b16 %v1204
        %v1213 = vunpack.c.l.b16 %v1205
        %v1214 = vpack.c.b16 %v1209, %v1209
        %v1215 = vpack.c.b16 %v1210, %v1210
        %v1216 = vpack.c.b16 %v1211, %v1211
        %v1217 = vpack.c.b16 %v1212, %v1212
        %v1218 = vpack.c.b16 %v1213, %v1213
        %vm1223 = vcmask 523264
        %v1225 = vsel %vm1223, %v1218, 0
        %1227 = vmatprep.subr.bf16.mxu0 %v356
        %1228 = vmatpush1.bf16.msra.mxu0 %v355
        %1229 = vmatprep.subr.bf16.mxu0 %v388
        %1230 = vmatpush1.bf16.msra.mxu0 %v387
        %1231 = vmatprep.subr.bf16.mxu0 %v407
        %1232 = vmatpush1.bf16.msra.mxu0 %v406
        %1233 = vmatprep.subr.bf16.mxu0 %v426
        %1234 = vmatpush1.bf16.msra.mxu0 %v425
        %1235 = vmatprep.subr.bf16.mxu0 %v445
        %1236 = vmatpush1.bf16.msra.mxu0 %v444
        %1237 = vmatprep.subr.bf16.mxu0 %v464
        %1238 = vmatpush1.bf16.msra.mxu0 %v463
        %1239 = vmatprep.subr.bf16.mxu0 %v483
        %1240 = vmatpush1.bf16.msra.mxu0 %v482
        %1241 = vmatprep.subr.bf16.mxu0 %v502
        %1242 = vmatpush1.bf16.msra.mxu0 %v501
        %1243 = vmatprep.subr.bf16.mxu0 %v521
        %1244 = vmatpush1.bf16.msra.mxu0 %v520
        %1245 = vmatprep.subr.bf16.mxu0 %v540
        %1246 = vmatpush1.bf16.msra.mxu0 %v539
        %1247 = vmatprep.subr.bf16.mxu0 %v559
        %1248 = vmatpush1.bf16.msra.mxu0 %v558
        %1249 = vmatprep.subr.bf16.mxu0 %v578
        %1250 = vmatpush1.bf16.msra.mxu0 %v577
        %1251 = vmatprep.subr.bf16.mxu0 %v597
        %1252 = vmatpush1.bf16.msra.mxu0 %v596
        %1253 = vmatprep.subr.bf16.mxu0 %v616
        %1254 = vmatpush1.bf16.msra.mxu0 %v615
        %1255 = vmatprep.subr.bf16.mxu0 %v635
        %1256 = vmatpush1.bf16.msra.mxu0 %v634
        %1257 = vmatprep.subr.bf16.mxu0 %v654
        %1258 = vmatpush1.bf16.msra.mxu0 %v653
        %1259 = vmatprep.mubr.bf16.mxu0 %v1215
        %1260 = vmatmul.mubr.bf16.gmra.mrb[0].mxu0 %v1214
        %v1261 = vpop.f32.mrb[0].mxu0
        %v1262 = vadd.f32 0.0, %v1261
        %v1263 = vpop.f32.mrb[0].mxu0
        %v1264 = vadd.f32 0.0, %v1263
        %v1265 = vpop.f32.mrb[0].mxu0
        %v1266 = vpop.f32.mrb[0].mxu0
        %1267 = vdwg.mxu0
        %1268 = vmatprep.subr.bf16.mxu0 %v1003
        %1269 = vmatpush1.bf16.msra.mxu0 %v1002
        %1270 = vmatprep.subr.bf16.mxu0 %v1007
        %1271 = vmatpush1.bf16.msra.mxu0 %v1006
        %1272 = vmatprep.subr.bf16.mxu0 %v1011
        %1273 = vmatpush1.bf16.msra.mxu0 %v1010
        %1274 = vmatprep.subr.bf16.mxu0 %v1015
        %1275 = vmatpush1.bf16.msra.mxu0 %v1014
        %1276 = vmatprep.subr.bf16.mxu0 %v1019
        %1277 = vmatpush1.bf16.msra.mxu0 %v1018
        %1278 = vmatprep.subr.bf16.mxu0 %v1023
        %1279 = vmatpush1.bf16.msra.mxu0 %v1022
        %1280 = vmatprep.subr.bf16.mxu0 %v1027
        %1281 = vmatpush1.bf16.msra.mxu0 %v1026
        %1282 = vmatprep.subr.bf16.mxu0 %v1031
        %1283 = vmatpush1.bf16.msra.mxu0 %v1030
        %1284 = vmatprep.subr.bf16.mxu0 %v1035
        %1285 = vmatpush1.bf16.msra.mxu0 %v1034
        %1286 = vmatprep.subr.bf16.mxu0 %v1039
        %1287 = vmatpush1.bf16.msra.mxu0 %v1038
        %1288 = vmatprep.subr.bf16.mxu0 %v1043
        %1289 = vmatpush1.bf16.msra.mxu0 %v1042
        %1290 = vmatprep.subr.bf16.mxu0 %v1047
        %1291 = vmatpush1.bf16.msra.mxu0 %v1046
        %1292 = vmatprep.subr.bf16.mxu0 %v1051
        %1293 = vmatpush1.bf16.msra.mxu0 %v1050
        %1294 = vmatprep.subr.bf16.mxu0 %v1055
        %1295 = vmatpush1.bf16.msra.mxu0 %v1054
        %1296 = vmatprep.subr.bf16.mxu0 %v1059
        %1297 = vmatpush1.bf16.msra.mxu0 %v1058
        %1298 = vmatprep.subr.bf16.mxu0 %v1063
        %1299 = vmatpush1.bf16.msra.mxu0 %v1062
        %1300 = vmatprep.mubr.bf16.mxu0 %v1217
        %1301 = vmatmul.mubr.bf16.gmra.mrb[0].mxu0 %v1216
        %v1302 = vpop.f32.mrb[0].mxu0
        %v1303 = vadd.f32 %v1262, %v1302
        %v1304 = vpop.f32.mrb[0].mxu0
        %v1305 = vadd.f32 %v1264, %v1304
        %v1306 = vpop.f32.mrb[0].mxu0
        %v1307 = vpop.f32.mrb[0].mxu0
        %1308 = vdwg.mxu0
        %1309 = vmatprep.subr.bf16.mxu0 %v1172
        %1310 = vmatpush1.bf16.msra.mxu0 %v1171
        %1311 = vmatprep.subr.bf16.mxu0 %v1176
        %1312 = vmatpush1.bf16.msra.mxu0 %v1175
        %1313 = vmatprep.subr.bf16.mxu0 %v1180
        %1314 = vmatpush1.bf16.msra.mxu0 %v1179
        %1315 = vmatprep.subr.bf16.mxu0 %v1184
        %1316 = vmatpush1.bf16.msra.mxu0 %v1183
        %1317 = vmatprep.subr.bf16.mxu0 0
        %1318 = vmatpush1.bf16.msra.mxu0 0
        %1319 = vmatprep.subr.bf16.mxu0 0
        %1320 = vmatpush1.bf16.msra.mxu0 0
        %1321 = vmatprep.subr.bf16.mxu0 0
        %1322 = vmatpush1.bf16.msra.mxu0 0
        %1323 = vmatprep.subr.bf16.mxu0 0
        %1324 = vmatpush1.bf16.msra.mxu0 0
        %1325 = vmatprep.subr.bf16.mxu0 0
        %1326 = vmatpush1.bf16.msra.mxu0 0
        %1327 = vmatprep.subr.bf16.mxu0 0
        %1328 = vmatpush1.bf16.msra.mxu0 0
        %1329 = vmatprep.subr.bf16.mxu0 0
        %1330 = vmatpush1.bf16.msra.mxu0 0
        %1331 = vmatprep.subr.bf16.mxu0 0
        %1332 = vmatpush1.bf16.msra.mxu0 0
        %1333 = vmatprep.subr.bf16.mxu0 0
        %1334 = vmatpush1.bf16.msra.mxu0 0
        %1335 = vmatprep.subr.bf16.mxu0 0
        %1336 = vmatpush1.bf16.msra.mxu0 0
        %1337 = vmatprep.subr.bf16.mxu0 0
        %1338 = vmatpush1.bf16.msra.mxu0 0
        %1339 = vmatprep.subr.bf16.mxu0 0
        %1340 = vmatpush1.bf16.msra.mxu0 0
        %1341 = vmatprep.mubr.bf16.mxu0 0
        %1342 = vmatmul.mubr.bf16.gmra.mrb[0].mxu0 %v1225
        %v1343 = vpop.f32.mrb[0].mxu0
        %v1344 = vadd.f32 %v1303, %v1343
        %v1345 = vpop.f32.mrb[0].mxu0
        %v1346 = vadd.f32 %v1305, %v1345
        %v1347 = vpop.f32.mrb[0].mxu0
        %v1348 = vpop.f32.mrb[0].mxu0
        %1349 = vdwg.mxu0
        %1350 = vmatprep.subr.bf16.mxu0 %v358
        %1351 = vmatpush1.bf16.msra.mxu0 %v357
        %1352 = vmatprep.subr.bf16.mxu0 %v390
        %1353 = vmatpush1.bf16.msra.mxu0 %v389
        %1354 = vmatprep.subr.bf16.mxu0 %v409
        %1355 = vmatpush1.bf16.msra.mxu0 %v408
        %1356 = vmatprep.subr.bf16.mxu0 %v428
        %1357 = vmatpush1.bf16.msra.mxu0 %v427
        %1358 = vmatprep.subr.bf16.mxu0 %v447
        %1359 = vmatpush1.bf16.msra.mxu0 %v446
        %1360 = vmatprep.subr.bf16.mxu0 %v466
        %1361 = vmatpush1.bf16.msra.mxu0 %v465
        %1362 = vmatprep.subr.bf16.mxu0 %v485
        %1363 = vmatpush1.bf16.msra.mxu0 %v484
        %1364 = vmatprep.subr.bf16.mxu0 %v504
        %1365 = vmatpush1.bf16.msra.mxu0 %v503
        %1366 = vmatprep.subr.bf16.mxu0 %v523
        %1367 = vmatpush1.bf16.msra.mxu0 %v522
        %1368 = vmatprep.subr.bf16.mxu0 %v542
        %1369 = vmatpush1.bf16.msra.mxu0 %v541
        %1370 = vmatprep.subr.bf16.mxu0 %v561
        %1371 = vmatpush1.bf16.msra.mxu0 %v560
        %1372 = vmatprep.subr.bf16.mxu0 %v580
        %1373 = vmatpush1.bf16.msra.mxu0 %v579
        %1374 = vmatprep.subr.bf16.mxu0 %v599
        %1375 = vmatpush1.bf16.msra.mxu0 %v598
        %1376 = vmatprep.subr.bf16.mxu0 %v618
        %1377 = vmatpush1.bf16.msra.mxu0 %v617
        %1378 = vmatprep.subr.bf16.mxu0 %v637
        %1379 = vmatpush1.bf16.msra.mxu0 %v636
        %1380 = vmatprep.subr.bf16.mxu0 %v656
        %1381 = vmatpush1.bf16.msra.mxu0 %v655
        %1382 = vmatprep.mubr.bf16.mxu0 %v1215
        %1383 = vmatmul.mubr.bf16.gmra.mrb[0].mxu0 %v1214
        %v1384 = vpop.f32.mrb[0].mxu0
        %v1385 = vadd.f32 0.0, %v1384
        %v1386 = vpop.f32.mrb[0].mxu0
        %v1387 = vadd.f32 0.0, %v1386
        %v1388 = vpop.f32.mrb[0].mxu0
        %v1389 = vpop.f32.mrb[0].mxu0
        %1390 = vdwg.mxu0
        %1391 = vmatprep.subr.bf16.mxu0 %v1005
        %1392 = vmatpush1.bf16.msra.mxu0 %v1004
        %1393 = vmatprep.subr.bf16.mxu0 %v1009
        %1394 = vmatpush1.bf16.msra.mxu0 %v1008
        %1395 = vmatprep.subr.bf16.mxu0 %v1013
        %1396 = vmatpush1.bf16.msra.mxu0 %v1012
        %1397 = vmatprep.subr.bf16.mxu0 %v1017
        %1398 = vmatpush1.bf16.msra.mxu0 %v1016
        %1399 = vmatprep.subr.bf16.mxu0 %v1021
        %1400 = vmatpush1.bf16.msra.mxu0 %v1020
        %1401 = vmatprep.subr.bf16.mxu0 %v1025
        %1402 = vmatpush1.bf16.msra.mxu0 %v1024
        %1403 = vmatprep.subr.bf16.mxu0 %v1029
        %1404 = vmatpush1.bf16.msra.mxu0 %v1028
        %1405 = vmatprep.subr.bf16.mxu0 %v1033
        %1406 = vmatpush1.bf16.msra.mxu0 %v1032
        %1407 = vmatprep.subr.bf16.mxu0 %v1037
        %1408 = vmatpush1.bf16.msra.mxu0 %v1036
        %1409 = vmatprep.subr.bf16.mxu0 %v1041
        %1410 = vmatpush1.bf16.msra.mxu0 %v1040
        %1411 = vmatprep.subr.bf16.mxu0 %v1045
        %1412 = vmatpush1.bf16.msra.mxu0 %v1044
        %1413 = vmatprep.subr.bf16.mxu0 %v1049
        %1414 = vmatpush1.bf16.msra.mxu0 %v1048
        %1415 = vmatprep.subr.bf16.mxu0 %v1053
        %1416 = vmatpush1.bf16.msra.mxu0 %v1052
        %1417 = vmatprep.subr.bf16.mxu0 %v1057
        %1418 = vmatpush1.bf16.msra.mxu0 %v1056
        %1419 = vmatprep.subr.bf16.mxu0 %v1061
        %1420 = vmatpush1.bf16.msra.mxu0 %v1060
        %1421 = vmatprep.subr.bf16.mxu0 %v1065
        %1422 = vmatpush1.bf16.msra.mxu0 %v1064
        %1423 = vmatprep.mubr.bf16.mxu0 %v1217
        %1424 = vmatmul.mubr.bf16.gmra.mrb[0].mxu0 %v1216
        %v1425 = vpop.f32.mrb[0].mxu0
        %v1426 = vadd.f32 %v1385, %v1425
        %v1427 = vpop.f32.mrb[0].mxu0
        %v1428 = vadd.f32 %v1387, %v1427
        %v1429 = vpop.f32.mrb[0].mxu0
        %v1430 = vpop.f32.mrb[0].mxu0
        %1431 = vdwg.mxu0
        %1432 = vmatprep.subr.bf16.mxu0 %v1174
        %1433 = vmatpush1.bf16.msra.mxu0 %v1173
        %1434 = vmatprep.subr.bf16.mxu0 %v1178
        %1435 = vmatpush1.bf16.msra.mxu0 %v1177
        %1436 = vmatprep.subr.bf16.mxu0 %v1182
        %1437 = vmatpush1.bf16.msra.mxu0 %v1181
        %1438 = vmatprep.subr.bf16.mxu0 %v1186
        %1439 = vmatpush1.bf16.msra.mxu0 %v1185
        %1440 = vmatprep.subr.bf16.mxu0 0
        %1441 = vmatpush1.bf16.msra.mxu0 0
        %1442 = vmatprep.subr.bf16.mxu0 0
        %1443 = vmatpush1.bf16.msra.mxu0 0
        %1444 = vmatprep.subr.bf16.mxu0 0
        %1445 = vmatpush1.bf16.msra.mxu0 0
        %1446 = vmatprep.subr.bf16.mxu0 0
        %1447 = vmatpush1.bf16.msra.mxu0 0
        %1448 = vmatprep.subr.bf16.mxu0 0
        %1449 = vmatpush1.bf16.msra.mxu0 0
        %1450 = vmatprep.subr.bf16.mxu0 0
        %1451 = vmatpush1.bf16.msra.mxu0 0
        %1452 = vmatprep.subr.bf16.mxu0 0
        %1453 = vmatpush1.bf16.msra.mxu0 0
        %1454 = vmatprep.subr.bf16.mxu0 0
        %1455 = vmatpush1.bf16.msra.mxu0 0
        %1456 = vmatprep.subr.bf16.mxu0 0
        %1457 = vmatpush1.bf16.msra.mxu0 0
        %1458 = vmatprep.subr.bf16.mxu0 0
        %1459 = vmatpush1.bf16.msra.mxu0 0
        %1460 = vmatprep.subr.bf16.mxu0 0
        %1461 = vmatpush1.bf16.msra.mxu0 0
        %1462 = vmatprep.subr.bf16.mxu0 0
        %1463 = vmatpush1.bf16.msra.mxu0 0
        %1464 = vmatprep.mubr.bf16.mxu0 0
        %1465 = vmatmul.mubr.bf16.gmra.mrb[0].mxu0 %v1225
        %v1466 = vpop.f32.mrb[0].mxu0
        %v1467 = vadd.f32 %v1426, %v1466
        %v1468 = vpop.f32.mrb[0].mxu0
        %v1469 = vadd.f32 %v1428, %v1468
        %v1470 = vpop.f32.mrb[0].mxu0
        %v1471 = vpop.f32.mrb[0].mxu0
        %1472 = vdwg.mxu0
        %v1473 = vld [vmem:[%s3] sm:$0xff]
        %1475 = vset.pattern.permute.xlu0 0
        %1476 = vperm.xlu0 %1475, %v1473
        %v1477 = vpop.permute.xlu0 %1476
        %v1479 = vmul.f32 %v1344, %v1477
        %v1480 = vmul.f32 %v1346, %v1477
        %v1481 = vmul.f32 %v1467, %v1477
        %v1482 = vmul.f32 %v1469, %v1477
        %v1483 = vld [vmem:[%s4] sm:$0xff]
        %1485 = vset.pattern.permute.xlu0 0
        %1486 = vperm.xlu0 %1485, %v1483
        %v1487 = vpop.permute.xlu0 %1486
        %v1489 = vadd.f32 %v1479, %v1487
        %v1490 = vadd.f32 %v1480, %v1487
        %v1491 = vadd.f32 %v1481, %v1487
        %v1492 = vadd.f32 %v1482, %v1487
        %v1493 = vmax.f32 %v1489, 0.0
        %v1494 = vmax.f32 %v1490, 0.0
        %v1495 = vmax.f32 %v1491, 0.0
        %v1496 = vmax.f32 %v1492, 0.0
        %1497 = vst [vmem:[%s332] sm:$0xff] %v1493
        %1498 = vst [vmem:[%s332 + $0x8] sm:$0xff] %v1494
        %1499 = vst [vmem:[%s332 + $0x10] sm:$0xff] %v1495
        %1500 = vst [vmem:[%s332 + $0x18] sm:$0xff] %v1496
        %s1501 = smul.u32 4, %s21
        %p1502 = scmp.lt.s32.totalorder %s20, 1
        %s1503 = scalar_select %p1502, %s20, 1
        %p1504 = scmp.lt.s32.totalorder %s1501, 39
        %s1505 = scalar_select %p1504, %s1501, 39
        %s1506 = smul.addr %s1503, 40
        %s1507 = sadd.s32 %s1505, %s1506
        %s1508 = smul.addr %s1507, 8
        %s1509 = scalar_lea.vmem %s5, %s1508
        // Predicated region
        $region87: #{siamrpn_forward.8} parent=77 // pred_check
          %p1510 = pneg %p169
        $region88: #{siamrpn_forward.8} parent=77 // pred_check_branch
          %1512 = sbr.rel (%p1510) target = $region90
        $region89: #{siamrpn_forward.8} parent=77 // pred_region
          %s1513 = smul.u32 4, %s21
        $region90: #{siamrpn_forward.8} parent=77 // pred_fallthru
          _
      $region78: #{siamrpn_forward.8} parent=5 // pred_fallthru
        _
      %p1514 = scmp.le.s32.totalorder 2, %s11
      // Predicated region
      $region91: #{siamrpn_forward.8} parent=5 // pred_check
        %p1515 = pneg %p1514
      $region92: #{siamrpn_forward.8} parent=5 // pred_check_branch
        %1517 = sbr.rel (%p1515) target = $region94
      $region93: #{siamrpn_forward.8} parent=5 // pred_region
        %s1518 = ssub.s32 %s11, 2
        // Predicated region
        $region95: #{siamrpn_forward.8} parent=93 // pred_check
          %p1519 = pneg %p175
        $region96: #{siamrpn_forward.8} parent=93 // pred_check_branch
          %1521 = sbr.rel (%p1519) target = $region98
        $region97: #{siamrpn_forward.8} parent=93 // pred_region
          %s1522 = smul.u32 4, %s23
          %p1523 = scmp.lt.s32.totalorder %s22, 1
          %s1524 = scalar_select %p1523, %s22, 1
          %p1525 = scmp.lt.s32.totalorder %s1522, 39
          %s1526 = scalar_select %p1525, %s1522, 39
          %s1527 = smul.addr %s1524, 40
          %s1528 = sadd.s32 %s1526, %s1527
          %s1529 = smul.addr %s1528, 8
          %s1530 = scalar_lea.vmem %s5, %s1529
        $region98: #{siamrpn_forward.8} parent=93 // pred_fallthru
          _
      $region94: #{siamrpn_forward.8} parent=5 // pred_fallthru
        _
    $region6: #{siamrpn_forward.8} parent=1 // loop_footer
      %s15 = sadd.s32 1, %s11
    $region7: #{siamrpn_forward.8} parent=1 // loop_footer_branch
      %10 = sbr.rel target = $region3
    $region8: #{siamrpn_forward.8} parent=1 // loop_exit
      _

// kernel: siamrpn_forward.9
$region0: #{siamrpn_forward.9}
  #allocation0 [shape = 'u32[]', space=smem, size = 0x4, offset = 0x4, fixed_abs, tag = 'smem constant byte address 0x4 - core index']
  #allocation1 [shape = 'u32[144,128]{1,0:T(1,128)}', space=vmem, size = 0x12000, scoped, tag = 'internal scratch']
  %s0 = inlined_call_operand.vmem [shape: f32[4,2,8,1280], index: 0, kind: input, shape index: {}]
  %s1 = inlined_call_operand.vmem [shape: f32[2,8,1152], index: 1, kind: output, shape index: {}]
  %s2 = sld [smem:[#allocation0]]
  $region60: #{siamrpn_forward.9} parent=0
    _
  %s4 = ssub.s32 1, %s2
  %s5 = scalar_select 0, %s4, %s2
  $region1: #{siamrpn_forward.9} parent=0
    #allocation2 [shape = 'u8[327680]{0}', space=vmem, size = 0x50000, scoped, tag = 'input window, operand 0']
    loop: start=0, step=1, limit=4
    $region2: #{siamrpn_forward.9} parent=1 // loop_pre_header
      _
    $region3: #{siamrpn_forward.9} parent=1 // loop_header
      %s7 = sphi 0, %s11
      %p8 = scmp.ge.s32.totalorder %s7, 4
      %s17 = sphi 0, %s19
      %s20 = sphi 0, %s17
      %s21 = sphi 0, %s20
      %s37 = sphi 0, %s21
      %s43 = sphi 0, %s45
      %s46 = sphi 0, %s43
      %s47 = sphi 0, %s46
      %s63 = sphi 0, %s47
    $region4: #{siamrpn_forward.9} parent=1 // loop_header_branch
      %10 = sbr.rel (%p8) target = $region8
    $region5: #{siamrpn_forward.9} parent=1 // loop_body
      %s12 = ssub.s32 %s7, 1
      %s13 = ssub.s32 %s7, 2
      %s14 = sadd.s32 %s7, 1
      %s15 = ssub.s32 %s7, %s14
      %p16 = scmp.eq.s32.totalorder %s15, 0
      %s18 = sadd.s32 %s17, 1
      %s19 = scalar_select %p16, %s17, %s18
      %p22 = pneg %p16
      %p23 = scmp.eq.s32.totalorder %s7, 1
      %p24 = por %p22, %p23
      %p25 = scmp.ne.s32.totalorder %s17, %s20
      %p26 = scmp.eq.s32.totalorder %s7, 0
      %p27 = por %p25, %p26
      %p28 = scmp.ne.s32.totalorder %s17, %s20
      %p29 = scmp.eq.s32.totalorder %s12, 1
      %p30 = por %p28, %p29
      %p31 = scmp.ne.s32.totalorder %s20, %s21
      %p32 = scmp.eq.s32.totalorder %s12, 0
      %p33 = por %p31, %p32
      %p34 = scmp.ne.s32.totalorder %s20, %s21
      %p35 = scmp.eq.s32.totalorder %s13, 1
      %p36 = por %p34, %p35
      %p38 = scmp.ne.s32.totalorder %s21, %s37
      %p39 = scmp.eq.s32.totalorder %s13, 0
      %p40 = por %p38, %p39
      %s41 = ssub.s32 %s7, %s14
      %p42 = scmp.eq.s32.totalorder %s41, 0
      %s44 = sadd.s32 %s43, 1
      %s45 = scalar_select %p42, %s43, %s44
      %p48 = pneg %p42
      %p49 = scmp.eq.s32.totalorder %s7, 1
      %p50 = por %p48, %p49
      %p51 = scmp.ne.s32.totalorder %s43, %s46
      %p52 = scmp.eq.s32.totalorder %s7, 0
      %p53 = por %p51, %p52
      %p54 = scmp.ne.s32.totalorder %s43, %s46
      %p55 = scmp.eq.s32.totalorder %s12, 1
      %p56 = por %p54, %p55
      %p57 = scmp.ne.s32.totalorder %s46, %s47
      %p58 = scmp.eq.s32.totalorder %s12, 0
      %p59 = por %p57, %p58
      %p60 = scmp.ne.s32.totalorder %s46, %s47
      %p61 = scmp.eq.s32.totalorder %s13, 1
      %p62 = por %p60, %p61
      %p64 = scmp.ne.s32.totalorder %s47, %s63
      %p65 = scmp.eq.s32.totalorder %s13, 0
      %p66 = por %p64, %p65
      %p67 = scmp.le.s32.totalorder 1, %s7
      %p68 = scmp.lt.s32.totalorder %s7, 3
      %p69 = pnand %p67, %p68
      %p70 = pneg %p69
      // Predicated region
      $region9: #{siamrpn_forward.9} parent=5 // pred_check
        _
      $region10: #{siamrpn_forward.9} parent=5 // pred_check_branch
        %72 = sbr.rel (%p69) target = $region12
      $region11: #{siamrpn_forward.9} parent=5 // pred_region
        %s73 = ssub.s32 %s7, 1
      $region12: #{siamrpn_forward.9} parent=5 // pred_fallthru
        _
      %p74 = scmp.lt.s32.totalorder %s7, 2
      // Predicated region
      $region13: #{siamrpn_forward.9} parent=5 // pred_check
        %p75 = pneg %p74
      $region14: #{siamrpn_forward.9} parent=5 // pred_check_branch
        %77 = sbr.rel (%p75) target = $region16
      $region15: #{siamrpn_forward.9} parent=5 // pred_region
        // Predicated region
        $region17: #{siamrpn_forward.9} parent=15 // pred_check
          %p78 = pneg %p27
        $region18: #{siamrpn_forward.9} parent=15 // pred_check_branch
          %80 = sbr.rel (%p78) target = $region20
        $region19: #{siamrpn_forward.9} parent=15 // pred_region
          %s81 = sand.u32 %s17, 1
          %s82 = sand.u32 %s17, 1
          %s83 = smul.addr %s82, 320
          %s84 = scalar_lea.vmem [#allocation2], %s83
          %s85 = smul.addr %s7, 10
          %s86 = smul.addr %s85, 8
          %s87 = scalar_lea.vmem %s0, %s86
          // Predicated region
          $region21: #{siamrpn_forward.9} parent=19 // pred_check
            _
          $region22: #{siamrpn_forward.9} parent=19 // pred_check_branch
            %89 = sbr.rel (0) target = $region24
          $region23: #{siamrpn_forward.9} parent=19 // pred_region
            // Predicated region
            $region25: #{siamrpn_forward.9} parent=23 // pred_check
              _
            $region26: #{siamrpn_forward.9} parent=23 // pred_check_branch
              %91 = sbr.rel (0) target = $region28
            $region27: #{siamrpn_forward.9} parent=23 // pred_region
              loop: start=0, step=1, limit=1
              $region29: #{siamrpn_forward.9} parent=27 // loop_pre_header
                _
              $region30: #{siamrpn_forward.9} parent=27 // loop_header
                %s93 = sphi 0, %s97
                %p94 = scmp.ge.s32.totalorder %s93, 1
                %s98 = sphi %s87, %s87
                %s99 = sphi %s84, %s84
              $region31: #{siamrpn_forward.9} parent=27 // loop_header_branch
                %96 = sbr.rel (%p94) target = $region35
              $region32: #{siamrpn_forward.9} parent=27 // loop_body
                %v100 = vld [vmem:[%s98] sm:$0xff]
                %101 = vst [vmem:[%s99] sm:$0xff] %v100
                %v102 = vld [vmem:[%s98 + $0x8] sm:$0xff]
                %103 = vst [vmem:[%s99 + $0x8] sm:$0xff] %v102
                %v104 = vld [vmem:[%s98 + $0x10] sm:$0xff]
                %105 = vst [vmem:[%s99 + $0x10] sm:$0xff] %v104
                %v106 = vld [vmem:[%s98 + $0x18] sm:$0xff]
                %107 = vst [vmem:[%s99 + $0x18] sm:$0xff] %v106
                %v108 = vld [vmem:[%s98 + $0x20] sm:$0xff]
                %109 = vst [vmem:[%s99 + $0x20] sm:$0xff] %v108
                %v110 = vld [vmem:[%s98 + $0x28] sm:$0xff]
                %111 = vst [vmem:[%s99 + $0x28] sm:$0xff] %v110
                %v112 = vld [vmem:[%s98 + $0x30] sm:$0xff]
                %113 = vst [vmem:[%s99 + $0x30] sm:$0xff] %v112
                %v114 = vld [vmem:[%s98 + $0x38] sm:$0xff]
                %115 = vst [vmem:[%s99 + $0x38] sm:$0xff] %v114
                %v116 = vld [vmem:[%s98 + $0x40] sm:$0xff]
                %117 = vst [vmem:[%s99 + $0x40] sm:$0xff] %v116
                %v118 = vld [vmem:[%s98 + $0x48] sm:$0xff]
                %119 = vst [vmem:[%s99 + $0x48] sm:$0xff] %v118
                %v120 = vld [vmem:[%s98 + $0xa0] sm:$0xff]
                %121 = vst [vmem:[%s99 + $0x50] sm:$0xff] %v120
                %v122 = vld [vmem:[%s98 + $0xa8] sm:$0xff]
                %123 = vst [vmem:[%s99 + $0x58] sm:$0xff] %v122
                %v124 = vld [vmem:[%s98 + $0xb0] sm:$0xff]
                %125 = vst [vmem:[%s99 + $0x60] sm:$0xff] %v124
                %v126 = vld [vmem:[%s98 + $0xb8] sm:$0xff]
                %127 = vst [vmem:[%s99 + $0x68] sm:$0xff] %v126
                %v128 = vld [vmem:[%s98 + $0xc0] sm:$0xff]
                %129 = vst [vmem:[%s99 + $0x70] sm:$0xff] %v128
                %v130 = vld [vmem:[%s98 + $0xc8] sm:$0xff]
                %131 = vst [vmem:[%s99 + $0x78] sm:$0xff] %v130
                %v132 = vld [vmem:[%s98 + $0xd0] sm:$0xff]
                %133 = vst [vmem:[%s99 + $0x80] sm:$0xff] %v132
                %v134 = vld [vmem:[%s98 + $0xd8] sm:$0xff]
                %135 = vst [vmem:[%s99 + $0x88] sm:$0xff] %v134
                %v136 = vld [vmem:[%s98 + $0xe0] sm:$0xff]
                %137 = vst [vmem:[%s99 + $0x90] sm:$0xff] %v136
                %v138 = vld [vmem:[%s98 + $0xe8] sm:$0xff]
                %139 = vst [vmem:[%s99 + $0x98] sm:$0xff] %v138
                %v140 = vld [vmem:[%s98 + $0x140] sm:$0xff]
                %141 = vst [vmem:[%s99 + $0xa0] sm:$0xff] %v140
                %v142 = vld [vmem:[%s98 + $0x148] sm:$0xff]
                %143 = vst [vmem:[%s99 + $0xa8] sm:$0xff] %v142
                %v144 = vld [vmem:[%s98 + $0x150] sm:$0xff]
                %145 = vst [vmem:[%s99 + $0xb0] sm:$0xff] %v144
                %v146 = vld [vmem:[%s98 + $0x158] sm:$0xff]
                %147 = vst [vmem:[%s99 + $0xb8] sm:$0xff] %v146
                %v148 = vld [vmem:[%s98 + $0x160] sm:$0xff]
                %149 = vst [vmem:[%s99 + $0xc0] sm:$0xff] %v148
                %v150 = vld [vmem:[%s98 + $0x168] sm:$0xff]
                %151 = vst [vmem:[%s99 + $0xc8] sm:$0xff] %v150
                %v152 = vld [vmem:[%s98 + $0x170] sm:$0xff]
                %153 = vst [vmem:[%s99 + $0xd0] sm:$0xff] %v152
                %v154 = vld [vmem:[%s98 + $0x178] sm:$0xff]
                %155 = vst [vmem:[%s99 + $0xd8] sm:$0xff] %v154
                %v156 = vld [vmem:[%s98 + $0x180] sm:$0xff]
                %157 = vst [vmem:[%s99 + $0xe0] sm:$0xff] %v156
                %v158 = vld [vmem:[%s98 + $0x188] sm:$0xff]
                %159 = vst [vmem:[%s99 + $0xe8] sm:$0xff] %v158
                %v160 = vld [vmem:[%s98 + $0x1e0] sm:$0xff]
                %161 = vst [vmem:[%s99 + $0xf0] sm:$0xff] %v160
                %v162 = vld [vmem:[%s98 + $0x1e8] sm:$0xff]
                %163 = vst [vmem:[%s99 + $0xf8] sm:$0xff] %v162
                %v164 = vld [vmem:[%s98 + $0x1f0] sm:$0xff]
                %165 = vst [vmem:[%s99 + $0x100] sm:$0xff] %v164
                %v166 = vld [vmem:[%s98 + $0x1f8] sm:$0xff]
                %167 = vst [vmem:[%s99 + $0x108] sm:$0xff] %v166
                %v168 = vld [vmem:[%s98 + $0x200] sm:$0xff]
                %169 = vst [vmem:[%s99 + $0x110] sm:$0xff] %v168
                %v170 = vld [vmem:[%s98 + $0x208] sm:$0xff]
                %171 = vst [vmem:[%s99 + $0x118] sm:$0xff] %v170
                %v172 = vld [vmem:[%s98 + $0x210] sm:$0xff]
                %173 = vst [vmem:[%s99 + $0x120] sm:$0xff] %v172
                %v174 = vld [vmem:[%s98 + $0x218] sm:$0xff]
                %175 = vst [vmem:[%s99 + $0x128] sm:$0xff] %v174
                %v176 = vld [vmem:[%s98 + $0x220] sm:$0xff]
                %177 = vst [vmem:[%s99 + $0x130] sm:$0xff] %v176
                %v178 = vld [vmem:[%s98 + $0x228] sm:$0xff]
                %179 = vst [vmem:[%s99 + $0x138] sm:$0xff] %v178
              $region33: #{siamrpn_forward.9} parent=27 // loop_footer
                %s97 = sadd.s32 1, %s93
              $region34: #{siamrpn_forward.9} parent=27 // loop_footer_branch
                %92 = sbr.rel target = $region30
              $region35: #{siamrpn_forward.9} parent=27 // loop_exit
                _
            $region28: #{siamrpn_forward.9} parent=23 // pred_fallthru
              _
            // Predicated region
            $region36: #{siamrpn_forward.9} parent=23 // pred_check
              _
            $region37: #{siamrpn_forward.9} parent=23 // pred_check_branch
              %181 = sbr.rel target = $region39
            $region38: #{siamrpn_forward.9} parent=23 // pred_region
              _
            $region39: #{siamrpn_forward.9} parent=23 // pred_fallthru
              _
          $region24: #{siamrpn_forward.9} parent=19 // pred_fallthru
            _
          %182 = vnop
        $region20: #{siamrpn_forward.9} parent=15 // pred_fallthru
          _
      $region16: #{siamrpn_forward.9} parent=5 // pred_fallthru
        _
      %p183 = scmp.le.s32.totalorder 1, %s7
      %p184 = scmp.lt.s32.totalorder %s7, 3
      %p185 = pnand %p183, %p184
      %p186 = pneg %p185
      // Predicated region
      $region40: #{siamrpn_forward.9} parent=5 // pred_check
        _
      $region41: #{siamrpn_forward.9} parent=5 // pred_check_branch
        %188 = sbr.rel (%p185) target = $region43
      $region42: #{siamrpn_forward.9} parent=5 // pred_region
        %s189 = ssub.s32 %s7, 1
        %s190 = sand.u32 %s20, 1
        %s191 = sand.u32 %s20, 1
        %s192 = smul.addr %s191, 320
        %s193 = scalar_lea.vmem [#allocation2], %s192
        // Predicated region
        $region44: #{siamrpn_forward.9} parent=42 // pred_check
          %p194 = pneg %p33
        $region45: #{siamrpn_forward.9} parent=42 // pred_check_branch
          %196 = sbr.rel (%p194) target = $region47
        $region46: #{siamrpn_forward.9} parent=42 // pred_region
          _
        $region47: #{siamrpn_forward.9} parent=42 // pred_fallthru
          _
        %s197 = sand.u32 %s20, 1
        %s198 = sand.u32 %s20, 1
        %s199 = smul.addr %s198, 320
        %s200 = scalar_lea.vmem [#allocation2], %s199
        %p201 = pneg %p33
        %p202 = pneg %p30
        %p203 = pneg %p59
        %p204 = pneg %p56
        %p205 = scmp.lt.s32.totalorder %s12, 1
        %s206 = scalar_select %p205, %s12, 1
        %s207 = smul.addr %s206, 9
        %s208 = smul.addr %s207, 8
        %s209 = scalar_lea.vmem %s1, %s208
        %p210 = scmp.lt.s32.totalorder %s12, 1
        %s211 = scalar_select %p210, %s12, 1
        %s212 = smul.addr %s211, 9
        %s213 = smul.addr %s212, 8
        %s214 = scalar_lea.vmem %s1, %s213
        %v215 = vld [vmem:[%s193] sm:$0xff]
        %v216 = vld [vmem:[%s193 + $0x8] sm:$0xff]
        %v217 = vld [vmem:[%s193 + $0x10] sm:$0xff]
        %v218 = vld [vmem:[%s193 + $0x18] sm:$0xff]
        %v219 = vld [vmem:[%s193 + $0x20] sm:$0xff]
        %v220 = vld [vmem:[%s193 + $0x28] sm:$0xff]
        %v221 = vld [vmem:[%s193 + $0x30] sm:$0xff]
        %v222 = vld [vmem:[%s193 + $0x38] sm:$0xff]
        %v223 = vld [vmem:[%s193 + $0x40] sm:$0xff]
        %s224 = scalar_lea.vmem %s193, 80 [#allocation2]
        %v225 = vld [vmem:[%s224] sm:$0xff]
        %v226 = vld [vmem:[%s224 + $0x8] sm:$0xff]
        %v227 = vld [vmem:[%s224 + $0x10] sm:$0xff]
        %v228 = vld [vmem:[%s224 + $0x18] sm:$0xff]
        %v229 = vld [vmem:[%s224 + $0x20] sm:$0xff]
        %v230 = vld [vmem:[%s224 + $0x28] sm:$0xff]
        %v231 = vld [vmem:[%s224 + $0x30] sm:$0xff]
        %v232 = vld [vmem:[%s224 + $0x38] sm:$0xff]
        %v233 = vld [vmem:[%s224 + $0x40] sm:$0xff]
        %v234 = vmax.f32 %v215, %v225
        %v235 = vmax.f32 %v216, %v226
        %v236 = vmax.f32 %v217, %v227
        %v237 = vmax.f32 %v218, %v228
        %v238 = vmax.f32 %v219, %v229
        %v239 = vmax.f32 %v220, %v230
        %v240 = vmax.f32 %v221, %v231
        %v241 = vmax.f32 %v222, %v232
        %v242 = vmax.f32 %v223, %v233
        %v243 = vld [vmem:[%s193 + $0x48] sm:$0xff]
        %254 = vrot.lane.b32.xlu0 %v215, 127
        %v255 = vpop.permute.xlu0 %254
        %256 = vrot.lane.b32.xlu0 %v216, 127
        %v257 = vpop.permute.xlu0 %256
        %258 = vrot.lane.b32.xlu0 %v217, 127
        %v259 = vpop.permute.xlu0 %258
        %260 = vrot.lane.b32.xlu0 %v218, 127
        %v261 = vpop.permute.xlu0 %260
        %262 = vrot.lane.b32.xlu0 %v219, 127
        %v263 = vpop.permute.xlu0 %262
        %264 = vrot.lane.b32.xlu0 %v220, 127
        %v265 = vpop.permute.xlu0 %264
        %266 = vrot.lane.b32.xlu0 %v221, 127
        %v267 = vpop.permute.xlu0 %266
        %268 = vrot.lane.b32.xlu0 %v222, 127
        %v269 = vpop.permute.xlu0 %268
        %270 = vrot.lane.b32.xlu0 %v223, 127
        %v271 = vpop.permute.xlu0 %270
        %272 = vrot.lane.b32.xlu0 %v243, 127
        %v273 = vpop.permute.xlu0 %272
        %vm274 = vcmask 1039360
        %v275 = vsel %vm274, %v255, %v257
        %v276 = vsel %vm274, %v257, %v259
        %v277 = vsel %vm274, %v259, %v261
        %v278 = vsel %vm274, %v261, %v263
        %v279 = vsel %vm274, %v263, %v265
        %v280 = vsel %vm274, %v265, %v267
        %v281 = vsel %vm274, %v267, %v269
        %v282 = vsel %vm274, %v269, %v271
        %v283 = vsel %vm274, %v271, %v273
        %v293 = vmax.f32 %v234, %v275
        %v294 = vmax.f32 %v235, %v276
        %v295 = vmax.f32 %v236, %v277
        %v296 = vmax.f32 %v237, %v278
        %v297 = vmax.f32 %v238, %v279
        %v298 = vmax.f32 %v239, %v280
        %v299 = vmax.f32 %v240, %v281
        %v300 = vmax.f32 %v241, %v282
        %v301 = vmax.f32 %v242, %v283
        %s302 = scalar_lea.vmem %s193, 160 [#allocation2]
        %v303 = vld [vmem:[%s302] sm:$0xff]
        %v304 = vld [vmem:[%s302 + $0x8] sm:$0xff]
        %v305 = vld [vmem:[%s302 + $0x10] sm:$0xff]
        %v306 = vld [vmem:[%s302 + $0x18] sm:$0xff]
        %v307 = vld [vmem:[%s302 + $0x20] sm:$0xff]
        %v308 = vld [vmem:[%s302 + $0x28] sm:$0xff]
        %v309 = vld [vmem:[%s302 + $0x30] sm:$0xff]
        %v310 = vld [vmem:[%s302 + $0x38] sm:$0xff]
        %v311 = vld [vmem:[%s302 + $0x40] sm:$0xff]
        %v312 = vmax.f32 %v293, %v303
        %v313 = vmax.f32 %v294, %v304
        %v314 = vmax.f32 %v295, %v305
        %v315 = vmax.f32 %v296, %v306
        %v316 = vmax.f32 %v297, %v307
        %v317 = vmax.f32 %v298, %v308
        %v318 = vmax.f32 %v299, %v309
        %v319 = vmax.f32 %v300, %v310
        %v320 = vmax.f32 %v301, %v311
        %s321 = scalar_lea.vmem %s193, 240 [#allocation2]
        %v322 = vld [vmem:[%s321] sm:$0xff]
        %v323 = vld [vmem:[%s321 + $0x8] sm:$0xff]
        %v324 = vld [vmem:[%s321 + $0x10] sm:$0xff]
        %v325 = vld [vmem:[%s321 + $0x18] sm:$0xff]
        %v326 = vld [vmem:[%s321 + $0x20] sm:$0xff]
        %v327 = vld [vmem:[%s321 + $0x28] sm:$0xff]
        %v328 = vld [vmem:[%s321 + $0x30] sm:$0xff]
        %v329 = vld [vmem:[%s321 + $0x38] sm:$0xff]
        %v330 = vld [vmem:[%s321 + $0x40] sm:$0xff]
        %v331 = vmax.f32 %v312, %v322
        %v332 = vmax.f32 %v313, %v323
        %v333 = vmax.f32 %v314, %v324
        %v334 = vmax.f32 %v315, %v325
        %v335 = vmax.f32 %v316, %v326
        %v336 = vmax.f32 %v317, %v327
        %v337 = vmax.f32 %v318, %v328
        %v338 = vmax.f32 %v319, %v329
        %v339 = vmax.f32 %v320, %v330
        %v340 = vld [vmem:[%s302 + $0x48] sm:$0xff]
        %351 = vrot.lane.b32.xlu0 %v303, 127
        %v352 = vpop.permute.xlu0 %351
        %353 = vrot.lane.b32.xlu0 %v304, 127
        %v354 = vpop.permute.xlu0 %353
        %355 = vrot.lane.b32.xlu0 %v305, 127
        %v356 = vpop.permute.xlu0 %355
        %357 = vrot.lane.b32.xlu0 %v306, 127
        %v358 = vpop.permute.xlu0 %357
        %359 = vrot.lane.b32.xlu0 %v307, 127
        %v360 = vpop.permute.xlu0 %359
        %361 = vrot.lane.b32.xlu0 %v308, 127
        %v362 = vpop.permute.xlu0 %361
        %363 = vrot.lane.b32.xlu0 %v309, 127
        %v364 = vpop.permute.xlu0 %363
        %365 = vrot.lane.b32.xlu0 %v310, 127
        %v366 = vpop.permute.xlu0 %365
        %367 = vrot.lane.b32.xlu0 %v311, 127
        %v368 = vpop.permute.xlu0 %367
        %369 = vrot.lane.b32.xlu0 %v340, 127
        %v370 = vpop.permute.xlu0 %369
        %v371 = vsel %vm274, %v352, %v354
        %v372 = vsel %vm274, %v354, %v356
        %v373 = vsel %vm274, %v356, %v358
        %v374 = vsel %vm274, %v358, %v360
        %v375 = vsel %vm274, %v360, %v362
        %v376 = vsel %vm274, %v362, %v364
        %v377 = vsel %vm274, %v364, %v366
        %v378 = vsel %vm274, %v366, %v368
        %v379 = vsel %vm274, %v368, %v370
        %v389 = vmax.f32 %v331, %v371
        %v390 = vmax.f32 %v332, %v372
        %v391 = vmax.f32 %v333, %v373
        %v392 = vmax.f32 %v334, %v374
        %v393 = vmax.f32 %v335, %v375
        %v394 = vmax.f32 %v336, %v376
        %v395 = vmax.f32 %v337, %v377
        %v396 = vmax.f32 %v338, %v378
        %v397 = vmax.f32 %v339, %v379
        %398 = vrot.lane.b32.xlu0 %v215, 94
        %v399 = vpop.permute.xlu0 %398
        %400 = vrot.lane.b32.xlu0 %v216, 94
        %v401 = vpop.permute.xlu0 %400
        %402 = vrot.lane.b32.xlu0 %v217, 94
        %v403 = vpop.permute.xlu0 %402
        %404 = vrot.lane.b32.xlu0 %v218, 94
        %v405 = vpop.permute.xlu0 %404
        %406 = vrot.lane.b32.xlu0 %v219, 94
        %v407 = vpop.permute.xlu0 %406
        %408 = vrot.lane.b32.xlu0 %v220, 94
        %v409 = vpop.permute.xlu0 %408
        %410 = vrot.lane.b32.xlu0 %v221, 94
        %v411 = vpop.permute.xlu0 %410
        %412 = vrot.lane.b32.xlu0 %v222, 94
        %v413 = vpop.permute.xlu0 %412
        %414 = vrot.lane.b32.xlu0 %v223, 94
        %v415 = vpop.permute.xlu0 %414
        %416 = vrot.lane.b32.xlu0 %v243, 94
        %v417 = vpop.permute.xlu0 %416
        %vm418 = vcmask 769024
        %v419 = vsel %vm418, %v399, %v401
        %v420 = vsel %vm418, %v401, %v403
        %v421 = vsel %vm418, %v403, %v405
        %v422 = vsel %vm418, %v405, %v407
        %v423 = vsel %vm418, %v407, %v409
        %v424 = vsel %vm418, %v409, %v411
        %v425 = vsel %vm418, %v411, %v413
        %v426 = vsel %vm418, %v413, %v415
        %v427 = vsel %vm418, %v415, %v417
        %v437 = vmax.f32 %v389, %v419
        %v438 = vmax.f32 %v390, %v420
        %v439 = vmax.f32 %v391, %v421
        %v440 = vmax.f32 %v392, %v422
        %v441 = vmax.f32 %v393, %v423
        %v442 = vmax.f32 %v394, %v424
        %v443 = vmax.f32 %v395, %v425
        %v444 = vmax.f32 %v396, %v426
        %v445 = vmax.f32 %v397, %v427
        %v446 = vld [vmem:[%s224 + $0x48] sm:$0xff]
        %457 = vrot.lane.b32.xlu0 %v225, 94
        %v458 = vpop.permute.xlu0 %457
        %459 = vrot.lane.b32.xlu0 %v226, 94
        %v460 = vpop.permute.xlu0 %459
        %461 = vrot.lane.b32.xlu0 %v227, 94
        %v462 = vpop.permute.xlu0 %461
        %463 = vrot.lane.b32.xlu0 %v228, 94
        %v464 = vpop.permute.xlu0 %463
        %465 = vrot.lane.b32.xlu0 %v229, 94
        %v466 = vpop.permute.xlu0 %465
        %467 = vrot.lane.b32.xlu0 %v230, 94
        %v468 = vpop.permute.xlu0 %467
        %469 = vrot.lane.b32.xlu0 %v231, 94
        %v470 = vpop.permute.xlu0 %469
        %471 = vrot.lane.b32.xlu0 %v232, 94
        %v472 = vpop.permute.xlu0 %471
        %473 = vrot.lane.b32.xlu0 %v233, 94
        %v474 = vpop.permute.xlu0 %473
        %475 = vrot.lane.b32.xlu0 %v446, 94
        %v476 = vpop.permute.xlu0 %475
        %v477 = vsel %vm418, %v458, %v460
        %v478 = vsel %vm418, %v460, %v462
        %v479 = vsel %vm418, %v462, %v464
        %v480 = vsel %vm418, %v464, %v466
        %v481 = vsel %vm418, %v466, %v468
        %v482 = vsel %vm418, %v468, %v470
        %v483 = vsel %vm418, %v470, %v472
        %v484 = vsel %vm418, %v472, %v474
        %v485 = vsel %vm418, %v474, %v476
        %v495 = vmax.f32 %v437, %v477
        %v496 = vmax.f32 %v438, %v478
        %v497 = vmax.f32 %v439, %v479
        %v498 = vmax.f32 %v440, %v480
        %v499 = vmax.f32 %v441, %v481
        %v500 = vmax.f32 %v442, %v482
        %v501 = vmax.f32 %v443, %v483
        %v502 = vmax.f32 %v444, %v484
        %v503 = vmax.f32 %v445, %v485
        %504 = vrot.lane.b32.xlu0 %v215, 93
        %v505 = vpop.permute.xlu0 %504
        %506 = vrot.lane.b32.xlu0 %v216, 93
        %v507 = vpop.permute.xlu0 %506
        %508 = vrot.lane.b32.xlu0 %v217, 93
        %v509 = vpop.permute.xlu0 %508
        %510 = vrot.lane.b32.xlu0 %v218, 93
        %v511 = vpop.permute.xlu0 %510
        %512 = vrot.lane.b32.xlu0 %v219, 93
        %v513 = vpop.permute.xlu0 %512
        %514 = vrot.lane.b32.xlu0 %v220, 93
        %v515 = vpop.permute.xlu0 %514
        %516 = vrot.lane.b32.xlu0 %v221, 93
        %v517 = vpop.permute.xlu0 %516
        %518 = vrot.lane.b32.xlu0 %v222, 93
        %v519 = vpop.permute.xlu0 %518
        %520 = vrot.lane.b32.xlu0 %v223, 93
        %v521 = vpop.permute.xlu0 %520
        %522 = vrot.lane.b32.xlu0 %v243, 93
        %v523 = vpop.permute.xlu0 %522
        %vm524 = vcmask 760832
        %v525 = vsel %vm524, %v505, %v507
        %v526 = vsel %vm524, %v507, %v509
        %v527 = vsel %vm524, %v509, %v511
        %v528 = vsel %vm524, %v511, %v513
        %v529 = vsel %vm524, %v513, %v515
        %v530 = vsel %vm524, %v515, %v517
        %v531 = vsel %vm524, %v517, %v519
        %v532 = vsel %vm524, %v519, %v521
        %v533 = vsel %vm524, %v521, %v523
        %v543 = vmax.f32 %v495, %v525
        %v544 = vmax.f32 %v496, %v526
        %v545 = vmax.f32 %v497, %v527
        %v546 = vmax.f32 %v498, %v528
        %v547 = vmax.f32 %v499, %v529
        %v548 = vmax.f32 %v500, %v530
        %v549 = vmax.f32 %v501, %v531
        %v550 = vmax.f32 %v502, %v532
        %v551 = vmax.f32 %v503, %v533
        %552 = vst [vmem:[%s214] sm:$0xff] %v543
        %553 = vst [vmem:[%s214 + $0x8] sm:$0xff] %v544
        %554 = vst [vmem:[%s214 + $0x10] sm:$0xff] %v545
        %555 = vst [vmem:[%s214 + $0x18] sm:$0xff] %v546
        %556 = vst [vmem:[%s214 + $0x20] sm:$0xff] %v547
        %557 = vst [vmem:[%s214 + $0x28] sm:$0xff] %v548
        %558 = vst [vmem:[%s214 + $0x30] sm:$0xff] %v549
        %559 = vst [vmem:[%s214 + $0x38] sm:$0xff] %v550
        %560 = vst [vmem:[%s214 + $0x40] sm:$0xff] %v551
        %p561 = scmp.lt.s32.totalorder %s12, 1
        %s562 = scalar_select %p561, %s12, 1
        %s563 = smul.addr %s562, 9
        %s564 = smul.addr %s563, 8
        %s565 = scalar_lea.vmem %s1, %s564
        // Predicated region
        $region48: #{siamrpn_forward.9} parent=42 // pred_check
          %p566 = pneg %p56
        $region49: #{siamrpn_forward.9} parent=42 // pred_check_branch
          %568 = sbr.rel (%p566) target = $region51
        $region50: #{siamrpn_forward.9} parent=42 // pred_region
          _
        $region51: #{siamrpn_forward.9} parent=42 // pred_fallthru
          _
      $region43: #{siamrpn_forward.9} parent=5 // pred_fallthru
        _
      %p569 = scmp.le.s32.totalorder 2, %s7
      // Predicated region
      $region52: #{siamrpn_forward.9} parent=5 // pred_check
        %p570 = pneg %p569
      $region53: #{siamrpn_forward.9} parent=5 // pred_check_branch
        %572 = sbr.rel (%p570) target = $region55
      $region54: #{siamrpn_forward.9} parent=5 // pred_region
        %s573 = ssub.s32 %s7, 2
        // Predicated region
        $region56: #{siamrpn_forward.9} parent=54 // pred_check
          %p574 = pneg %p62
        $region57: #{siamrpn_forward.9} parent=54 // pred_check_branch
          %576 = sbr.rel (%p574) target = $region59
        $region58: #{siamrpn_forward.9} parent=54 // pred_region
          %p577 = scmp.lt.s32.totalorder %s13, 1
          %s578 = scalar_select %p577, %s13, 1
          %s579 = smul.addr %s578, 9
          %s580 = smul.addr %s579, 8
          %s581 = scalar_lea.vmem %s1, %s580
        $region59: #{siamrpn_forward.9} parent=54 // pred_fallthru
          _
      $region55: #{siamrpn_forward.9} parent=5 // pred_fallthru
        _
    $region6: #{siamrpn_forward.9} parent=1 // loop_footer
      %s11 = sadd.s32 1, %s7
    $region7: #{siamrpn_forward.9} parent=1 // loop_footer_branch
      %6 = sbr.rel target = $region3
    $region8: #{siamrpn_forward.9} parent=1 // loop_exit
      _

// kernel: siamrpn_forward.10
$region0: #{siamrpn_forward.10}
  #allocation0 [shape = 'u32[]', space=smem, size = 0x4, offset = 0x4, fixed_abs, tag = 'smem constant byte address 0x4 - core index']
  #allocation1 [shape = 'u32[144,128]{1,0:T(1,128)}', space=vmem, size = 0x12000, scoped, tag = 'internal scratch']
  %s0 = inlined_call_operand.vmem [shape: bf16[2,8,1536], index: 0, kind: input, shape index: {}, may-alias: {0,1}]
  %s1 = inlined_call_operand.vmem [shape: bf16[2,8,1536], index: 1, kind: input, shape index: {}, may-alias: {0,1}]
  %s2 = inlined_call_operand.vmem [shape: bf16[16,200], index: 2, kind: input, shape index: {}]
  %s3 = inlined_call_operand.vmem [shape: f32[16,1], index: 3, kind: input, shape index: {}]
  %s4 = inlined_call_operand.vmem [shape: f32[16,1], index: 4, kind: input, shape index: {}]
  %s5 = inlined_call_operand.vmem [shape: f32[2,16,1024], index: 5, kind: output, shape index: {}]
  %s6 = sld [smem:[#allocation0]]
  $region72: #{siamrpn_forward.10} parent=0
    _
  %s8 = ssub.s32 1, %s6
  %s9 = scalar_select 0, %s8, %s6
  $region1: #{siamrpn_forward.10} parent=0
    #allocation2 [shape = 'u8[65536]{0}', space=vmem, size = 0x10000, scoped, tag = 'output window, operand 0']
    loop: start=0, step=1, limit=6
    $region2: #{siamrpn_forward.10} parent=1 // loop_pre_header
      _
    $region3: #{siamrpn_forward.10} parent=1 // loop_header
      %s11 = sphi 0, %s15
      %p12 = scmp.ge.s32.totalorder %s11, 6
      %s18 = sphi 0, %s30
      %s19 = sphi 0, %s26
      %s20 = sphi 0, %s18
      %s21 = sphi 0, %s19
      %s22 = sphi 0, %s20
      %s23 = sphi 0, %s21
      %s35 = sphi 0, %s37
      %s38 = sphi 0, %s35
      %s39 = sphi 0, %s38
      %s55 = sphi 0, %s39
      %s65 = sphi 0, %s67
      %s68 = sphi 0, %s65
      %s69 = sphi 0, %s68
      %s85 = sphi 0, %s69
      %s89 = sphi 0, %s89
      %s91 = sphi 0, %s89
      %s92 = sphi 0, %s91
      %s106 = sphi 0, %s92
      %s110 = sphi 0, %s110
      %s112 = sphi 0, %s110
      %s113 = sphi 0, %s112
      %s127 = sphi 0, %s113
      %s131 = sphi 0, %s131
      %s133 = sphi 0, %s131
      %s134 = sphi 0, %s133
      %s148 = sphi 0, %s134
      %s156 = sphi 0, %s158
      %s159 = sphi 0, %s156
      %s160 = sphi 0, %s159
      %s176 = sphi 0, %s160
    $region4: #{siamrpn_forward.10} parent=1 // loop_header_branch
      %14 = sbr.rel (%p12) target = $region8
    $region5: #{siamrpn_forward.10} parent=1 // loop_body
      %s16 = ssub.s32 %s11, 1
      %s17 = ssub.s32 %s11, 2
      %s24 = sadd.s32 1, %s19
      %p25 = scmp.ge.s32.totalorder %s24, 2
      %s26 = scalar_select %p25, 0, %s24
      %s27 = sadd.s32 1, %s18
      %s28 = scalar_select %p25, %s27, %s18
      %p29 = scmp.ge.s32.totalorder %s28, 2
      %s30 = scalar_select %p29, 0, %s28
      %s31 = ssub.s32 %s18, %s30
      %s32 = ssub.s32 %s19, %s26
      %s33 = sor.u32 %s31, %s32
      %p34 = scmp.eq.s32.totalorder %s33, 0
      %s36 = sadd.s32 %s35, 1
      %s37 = scalar_select %p34, %s35, %s36
      %p40 = pneg %p34
      %p41 = scmp.eq.s32.totalorder %s11, 3
      %p42 = por %p40, %p41
      %p43 = scmp.ne.s32.totalorder %s35, %s38
      %p44 = scmp.eq.s32.totalorder %s11, 0
      %p45 = por %p43, %p44
      %p46 = scmp.ne.s32.totalorder %s35, %s38
      %p47 = scmp.eq.s32.totalorder %s16, 3
      %p48 = por %p46, %p47
      %p49 = scmp.ne.s32.totalorder %s38, %s39
      %p50 = scmp.eq.s32.totalorder %s16, 0
      %p51 = por %p49, %p50
      %p52 = scmp.ne.s32.totalorder %s38, %s39
      %p53 = scmp.eq.s32.totalorder %s17, 3
      %p54 = por %p52, %p53
      %p56 = scmp.ne.s32.totalorder %s39, %s55
      %p57 = scmp.eq.s32.totalorder %s17, 0
      %p58 = por %p56, %p57
      %s59 = sadd.s32 %s19, 1
      %s60 = sadd.s32 %s26, 1
      %s61 = ssub.s32 %s18, %s30
      %s62 = ssub.s32 %s59, %s60
      %s63 = sor.u32 %s61, %s62
      %p64 = scmp.eq.s32.totalorder %s63, 0
      %s66 = sadd.s32 %s65, 1
      %s67 = scalar_select %p64, %s65, %s66
      %p70 = pneg %p64
      %p71 = scmp.eq.s32.totalorder %s11, 3
      %p72 = por %p70, %p71
      %p73 = scmp.ne.s32.totalorder %s65, %s68
      %p74 = scmp.eq.s32.totalorder %s11, 0
      %p75 = por %p73, %p74
      %p76 = scmp.ne.s32.totalorder %s65, %s68
      %p77 = scmp.eq.s32.totalorder %s16, 3
      %p78 = por %p76, %p77
      %p79 = scmp.ne.s32.totalorder %s68, %s69
      %p80 = scmp.eq.s32.totalorder %s16, 0
      %p81 = por %p79, %p80
      %p82 = scmp.ne.s32.totalorder %s68, %s69
      %p83 = scmp.eq.s32.totalorder %s17, 3
      %p84 = por %p82, %p83
      %p86 = scmp.ne.s32.totalorder %s69, %s85
      %p87 = scmp.eq.s32.totalorder %s17, 0
      %p88 = por %p86, %p87
      %s90 = sadd.s32 %s89, 1
      %p93 = scmp.eq.s32.totalorder %s11, 3
      %p94 = scmp.ne.s32.totalorder %s89, %s91
      %p95 = scmp.eq.s32.totalorder %s11, 0
      %p96 = por %p94, %p95
      %p97 = scmp.ne.s32.totalorder %s89, %s91
      %p98 = scmp.eq.s32.totalorder %s16, 3
      %p99 = por %p97, %p98
      %p100 = scmp.ne.s32.totalorder %s91, %s92
      %p101 = scmp.eq.s32.totalorder %s16, 0
      %p102 = por %p100, %p101
      %p103 = scmp.ne.s32.totalorder %s91, %s92
      %p104 = scmp.eq.s32.totalorder %s17, 3
      %p105 = por %p103, %p104
      %p107 = scmp.ne.s32.totalorder %s92, %s106
      %p108 = scmp.eq.s32.totalorder %s17, 0
      %p109 = por %p107, %p108
      %s111 = sadd.s32 %s110, 1
      %p114 = scmp.eq.s32.totalorder %s11, 3
      %p115 = scmp.ne.s32.totalorder %s110, %s112
      %p116 = scmp.eq.s32.totalorder %s11, 0
      %p117 = por %p115, %p116
      %p118 = scmp.ne.s32.totalorder %s110, %s112
      %p119 = scmp.eq.s32.totalorder %s16, 3
      %p120 = por %p118, %p119
      %p121 = scmp.ne.s32.totalorder %s112, %s113
      %p122 = scmp.eq.s32.totalorder %s16, 0
      %p123 = por %p121, %p122
      %p124 = scmp.ne.s32.totalorder %s112, %s113
      %p125 = scmp.eq.s32.totalorder %s17, 3
      %p126 = por %p124, %p125
      %p128 = scmp.ne.s32.totalorder %s113, %s127
      %p129 = scmp.eq.s32.totalorder %s17, 0
      %p130 = por %p128, %p129
      %s132 = sadd.s32 %s131, 1
      %p135 = scmp.eq.s32.totalorder %s11, 3
      %p136 = scmp.ne.s32.totalorder %s131, %s133
      %p137 = scmp.eq.s32.totalorder %s11, 0
      %p138 = por %p136, %p137
      %p139 = scmp.ne.s32.totalorder %s131, %s133
      %p140 = scmp.eq.s32.totalorder %s16, 3
      %p141 = por %p139, %p140
      %p142 = scmp.ne.s32.totalorder %s133, %s134
      %p143 = scmp.eq.s32.totalorder %s16, 0
      %p144 = por %p142, %p143
      %p145 = scmp.ne.s32.totalorder %s133, %s134
      %p146 = scmp.eq.s32.totalorder %s17, 3
      %p147 = por %p145, %p146
      %p149 = scmp.ne.s32.totalorder %s134, %s148
      %p150 = scmp.eq.s32.totalorder %s17, 0
      %p151 = por %p149, %p150
      %s152 = ssub.s32 %s18, %s30
      %s153 = ssub.s32 %s19, %s26
      %s154 = sor.u32 %s152, %s153
      %p155 = scmp.eq.s32.totalorder %s154, 0
      %s157 = sadd.s32 %s156, 1
      %s158 = scalar_select %p155, %s156, %s157
      %p161 = pneg %p155
      %p162 = scmp.eq.s32.totalorder %s11, 3
      %p163 = por %p161, %p162
      %p164 = scmp.ne.s32.totalorder %s156, %s159
      %p165 = scmp.eq.s32.totalorder %s11, 0
      %p166 = por %p164, %p165
      %p167 = scmp.ne.s32.totalorder %s156, %s159
      %p168 = scmp.eq.s32.totalorder %s16, 3
      %p169 = por %p167, %p168
      %p170 = scmp.ne.s32.totalorder %s159, %s160
      %p171 = scmp.eq.s32.totalorder %s16, 0
      %p172 = por %p170, %p171
      %p173 = scmp.ne.s32.totalorder %s159, %s160
      %p174 = scmp.eq.s32.totalorder %s17, 3
      %p175 = por %p173, %p174
      %p177 = scmp.ne.s32.totalorder %s160, %s176
      %p178 = scmp.eq.s32.totalorder %s17, 0
      %p179 = por %p177, %p178
      %p180 = scmp.le.s32.totalorder 1, %s11
      %p181 = scmp.lt.s32.totalorder %s11, 5
      %p182 = pnand %p180, %p181
      %p183 = pneg %p182
      // Predicated region
      $region9: #{siamrpn_forward.10} parent=5 // pred_check
        _
      $region10: #{siamrpn_forward.10} parent=5 // pred_check_branch
        %185 = sbr.rel (%p182) target = $region12
      $region11: #{siamrpn_forward.10} parent=5 // pred_region
        %s186 = ssub.s32 %s11, 1
        // Predicated region
        $region13: #{siamrpn_forward.10} parent=11 // pred_check
          %p187 = pneg %p102
        $region14: #{siamrpn_forward.10} parent=11 // pred_check_branch
          %189 = sbr.rel (%p187) target = $region16
        $region15: #{siamrpn_forward.10} parent=11 // pred_region
          _
        $region16: #{siamrpn_forward.10} parent=11 // pred_fallthru
          _
        // Predicated region
        $region17: #{siamrpn_forward.10} parent=11 // pred_check
          %p190 = pneg %p123
        $region18: #{siamrpn_forward.10} parent=11 // pred_check_branch
          %192 = sbr.rel (%p190) target = $region20
        $region19: #{siamrpn_forward.10} parent=11 // pred_region
          _
        $region20: #{siamrpn_forward.10} parent=11 // pred_fallthru
          _
        // Predicated region
        $region21: #{siamrpn_forward.10} parent=11 // pred_check
          %p193 = pneg %p144
        $region22: #{siamrpn_forward.10} parent=11 // pred_check_branch
          %195 = sbr.rel (%p193) target = $region24
        $region23: #{siamrpn_forward.10} parent=11 // pred_region
          _
        $region24: #{siamrpn_forward.10} parent=11 // pred_fallthru
          _
      $region12: #{siamrpn_forward.10} parent=5 // pred_fallthru
        _
      %p196 = scmp.lt.s32.totalorder %s11, 4
      // Predicated region
      $region25: #{siamrpn_forward.10} parent=5 // pred_check
        %p197 = pneg %p196
      $region26: #{siamrpn_forward.10} parent=5 // pred_check_branch
        %199 = sbr.rel (%p197) target = $region28
      $region27: #{siamrpn_forward.10} parent=5 // pred_region
        // Predicated region
        $region29: #{siamrpn_forward.10} parent=27 // pred_check
          %p200 = pneg %p45
        $region30: #{siamrpn_forward.10} parent=27 // pred_check_branch
          %202 = sbr.rel (%p200) target = $region32
        $region31: #{siamrpn_forward.10} parent=27 // pred_region
          %s203 = smul.u32 4, %s19
          %p204 = scmp.lt.s32.totalorder %s18, 1
          %s205 = scalar_select %p204, %s18, 1
          %p206 = scmp.lt.s32.totalorder %s203, 11
          %s207 = scalar_select %p206, %s203, 11
          %s208 = smul.addr %s205, 12
          %s209 = sadd.s32 %s207, %s208
          %s210 = smul.addr %s209, 4
          %s211 = scalar_lea.vmem %s0, %s210
          %s212 = smul.u32 4, %s19
        $region32: #{siamrpn_forward.10} parent=27 // pred_fallthru
          _
        // Predicated region
        $region33: #{siamrpn_forward.10} parent=27 // pred_check
          %p213 = pneg %p75
        $region34: #{siamrpn_forward.10} parent=27 // pred_check_branch
          %215 = sbr.rel (%p213) target = $region36
        $region35: #{siamrpn_forward.10} parent=27 // pred_region
          %s216 = sadd.s32 %s19, 1
          %s217 = smul.u32 4, %s216
          %p218 = scmp.lt.s32.totalorder %s18, 1
          %s219 = scalar_select %p218, %s18, 1
          %p220 = scmp.lt.s32.totalorder %s217, 11
          %s221 = scalar_select %p220, %s217, 11
          %s222 = smul.addr %s219, 12
          %s223 = sadd.s32 %s221, %s222
          %s224 = smul.addr %s223, 4
          %s225 = scalar_lea.vmem %s1, %s224
          %s226 = sadd.s32 %s19, 1
          %s227 = smul.u32 4, %s226
        $region36: #{siamrpn_forward.10} parent=27 // pred_fallthru
          _
      $region28: #{siamrpn_forward.10} parent=5 // pred_fallthru
        _
      %p228 = scmp.le.s32.totalorder 1, %s11
      %p229 = scmp.lt.s32.totalorder %s11, 5
      %p230 = pnand %p228, %p229
      %p231 = pneg %p230
      // Predicated region
      $region37: #{siamrpn_forward.10} parent=5 // pred_check
        _
      $region38: #{siamrpn_forward.10} parent=5 // pred_check_branch
        %233 = sbr.rel (%p230) target = $region40
      $region39: #{siamrpn_forward.10} parent=5 // pred_region
        %s234 = ssub.s32 %s11, 1
        %s235 = smul.u32 4, %s21
        %p236 = scmp.lt.s32.totalorder %s20, 1
        %s237 = scalar_select %p236, %s20, 1
        %p238 = scmp.lt.s32.totalorder %s235, 11
        %s239 = scalar_select %p238, %s235, 11
        %s240 = smul.addr %s237, 12
        %s241 = sadd.s32 %s239, %s240
        %s242 = smul.addr %s241, 4
        %s243 = scalar_lea.vmem %s0, %s242
        %p244 = pneg %p51
        %p245 = pneg %p48
        %s246 = sadd.s32 %s21, 1
        %s247 = smul.u32 4, %s246
        %p248 = scmp.lt.s32.totalorder %s20, 1
        %s249 = scalar_select %p248, %s20, 1
        %p250 = scmp.lt.s32.totalorder %s247, 11
        %s251 = scalar_select %p250, %s247, 11
        %s252 = smul.addr %s249, 12
        %s253 = sadd.s32 %s251, %s252
        %s254 = smul.addr %s253, 4
        %s255 = scalar_lea.vmem %s1, %s254
        %p256 = pneg %p81
        %p257 = pneg %p78
        %p258 = pneg %p102
        %p259 = pneg %p99
        %p260 = pneg %p123
        %p261 = pneg %p120
        %p262 = pneg %p144
        %p263 = pneg %p141
        %p264 = pneg %p172
        %p265 = pneg %p169
        %s266 = sand.u32 %s159, 1
        %s267 = sand.u32 %s159, 1
        %s268 = smul.addr %s267, 64
        %s269 = scalar_lea.vmem [#allocation2], %s268
        %s270 = smul.u32 4, %s21
        %p271 = scmp.lt.s32.totalorder %s20, 1
        %s272 = scalar_select %p271, %s20, 1
        %p273 = scmp.lt.s32.totalorder %s270, 11
        %s274 = scalar_select %p273, %s270, 11
        %s275 = smul.addr %s272, 12
        %s276 = sadd.s32 %s274, %s275
        %s277 = smul.addr %s276, 4
        %s278 = scalar_lea.vmem %s0, %s277
        %s279 = smul.u32 4, %s21
        %s280 = sadd.s32 %s21, 1
        %s281 = smul.u32 4, %s280
        %p282 = scmp.lt.s32.totalorder %s20, 1
        %s283 = scalar_select %p282, %s20, 1
        %p284 = scmp.lt.s32.totalorder %s281, 11
        %s285 = scalar_select %p284, %s281, 11
        %s286 = smul.addr %s283, 12
        %s287 = sadd.s32 %s285, %s286
        %s288 = smul.addr %s287, 4
        %s289 = scalar_lea.vmem %s1, %s288
        %s290 = sadd.s32 %s21, 1
        %s291 = smul.u32 4, %s290
        %s292 = smul.u32 4, %s21
        %v294 = vld [vmem:[%s278] sm:$0xff]
        %v295 = vld [vmem:[%s278 + $0x8] sm:$0xff]
        %v296 = vld [vmem:[%s289] sm:$0xff]
        %v299 = vunpack.c.l.b16 %v294
        %v300 = vunpack.c.h.b16 %v294
        %v301 = vunpack.c.l.b16 %v295
        %v302 = vunpack.c.h.b16 %v295
        %v303 = vpack.c.b16 %v299, %v299
        %v304 = vpack.c.b16 %v300, %v300
        %v305 = vpack.c.b16 %v301, %v301
        %v306 = vpack.c.b16 %v302, %v302
        %v308 = vunpack.c.l.b16 %v296
        %v309 = vunpack.c.h.b16 %v296
        %v310 = vpack.c.b16 %v308, %v308
        %v311 = vpack.c.b16 %v309, %v309
        %v312 = vrot.slane %v303, 4
        %v313 = vrot.slane %v304, 4
        %v314 = vrot.slane %v305, 4
        %v315 = vrot.slane %v306, 4
        %v316 = vrot.slane %v310, 4
        %317 = vrot.lane.b32.xlu0 %v312, 127
        %v318 = vpop.permute.xlu0 %317
        %319 = vrot.lane.b32.xlu0 %v313, 127
        %v320 = vpop.permute.xlu0 %319
        %321 = vrot.lane.b32.xlu0 %v314, 127
        %v322 = vpop.permute.xlu0 %321
        %323 = vrot.lane.b32.xlu0 %v315, 127
        %v324 = vpop.permute.xlu0 %323
        %325 = vrot.lane.b32.xlu0 %v316, 127
        %v326 = vpop.permute.xlu0 %325
        %vm327 = vcmask 1039360
        %v328 = vsel %vm327, %v318, %v320
        %v329 = vsel %vm327, %v320, %v322
        %v330 = vsel %vm327, %v322, %v324
        %v331 = vsel %vm327, %v324, %v326
        %332 = vrot.lane.b32.xlu0 %v303, 126
        %v333 = vpop.permute.xlu0 %332
        %334 = vrot.lane.b32.xlu0 %v304, 126
        %v335 = vpop.permute.xlu0 %334
        %336 = vrot.lane.b32.xlu0 %v305, 126
        %v337 = vpop.permute.xlu0 %336
        %338 = vrot.lane.b32.xlu0 %v306, 126
        %v339 = vpop.permute.xlu0 %338
        %340 = vrot.lane.b32.xlu0 %v310, 126
        %v341 = vpop.permute.xlu0 %340
        %vm342 = vcmask 1031168
        %v343 = vsel %vm342, %v333, %v335
        %v344 = vsel %vm342, %v335, %v337
        %v345 = vsel %vm342, %v337, %v339
        %v346 = vsel %vm342, %v339, %v341
        %347 = vrot.lane.b32.xlu0 %v312, 125
        %v348 = vpop.permute.xlu0 %347
        %349 = vrot.lane.b32.xlu0 %v313, 125
        %v350 = vpop.permute.xlu0 %349
        %351 = vrot.lane.b32.xlu0 %v314, 125
        %v352 = vpop.permute.xlu0 %351
        %353 = vrot.lane.b32.xlu0 %v315, 125
        %v354 = vpop.permute.xlu0 %353
        %355 = vrot.lane.b32.xlu0 %v316, 125
        %v356 = vpop.permute.xlu0 %355
        %vm357 = vcmask 1022976
        %v358 = vsel %vm357, %v348, %v350
        %v359 = vsel %vm357, %v350, %v352
        %v360 = vsel %vm357, %v352, %v354
        %v361 = vsel %vm357, %v354, %v356
        %362 = vrot.lane.b32.xlu0 %v303, 124
        %v363 = vpop.permute.xlu0 %362
        %364 = vrot.lane.b32.xlu0 %v304, 124
        %v365 = vpop.permute.xlu0 %364
        %366 = vrot.lane.b32.xlu0 %v305, 124
        %v367 = vpop.permute.xlu0 %366
        %368 = vrot.lane.b32.xlu0 %v306, 124
        %v369 = vpop.permute.xlu0 %368
        %370 = vrot.lane.b32.xlu0 %v310, 124
        %v371 = vpop.permute.xlu0 %370
        %vm372 = vcmask 1014784
        %v373 = vsel %vm372, %v363, %v365
        %v374 = vsel %vm372, %v365, %v367
        %v375 = vsel %vm372, %v367, %v369
        %v376 = vsel %vm372, %v369, %v371
        %377 = vrot.lane.b32.xlu0 %v312, 95
        %v378 = vpop.permute.xlu0 %377
        %379 = vrot.lane.b32.xlu0 %v313, 95
        %v380 = vpop.permute.xlu0 %379
        %381 = vrot.lane.b32.xlu0 %v314, 95
        %v382 = vpop.permute.xlu0 %381
        %383 = vrot.lane.b32.xlu0 %v315, 95
        %v384 = vpop.permute.xlu0 %383
        %385 = vrot.lane.b32.xlu0 %v316, 95
        %v386 = vpop.permute.xlu0 %385
        %vm387 = vcmask 777216
        %v388 = vsel %vm387, %v378, %v380
        %v389 = vsel %vm387, %v380, %v382
        %v390 = vsel %vm387, %v382, %v384
        %v391 = vsel %vm387, %v384, %v386
        %392 = vrot.lane.b32.xlu0 %v303, 94
        %v393 = vpop.permute.xlu0 %392
        %394 = vrot.lane.b32.xlu0 %v304, 94
        %v395 = vpop.permute.xlu0 %394
        %396 = vrot.lane.b32.xlu0 %v305, 94
        %v397 = vpop.permute.xlu0 %396
        %398 = vrot.lane.b32.xlu0 %v306, 94
        %v399 = vpop.permute.xlu0 %398
        %400 = vrot.lane.b32.xlu0 %v310, 94
        %v401 = vpop.permute.xlu0 %400
        %vm402 = vcmask 769024
        %v403 = vsel %vm402, %v393, %v395
        %v404 = vsel %vm402, %v395, %v397
        %v405 = vsel %vm402, %v397, %v399
        %v406 = vsel %vm402, %v399, %v401
        %407 = vrot.lane.b32.xlu0 %v312, 93
        %v408 = vpop.permute.xlu0 %407
        %409 = vrot.lane.b32.xlu0 %v313, 93
        %v410 = vpop.permute.xlu0 %409
        %411 = vrot.lane.b32.xlu0 %v314, 93
        %v412 = vpop.permute.xlu0 %411
        %413 = vrot.lane.b32.xlu0 %v315, 93
        %v414 = vpop.permute.xlu0 %413
        %415 = vrot.lane.b32.xlu0 %v316, 93
        %v416 = vpop.permute.xlu0 %415
        %vm417 = vcmask 760832
        %v418 = vsel %vm417, %v408, %v410
        %v419 = vsel %vm417, %v410, %v412
        %v420 = vsel %vm417, %v412, %v414
        %v421 = vsel %vm417, %v414, %v416
        %422 = vrot.lane.b32.xlu0 %v303, 92
        %v423 = vpop.permute.xlu0 %422
        %424 = vrot.lane.b32.xlu0 %v304, 92
        %v425 = vpop.permute.xlu0 %424
        %426 = vrot.lane.b32.xlu0 %v305, 92
        %v427 = vpop.permute.xlu0 %426
        %428 = vrot.lane.b32.xlu0 %v306, 92
        %v429 = vpop.permute.xlu0 %428
        %430 = vrot.lane.b32.xlu0 %v310, 92
        %v431 = vpop.permute.xlu0 %430
        %vm432 = vcmask 752640
        %v433 = vsel %vm432, %v423, %v425
        %v434 = vsel %vm432, %v425, %v427
        %v435 = vsel %vm432, %v427, %v429
        %v436 = vsel %vm432, %v429, %v431
        %437 = vrot.lane.b32.xlu0 %v312, 91
        %v438 = vpop.permute.xlu0 %437
        %439 = vrot.lane.b32.xlu0 %v313, 91
        %v440 = vpop.permute.xlu0 %439
        %441 = vrot.lane.b32.xlu0 %v314, 91
        %v442 = vpop.permute.xlu0 %441
        %443 = vrot.lane.b32.xlu0 %v315, 91
        %v444 = vpop.permute.xlu0 %443
        %445 = vrot.lane.b32.xlu0 %v316, 91
        %v446 = vpop.permute.xlu0 %445
        %vm447 = vcmask 744448
        %v448 = vsel %vm447, %v438, %v440
        %v449 = vsel %vm447, %v440, %v442
        %v450 = vsel %vm447, %v442, %v444
        %v451 = vsel %vm447, %v444, %v446
        %452 = vrot.lane.b32.xlu0 %v303, 62
        %v453 = vpop.permute.xlu0 %452
        %454 = vrot.lane.b32.xlu0 %v304, 62
        %v455 = vpop.permute.xlu0 %454
        %456 = vrot.lane.b32.xlu0 %v305, 62
        %v457 = vpop.permute.xlu0 %456
        %458 = vrot.lane.b32.xlu0 %v306, 62
        %v459 = vpop.permute.xlu0 %458
        %460 = vrot.lane.b32.xlu0 %v310, 62
        %v461 = vpop.permute.xlu0 %460
        %vm462 = vcmask 506880
        %v463 = vsel %vm462, %v453, %v455
        %v464 = vsel %vm462, %v455, %v457
        %v465 = vsel %vm462, %v457, %v459
        %v466 = vsel %vm462, %v459, %v461
        %467 = vrot.lane.b32.xlu0 %v312, 61
        %v468 = vpop.permute.xlu0 %467
        %469 = vrot.lane.b32.xlu0 %v313, 61
        %v470 = vpop.permute.xlu0 %469
        %471 = vrot.lane.b32.xlu0 %v314, 61
        %v472 = vpop.permute.xlu0 %471
        %473 = vrot.lane.b32.xlu0 %v315, 61
        %v474 = vpop.permute.xlu0 %473
        %475 = vrot.lane.b32.xlu0 %v316, 61
        %v476 = vpop.permute.xlu0 %475
        %vm477 = vcmask 498688
        %v478 = vsel %vm477, %v468, %v470
        %v479 = vsel %vm477, %v470, %v472
        %v480 = vsel %vm477, %v472, %v474
        %v481 = vsel %vm477, %v474, %v476
        %482 = vrot.lane.b32.xlu0 %v303, 60
        %v483 = vpop.permute.xlu0 %482
        %484 = vrot.lane.b32.xlu0 %v304, 60
        %v485 = vpop.permute.xlu0 %484
        %486 = vrot.lane.b32.xlu0 %v305, 60
        %v487 = vpop.permute.xlu0 %486
        %488 = vrot.lane.b32.xlu0 %v306, 60
        %v489 = vpop.permute.xlu0 %488
        %490 = vrot.lane.b32.xlu0 %v310, 60
        %v491 = vpop.permute.xlu0 %490
        %vm492 = vcmask 490496
        %v493 = vsel %vm492, %v483, %v485
        %v494 = vsel %vm492, %v485, %v487
        %v495 = vsel %vm492, %v487, %v489
        %v496 = vsel %vm492, %v489, %v491
        %497 = vrot.lane.b32.xlu0 %v312, 59
        %v498 = vpop.permute.xlu0 %497
        %499 = vrot.lane.b32.xlu0 %v313, 59
        %v500 = vpop.permute.xlu0 %499
        %501 = vrot.lane.b32.xlu0 %v314, 59
        %v502 = vpop.permute.xlu0 %501
        %503 = vrot.lane.b32.xlu0 %v315, 59
        %v504 = vpop.permute.xlu0 %503
        %505 = vrot.lane.b32.xlu0 %v316, 59
        %v506 = vpop.permute.xlu0 %505
        %vm507 = vcmask 482304
        %v508 = vsel %vm507, %v498, %v500
        %v509 = vsel %vm507, %v500, %v502
        %v510 = vsel %vm507, %v502, %v504
        %v511 = vsel %vm507, %v504, %v506
        %512 = vrot.lane.b32.xlu0 %v303, 58
        %v513 = vpop.permute.xlu0 %512
        %514 = vrot.lane.b32.xlu0 %v304, 58
        %v515 = vpop.permute.xlu0 %514
        %516 = vrot.lane.b32.xlu0 %v305, 58
        %v517 = vpop.permute.xlu0 %516
        %518 = vrot.lane.b32.xlu0 %v306, 58
        %v519 = vpop.permute.xlu0 %518
        %520 = vrot.lane.b32.xlu0 %v310, 58
        %v521 = vpop.permute.xlu0 %520
        %vm522 = vcmask 474112
        %v523 = vsel %vm522, %v513, %v515
        %v524 = vsel %vm522, %v515, %v517
        %v525 = vsel %vm522, %v517, %v519
        %v526 = vsel %vm522, %v519, %v521
        %527 = vrot.lane.b32.xlu0 %v312, 29
        %v528 = vpop.permute.xlu0 %527
        %529 = vrot.lane.b32.xlu0 %v313, 29
        %v530 = vpop.permute.xlu0 %529
        %531 = vrot.lane.b32.xlu0 %v314, 29
        %v532 = vpop.permute.xlu0 %531
        %533 = vrot.lane.b32.xlu0 %v315, 29
        %v534 = vpop.permute.xlu0 %533
        %535 = vrot.lane.b32.xlu0 %v316, 29
        %v536 = vpop.permute.xlu0 %535
        %vm537 = vcmask 236544
        %v538 = vsel %vm537, %v528, %v530
        %v539 = vsel %vm537, %v530, %v532
        %v540 = vsel %vm537, %v532, %v534
        %v541 = vsel %vm537, %v534, %v536
        %vm542 = vcmask 1043456
        %v545 = vsel %vm542, %v303, %v328
        %v549 = vsel %vm542, %v304, %v329
        %v553 = vsel %vm542, %v305, %v330
        %v557 = vsel %vm542, %v306, %v331
        %v561 = vsel %vm542, %v343, %v358
        %v565 = vsel %vm542, %v344, %v359
        %v569 = vsel %vm542, %v345, %v360
        %v573 = vsel %vm542, %v346, %v361
        %v577 = vsel %vm542, %v373, %v388
        %v581 = vsel %vm542, %v374, %v389
        %v585 = vsel %vm542, %v375, %v390
        %v589 = vsel %vm542, %v376, %v391
        %v593 = vsel %vm542, %v403, %v418
        %v597 = vsel %vm542, %v404, %v419
        %v601 = vsel %vm542, %v405, %v420
        %v605 = vsel %vm542, %v406, %v421
        %v609 = vsel %vm542, %v433, %v448
        %v613 = vsel %vm542, %v434, %v449
        %v617 = vsel %vm542, %v435, %v450
        %v621 = vsel %vm542, %v436, %v451
        %v625 = vsel %vm542, %v463, %v478
        %v629 = vsel %vm542, %v464, %v479
        %v633 = vsel %vm542, %v465, %v480
        %v637 = vsel %vm542, %v466, %v481
        %v641 = vsel %vm542, %v493, %v508
        %v645 = vsel %vm542, %v494, %v509
        %v649 = vsel %vm542, %v495, %v510
        %v653 = vsel %vm542, %v496, %v511
        %v657 = vsel %vm542, %v523, %v538
        %v661 = vsel %vm542, %v524, %v539
        %v665 = vsel %vm542, %v525, %v540
        %v669 = vsel %vm542, %v526, %v541
        %671 = vrot.lane.b32.xlu0 %v304, 96
        %v672 = vpop.permute.xlu0 %671
        %673 = vrot.lane.b32.xlu0 %v305, 96
        %v674 = vpop.permute.xlu0 %673
        %675 = vrot.lane.b32.xlu0 %v306, 96
        %v676 = vpop.permute.xlu0 %675
        %677 = vrot.lane.b32.xlu0 %v310, 96
        %v678 = vpop.permute.xlu0 %677
        %679 = vrot.lane.b32.xlu0 %v311, 96
        %v680 = vpop.permute.xlu0 %679
        %vm681 = vcmask 785408
        %v682 = vsel %vm681, %v672, %v674
        %v683 = vsel %vm681, %v674, %v676
        %v684 = vsel %vm681, %v676, %v678
        %v685 = vsel %vm681, %v678, %v680
        %v686 = vrot.slane %v311, 4
        %687 = vrot.lane.b32.xlu0 %v686, 95
        %v688 = vpop.permute.xlu0 %687
        %v689 = vsel %vm387, %v386, %v688
        %690 = vrot.lane.b32.xlu0 %v311, 94
        %v691 = vpop.permute.xlu0 %690
        %v692 = vsel %vm402, %v401, %v691
        %693 = vrot.lane.b32.xlu0 %v686, 93
        %v694 = vpop.permute.xlu0 %693
        %v695 = vsel %vm417, %v416, %v694
        %696 = vrot.lane.b32.xlu0 %v311, 92
        %v697 = vpop.permute.xlu0 %696
        %v698 = vsel %vm432, %v431, %v697
        %v701 = vsel %vm542, %v310, %v326
        %v704 = vsel %vm542, %v341, %v356
        %v707 = vsel %vm542, %v672, %v380
        %v709 = vsel %vm542, %v682, %v389
        %v711 = vsel %vm542, %v683, %v390
        %v713 = vsel %vm542, %v684, %v391
        %v716 = vsel %vm542, %v685, %v689
        %v719 = vsel %vm542, %v395, %v410
        %v722 = vsel %vm542, %v692, %v695
        %743 = vrot.lane.b32.xlu0 %v545, 28
        %v744 = vpop.permute.xlu0 %743
        %745 = vrot.lane.b32.xlu0 %v549, 28
        %v746 = vpop.permute.xlu0 %745
        %747 = vrot.lane.b32.xlu0 %v553, 28
        %v748 = vpop.permute.xlu0 %747
        %749 = vrot.lane.b32.xlu0 %v557, 28
        %v750 = vpop.permute.xlu0 %749
        %751 = vrot.lane.b32.xlu0 %v701, 28
        %v752 = vpop.permute.xlu0 %751
        %753 = vrot.lane.b32.xlu0 %v561, 28
        %v754 = vpop.permute.xlu0 %753
        %755 = vrot.lane.b32.xlu0 %v565, 28
        %v756 = vpop.permute.xlu0 %755
        %757 = vrot.lane.b32.xlu0 %v569, 28
        %v758 = vpop.permute.xlu0 %757
        %759 = vrot.lane.b32.xlu0 %v573, 28
        %v760 = vpop.permute.xlu0 %759
        %761 = vrot.lane.b32.xlu0 %v704, 28
        %v762 = vpop.permute.xlu0 %761
        %763 = vrot.lane.b32.xlu0 %v707, 28
        %v764 = vpop.permute.xlu0 %763
        %765 = vrot.lane.b32.xlu0 %v709, 28
        %v766 = vpop.permute.xlu0 %765
        %767 = vrot.lane.b32.xlu0 %v711, 28
        %v768 = vpop.permute.xlu0 %767
        %769 = vrot.lane.b32.xlu0 %v713, 28
        %v770 = vpop.permute.xlu0 %769
        %771 = vrot.lane.b32.xlu0 %v716, 28
        %v772 = vpop.permute.xlu0 %771
        %773 = vrot.lane.b32.xlu0 %v719, 28
        %v774 = vpop.permute.xlu0 %773
        %775 = vrot.lane.b32.xlu0 %v597, 28
        %v776 = vpop.permute.xlu0 %775
        %777 = vrot.lane.b32.xlu0 %v601, 28
        %v778 = vpop.permute.xlu0 %777
        %779 = vrot.lane.b32.xlu0 %v605, 28
        %v780 = vpop.permute.xlu0 %779
        %781 = vrot.lane.b32.xlu0 %v722, 28
        %v782 = vpop.permute.xlu0 %781
        %783 = vrot.lane.b32.xlu0 %v425, 28
        %v784 = vpop.permute.xlu0 %783
        %785 = vrot.lane.b32.xlu0 %v434, 28
        %v786 = vpop.permute.xlu0 %785
        %787 = vrot.lane.b32.xlu0 %v435, 28
        %v788 = vpop.permute.xlu0 %787
        %789 = vrot.lane.b32.xlu0 %v436, 28
        %v790 = vpop.permute.xlu0 %789
        %791 = vrot.lane.b32.xlu0 %v698, 28
        %v792 = vpop.permute.xlu0 %791
        %vm793 = vcmask 228352
        %v794 = vsel %vm793, %v744, %v746
        %v795 = vsel %vm793, %v746, %v748
        %v796 = vsel %vm793, %v748, %v750
        %v797 = vsel %vm793, %v750, %v752
        %v798 = vsel %vm793, %v754, %v756
        %v799 = vsel %vm793, %v756, %v758
        %v800 = vsel %vm793, %v758, %v760
        %v801 = vsel %vm793, %v760, %v762
        %v802 = vsel %vm793, %v764, %v766
        %v803 = vsel %vm793, %v766, %v768
        %v804 = vsel %vm793, %v768, %v770
        %v805 = vsel %vm793, %v770, %v772
        %v806 = vsel %vm793, %v774, %v776
        %v807 = vsel %vm793, %v776, %v778
        %v808 = vsel %vm793, %v778, %v780
        %v809 = vsel %vm793, %v780, %v782
        %v810 = vsel %vm793, %v784, %v786
        %v811 = vsel %vm793, %v786, %v788
        %v812 = vsel %vm793, %v788, %v790
        %v813 = vsel %vm793, %v790, %v792
        %v830 = vld [vmem:[%s2] sm:$0xff]
        %v831 = vld [vmem:[%s2 + $0x8] sm:$0xff]
        %v834 = vunpack.c.l.b16 %v830
        %v835 = vunpack.c.h.b16 %v830
        %v836 = vunpack.c.l.b16 %v831
        %v837 = vunpack.c.h.b16 %v831
        %v838 = vpack.c.b16 %v836, %v834
        %v839 = vpack.c.b16 %v837, %v835
        %vm841 = vcmask 588800
        %v843 = vsel %vm841, %v839, 0
        %v846 = vsel %vm542, %v810, 0
        %v849 = vsel %vm542, %v811, 0
        %v852 = vsel %vm542, %v812, 0
        %v855 = vsel %vm542, %v813, 0
        %857 = vmatprep.subr.bf16.mxu0 %v549
        %858 = vmatpush1.bf16.msra.mxu0 %v545
        %859 = vmatprep.subr.bf16.mxu0 %v565
        %860 = vmatpush1.bf16.msra.mxu0 %v561
        %861 = vmatprep.subr.bf16.mxu0 %v581
        %862 = vmatpush1.bf16.msra.mxu0 %v577
        %863 = vmatprep.subr.bf16.mxu0 %v597
        %864 = vmatpush1.bf16.msra.mxu0 %v593
        %865 = vmatprep.subr.bf16.mxu0 %v613
        %866 = vmatpush1.bf16.msra.mxu0 %v609
        %867 = vmatprep.subr.bf16.mxu0 %v629
        %868 = vmatpush1.bf16.msra.mxu0 %v625
        %869 = vmatprep.subr.bf16.mxu0 %v645
        %870 = vmatpush1.bf16.msra.mxu0 %v641
        %871 = vmatprep.subr.bf16.mxu0 %v661
        %872 = vmatpush1.bf16.msra.mxu0 %v657
        %873 = vmatprep.subr.bf16.mxu0 %v795
        %874 = vmatpush1.bf16.msra.mxu0 %v794
        %875 = vmatprep.subr.bf16.mxu0 %v799
        %876 = vmatpush1.bf16.msra.mxu0 %v798
        %877 = vmatprep.subr.bf16.mxu0 %v803
        %878 = vmatpush1.bf16.msra.mxu0 %v802
        %879 = vmatprep.subr.bf16.mxu0 %v807
        %880 = vmatpush1.bf16.msra.mxu0 %v806
        %881 = vmatprep.subr.bf16.mxu0 %v849
        %882 = vmatpush1.bf16.msra.mxu0 %v846
        %883 = vmatprep.subr.bf16.mxu0 0
        %884 = vmatpush1.bf16.msra.mxu0 0
        %885 = vmatprep.subr.bf16.mxu0 0
        %886 = vmatpush1.bf16.msra.mxu0 0
        %887 = vmatprep.subr.bf16.mxu0 0
        %888 = vmatpush1.bf16.msra.mxu0 0
        %889 = vmatprep.mubr.bf16.mxu0 %v843
        %890 = vmatmul.mubr.bf16.gmra.mrb[0].mxu0 %v838
        %v891 = vpop.f32.mrb[0].mxu0
        %v892 = vadd.f32 0.0, %v891
        %v893 = vpop.f32.mrb[0].mxu0
        %v894 = vadd.f32 0.0, %v893
        %v895 = vpop.f32.mrb[0].mxu0
        %v896 = vadd.f32 0.0, %v895
        %v897 = vpop.f32.mrb[0].mxu0
        %v898 = vadd.f32 0.0, %v897
        %899 = vdwg.mxu0
        %900 = vmatprep.subr.bf16.mxu0 %v557
        %901 = vmatpush1.bf16.msra.mxu0 %v553
        %902 = vmatprep.subr.bf16.mxu0 %v573
        %903 = vmatpush1.bf16.msra.mxu0 %v569
        %904 = vmatprep.subr.bf16.mxu0 %v589
        %905 = vmatpush1.bf16.msra.mxu0 %v585
        %906 = vmatprep.subr.bf16.mxu0 %v605
        %907 = vmatpush1.bf16.msra.mxu0 %v601
        %908 = vmatprep.subr.bf16.mxu0 %v621
        %909 = vmatpush1.bf16.msra.mxu0 %v617
        %910 = vmatprep.subr.bf16.mxu0 %v637
        %911 = vmatpush1.bf16.msra.mxu0 %v633
        %912 = vmatprep.subr.bf16.mxu0 %v653
        %913 = vmatpush1.bf16.msra.mxu0 %v649
        %914 = vmatprep.subr.bf16.mxu0 %v669
        %915 = vmatpush1.bf16.msra.mxu0 %v665
        %916 = vmatprep.subr.bf16.mxu0 %v797
        %917 = vmatpush1.bf16.msra.mxu0 %v796
        %918 = vmatprep.subr.bf16.mxu0 %v801
        %919 = vmatpush1.bf16.msra.mxu0 %v800
        %920 = vmatprep.subr.bf16.mxu0 %v805
        %921 = vmatpush1.bf16.msra.mxu0 %v804
        %922 = vmatprep.subr.bf16.mxu0 %v809
        %923 = vmatpush1.bf16.msra.mxu0 %v808
        %924 = vmatprep.subr.bf16.mxu0 %v855
        %925 = vmatpush1.bf16.msra.mxu0 %v852
        %926 = vmatprep.subr.bf16.mxu0 0
        %927 = vmatpush1.bf16.msra.mxu0 0
        %928 = vmatprep.subr.bf16.mxu0 0
        %929 = vmatpush1.bf16.msra.mxu0 0
        %930 = vmatprep.subr.bf16.mxu0 0
        %931 = vmatpush1.bf16.msra.mxu0 0
        %932 = vmatprep.mubr.bf16.mxu0 %v843
        %933 = vmatmul.mubr.bf16.gmra.mrb[0].mxu0 %v838
        %v934 = vpop.f32.mrb[0].mxu0
        %v935 = vadd.f32 0.0, %v934
        %v936 = vpop.f32.mrb[0].mxu0
        %v937 = vadd.f32 0.0, %v936
        %v938 = vpop.f32.mrb[0].mxu0
        %v939 = vadd.f32 0.0, %v938
        %v940 = vpop.f32.mrb[0].mxu0
        %v941 = vadd.f32 0.0, %v940
        %942 = vdwg.mxu0
        %v943 = vld [vmem:[%s3] sm:$0xff]
        %v944 = vld [vmem:[%s3 + $0x8] sm:$0xff]
        %946 = vset.pattern.permute.xlu0 0
        %947 = vperm.xlu0 %946, %v943
        %v948 = vpop.permute.xlu0 %947
        %951 = vset.pattern.permute.xlu0 0
        %952 = vperm.xlu0 %951, %v944
        %v953 = vpop.permute.xlu0 %952
        %v955 = vmul.f32 %v892, %v948
        %v956 = vmul.f32 %v894, %v948
        %v957 = vmul.f32 %v935, %v948
        %v958 = vmul.f32 %v937, %v948
        %v959 = vmul.f32 %v896, %v953
        %v960 = vmul.f32 %v898, %v953
        %v961 = vmul.f32 %v939, %v953
        %v962 = vmul.f32 %v941, %v953
        %v963 = vld [vmem:[%s4] sm:$0xff]
        %v964 = vld [vmem:[%s4 + $0x8] sm:$0xff]
        %966 = vset.pattern.permute.xlu0 0
        %967 = vperm.xlu0 %966, %v963
        %v968 = vpop.permute.xlu0 %967
        %971 = vset.pattern.permute.xlu0 0
        %972 = vperm.xlu0 %971, %v964
        %v973 = vpop.permute.xlu0 %972
        %v975 = vadd.f32 %v955, %v968
        %v976 = vadd.f32 %v956, %v968
        %v977 = vadd.f32 %v957, %v968
        %v978 = vadd.f32 %v958, %v968
        %v979 = vadd.f32 %v959, %v973
        %v980 = vadd.f32 %v960, %v973
        %v981 = vadd.f32 %v961, %v973
        %v982 = vadd.f32 %v962, %v973
        %v983 = vmax.f32 %v975, 0.0
        %v984 = vmax.f32 %v976, 0.0
        %v985 = vmax.f32 %v977, 0.0
        %v986 = vmax.f32 %v978, 0.0
        %v987 = vmax.f32 %v979, 0.0
        %v988 = vmax.f32 %v980, 0.0
        %v989 = vmax.f32 %v981, 0.0
        %v990 = vmax.f32 %v982, 0.0
        %991 = vst [vmem:[%s269] sm:$0xff] %v983
        %992 = vst [vmem:[%s269 + $0x8] sm:$0xff] %v984
        %993 = vst [vmem:[%s269 + $0x10] sm:$0xff] %v985
        %994 = vst [vmem:[%s269 + $0x18] sm:$0xff] %v986
        %995 = vst [vmem:[%s269 + $0x20] sm:$0xff] %v987
        %996 = vst [vmem:[%s269 + $0x28] sm:$0xff] %v988
        %997 = vst [vmem:[%s269 + $0x30] sm:$0xff] %v989
        %998 = vst [vmem:[%s269 + $0x38] sm:$0xff] %v990
        %s999 = sand.u32 %s159, 1
        %s1000 = sand.u32 %s159, 1
        %s1001 = smul.addr %s1000, 64
        %s1002 = scalar_lea.vmem [#allocation2], %s1001
        // Predicated region
        $region41: #{siamrpn_forward.10} parent=39 // pred_check
          %p1003 = pneg %p169
        $region42: #{siamrpn_forward.10} parent=39 // pred_check_branch
          %1005 = sbr.rel (%p1003) target = $region44
        $region43: #{siamrpn_forward.10} parent=39 // pred_region
          %s1006 = smul.u32 4, %s21
          %s1007 = smul.addr %s20, 16
          %s1008 = sadd.s32 %s1006, %s1007
          %s1009 = smul.addr %s1008, 8
          %s1010 = scalar_lea.vmem %s5, %s1009
          // Predicated region
          $region45: #{siamrpn_forward.10} parent=43 // pred_check
            _
          $region46: #{siamrpn_forward.10} parent=43 // pred_check_branch
            %1012 = sbr.rel (0) target = $region48
          $region47: #{siamrpn_forward.10} parent=43 // pred_region
            // Predicated region
            $region49: #{siamrpn_forward.10} parent=47 // pred_check
              _
            $region50: #{siamrpn_forward.10} parent=47 // pred_check_branch
              %1014 = sbr.rel (0) target = $region52
            $region51: #{siamrpn_forward.10} parent=47 // pred_region
              loop: start=0, step=1, limit=1
              $region53: #{siamrpn_forward.10} parent=51 // loop_pre_header
                _
              $region54: #{siamrpn_forward.10} parent=51 // loop_header
                %s1016 = sphi 0, %s1020
                %p1017 = scmp.ge.s32.totalorder %s1016, 1
                %s1021 = sphi %s1002, %s1002
                %s1022 = sphi %s1010, %s1010
              $region55: #{siamrpn_forward.10} parent=51 // loop_header_branch
                %1019 = sbr.rel (%p1017) target = $region59
              $region56: #{siamrpn_forward.10} parent=51 // loop_body
                %v1023 = vld [vmem:[%s1021] sm:$0xff]
                %1024 = vst [vmem:[%s1022] sm:$0xff] %v1023
                %v1025 = vld [vmem:[%s1021 + $0x8] sm:$0xff]
                %1026 = vst [vmem:[%s1022 + $0x8] sm:$0xff] %v1025
                %v1027 = vld [vmem:[%s1021 + $0x10] sm:$0xff]
                %1028 = vst [vmem:[%s1022 + $0x10] sm:$0xff] %v1027
                %v1029 = vld [vmem:[%s1021 + $0x18] sm:$0xff]
                %1030 = vst [vmem:[%s1022 + $0x18] sm:$0xff] %v1029
                %v1031 = vld [vmem:[%s1021 + $0x20] sm:$0xff]
                %1032 = vst [vmem:[%s1022 + $0x40] sm:$0xff] %v1031
                %v1033 = vld [vmem:[%s1021 + $0x28] sm:$0xff]
                %1034 = vst [vmem:[%s1022 + $0x48] sm:$0xff] %v1033
                %v1035 = vld [vmem:[%s1021 + $0x30] sm:$0xff]
                %1036 = vst [vmem:[%s1022 + $0x50] sm:$0xff] %v1035
                %v1037 = vld [vmem:[%s1021 + $0x38] sm:$0xff]
                %1038 = vst [vmem:[%s1022 + $0x58] sm:$0xff] %v1037
              $region57: #{siamrpn_forward.10} parent=51 // loop_footer
                %s1020 = sadd.s32 1, %s1016
              $region58: #{siamrpn_forward.10} parent=51 // loop_footer_branch
                %1015 = sbr.rel target = $region54
              $region59: #{siamrpn_forward.10} parent=51 // loop_exit
                _
            $region52: #{siamrpn_forward.10} parent=47 // pred_fallthru
              _
            // Predicated region
            $region60: #{siamrpn_forward.10} parent=47 // pred_check
              _
            $region61: #{siamrpn_forward.10} parent=47 // pred_check_branch
              %1040 = sbr.rel target = $region63
            $region62: #{siamrpn_forward.10} parent=47 // pred_region
              _
            $region63: #{siamrpn_forward.10} parent=47 // pred_fallthru
              _
          $region48: #{siamrpn_forward.10} parent=43 // pred_fallthru
            _
          %1041 = vnop
        $region44: #{siamrpn_forward.10} parent=39 // pred_fallthru
          _
      $region40: #{siamrpn_forward.10} parent=5 // pred_fallthru
        _
      %p1042 = scmp.le.s32.totalorder 2, %s11
      // Predicated region
      $region64: #{siamrpn_forward.10} parent=5 // pred_check
        %p1043 = pneg %p1042
      $region65: #{siamrpn_forward.10} parent=5 // pred_check_branch
        %1045 = sbr.rel (%p1043) target = $region67
      $region66: #{siamrpn_forward.10} parent=5 // pred_region
        %s1046 = ssub.s32 %s11, 2
        // Predicated region
        $region68: #{siamrpn_forward.10} parent=66 // pred_check
          %p1047 = pneg %p175
        $region69: #{siamrpn_forward.10} parent=66 // pred_check_branch
          %1049 = sbr.rel (%p1047) target = $region71
        $region70: #{siamrpn_forward.10} parent=66 // pred_region
          %s1050 = sand.u32 %s160, 1
          %s1051 = sand.u32 %s160, 1
          %s1052 = smul.addr %s1051, 64
          %s1053 = scalar_lea.vmem [#allocation2], %s1052
        $region71: #{siamrpn_forward.10} parent=66 // pred_fallthru
          _
      $region67: #{siamrpn_forward.10} parent=5 // pred_fallthru
        _
    $region6: #{siamrpn_forward.10} parent=1 // loop_footer
      %s15 = sadd.s32 1, %s11
    $region7: #{siamrpn_forward.10} parent=1 // loop_footer_branch
      %10 = sbr.rel target = $region3
    $region8: #{siamrpn_forward.10} parent=1 // loop_exit
      _

// kernel: siamrpn_forward.11
$region0: #{siamrpn_forward.11}
  #allocation0 [shape = 'u32[]', space=smem, size = 0x4, offset = 0x4, fixed_abs, tag = 'smem constant byte address 0x4 - core index']
  #allocation1 [shape = 'u32[144,128]{1,0:T(1,128)}', space=vmem, size = 0x12000, scoped, tag = 'internal scratch']
  %s0 = inlined_call_operand.vmem [shape: f32[4,2,16,384], index: 0, kind: input, shape index: {}]
  %s1 = inlined_call_operand.vmem [shape: f32[2,16,256], index: 1, kind: output, shape index: {}]
  %s2 = sld [smem:[#allocation0]]
  $region60: #{siamrpn_forward.11} parent=0
    _
  %s4 = ssub.s32 1, %s2
  %s5 = scalar_select 0, %s4, %s2
  $region1: #{siamrpn_forward.11} parent=0
    #allocation2 [shape = 'u8[196608]{0}', space=vmem, size = 0x30000, scoped, tag = 'input window, operand 0']
    loop: start=0, step=1, limit=4
    $region2: #{siamrpn_forward.11} parent=1 // loop_pre_header
      _
    $region3: #{siamrpn_forward.11} parent=1 // loop_header
      %s7 = sphi 0, %s11
      %p8 = scmp.ge.s32.totalorder %s7, 4
      %s17 = sphi 0, %s19
      %s20 = sphi 0, %s17
      %s21 = sphi 0, %s20
      %s37 = sphi 0, %s21
      %s43 = sphi 0, %s45
      %s46 = sphi 0, %s43
      %s47 = sphi 0, %s46
      %s63 = sphi 0, %s47
    $region4: #{siamrpn_forward.11} parent=1 // loop_header_branch
      %10 = sbr.rel (%p8) target = $region8
    $region5: #{siamrpn_forward.11} parent=1 // loop_body
      %s12 = ssub.s32 %s7, 1
      %s13 = ssub.s32 %s7, 2
      %s14 = sadd.s32 %s7, 1
      %s15 = ssub.s32 %s7, %s14
      %p16 = scmp.eq.s32.totalorder %s15, 0
      %s18 = sadd.s32 %s17, 1
      %s19 = scalar_select %p16, %s17, %s18
      %p22 = pneg %p16
      %p23 = scmp.eq.s32.totalorder %s7, 1
      %p24 = por %p22, %p23
      %p25 = scmp.ne.s32.totalorder %s17, %s20
      %p26 = scmp.eq.s32.totalorder %s7, 0
      %p27 = por %p25, %p26
      %p28 = scmp.ne.s32.totalorder %s17, %s20
      %p29 = scmp.eq.s32.totalorder %s12, 1
      %p30 = por %p28, %p29
      %p31 = scmp.ne.s32.totalorder %s20, %s21
      %p32 = scmp.eq.s32.totalorder %s12, 0
      %p33 = por %p31, %p32
      %p34 = scmp.ne.s32.totalorder %s20, %s21
      %p35 = scmp.eq.s32.totalorder %s13, 1
      %p36 = por %p34, %p35
      %p38 = scmp.ne.s32.totalorder %s21, %s37
      %p39 = scmp.eq.s32.totalorder %s13, 0
      %p40 = por %p38, %p39
      %s41 = ssub.s32 %s7, %s14
      %p42 = scmp.eq.s32.totalorder %s41, 0
      %s44 = sadd.s32 %s43, 1
      %s45 = scalar_select %p42, %s43, %s44
      %p48 = pneg %p42
      %p49 = scmp.eq.s32.totalorder %s7, 1
      %p50 = por %p48, %p49
      %p51 = scmp.ne.s32.totalorder %s43, %s46
      %p52 = scmp.eq.s32.totalorder %s7, 0
      %p53 = por %p51, %p52
      %p54 = scmp.ne.s32.totalorder %s43, %s46
      %p55 = scmp.eq.s32.totalorder %s12, 1
      %p56 = por %p54, %p55
      %p57 = scmp.ne.s32.totalorder %s46, %s47
      %p58 = scmp.eq.s32.totalorder %s12, 0
      %p59 = por %p57, %p58
      %p60 = scmp.ne.s32.totalorder %s46, %s47
      %p61 = scmp.eq.s32.totalorder %s13, 1
      %p62 = por %p60, %p61
      %p64 = scmp.ne.s32.totalorder %s47, %s63
      %p65 = scmp.eq.s32.totalorder %s13, 0
      %p66 = por %p64, %p65
      %p67 = scmp.le.s32.totalorder 1, %s7
      %p68 = scmp.lt.s32.totalorder %s7, 3
      %p69 = pnand %p67, %p68
      %p70 = pneg %p69
      // Predicated region
      $region9: #{siamrpn_forward.11} parent=5 // pred_check
        _
      $region10: #{siamrpn_forward.11} parent=5 // pred_check_branch
        %72 = sbr.rel (%p69) target = $region12
      $region11: #{siamrpn_forward.11} parent=5 // pred_region
        %s73 = ssub.s32 %s7, 1
      $region12: #{siamrpn_forward.11} parent=5 // pred_fallthru
        _
      %p74 = scmp.lt.s32.totalorder %s7, 2
      // Predicated region
      $region13: #{siamrpn_forward.11} parent=5 // pred_check
        %p75 = pneg %p74
      $region14: #{siamrpn_forward.11} parent=5 // pred_check_branch
        %77 = sbr.rel (%p75) target = $region16
      $region15: #{siamrpn_forward.11} parent=5 // pred_region
        // Predicated region
        $region17: #{siamrpn_forward.11} parent=15 // pred_check
          %p78 = pneg %p27
        $region18: #{siamrpn_forward.11} parent=15 // pred_check_branch
          %80 = sbr.rel (%p78) target = $region20
        $region19: #{siamrpn_forward.11} parent=15 // pred_region
          %s81 = sand.u32 %s17, 1
          %s82 = sand.u32 %s17, 1
          %s83 = smul.addr %s82, 192
          %s84 = scalar_lea.vmem [#allocation2], %s83
          %s85 = smul.addr %s7, 6
          %s86 = smul.addr %s85, 8
          %s87 = scalar_lea.vmem %s0, %s86
          // Predicated region
          $region21: #{siamrpn_forward.11} parent=19 // pred_check
            _
          $region22: #{siamrpn_forward.11} parent=19 // pred_check_branch
            %89 = sbr.rel (0) target = $region24
          $region23: #{siamrpn_forward.11} parent=19 // pred_region
            // Predicated region
            $region25: #{siamrpn_forward.11} parent=23 // pred_check
              _
            $region26: #{siamrpn_forward.11} parent=23 // pred_check_branch
              %91 = sbr.rel (0) target = $region28
            $region27: #{siamrpn_forward.11} parent=23 // pred_region
              loop: start=0, step=1, limit=1
              $region29: #{siamrpn_forward.11} parent=27 // loop_pre_header
                _
              $region30: #{siamrpn_forward.11} parent=27 // loop_header
                %s93 = sphi 0, %s97
                %p94 = scmp.ge.s32.totalorder %s93, 1
                %s98 = sphi %s87, %s87
                %s99 = sphi %s84, %s84
              $region31: #{siamrpn_forward.11} parent=27 // loop_header_branch
                %96 = sbr.rel (%p94) target = $region35
              $region32: #{siamrpn_forward.11} parent=27 // loop_body
                %v100 = vld [vmem:[%s98] sm:$0xff]
                %101 = vst [vmem:[%s99] sm:$0xff] %v100
                %v102 = vld [vmem:[%s98 + $0x8] sm:$0xff]
                %103 = vst [vmem:[%s99 + $0x8] sm:$0xff] %v102
                %v104 = vld [vmem:[%s98 + $0x10] sm:$0xff]
                %105 = vst [vmem:[%s99 + $0x10] sm:$0xff] %v104
                %v106 = vld [vmem:[%s98 + $0x18] sm:$0xff]
                %107 = vst [vmem:[%s99 + $0x18] sm:$0xff] %v106
                %v108 = vld [vmem:[%s98 + $0x20] sm:$0xff]
                %109 = vst [vmem:[%s99 + $0x20] sm:$0xff] %v108
                %v110 = vld [vmem:[%s98 + $0x28] sm:$0xff]
                %111 = vst [vmem:[%s99 + $0x28] sm:$0xff] %v110
                %v112 = vld [vmem:[%s98 + $0x60] sm:$0xff]
                %113 = vst [vmem:[%s99 + $0x30] sm:$0xff] %v112
                %v114 = vld [vmem:[%s98 + $0x68] sm:$0xff]
                %115 = vst [vmem:[%s99 + $0x38] sm:$0xff] %v114
                %v116 = vld [vmem:[%s98 + $0x70] sm:$0xff]
                %117 = vst [vmem:[%s99 + $0x40] sm:$0xff] %v116
                %v118 = vld [vmem:[%s98 + $0x78] sm:$0xff]
                %119 = vst [vmem:[%s99 + $0x48] sm:$0xff] %v118
                %v120 = vld [vmem:[%s98 + $0x80] sm:$0xff]
                %121 = vst [vmem:[%s99 + $0x50] sm:$0xff] %v120
                %v122 = vld [vmem:[%s98 + $0x88] sm:$0xff]
                %123 = vst [vmem:[%s99 + $0x58] sm:$0xff] %v122
                %v124 = vld [vmem:[%s98 + $0xc0] sm:$0xff]
                %125 = vst [vmem:[%s99 + $0x60] sm:$0xff] %v124
                %v126 = vld [vmem:[%s98 + $0xc8] sm:$0xff]
                %127 = vst [vmem:[%s99 + $0x68] sm:$0xff] %v126
                %v128 = vld [vmem:[%s98 + $0xd0] sm:$0xff]
                %129 = vst [vmem:[%s99 + $0x70] sm:$0xff] %v128
                %v130 = vld [vmem:[%s98 + $0xd8] sm:$0xff]
                %131 = vst [vmem:[%s99 + $0x78] sm:$0xff] %v130
                %v132 = vld [vmem:[%s98 + $0xe0] sm:$0xff]
                %133 = vst [vmem:[%s99 + $0x80] sm:$0xff] %v132
                %v134 = vld [vmem:[%s98 + $0xe8] sm:$0xff]
                %135 = vst [vmem:[%s99 + $0x88] sm:$0xff] %v134
                %v136 = vld [vmem:[%s98 + $0x120] sm:$0xff]
                %137 = vst [vmem:[%s99 + $0x90] sm:$0xff] %v136
                %v138 = vld [vmem:[%s98 + $0x128] sm:$0xff]
                %139 = vst [vmem:[%s99 + $0x98] sm:$0xff] %v138
                %v140 = vld [vmem:[%s98 + $0x130] sm:$0xff]
                %141 = vst [vmem:[%s99 + $0xa0] sm:$0xff] %v140
                %v142 = vld [vmem:[%s98 + $0x138] sm:$0xff]
                %143 = vst [vmem:[%s99 + $0xa8] sm:$0xff] %v142
                %v144 = vld [vmem:[%s98 + $0x140] sm:$0xff]
                %145 = vst [vmem:[%s99 + $0xb0] sm:$0xff] %v144
                %v146 = vld [vmem:[%s98 + $0x148] sm:$0xff]
                %147 = vst [vmem:[%s99 + $0xb8] sm:$0xff] %v146
              $region33: #{siamrpn_forward.11} parent=27 // loop_footer
                %s97 = sadd.s32 1, %s93
              $region34: #{siamrpn_forward.11} parent=27 // loop_footer_branch
                %92 = sbr.rel target = $region30
              $region35: #{siamrpn_forward.11} parent=27 // loop_exit
                _
            $region28: #{siamrpn_forward.11} parent=23 // pred_fallthru
              _
            // Predicated region
            $region36: #{siamrpn_forward.11} parent=23 // pred_check
              _
            $region37: #{siamrpn_forward.11} parent=23 // pred_check_branch
              %149 = sbr.rel target = $region39
            $region38: #{siamrpn_forward.11} parent=23 // pred_region
              _
            $region39: #{siamrpn_forward.11} parent=23 // pred_fallthru
              _
          $region24: #{siamrpn_forward.11} parent=19 // pred_fallthru
            _
          %150 = vnop
        $region20: #{siamrpn_forward.11} parent=15 // pred_fallthru
          _
      $region16: #{siamrpn_forward.11} parent=5 // pred_fallthru
        _
      %p151 = scmp.le.s32.totalorder 1, %s7
      %p152 = scmp.lt.s32.totalorder %s7, 3
      %p153 = pnand %p151, %p152
      %p154 = pneg %p153
      // Predicated region
      $region40: #{siamrpn_forward.11} parent=5 // pred_check
        _
      $region41: #{siamrpn_forward.11} parent=5 // pred_check_branch
        %156 = sbr.rel (%p153) target = $region43
      $region42: #{siamrpn_forward.11} parent=5 // pred_region
        %s157 = ssub.s32 %s7, 1
        %s158 = sand.u32 %s20, 1
        %s159 = sand.u32 %s20, 1
        %s160 = smul.addr %s159, 192
        %s161 = scalar_lea.vmem [#allocation2], %s160
        // Predicated region
        $region44: #{siamrpn_forward.11} parent=42 // pred_check
          %p162 = pneg %p33
        $region45: #{siamrpn_forward.11} parent=42 // pred_check_branch
          %164 = sbr.rel (%p162) target = $region47
        $region46: #{siamrpn_forward.11} parent=42 // pred_region
          _
        $region47: #{siamrpn_forward.11} parent=42 // pred_fallthru
          _
        %s165 = sand.u32 %s20, 1
        %s166 = sand.u32 %s20, 1
        %s167 = smul.addr %s166, 192
        %s168 = scalar_lea.vmem [#allocation2], %s167
        %p169 = pneg %p33
        %p170 = pneg %p30
        %p171 = pneg %p59
        %p172 = pneg %p56
        %p173 = scmp.lt.s32.totalorder %s12, 1
        %s174 = scalar_select %p173, %s12, 1
        %s175 = smul.addr %s174, 4
        %s176 = smul.addr %s175, 8
        %s177 = scalar_lea.vmem %s1, %s176
        %p178 = scmp.lt.s32.totalorder %s12, 1
        %s179 = scalar_select %p178, %s12, 1
        %s180 = smul.addr %s179, 4
        %s181 = smul.addr %s180, 8
        %s182 = scalar_lea.vmem %s1, %s181
        %v183 = vld [vmem:[%s161] sm:$0xff]
        %v184 = vld [vmem:[%s161 + $0x8] sm:$0xff]
        %v185 = vld [vmem:[%s161 + $0x18] sm:$0xff]
        %v186 = vld [vmem:[%s161 + $0x20] sm:$0xff]
        %s187 = scalar_lea.vmem %s161, 48 [#allocation2]
        %v188 = vld [vmem:[%s187] sm:$0xff]
        %v189 = vld [vmem:[%s187 + $0x8] sm:$0xff]
        %v190 = vld [vmem:[%s187 + $0x18] sm:$0xff]
        %v191 = vld [vmem:[%s187 + $0x20] sm:$0xff]
        %v192 = vmax.f32 %v183, %v188
        %v193 = vmax.f32 %v184, %v189
        %v194 = vmax.f32 %v185, %v190
        %v195 = vmax.f32 %v186, %v191
        %v196 = vld [vmem:[%s161 + $0x10] sm:$0xff]
        %v197 = vld [vmem:[%s161 + $0x28] sm:$0xff]
        %204 = vrot.lane.b32.xlu0 %v183, 127
        %v205 = vpop.permute.xlu0 %204
        %206 = vrot.lane.b32.xlu0 %v184, 127
        %v207 = vpop.permute.xlu0 %206
        %208 = vrot.lane.b32.xlu0 %v196, 127
        %v209 = vpop.permute.xlu0 %208
        %210 = vrot.lane.b32.xlu0 %v185, 127
        %v211 = vpop.permute.xlu0 %210
        %212 = vrot.lane.b32.xlu0 %v186, 127
        %v213 = vpop.permute.xlu0 %212
        %214 = vrot.lane.b32.xlu0 %v197, 127
        %v215 = vpop.permute.xlu0 %214
        %vm216 = vcmask 1039360
        %v217 = vsel %vm216, %v205, %v207
        %v218 = vsel %vm216, %v207, %v209
        %v219 = vsel %vm216, %v211, %v213
        %v220 = vsel %vm216, %v213, %v215
        %v225 = vmax.f32 %v192, %v217
        %v226 = vmax.f32 %v193, %v218
        %v227 = vmax.f32 %v194, %v219
        %v228 = vmax.f32 %v195, %v220
        %s229 = scalar_lea.vmem %s161, 96 [#allocation2]
        %v230 = vld [vmem:[%s229] sm:$0xff]
        %v231 = vld [vmem:[%s229 + $0x8] sm:$0xff]
        %v232 = vld [vmem:[%s229 + $0x18] sm:$0xff]
        %v233 = vld [vmem:[%s229 + $0x20] sm:$0xff]
        %v234 = vmax.f32 %v225, %v230
        %v235 = vmax.f32 %v226, %v231
        %v236 = vmax.f32 %v227, %v232
        %v237 = vmax.f32 %v228, %v233
        %s238 = scalar_lea.vmem %s161, 144 [#allocation2]
        %v239 = vld [vmem:[%s238] sm:$0xff]
        %v240 = vld [vmem:[%s238 + $0x8] sm:$0xff]
        %v241 = vld [vmem:[%s238 + $0x18] sm:$0xff]
        %v242 = vld [vmem:[%s238 + $0x20] sm:$0xff]
        %v243 = vmax.f32 %v234, %v239
        %v244 = vmax.f32 %v235, %v240
        %v245 = vmax.f32 %v236, %v241
        %v246 = vmax.f32 %v237, %v242
        %v247 = vld [vmem:[%s229 + $0x10] sm:$0xff]
        %v248 = vld [vmem:[%s229 + $0x28] sm:$0xff]
        %255 = vrot.lane.b32.xlu0 %v230, 127
        %v256 = vpop.permute.xlu0 %255
        %257 = vrot.lane.b32.xlu0 %v231, 127
        %v258 = vpop.permute.xlu0 %257
        %259 = vrot.lane.b32.xlu0 %v247, 127
        %v260 = vpop.permute.xlu0 %259
        %261 = vrot.lane.b32.xlu0 %v232, 127
        %v262 = vpop.permute.xlu0 %261
        %263 = vrot.lane.b32.xlu0 %v233, 127
        %v264 = vpop.permute.xlu0 %263
        %265 = vrot.lane.b32.xlu0 %v248, 127
        %v266 = vpop.permute.xlu0 %265
        %v267 = vsel %vm216, %v256, %v258
        %v268 = vsel %vm216, %v258, %v260
        %v269 = vsel %vm216, %v262, %v264
        %v270 = vsel %vm216, %v264, %v266
        %v275 = vmax.f32 %v243, %v267
        %v276 = vmax.f32 %v244, %v268
        %v277 = vmax.f32 %v245, %v269
        %v278 = vmax.f32 %v246, %v270
        %279 = vrot.lane.b32.xlu0 %v183, 113
        %v280 = vpop.permute.xlu0 %279
        %281 = vrot.lane.b32.xlu0 %v184, 113
        %v282 = vpop.permute.xlu0 %281
        %283 = vrot.lane.b32.xlu0 %v196, 113
        %v284 = vpop.permute.xlu0 %283
        %285 = vrot.lane.b32.xlu0 %v185, 113
        %v286 = vpop.permute.xlu0 %285
        %287 = vrot.lane.b32.xlu0 %v186, 113
        %v288 = vpop.permute.xlu0 %287
        %289 = vrot.lane.b32.xlu0 %v197, 113
        %v290 = vpop.permute.xlu0 %289
        %vm291 = vcmask 924672
        %v292 = vsel %vm291, %v280, %v282
        %v293 = vsel %vm291, %v282, %v284
        %v294 = vsel %vm291, %v286, %v288
        %v295 = vsel %vm291, %v288, %v290
        %v300 = vmax.f32 %v275, %v292
        %v301 = vmax.f32 %v276, %v293
        %v302 = vmax.f32 %v277, %v294
        %v303 = vmax.f32 %v278, %v295
        %v304 = vld [vmem:[%s187 + $0x10] sm:$0xff]
        %v305 = vld [vmem:[%s187 + $0x28] sm:$0xff]
        %312 = vrot.lane.b32.xlu0 %v188, 113
        %v313 = vpop.permute.xlu0 %312
        %314 = vrot.lane.b32.xlu0 %v189, 113
        %v315 = vpop.permute.xlu0 %314
        %316 = vrot.lane.b32.xlu0 %v304, 113
        %v317 = vpop.permute.xlu0 %316
        %318 = vrot.lane.b32.xlu0 %v190, 113
        %v319 = vpop.permute.xlu0 %318
        %320 = vrot.lane.b32.xlu0 %v191, 113
        %v321 = vpop.permute.xlu0 %320
        %322 = vrot.lane.b32.xlu0 %v305, 113
        %v323 = vpop.permute.xlu0 %322
        %v324 = vsel %vm291, %v313, %v315
        %v325 = vsel %vm291, %v315, %v317
        %v326 = vsel %vm291, %v319, %v321
        %v327 = vsel %vm291, %v321, %v323
        %v332 = vmax.f32 %v300, %v324
        %v333 = vmax.f32 %v301, %v325
        %v334 = vmax.f32 %v302, %v326
        %v335 = vmax.f32 %v303, %v327
        %336 = vrot.lane.b32.xlu0 %v183, 112
        %v337 = vpop.permute.xlu0 %336
        %338 = vrot.lane.b32.xlu0 %v184, 112
        %v339 = vpop.permute.xlu0 %338
        %340 = vrot.lane.b32.xlu0 %v196, 112
        %v341 = vpop.permute.xlu0 %340
        %342 = vrot.lane.b32.xlu0 %v185, 112
        %v343 = vpop.permute.xlu0 %342
        %344 = vrot.lane.b32.xlu0 %v186, 112
        %v345 = vpop.permute.xlu0 %344
        %346 = vrot.lane.b32.xlu0 %v197, 112
        %v347 = vpop.permute.xlu0 %346
        %vm348 = vcmask 916480
        %v349 = vsel %vm348, %v337, %v339
        %v350 = vsel %vm348, %v339, %v341
        %v351 = vsel %vm348, %v343, %v345
        %v352 = vsel %vm348, %v345, %v347
        %v357 = vmax.f32 %v332, %v349
        %v358 = vmax.f32 %v333, %v350
        %v359 = vmax.f32 %v334, %v351
        %v360 = vmax.f32 %v335, %v352
        %361 = vst [vmem:[%s182] sm:$0xff] %v357
        %362 = vst [vmem:[%s182 + $0x8] sm:$0xff] %v358
        %363 = vst [vmem:[%s182 + $0x10] sm:$0xff] %v359
        %364 = vst [vmem:[%s182 + $0x18] sm:$0xff] %v360
        %p365 = scmp.lt.s32.totalorder %s12, 1
        %s366 = scalar_select %p365, %s12, 1
        %s367 = smul.addr %s366, 4
        %s368 = smul.addr %s367, 8
        %s369 = scalar_lea.vmem %s1, %s368
        // Predicated region
        $region48: #{siamrpn_forward.11} parent=42 // pred_check
          %p370 = pneg %p56
        $region49: #{siamrpn_forward.11} parent=42 // pred_check_branch
          %372 = sbr.rel (%p370) target = $region51
        $region50: #{siamrpn_forward.11} parent=42 // pred_region
          _
        $region51: #{siamrpn_forward.11} parent=42 // pred_fallthru
          _
      $region43: #{siamrpn_forward.11} parent=5 // pred_fallthru
        _
      %p373 = scmp.le.s32.totalorder 2, %s7
      // Predicated region
      $region52: #{siamrpn_forward.11} parent=5 // pred_check
        %p374 = pneg %p373
      $region53: #{siamrpn_forward.11} parent=5 // pred_check_branch
        %376 = sbr.rel (%p374) target = $region55
      $region54: #{siamrpn_forward.11} parent=5 // pred_region
        %s377 = ssub.s32 %s7, 2
        // Predicated region
        $region56: #{siamrpn_forward.11} parent=54 // pred_check
          %p378 = pneg %p62
        $region57: #{siamrpn_forward.11} parent=54 // pred_check_branch
          %380 = sbr.rel (%p378) target = $region59
        $region58: #{siamrpn_forward.11} parent=54 // pred_region
          %p381 = scmp.lt.s32.totalorder %s13, 1
          %s382 = scalar_select %p381, %s13, 1
          %s383 = smul.addr %s382, 4
          %s384 = smul.addr %s383, 8
          %s385 = scalar_lea.vmem %s1, %s384
        $region59: #{siamrpn_forward.11} parent=54 // pred_fallthru
          _
      $region55: #{siamrpn_forward.11} parent=5 // pred_fallthru
        _
    $region6: #{siamrpn_forward.11} parent=1 // loop_footer
      %s11 = sadd.s32 1, %s7
    $region7: #{siamrpn_forward.11} parent=1 // loop_footer_branch
      %6 = sbr.rel target = $region3
    $region8: #{siamrpn_forward.11} parent=1 // loop_exit
      _

// kernel: siamrpn_forward.12
$region0: #{siamrpn_forward.12}
  #allocation0 [shape = 'u32[]', space=smem, size = 0x4, offset = 0x4, fixed_abs, tag = 'smem constant byte address 0x4 - core index']
  #allocation1 [shape = 'u32[144,128]{1,0:T(1,128)}', space=vmem, size = 0x12000, scoped, tag = 'internal scratch']
  %s0 = inlined_call_operand.vmem [shape: bf16[2,16,1024], index: 0, kind: input, shape index: {}, may-alias: {0,1}]
  %s1 = inlined_call_operand.vmem [shape: bf16[2,16,1024], index: 1, kind: input, shape index: {}, may-alias: {0,1}]
  %s2 = inlined_call_operand.vmem [shape: bf16[16,144], index: 2, kind: input, shape index: {}]
  %s3 = inlined_call_operand.vmem [shape: f32[16,1], index: 3, kind: input, shape index: {}]
  %s4 = inlined_call_operand.vmem [shape: f32[16,1], index: 4, kind: input, shape index: {}]
  %s5 = inlined_call_operand.vmem [shape: bf16[2,16,1024], index: 5, kind: output, shape index: {}]
  %s6 = sld [smem:[#allocation0]]
  $region118: #{siamrpn_forward.12} parent=0
    _
  %s8 = ssub.s32 1, %s6
  %s9 = scalar_select 0, %s8, %s6
  $region1: #{siamrpn_forward.12} parent=0
    #allocation2 [shape = 'u8[32768]{0}', space=vmem, size = 0x8000, scoped, tag = 'input window, operand 0']
    #allocation3 [shape = 'u8[32768]{0}', space=vmem, size = 0x8000, scoped, tag = 'input window, operand 1']
    #allocation4 [shape = 'u8[32768]{0}', space=vmem, size = 0x8000, scoped, tag = 'output window, operand 0']
    loop: start=0, step=1, limit=4
    $region2: #{siamrpn_forward.12} parent=1 // loop_pre_header
      _
    $region3: #{siamrpn_forward.12} parent=1 // loop_header
      %s11 = sphi 0, %s15
      %p12 = scmp.ge.s32.totalorder %s11, 4
      %s18 = sphi 0, %s30
      %s19 = sphi 0, %s26
      %s20 = sphi 0, %s18
      %s21 = sphi 0, %s19
      %s22 = sphi 0, %s20
      %s23 = sphi 0, %s21
      %s35 = sphi 0, %s37
      %s38 = sphi 0, %s35
      %s39 = sphi 0, %s38
      %s55 = sphi 0, %s39
      %s65 = sphi 0, %s67
      %s68 = sphi 0, %s65
      %s69 = sphi 0, %s68
      %s85 = sphi 0, %s69
      %s89 = sphi 0, %s89
      %s91 = sphi 0, %s89
      %s92 = sphi 0, %s91
      %s106 = sphi 0, %s92
      %s110 = sphi 0, %s110
      %s112 = sphi 0, %s110
      %s113 = sphi 0, %s112
      %s127 = sphi 0, %s113
      %s131 = sphi 0, %s131
      %s133 = sphi 0, %s131
      %s134 = sphi 0, %s133
      %s148 = sphi 0, %s134
      %s156 = sphi 0, %s158
      %s159 = sphi 0, %s156
      %s160 = sphi 0, %s159
      %s176 = sphi 0, %s160
    $region4: #{siamrpn_forward.12} parent=1 // loop_header_branch
      %14 = sbr.rel (%p12) target = $region8
    $region5: #{siamrpn_forward.12} parent=1 // loop_body
      %s16 = ssub.s32 %s11, 1
      %s17 = ssub.s32 %s11, 2
      %s24 = sadd.s32 1, %s19
      %p25 = scmp.ge.s32.totalorder %s24, 1
      %s26 = scalar_select %p25, 0, %s24
      %s27 = sadd.s32 1, %s18
      %s28 = scalar_select %p25, %s27, %s18
      %p29 = scmp.ge.s32.totalorder %s28, 2
      %s30 = scalar_select %p29, 0, %s28
      %s31 = ssub.s32 %s18, %s30
      %s32 = ssub.s32 %s19, %s26
      %s33 = sor.u32 %s31, %s32
      %p34 = scmp.eq.s32.totalorder %s33, 0
      %s36 = sadd.s32 %s35, 1
      %s37 = scalar_select %p34, %s35, %s36
      %p40 = pneg %p34
      %p41 = scmp.eq.s32.totalorder %s11, 1
      %p42 = por %p40, %p41
      %p43 = scmp.ne.s32.totalorder %s35, %s38
      %p44 = scmp.eq.s32.totalorder %s11, 0
      %p45 = por %p43, %p44
      %p46 = scmp.ne.s32.totalorder %s35, %s38
      %p47 = scmp.eq.s32.totalorder %s16, 1
      %p48 = por %p46, %p47
      %p49 = scmp.ne.s32.totalorder %s38, %s39
      %p50 = scmp.eq.s32.totalorder %s16, 0
      %p51 = por %p49, %p50
      %p52 = scmp.ne.s32.totalorder %s38, %s39
      %p53 = scmp.eq.s32.totalorder %s17, 1
      %p54 = por %p52, %p53
      %p56 = scmp.ne.s32.totalorder %s39, %s55
      %p57 = scmp.eq.s32.totalorder %s17, 0
      %p58 = por %p56, %p57
      %s59 = sadd.s32 %s19, 1
      %s60 = sadd.s32 %s26, 1
      %s61 = ssub.s32 %s18, %s30
      %s62 = ssub.s32 %s59, %s60
      %s63 = sor.u32 %s61, %s62
      %p64 = scmp.eq.s32.totalorder %s63, 0
      %s66 = sadd.s32 %s65, 1
      %s67 = scalar_select %p64, %s65, %s66
      %p70 = pneg %p64
      %p71 = scmp.eq.s32.totalorder %s11, 1
      %p72 = por %p70, %p71
      %p73 = scmp.ne.s32.totalorder %s65, %s68
      %p74 = scmp.eq.s32.totalorder %s11, 0
      %p75 = por %p73, %p74
      %p76 = scmp.ne.s32.totalorder %s65, %s68
      %p77 = scmp.eq.s32.totalorder %s16, 1
      %p78 = por %p76, %p77
      %p79 = scmp.ne.s32.totalorder %s68, %s69
      %p80 = scmp.eq.s32.totalorder %s16, 0
      %p81 = por %p79, %p80
      %p82 = scmp.ne.s32.totalorder %s68, %s69
      %p83 = scmp.eq.s32.totalorder %s17, 1
      %p84 = por %p82, %p83
      %p86 = scmp.ne.s32.totalorder %s69, %s85
      %p87 = scmp.eq.s32.totalorder %s17, 0
      %p88 = por %p86, %p87
      %s90 = sadd.s32 %s89, 1
      %p93 = scmp.eq.s32.totalorder %s11, 1
      %p94 = scmp.ne.s32.totalorder %s89, %s91
      %p95 = scmp.eq.s32.totalorder %s11, 0
      %p96 = por %p94, %p95
      %p97 = scmp.ne.s32.totalorder %s89, %s91
      %p98 = scmp.eq.s32.totalorder %s16, 1
      %p99 = por %p97, %p98
      %p100 = scmp.ne.s32.totalorder %s91, %s92
      %p101 = scmp.eq.s32.totalorder %s16, 0
      %p102 = por %p100, %p101
      %p103 = scmp.ne.s32.totalorder %s91, %s92
      %p104 = scmp.eq.s32.totalorder %s17, 1
      %p105 = por %p103, %p104
      %p107 = scmp.ne.s32.totalorder %s92, %s106
      %p108 = scmp.eq.s32.totalorder %s17, 0
      %p109 = por %p107, %p108
      %s111 = sadd.s32 %s110, 1
      %p114 = scmp.eq.s32.totalorder %s11, 1
      %p115 = scmp.ne.s32.totalorder %s110, %s112
      %p116 = scmp.eq.s32.totalorder %s11, 0
      %p117 = por %p115, %p116
      %p118 = scmp.ne.s32.totalorder %s110, %s112
      %p119 = scmp.eq.s32.totalorder %s16, 1
      %p120 = por %p118, %p119
      %p121 = scmp.ne.s32.totalorder %s112, %s113
      %p122 = scmp.eq.s32.totalorder %s16, 0
      %p123 = por %p121, %p122
      %p124 = scmp.ne.s32.totalorder %s112, %s113
      %p125 = scmp.eq.s32.totalorder %s17, 1
      %p126 = por %p124, %p125
      %p128 = scmp.ne.s32.totalorder %s113, %s127
      %p129 = scmp.eq.s32.totalorder %s17, 0
      %p130 = por %p128, %p129
      %s132 = sadd.s32 %s131, 1
      %p135 = scmp.eq.s32.totalorder %s11, 1
      %p136 = scmp.ne.s32.totalorder %s131, %s133
      %p137 = scmp.eq.s32.totalorder %s11, 0
      %p138 = por %p136, %p137
      %p139 = scmp.ne.s32.totalorder %s131, %s133
      %p140 = scmp.eq.s32.totalorder %s16, 1
      %p141 = por %p139, %p140
      %p142 = scmp.ne.s32.totalorder %s133, %s134
      %p143 = scmp.eq.s32.totalorder %s16, 0
      %p144 = por %p142, %p143
      %p145 = scmp.ne.s32.totalorder %s133, %s134
      %p146 = scmp.eq.s32.totalorder %s17, 1
      %p147 = por %p145, %p146
      %p149 = scmp.ne.s32.totalorder %s134, %s148
      %p150 = scmp.eq.s32.totalorder %s17, 0
      %p151 = por %p149, %p150
      %s152 = ssub.s32 %s18, %s30
      %s153 = ssub.s32 %s19, %s26
      %s154 = sor.u32 %s152, %s153
      %p155 = scmp.eq.s32.totalorder %s154, 0
      %s157 = sadd.s32 %s156, 1
      %s158 = scalar_select %p155, %s156, %s157
      %p161 = pneg %p155
      %p162 = scmp.eq.s32.totalorder %s11, 1
      %p163 = por %p161, %p162
      %p164 = scmp.ne.s32.totalorder %s156, %s159
      %p165 = scmp.eq.s32.totalorder %s11, 0
      %p166 = por %p164, %p165
      %p167 = scmp.ne.s32.totalorder %s156, %s159
      %p168 = scmp.eq.s32.totalorder %s16, 1
      %p169 = por %p167, %p168
      %p170 = scmp.ne.s32.totalorder %s159, %s160
      %p171 = scmp.eq.s32.totalorder %s16, 0
      %p172 = por %p170, %p171
      %p173 = scmp.ne.s32.totalorder %s159, %s160
      %p174 = scmp.eq.s32.totalorder %s17, 1
      %p175 = por %p173, %p174
      %p177 = scmp.ne.s32.totalorder %s160, %s176
      %p178 = scmp.eq.s32.totalorder %s17, 0
      %p179 = por %p177, %p178
      %p180 = scmp.le.s32.totalorder 1, %s11
      %p181 = scmp.lt.s32.totalorder %s11, 3
      %p182 = pnand %p180, %p181
      %p183 = pneg %p182
      // Predicated region
      $region9: #{siamrpn_forward.12} parent=5 // pred_check
        _
      $region10: #{siamrpn_forward.12} parent=5 // pred_check_branch
        %185 = sbr.rel (%p182) target = $region12
      $region11: #{siamrpn_forward.12} parent=5 // pred_region
        %s186 = ssub.s32 %s11, 1
        // Predicated region
        $region13: #{siamrpn_forward.12} parent=11 // pred_check
          %p187 = pneg %p102
        $region14: #{siamrpn_forward.12} parent=11 // pred_check_branch
          %189 = sbr.rel (%p187) target = $region16
        $region15: #{siamrpn_forward.12} parent=11 // pred_region
          _
        $region16: #{siamrpn_forward.12} parent=11 // pred_fallthru
          _
        // Predicated region
        $region17: #{siamrpn_forward.12} parent=11 // pred_check
          %p190 = pneg %p123
        $region18: #{siamrpn_forward.12} parent=11 // pred_check_branch
          %192 = sbr.rel (%p190) target = $region20
        $region19: #{siamrpn_forward.12} parent=11 // pred_region
          _
        $region20: #{siamrpn_forward.12} parent=11 // pred_fallthru
          _
        // Predicated region
        $region21: #{siamrpn_forward.12} parent=11 // pred_check
          %p193 = pneg %p144
        $region22: #{siamrpn_forward.12} parent=11 // pred_check_branch
          %195 = sbr.rel (%p193) target = $region24
        $region23: #{siamrpn_forward.12} parent=11 // pred_region
          _
        $region24: #{siamrpn_forward.12} parent=11 // pred_fallthru
          _
      $region12: #{siamrpn_forward.12} parent=5 // pred_fallthru
        _
      %p196 = scmp.lt.s32.totalorder %s11, 2
      // Predicated region
      $region25: #{siamrpn_forward.12} parent=5 // pred_check
        %p197 = pneg %p196
      $region26: #{siamrpn_forward.12} parent=5 // pred_check_branch
        %199 = sbr.rel (%p197) target = $region28
      $region27: #{siamrpn_forward.12} parent=5 // pred_region
        // Predicated region
        $region29: #{siamrpn_forward.12} parent=27 // pred_check
          %p200 = pneg %p45
        $region30: #{siamrpn_forward.12} parent=27 // pred_check_branch
          %202 = sbr.rel (%p200) target = $region32
        $region31: #{siamrpn_forward.12} parent=27 // pred_region
          %s203 = sand.u32 %s35, 1
          %s204 = sand.u32 %s35, 1
          %s205 = smul.addr %s204, 32
          %s206 = scalar_lea.vmem [#allocation2], %s205
          %s207 = smul.u32 4, %s19
          %s208 = smul.addr %s18, 16
          %s209 = sadd.s32 %s207, %s208
          %s210 = smul.addr %s209, 4
          %s211 = scalar_lea.vmem %s0, %s210
          // Predicated region
          $region33: #{siamrpn_forward.12} parent=31 // pred_check
            _
          $region34: #{siamrpn_forward.12} parent=31 // pred_check_branch
            %213 = sbr.rel (0) target = $region36
          $region35: #{siamrpn_forward.12} parent=31 // pred_region
            // Predicated region
            $region37: #{siamrpn_forward.12} parent=35 // pred_check
              _
            $region38: #{siamrpn_forward.12} parent=35 // pred_check_branch
              %215 = sbr.rel (0) target = $region40
            $region39: #{siamrpn_forward.12} parent=35 // pred_region
              loop: start=0, step=1, limit=1
              $region41: #{siamrpn_forward.12} parent=39 // loop_pre_header
                _
              $region42: #{siamrpn_forward.12} parent=39 // loop_header
                %s217 = sphi 0, %s221
                %p218 = scmp.ge.s32.totalorder %s217, 1
                %s222 = sphi %s211, %s211
                %s223 = sphi %s206, %s206
              $region43: #{siamrpn_forward.12} parent=39 // loop_header_branch
                %220 = sbr.rel (%p218) target = $region47
              $region44: #{siamrpn_forward.12} parent=39 // loop_body
                %v224 = vld [vmem:[%s222] sm:$0xff]
                %225 = vst [vmem:[%s223] sm:$0xff] %v224
                %v226 = vld [vmem:[%s222 + $0x8] sm:$0xff]
                %227 = vst [vmem:[%s223 + $0x8] sm:$0xff] %v226
                %v228 = vld [vmem:[%s222 + $0x20] sm:$0xff]
                %229 = vst [vmem:[%s223 + $0x10] sm:$0xff] %v228
                %v230 = vld [vmem:[%s222 + $0x28] sm:$0xff]
                %231 = vst [vmem:[%s223 + $0x18] sm:$0xff] %v230
              $region45: #{siamrpn_forward.12} parent=39 // loop_footer
                %s221 = sadd.s32 1, %s217
              $region46: #{siamrpn_forward.12} parent=39 // loop_footer_branch
                %216 = sbr.rel target = $region42
              $region47: #{siamrpn_forward.12} parent=39 // loop_exit
                _
            $region40: #{siamrpn_forward.12} parent=35 // pred_fallthru
              _
            // Predicated region
            $region48: #{siamrpn_forward.12} parent=35 // pred_check
              _
            $region49: #{siamrpn_forward.12} parent=35 // pred_check_branch
              %233 = sbr.rel target = $region51
            $region50: #{siamrpn_forward.12} parent=35 // pred_region
              _
            $region51: #{siamrpn_forward.12} parent=35 // pred_fallthru
              _
          $region36: #{siamrpn_forward.12} parent=31 // pred_fallthru
            _
          %234 = vnop
        $region32: #{siamrpn_forward.12} parent=27 // pred_fallthru
          _
        // Predicated region
        $region52: #{siamrpn_forward.12} parent=27 // pred_check
          %p235 = pneg %p75
        $region53: #{siamrpn_forward.12} parent=27 // pred_check_branch
          %237 = sbr.rel (%p235) target = $region55
        $region54: #{siamrpn_forward.12} parent=27 // pred_region
          %s238 = sand.u32 %s65, 1
          %s239 = sand.u32 %s65, 1
          %s240 = smul.addr %s239, 32
          %s241 = scalar_lea.vmem [#allocation3], %s240
          %s242 = sadd.s32 %s19, 1
          %s243 = smul.u32 4, %s242
          %s244 = smul.addr %s18, 16
          %s245 = sadd.s32 %s243, %s244
          %s246 = smul.addr %s245, 4
          %s247 = scalar_lea.vmem %s1, %s246
          // Predicated region
          $region56: #{siamrpn_forward.12} parent=54 // pred_check
            _
          $region57: #{siamrpn_forward.12} parent=54 // pred_check_branch
            %249 = sbr.rel (0) target = $region59
          $region58: #{siamrpn_forward.12} parent=54 // pred_region
            // Predicated region
            $region60: #{siamrpn_forward.12} parent=58 // pred_check
              _
            $region61: #{siamrpn_forward.12} parent=58 // pred_check_branch
              %251 = sbr.rel (0) target = $region63
            $region62: #{siamrpn_forward.12} parent=58 // pred_region
              loop: start=0, step=1, limit=1
              $region64: #{siamrpn_forward.12} parent=62 // loop_pre_header
                _
              $region65: #{siamrpn_forward.12} parent=62 // loop_header
                %s253 = sphi 0, %s257
                %p254 = scmp.ge.s32.totalorder %s253, 1
                %s258 = sphi %s247, %s247
                %s259 = sphi %s241, %s241
              $region66: #{siamrpn_forward.12} parent=62 // loop_header_branch
                %256 = sbr.rel (%p254) target = $region70
              $region67: #{siamrpn_forward.12} parent=62 // loop_body
                %v260 = vld [vmem:[%s258] sm:$0xff]
                %261 = vst [vmem:[%s259] sm:$0xff] %v260
                %v262 = vld [vmem:[%s258 + $0x8] sm:$0xff]
                %263 = vst [vmem:[%s259 + $0x8] sm:$0xff] %v262
                %v264 = vld [vmem:[%s258 + $0x20] sm:$0xff]
                %265 = vst [vmem:[%s259 + $0x10] sm:$0xff] %v264
                %v266 = vld [vmem:[%s258 + $0x28] sm:$0xff]
                %267 = vst [vmem:[%s259 + $0x18] sm:$0xff] %v266
              $region68: #{siamrpn_forward.12} parent=62 // loop_footer
                %s257 = sadd.s32 1, %s253
              $region69: #{siamrpn_forward.12} parent=62 // loop_footer_branch
                %252 = sbr.rel target = $region65
              $region70: #{siamrpn_forward.12} parent=62 // loop_exit
                _
            $region63: #{siamrpn_forward.12} parent=58 // pred_fallthru
              _
            // Predicated region
            $region71: #{siamrpn_forward.12} parent=58 // pred_check
              _
            $region72: #{siamrpn_forward.12} parent=58 // pred_check_branch
              %269 = sbr.rel target = $region74
            $region73: #{siamrpn_forward.12} parent=58 // pred_region
              _
            $region74: #{siamrpn_forward.12} parent=58 // pred_fallthru
              _
          $region59: #{siamrpn_forward.12} parent=54 // pred_fallthru
            _
          %270 = vnop
        $region55: #{siamrpn_forward.12} parent=27 // pred_fallthru
          _
      $region28: #{siamrpn_forward.12} parent=5 // pred_fallthru
        _
      %p271 = scmp.le.s32.totalorder 1, %s11
      %p272 = scmp.lt.s32.totalorder %s11, 3
      %p273 = pnand %p271, %p272
      %p274 = pneg %p273
      // Predicated region
      $region75: #{siamrpn_forward.12} parent=5 // pred_check
        _
      $region76: #{siamrpn_forward.12} parent=5 // pred_check_branch
        %276 = sbr.rel (%p273) target = $region78
      $region77: #{siamrpn_forward.12} parent=5 // pred_region
        %s277 = ssub.s32 %s11, 1
        %s278 = sand.u32 %s38, 1
        %s279 = sand.u32 %s38, 1
        %s280 = smul.addr %s279, 32
        %s281 = scalar_lea.vmem [#allocation2], %s280
        // Predicated region
        $region79: #{siamrpn_forward.12} parent=77 // pred_check
          %p282 = pneg %p51
        $region80: #{siamrpn_forward.12} parent=77 // pred_check_branch
          %284 = sbr.rel (%p282) target = $region82
        $region81: #{siamrpn_forward.12} parent=77 // pred_region
          _
        $region82: #{siamrpn_forward.12} parent=77 // pred_fallthru
          _
        %s285 = sand.u32 %s68, 1
        %s286 = sand.u32 %s68, 1
        %s287 = smul.addr %s286, 32
        %s288 = scalar_lea.vmem [#allocation3], %s287
        // Predicated region
        $region83: #{siamrpn_forward.12} parent=77 // pred_check
          %p289 = pneg %p81
        $region84: #{siamrpn_forward.12} parent=77 // pred_check_branch
          %291 = sbr.rel (%p289) target = $region86
        $region85: #{siamrpn_forward.12} parent=77 // pred_region
          _
        $region86: #{siamrpn_forward.12} parent=77 // pred_fallthru
          _
        %s292 = sand.u32 %s38, 1
        %s293 = sand.u32 %s38, 1
        %s294 = smul.addr %s293, 32
        %s295 = scalar_lea.vmem [#allocation2], %s294
        %p296 = pneg %p51
        %p297 = pneg %p48
        %s298 = sand.u32 %s68, 1
        %s299 = sand.u32 %s68, 1
        %s300 = smul.addr %s299, 32
        %s301 = scalar_lea.vmem [#allocation3], %s300
        %p302 = pneg %p81
        %p303 = pneg %p78
        %p304 = pneg %p102
        %p305 = pneg %p99
        %p306 = pneg %p123
        %p307 = pneg %p120
        %p308 = pneg %p144
        %p309 = pneg %p141
        %p310 = pneg %p172
        %p311 = pneg %p169
        %s312 = sand.u32 %s159, 1
        %s313 = sand.u32 %s159, 1
        %s314 = smul.addr %s313, 32
        %s315 = scalar_lea.vmem [#allocation4], %s314
        %s316 = smul.u32 4, %s21
        %s317 = sadd.s32 %s21, 1
        %s318 = smul.u32 4, %s317
        %s319 = smul.u32 4, %s21
        %v321 = vld [vmem:[%s281] sm:$0xff]
        %v322 = vld [vmem:[%s281 + $0x8] sm:$0xff]
        %v323 = vld [vmem:[%s281 + $0x10] sm:$0xff]
        %v324 = vld [vmem:[%s281 + $0x18] sm:$0xff]
        %v325 = vld [vmem:[%s288] sm:$0xff]
        %v326 = vld [vmem:[%s288 + $0x10] sm:$0xff]
        %v331 = vunpack.c.l.b16 %v321
        %v332 = vunpack.c.h.b16 %v321
        %v333 = vunpack.c.l.b16 %v322
        %v334 = vunpack.c.h.b16 %v322
        %v335 = vunpack.c.l.b16 %v323
        %v336 = vunpack.c.h.b16 %v323
        %v337 = vunpack.c.l.b16 %v324
        %v338 = vunpack.c.h.b16 %v324
        %v339 = vpack.c.b16 %v335, %v331
        %v340 = vpack.c.b16 %v336, %v332
        %v341 = vpack.c.b16 %v337, %v333
        %v342 = vpack.c.b16 %v338, %v334
        %v349 = vunpack.c.l.b16 %v325
        %v350 = vunpack.c.l.b16 %v326
        %v351 = vpack.c.b16 %v350, %v349
        %352 = vrot.lane.b32.xlu0 %v339, 127
        %v353 = vpop.permute.xlu0 %352
        %354 = vrot.lane.b32.xlu0 %v340, 127
        %v355 = vpop.permute.xlu0 %354
        %356 = vrot.lane.b32.xlu0 %v341, 127
        %v357 = vpop.permute.xlu0 %356
        %358 = vrot.lane.b32.xlu0 %v342, 127
        %v359 = vpop.permute.xlu0 %358
        %360 = vrot.lane.b32.xlu0 %v351, 127
        %v361 = vpop.permute.xlu0 %360
        %vm362 = vcmask 1039360
        %v363 = vsel %vm362, %v353, %v355
        %v364 = vsel %vm362, %v355, %v357
        %v365 = vsel %vm362, %v357, %v359
        %v366 = vsel %vm362, %v359, %v361
        %371 = vrot.lane.b32.xlu0 %v339, 126
        %v372 = vpop.permute.xlu0 %371
        %373 = vrot.lane.b32.xlu0 %v340, 126
        %v374 = vpop.permute.xlu0 %373
        %375 = vrot.lane.b32.xlu0 %v341, 126
        %v376 = vpop.permute.xlu0 %375
        %377 = vrot.lane.b32.xlu0 %v342, 126
        %v378 = vpop.permute.xlu0 %377
        %379 = vrot.lane.b32.xlu0 %v351, 126
        %v380 = vpop.permute.xlu0 %379
        %vm381 = vcmask 1031168
        %v382 = vsel %vm381, %v372, %v374
        %v383 = vsel %vm381, %v374, %v376
        %v384 = vsel %vm381, %v376, %v378
        %v385 = vsel %vm381, %v378, %v380
        %390 = vrot.lane.b32.xlu0 %v339, 114
        %v391 = vpop.permute.xlu0 %390
        %392 = vrot.lane.b32.xlu0 %v340, 114
        %v393 = vpop.permute.xlu0 %392
        %394 = vrot.lane.b32.xlu0 %v341, 114
        %v395 = vpop.permute.xlu0 %394
        %396 = vrot.lane.b32.xlu0 %v342, 114
        %v397 = vpop.permute.xlu0 %396
        %398 = vrot.lane.b32.xlu0 %v351, 114
        %v399 = vpop.permute.xlu0 %398
        %vm400 = vcmask 932864
        %v401 = vsel %vm400, %v391, %v393
        %v402 = vsel %vm400, %v393, %v395
        %v403 = vsel %vm400, %v395, %v397
        %v404 = vsel %vm400, %v397, %v399
        %409 = vrot.lane.b32.xlu0 %v339, 113
        %v410 = vpop.permute.xlu0 %409
        %411 = vrot.lane.b32.xlu0 %v340, 113
        %v412 = vpop.permute.xlu0 %411
        %413 = vrot.lane.b32.xlu0 %v341, 113
        %v414 = vpop.permute.xlu0 %413
        %415 = vrot.lane.b32.xlu0 %v342, 113
        %v416 = vpop.permute.xlu0 %415
        %417 = vrot.lane.b32.xlu0 %v351, 113
        %v418 = vpop.permute.xlu0 %417
        %vm419 = vcmask 924672
        %v420 = vsel %vm419, %v410, %v412
        %v421 = vsel %vm419, %v412, %v414
        %v422 = vsel %vm419, %v414, %v416
        %v423 = vsel %vm419, %v416, %v418
        %428 = vrot.lane.b32.xlu0 %v339, 112
        %v429 = vpop.permute.xlu0 %428
        %430 = vrot.lane.b32.xlu0 %v340, 112
        %v431 = vpop.permute.xlu0 %430
        %432 = vrot.lane.b32.xlu0 %v341, 112
        %v433 = vpop.permute.xlu0 %432
        %434 = vrot.lane.b32.xlu0 %v342, 112
        %v435 = vpop.permute.xlu0 %434
        %436 = vrot.lane.b32.xlu0 %v351, 112
        %v437 = vpop.permute.xlu0 %436
        %vm438 = vcmask 916480
        %v439 = vsel %vm438, %v429, %v431
        %v440 = vsel %vm438, %v431, %v433
        %v441 = vsel %vm438, %v433, %v435
        %v442 = vsel %vm438, %v435, %v437
        %447 = vrot.lane.b32.xlu0 %v339, 100
        %v448 = vpop.permute.xlu0 %447
        %449 = vrot.lane.b32.xlu0 %v340, 100
        %v450 = vpop.permute.xlu0 %449
        %451 = vrot.lane.b32.xlu0 %v341, 100
        %v452 = vpop.permute.xlu0 %451
        %453 = vrot.lane.b32.xlu0 %v342, 100
        %v454 = vpop.permute.xlu0 %453
        %455 = vrot.lane.b32.xlu0 %v351, 100
        %v456 = vpop.permute.xlu0 %455
        %vm457 = vcmask 818176
        %v458 = vsel %vm457, %v448, %v450
        %v459 = vsel %vm457, %v450, %v452
        %v460 = vsel %vm457, %v452, %v454
        %v461 = vsel %vm457, %v454, %v456
        %466 = vrot.lane.b32.xlu0 %v339, 99
        %v467 = vpop.permute.xlu0 %466
        %468 = vrot.lane.b32.xlu0 %v340, 99
        %v469 = vpop.permute.xlu0 %468
        %470 = vrot.lane.b32.xlu0 %v341, 99
        %v471 = vpop.permute.xlu0 %470
        %472 = vrot.lane.b32.xlu0 %v342, 99
        %v473 = vpop.permute.xlu0 %472
        %474 = vrot.lane.b32.xlu0 %v351, 99
        %v475 = vpop.permute.xlu0 %474
        %vm476 = vcmask 809984
        %v477 = vsel %vm476, %v467, %v469
        %v478 = vsel %vm476, %v469, %v471
        %v479 = vsel %vm476, %v471, %v473
        %v480 = vsel %vm476, %v473, %v475
        %485 = vrot.lane.b32.xlu0 %v339, 98
        %v486 = vpop.permute.xlu0 %485
        %487 = vrot.lane.b32.xlu0 %v340, 98
        %v488 = vpop.permute.xlu0 %487
        %489 = vrot.lane.b32.xlu0 %v341, 98
        %v490 = vpop.permute.xlu0 %489
        %491 = vrot.lane.b32.xlu0 %v342, 98
        %v492 = vpop.permute.xlu0 %491
        %493 = vrot.lane.b32.xlu0 %v351, 98
        %v494 = vpop.permute.xlu0 %493
        %vm495 = vcmask 801792
        %v496 = vsel %vm495, %v486, %v488
        %v497 = vsel %vm495, %v488, %v490
        %v498 = vsel %vm495, %v490, %v492
        %v499 = vsel %vm495, %v492, %v494
        %v504 = vld [vmem:[%s2] sm:$0xff]
        %v505 = vld [vmem:[%s2 + $0x8] sm:$0xff]
        %v508 = vunpack.c.l.b16 %v504
        %v509 = vunpack.c.h.b16 %v504
        %v510 = vunpack.c.l.b16 %v505
        %v511 = vunpack.c.h.b16 %v505
        %v512 = vpack.c.b16 %v510, %v508
        %v513 = vpack.c.b16 %v511, %v509
        %vm515 = vcmask 130048
        %v517 = vsel %vm515, %v513, 0
        %519 = vmatprep.subr.bf16.mxu0 %v340
        %520 = vmatpush1.bf16.msra.mxu0 %v339
        %521 = vmatprep.subr.bf16.mxu0 %v364
        %522 = vmatpush1.bf16.msra.mxu0 %v363
        %523 = vmatprep.subr.bf16.mxu0 %v383
        %524 = vmatpush1.bf16.msra.mxu0 %v382
        %525 = vmatprep.subr.bf16.mxu0 %v402
        %526 = vmatpush1.bf16.msra.mxu0 %v401
        %527 = vmatprep.subr.bf16.mxu0 %v421
        %528 = vmatpush1.bf16.msra.mxu0 %v420
        %529 = vmatprep.subr.bf16.mxu0 %v440
        %530 = vmatpush1.bf16.msra.mxu0 %v439
        %531 = vmatprep.subr.bf16.mxu0 %v459
        %532 = vmatpush1.bf16.msra.mxu0 %v458
        %533 = vmatprep.subr.bf16.mxu0 %v478
        %534 = vmatpush1.bf16.msra.mxu0 %v477
        %535 = vmatprep.subr.bf16.mxu0 %v497
        %536 = vmatpush1.bf16.msra.mxu0 %v496
        %537 = vmatprep.subr.bf16.mxu0 0
        %538 = vmatpush1.bf16.msra.mxu0 0
        %539 = vmatprep.subr.bf16.mxu0 0
        %540 = vmatpush1.bf16.msra.mxu0 0
        %541 = vmatprep.subr.bf16.mxu0 0
        %542 = vmatpush1.bf16.msra.mxu0 0
        %543 = vmatprep.subr.bf16.mxu0 0
        %544 = vmatpush1.bf16.msra.mxu0 0
        %545 = vmatprep.subr.bf16.mxu0 0
        %546 = vmatpush1.bf16.msra.mxu0 0
        %547 = vmatprep.subr.bf16.mxu0 0
        %548 = vmatpush1.bf16.msra.mxu0 0
        %549 = vmatprep.subr.bf16.mxu0 0
        %550 = vmatpush1.bf16.msra.mxu0 0
        %551 = vmatprep.mubr.bf16.mxu0 %v517
        %552 = vmatmul.mubr.bf16.gmra.mrb[0].mxu0 %v512
        %v553 = vpop.f32.mrb[0].mxu0
        %v554 = vadd.f32 0.0, %v553
        %v555 = vpop.f32.mrb[0].mxu0
        %v556 = vadd.f32 0.0, %v555
        %v557 = vpop.f32.mrb[0].mxu0
        %v558 = vadd.f32 0.0, %v557
        %v559 = vpop.f32.mrb[0].mxu0
        %v560 = vadd.f32 0.0, %v559
        %561 = vdwg.mxu0
        %562 = vmatprep.subr.bf16.mxu0 %v342
        %563 = vmatpush1.bf16.msra.mxu0 %v341
        %564 = vmatprep.subr.bf16.mxu0 %v366
        %565 = vmatpush1.bf16.msra.mxu0 %v365
        %566 = vmatprep.subr.bf16.mxu0 %v385
        %567 = vmatpush1.bf16.msra.mxu0 %v384
        %568 = vmatprep.subr.bf16.mxu0 %v404
        %569 = vmatpush1.bf16.msra.mxu0 %v403
        %570 = vmatprep.subr.bf16.mxu0 %v423
        %571 = vmatpush1.bf16.msra.mxu0 %v422
        %572 = vmatprep.subr.bf16.mxu0 %v442
        %573 = vmatpush1.bf16.msra.mxu0 %v441
        %574 = vmatprep.subr.bf16.mxu0 %v461
        %575 = vmatpush1.bf16.msra.mxu0 %v460
        %576 = vmatprep.subr.bf16.mxu0 %v480
        %577 = vmatpush1.bf16.msra.mxu0 %v479
        %578 = vmatprep.subr.bf16.mxu0 %v499
        %579 = vmatpush1.bf16.msra.mxu0 %v498
        %580 = vmatprep.subr.bf16.mxu0 0
        %581 = vmatpush1.bf16.msra.mxu0 0
        %582 = vmatprep.subr.bf16.mxu0 0
        %583 = vmatpush1.bf16.msra.mxu0 0
        %584 = vmatprep.subr.bf16.mxu0 0
        %585 = vmatpush1.bf16.msra.mxu0 0
        %586 = vmatprep.subr.bf16.mxu0 0
        %587 = vmatpush1.bf16.msra.mxu0 0
        %588 = vmatprep.subr.bf16.mxu0 0
        %589 = vmatpush1.bf16.msra.mxu0 0
        %590 = vmatprep.subr.bf16.mxu0 0
        %591 = vmatpush1.bf16.msra.mxu0 0
        %592 = vmatprep.subr.bf16.mxu0 0
        %593 = vmatpush1.bf16.msra.mxu0 0
        %594 = vmatprep.mubr.bf16.mxu0 %v517
        %595 = vmatmul.mubr.bf16.gmra.mrb[0].mxu0 %v512
        %v596 = vpop.f32.mrb[0].mxu0
        %v597 = vadd.f32 0.0, %v596
        %v598 = vpop.f32.mrb[0].mxu0
        %v599 = vadd.f32 0.0, %v598
        %v600 = vpop.f32.mrb[0].mxu0
        %v601 = vadd.f32 0.0, %v600
        %v602 = vpop.f32.mrb[0].mxu0
        %v603 = vadd.f32 0.0, %v602
        %604 = vdwg.mxu0
        %v605 = vld [vmem:[%s3] sm:$0xff]
        %v606 = vld [vmem:[%s3 + $0x8] sm:$0xff]
        %608 = vset.pattern.permute.xlu0 0
        %609 = vperm.xlu0 %608, %v605
        %v610 = vpop.permute.xlu0 %609
        %613 = vset.pattern.permute.xlu0 0
        %614 = vperm.xlu0 %613, %v606
        %v615 = vpop.permute.xlu0 %614
        %v617 = vmul.f32 %v554, %v610
        %v618 = vmul.f32 %v556, %v610
        %v619 = vmul.f32 %v597, %v610
        %v620 = vmul.f32 %v599, %v610
        %v621 = vmul.f32 %v558, %v615
        %v622 = vmul.f32 %v560, %v615
        %v623 = vmul.f32 %v601, %v615
        %v624 = vmul.f32 %v603, %v615
        %v625 = vld [vmem:[%s4] sm:$0xff]
        %v626 = vld [vmem:[%s4 + $0x8] sm:$0xff]
        %628 = vset.pattern.permute.xlu0 0
        %629 = vperm.xlu0 %628, %v625
        %v630 = vpop.permute.xlu0 %629
        %633 = vset.pattern.permute.xlu0 0
        %634 = vperm.xlu0 %633, %v626
        %v635 = vpop.permute.xlu0 %634
        %v637 = vadd.f32 %v617, %v630
        %v638 = vadd.f32 %v618, %v630
        %v639 = vadd.f32 %v619, %v630
        %v640 = vadd.f32 %v620, %v630
        %v641 = vadd.f32 %v621, %v635
        %v642 = vadd.f32 %v622, %v635
        %v643 = vadd.f32 %v623, %v635
        %v644 = vadd.f32 %v624, %v635
        %v645 = vmax.f32 %v637, 0.0
        %v646 = vmax.f32 %v638, 0.0
        %v647 = vmax.f32 %v639, 0.0
        %v648 = vmax.f32 %v640, 0.0
        %v649 = vmax.f32 %v641, 0.0
        %v650 = vmax.f32 %v642, 0.0
        %v651 = vmax.f32 %v643, 0.0
        %v652 = vmax.f32 %v644, 0.0
        %v653 = vpack.c.bf16 %v649, %v645
        %v654 = vpack.c.bf16 %v650, %v646
        %v655 = vpack.c.bf16 %v651, %v647
        %v656 = vpack.c.bf16 %v652, %v648
        %v661 = vunpack.c.l.b16 %v653
        %v662 = vunpack.c.l.b16 %v654
        %v663 = vunpack.c.l.b16 %v655
        %v664 = vunpack.c.l.b16 %v656
        %v665 = vunpack.c.h.b16 %v653
        %v666 = vunpack.c.h.b16 %v654
        %v667 = vunpack.c.h.b16 %v655
        %v668 = vunpack.c.h.b16 %v656
        %v669 = vpack.c.b16 %v662, %v661
        %v670 = vpack.c.b16 %v664, %v663
        %v671 = vpack.c.b16 %v666, %v665
        %v672 = vpack.c.b16 %v668, %v667
        %677 = vst [vmem:[%s315] sm:$0xff] %v669
        %678 = vst [vmem:[%s315 + $0x8] sm:$0xff] %v670
        %679 = vst [vmem:[%s315 + $0x10] sm:$0xff] %v671
        %680 = vst [vmem:[%s315 + $0x18] sm:$0xff] %v672
        %s681 = sand.u32 %s159, 1
        %s682 = sand.u32 %s159, 1
        %s683 = smul.addr %s682, 32
        %s684 = scalar_lea.vmem [#allocation4], %s683
        // Predicated region
        $region87: #{siamrpn_forward.12} parent=77 // pred_check
          %p685 = pneg %p169
        $region88: #{siamrpn_forward.12} parent=77 // pred_check_branch
          %687 = sbr.rel (%p685) target = $region90
        $region89: #{siamrpn_forward.12} parent=77 // pred_region
          %s688 = smul.u32 4, %s21
          %s689 = smul.addr %s20, 16
          %s690 = sadd.s32 %s688, %s689
          %s691 = smul.addr %s690, 4
          %s692 = scalar_lea.vmem %s5, %s691
          // Predicated region
          $region91: #{siamrpn_forward.12} parent=89 // pred_check
            _
          $region92: #{siamrpn_forward.12} parent=89 // pred_check_branch
            %694 = sbr.rel (0) target = $region94
          $region93: #{siamrpn_forward.12} parent=89 // pred_region
            // Predicated region
            $region95: #{siamrpn_forward.12} parent=93 // pred_check
              _
            $region96: #{siamrpn_forward.12} parent=93 // pred_check_branch
              %696 = sbr.rel (0) target = $region98
            $region97: #{siamrpn_forward.12} parent=93 // pred_region
              loop: start=0, step=1, limit=1
              $region99: #{siamrpn_forward.12} parent=97 // loop_pre_header
                _
              $region100: #{siamrpn_forward.12} parent=97 // loop_header
                %s698 = sphi 0, %s702
                %p699 = scmp.ge.s32.totalorder %s698, 1
                %s703 = sphi %s684, %s684
                %s704 = sphi %s692, %s692
              $region101: #{siamrpn_forward.12} parent=97 // loop_header_branch
                %701 = sbr.rel (%p699) target = $region105
              $region102: #{siamrpn_forward.12} parent=97 // loop_body
                %v705 = vld [vmem:[%s703] sm:$0xff]
                %706 = vst [vmem:[%s704] sm:$0xff] %v705
                %v707 = vld [vmem:[%s703 + $0x8] sm:$0xff]
                %708 = vst [vmem:[%s704 + $0x8] sm:$0xff] %v707
                %v709 = vld [vmem:[%s703 + $0x10] sm:$0xff]
                %710 = vst [vmem:[%s704 + $0x20] sm:$0xff] %v709
                %v711 = vld [vmem:[%s703 + $0x18] sm:$0xff]
                %712 = vst [vmem:[%s704 + $0x28] sm:$0xff] %v711
              $region103: #{siamrpn_forward.12} parent=97 // loop_footer
                %s702 = sadd.s32 1, %s698
              $region104: #{siamrpn_forward.12} parent=97 // loop_footer_branch
                %697 = sbr.rel target = $region100
              $region105: #{siamrpn_forward.12} parent=97 // loop_exit
                _
            $region98: #{siamrpn_forward.12} parent=93 // pred_fallthru
              _
            // Predicated region
            $region106: #{siamrpn_forward.12} parent=93 // pred_check
              _
            $region107: #{siamrpn_forward.12} parent=93 // pred_check_branch
              %714 = sbr.rel target = $region109
            $region108: #{siamrpn_forward.12} parent=93 // pred_region
              _
            $region109: #{siamrpn_forward.12} parent=93 // pred_fallthru
              _
          $region94: #{siamrpn_forward.12} parent=89 // pred_fallthru
            _
          %715 = vnop
        $region90: #{siamrpn_forward.12} parent=77 // pred_fallthru
          _
      $region78: #{siamrpn_forward.12} parent=5 // pred_fallthru
        _
      %p716 = scmp.le.s32.totalorder 2, %s11
      // Predicated region
      $region110: #{siamrpn_forward.12} parent=5 // pred_check
        %p717 = pneg %p716
      $region111: #{siamrpn_forward.12} parent=5 // pred_check_branch
        %719 = sbr.rel (%p717) target = $region113
      $region112: #{siamrpn_forward.12} parent=5 // pred_region
        %s720 = ssub.s32 %s11, 2
        // Predicated region
        $region114: #{siamrpn_forward.12} parent=112 // pred_check
          %p721 = pneg %p175
        $region115: #{siamrpn_forward.12} parent=112 // pred_check_branch
          %723 = sbr.rel (%p721) target = $region117
        $region116: #{siamrpn_forward.12} parent=112 // pred_region
          %s724 = sand.u32 %s160, 1
          %s725 = sand.u32 %s160, 1
          %s726 = smul.addr %s725, 32
          %s727 = scalar_lea.vmem [#allocation4], %s726
        $region117: #{siamrpn_forward.12} parent=112 // pred_fallthru
          _
      $region113: #{siamrpn_forward.12} parent=5 // pred_fallthru
        _
    $region6: #{siamrpn_forward.12} parent=1 // loop_footer
      %s15 = sadd.s32 1, %s11
    $region7: #{siamrpn_forward.12} parent=1 // loop_footer_branch
      %10 = sbr.rel target = $region3
    $region8: #{siamrpn_forward.12} parent=1 // loop_exit
      _

// kernel: siamrpn_forward.14
$region0: #{siamrpn_forward.14}
  #allocation0 [shape = 'u32[]', space=smem, size = 0x4, offset = 0x4, fixed_abs, tag = 'smem constant byte address 0x4 - core index']
  #allocation1 [shape = 'u32[144,128]{1,0:T(1,128)}', space=vmem, size = 0x12000, scoped, tag = 'internal scratch']
  %s0 = inlined_call_operand.vmem [shape: bf16[2,16,1024], index: 0, kind: input, shape index: {}, may-alias: {0,1}]
  %s1 = inlined_call_operand.vmem [shape: bf16[2,16,1024], index: 1, kind: input, shape index: {}, may-alias: {0,1}]
  %s2 = inlined_call_operand.vmem [shape: bf16[16,144], index: 2, kind: input, shape index: {}]
  %s3 = inlined_call_operand.vmem [shape: f32[16,1], index: 3, kind: input, shape index: {}]
  %s4 = inlined_call_operand.vmem [shape: f32[16,1], index: 4, kind: input, shape index: {}]
  %s5 = inlined_call_operand.vmem [shape: bf16[2,16,1024], index: 5, kind: output, shape index: {}]
  %s6 = sld [smem:[#allocation0]]
  $region118: #{siamrpn_forward.14} parent=0
    _
  %s8 = ssub.s32 1, %s6
  %s9 = scalar_select 0, %s8, %s6
  $region1: #{siamrpn_forward.14} parent=0
    #allocation2 [shape = 'u8[32768]{0}', space=vmem, size = 0x8000, scoped, tag = 'input window, operand 0']
    #allocation3 [shape = 'u8[32768]{0}', space=vmem, size = 0x8000, scoped, tag = 'input window, operand 1']
    #allocation4 [shape = 'u8[32768]{0}', space=vmem, size = 0x8000, scoped, tag = 'output window, operand 0']
    loop: start=0, step=1, limit=4
    $region2: #{siamrpn_forward.14} parent=1 // loop_pre_header
      _
    $region3: #{siamrpn_forward.14} parent=1 // loop_header
      %s11 = sphi 0, %s15
      %p12 = scmp.ge.s32.totalorder %s11, 4
      %s18 = sphi 0, %s30
      %s19 = sphi 0, %s26
      %s20 = sphi 0, %s18
      %s21 = sphi 0, %s19
      %s22 = sphi 0, %s20
      %s23 = sphi 0, %s21
      %s35 = sphi 0, %s37
      %s38 = sphi 0, %s35
      %s39 = sphi 0, %s38
      %s55 = sphi 0, %s39
      %s65 = sphi 0, %s67
      %s68 = sphi 0, %s65
      %s69 = sphi 0, %s68
      %s85 = sphi 0, %s69
      %s89 = sphi 0, %s89
      %s91 = sphi 0, %s89
      %s92 = sphi 0, %s91
      %s106 = sphi 0, %s92
      %s110 = sphi 0, %s110
      %s112 = sphi 0, %s110
      %s113 = sphi 0, %s112
      %s127 = sphi 0, %s113
      %s131 = sphi 0, %s131
      %s133 = sphi 0, %s131
      %s134 = sphi 0, %s133
      %s148 = sphi 0, %s134
      %s156 = sphi 0, %s158
      %s159 = sphi 0, %s156
      %s160 = sphi 0, %s159
      %s176 = sphi 0, %s160
    $region4: #{siamrpn_forward.14} parent=1 // loop_header_branch
      %14 = sbr.rel (%p12) target = $region8
    $region5: #{siamrpn_forward.14} parent=1 // loop_body
      %s16 = ssub.s32 %s11, 1
      %s17 = ssub.s32 %s11, 2
      %s24 = sadd.s32 1, %s19
      %p25 = scmp.ge.s32.totalorder %s24, 1
      %s26 = scalar_select %p25, 0, %s24
      %s27 = sadd.s32 1, %s18
      %s28 = scalar_select %p25, %s27, %s18
      %p29 = scmp.ge.s32.totalorder %s28, 2
      %s30 = scalar_select %p29, 0, %s28
      %s31 = ssub.s32 %s18, %s30
      %s32 = ssub.s32 %s19, %s26
      %s33 = sor.u32 %s31, %s32
      %p34 = scmp.eq.s32.totalorder %s33, 0
      %s36 = sadd.s32 %s35, 1
      %s37 = scalar_select %p34, %s35, %s36
      %p40 = pneg %p34
      %p41 = scmp.eq.s32.totalorder %s11, 1
      %p42 = por %p40, %p41
      %p43 = scmp.ne.s32.totalorder %s35, %s38
      %p44 = scmp.eq.s32.totalorder %s11, 0
      %p45 = por %p43, %p44
      %p46 = scmp.ne.s32.totalorder %s35, %s38
      %p47 = scmp.eq.s32.totalorder %s16, 1
      %p48 = por %p46, %p47
      %p49 = scmp.ne.s32.totalorder %s38, %s39
      %p50 = scmp.eq.s32.totalorder %s16, 0
      %p51 = por %p49, %p50
      %p52 = scmp.ne.s32.totalorder %s38, %s39
      %p53 = scmp.eq.s32.totalorder %s17, 1
      %p54 = por %p52, %p53
      %p56 = scmp.ne.s32.totalorder %s39, %s55
      %p57 = scmp.eq.s32.totalorder %s17, 0
      %p58 = por %p56, %p57
      %s59 = sadd.s32 %s19, 1
      %s60 = sadd.s32 %s26, 1
      %s61 = ssub.s32 %s18, %s30
      %s62 = ssub.s32 %s59, %s60
      %s63 = sor.u32 %s61, %s62
      %p64 = scmp.eq.s32.totalorder %s63, 0
      %s66 = sadd.s32 %s65, 1
      %s67 = scalar_select %p64, %s65, %s66
      %p70 = pneg %p64
      %p71 = scmp.eq.s32.totalorder %s11, 1
      %p72 = por %p70, %p71
      %p73 = scmp.ne.s32.totalorder %s65, %s68
      %p74 = scmp.eq.s32.totalorder %s11, 0
      %p75 = por %p73, %p74
      %p76 = scmp.ne.s32.totalorder %s65, %s68
      %p77 = scmp.eq.s32.totalorder %s16, 1
      %p78 = por %p76, %p77
      %p79 = scmp.ne.s32.totalorder %s68, %s69
      %p80 = scmp.eq.s32.totalorder %s16, 0
      %p81 = por %p79, %p80
      %p82 = scmp.ne.s32.totalorder %s68, %s69
      %p83 = scmp.eq.s32.totalorder %s17, 1
      %p84 = por %p82, %p83
      %p86 = scmp.ne.s32.totalorder %s69, %s85
      %p87 = scmp.eq.s32.totalorder %s17, 0
      %p88 = por %p86, %p87
      %s90 = sadd.s32 %s89, 1
      %p93 = scmp.eq.s32.totalorder %s11, 1
      %p94 = scmp.ne.s32.totalorder %s89, %s91
      %p95 = scmp.eq.s32.totalorder %s11, 0
      %p96 = por %p94, %p95
      %p97 = scmp.ne.s32.totalorder %s89, %s91
      %p98 = scmp.eq.s32.totalorder %s16, 1
      %p99 = por %p97, %p98
      %p100 = scmp.ne.s32.totalorder %s91, %s92
      %p101 = scmp.eq.s32.totalorder %s16, 0
      %p102 = por %p100, %p101
      %p103 = scmp.ne.s32.totalorder %s91, %s92
      %p104 = scmp.eq.s32.totalorder %s17, 1
      %p105 = por %p103, %p104
      %p107 = scmp.ne.s32.totalorder %s92, %s106
      %p108 = scmp.eq.s32.totalorder %s17, 0
      %p109 = por %p107, %p108
      %s111 = sadd.s32 %s110, 1
      %p114 = scmp.eq.s32.totalorder %s11, 1
      %p115 = scmp.ne.s32.totalorder %s110, %s112
      %p116 = scmp.eq.s32.totalorder %s11, 0
      %p117 = por %p115, %p116
      %p118 = scmp.ne.s32.totalorder %s110, %s112
      %p119 = scmp.eq.s32.totalorder %s16, 1
      %p120 = por %p118, %p119
      %p121 = scmp.ne.s32.totalorder %s112, %s113
      %p122 = scmp.eq.s32.totalorder %s16, 0
      %p123 = por %p121, %p122
      %p124 = scmp.ne.s32.totalorder %s112, %s113
      %p125 = scmp.eq.s32.totalorder %s17, 1
      %p126 = por %p124, %p125
      %p128 = scmp.ne.s32.totalorder %s113, %s127
      %p129 = scmp.eq.s32.totalorder %s17, 0
      %p130 = por %p128, %p129
      %s132 = sadd.s32 %s131, 1
      %p135 = scmp.eq.s32.totalorder %s11, 1
      %p136 = scmp.ne.s32.totalorder %s131, %s133
      %p137 = scmp.eq.s32.totalorder %s11, 0
      %p138 = por %p136, %p137
      %p139 = scmp.ne.s32.totalorder %s131, %s133
      %p140 = scmp.eq.s32.totalorder %s16, 1
      %p141 = por %p139, %p140
      %p142 = scmp.ne.s32.totalorder %s133, %s134
      %p143 = scmp.eq.s32.totalorder %s16, 0
      %p144 = por %p142, %p143
      %p145 = scmp.ne.s32.totalorder %s133, %s134
      %p146 = scmp.eq.s32.totalorder %s17, 1
      %p147 = por %p145, %p146
      %p149 = scmp.ne.s32.totalorder %s134, %s148
      %p150 = scmp.eq.s32.totalorder %s17, 0
      %p151 = por %p149, %p150
      %s152 = ssub.s32 %s18, %s30
      %s153 = ssub.s32 %s19, %s26
      %s154 = sor.u32 %s152, %s153
      %p155 = scmp.eq.s32.totalorder %s154, 0
      %s157 = sadd.s32 %s156, 1
      %s158 = scalar_select %p155, %s156, %s157
      %p161 = pneg %p155
      %p162 = scmp.eq.s32.totalorder %s11, 1
      %p163 = por %p161, %p162
      %p164 = scmp.ne.s32.totalorder %s156, %s159
      %p165 = scmp.eq.s32.totalorder %s11, 0
      %p166 = por %p164, %p165
      %p167 = scmp.ne.s32.totalorder %s156, %s159
      %p168 = scmp.eq.s32.totalorder %s16, 1
      %p169 = por %p167, %p168
      %p170 = scmp.ne.s32.totalorder %s159, %s160
      %p171 = scmp.eq.s32.totalorder %s16, 0
      %p172 = por %p170, %p171
      %p173 = scmp.ne.s32.totalorder %s159, %s160
      %p174 = scmp.eq.s32.totalorder %s17, 1
      %p175 = por %p173, %p174
      %p177 = scmp.ne.s32.totalorder %s160, %s176
      %p178 = scmp.eq.s32.totalorder %s17, 0
      %p179 = por %p177, %p178
      %p180 = scmp.le.s32.totalorder 1, %s11
      %p181 = scmp.lt.s32.totalorder %s11, 3
      %p182 = pnand %p180, %p181
      %p183 = pneg %p182
      // Predicated region
      $region9: #{siamrpn_forward.14} parent=5 // pred_check
        _
      $region10: #{siamrpn_forward.14} parent=5 // pred_check_branch
        %185 = sbr.rel (%p182) target = $region12
      $region11: #{siamrpn_forward.14} parent=5 // pred_region
        %s186 = ssub.s32 %s11, 1
        // Predicated region
        $region13: #{siamrpn_forward.14} parent=11 // pred_check
          %p187 = pneg %p102
        $region14: #{siamrpn_forward.14} parent=11 // pred_check_branch
          %189 = sbr.rel (%p187) target = $region16
        $region15: #{siamrpn_forward.14} parent=11 // pred_region
          _
        $region16: #{siamrpn_forward.14} parent=11 // pred_fallthru
          _
        // Predicated region
        $region17: #{siamrpn_forward.14} parent=11 // pred_check
          %p190 = pneg %p123
        $region18: #{siamrpn_forward.14} parent=11 // pred_check_branch
          %192 = sbr.rel (%p190) target = $region20
        $region19: #{siamrpn_forward.14} parent=11 // pred_region
          _
        $region20: #{siamrpn_forward.14} parent=11 // pred_fallthru
          _
        // Predicated region
        $region21: #{siamrpn_forward.14} parent=11 // pred_check
          %p193 = pneg %p144
        $region22: #{siamrpn_forward.14} parent=11 // pred_check_branch
          %195 = sbr.rel (%p193) target = $region24
        $region23: #{siamrpn_forward.14} parent=11 // pred_region
          _
        $region24: #{siamrpn_forward.14} parent=11 // pred_fallthru
          _
      $region12: #{siamrpn_forward.14} parent=5 // pred_fallthru
        _
      %p196 = scmp.lt.s32.totalorder %s11, 2
      // Predicated region
      $region25: #{siamrpn_forward.14} parent=5 // pred_check
        %p197 = pneg %p196
      $region26: #{siamrpn_forward.14} parent=5 // pred_check_branch
        %199 = sbr.rel (%p197) target = $region28
      $region27: #{siamrpn_forward.14} parent=5 // pred_region
        // Predicated region
        $region29: #{siamrpn_forward.14} parent=27 // pred_check
          %p200 = pneg %p45
        $region30: #{siamrpn_forward.14} parent=27 // pred_check_branch
          %202 = sbr.rel (%p200) target = $region32
        $region31: #{siamrpn_forward.14} parent=27 // pred_region
          %s203 = sand.u32 %s35, 1
          %s204 = sand.u32 %s35, 1
          %s205 = smul.addr %s204, 32
          %s206 = scalar_lea.vmem [#allocation2], %s205
          %s207 = smul.u32 4, %s19
          %s208 = smul.addr %s18, 16
          %s209 = sadd.s32 %s207, %s208
          %s210 = smul.addr %s209, 4
          %s211 = scalar_lea.vmem %s0, %s210
          // Predicated region
          $region33: #{siamrpn_forward.14} parent=31 // pred_check
            _
          $region34: #{siamrpn_forward.14} parent=31 // pred_check_branch
            %213 = sbr.rel (0) target = $region36
          $region35: #{siamrpn_forward.14} parent=31 // pred_region
            // Predicated region
            $region37: #{siamrpn_forward.14} parent=35 // pred_check
              _
            $region38: #{siamrpn_forward.14} parent=35 // pred_check_branch
              %215 = sbr.rel (0) target = $region40
            $region39: #{siamrpn_forward.14} parent=35 // pred_region
              loop: start=0, step=1, limit=1
              $region41: #{siamrpn_forward.14} parent=39 // loop_pre_header
                _
              $region42: #{siamrpn_forward.14} parent=39 // loop_header
                %s217 = sphi 0, %s221
                %p218 = scmp.ge.s32.totalorder %s217, 1
                %s222 = sphi %s211, %s211
                %s223 = sphi %s206, %s206
              $region43: #{siamrpn_forward.14} parent=39 // loop_header_branch
                %220 = sbr.rel (%p218) target = $region47
              $region44: #{siamrpn_forward.14} parent=39 // loop_body
                %v224 = vld [vmem:[%s222] sm:$0xff]
                %225 = vst [vmem:[%s223] sm:$0xff] %v224
                %v226 = vld [vmem:[%s222 + $0x8] sm:$0xff]
                %227 = vst [vmem:[%s223 + $0x8] sm:$0xff] %v226
                %v228 = vld [vmem:[%s222 + $0x20] sm:$0xff]
                %229 = vst [vmem:[%s223 + $0x10] sm:$0xff] %v228
                %v230 = vld [vmem:[%s222 + $0x28] sm:$0xff]
                %231 = vst [vmem:[%s223 + $0x18] sm:$0xff] %v230
              $region45: #{siamrpn_forward.14} parent=39 // loop_footer
                %s221 = sadd.s32 1, %s217
              $region46: #{siamrpn_forward.14} parent=39 // loop_footer_branch
                %216 = sbr.rel target = $region42
              $region47: #{siamrpn_forward.14} parent=39 // loop_exit
                _
            $region40: #{siamrpn_forward.14} parent=35 // pred_fallthru
              _
            // Predicated region
            $region48: #{siamrpn_forward.14} parent=35 // pred_check
              _
            $region49: #{siamrpn_forward.14} parent=35 // pred_check_branch
              %233 = sbr.rel target = $region51
            $region50: #{siamrpn_forward.14} parent=35 // pred_region
              _
            $region51: #{siamrpn_forward.14} parent=35 // pred_fallthru
              _
          $region36: #{siamrpn_forward.14} parent=31 // pred_fallthru
            _
          %234 = vnop
        $region32: #{siamrpn_forward.14} parent=27 // pred_fallthru
          _
        // Predicated region
        $region52: #{siamrpn_forward.14} parent=27 // pred_check
          %p235 = pneg %p75
        $region53: #{siamrpn_forward.14} parent=27 // pred_check_branch
          %237 = sbr.rel (%p235) target = $region55
        $region54: #{siamrpn_forward.14} parent=27 // pred_region
          %s238 = sand.u32 %s65, 1
          %s239 = sand.u32 %s65, 1
          %s240 = smul.addr %s239, 32
          %s241 = scalar_lea.vmem [#allocation3], %s240
          %s242 = sadd.s32 %s19, 1
          %s243 = smul.u32 4, %s242
          %s244 = smul.addr %s18, 16
          %s245 = sadd.s32 %s243, %s244
          %s246 = smul.addr %s245, 4
          %s247 = scalar_lea.vmem %s1, %s246
          // Predicated region
          $region56: #{siamrpn_forward.14} parent=54 // pred_check
            _
          $region57: #{siamrpn_forward.14} parent=54 // pred_check_branch
            %249 = sbr.rel (0) target = $region59
          $region58: #{siamrpn_forward.14} parent=54 // pred_region
            // Predicated region
            $region60: #{siamrpn_forward.14} parent=58 // pred_check
              _
            $region61: #{siamrpn_forward.14} parent=58 // pred_check_branch
              %251 = sbr.rel (0) target = $region63
            $region62: #{siamrpn_forward.14} parent=58 // pred_region
              loop: start=0, step=1, limit=1
              $region64: #{siamrpn_forward.14} parent=62 // loop_pre_header
                _
              $region65: #{siamrpn_forward.14} parent=62 // loop_header
                %s253 = sphi 0, %s257
                %p254 = scmp.ge.s32.totalorder %s253, 1
                %s258 = sphi %s247, %s247
                %s259 = sphi %s241, %s241
              $region66: #{siamrpn_forward.14} parent=62 // loop_header_branch
                %256 = sbr.rel (%p254) target = $region70
              $region67: #{siamrpn_forward.14} parent=62 // loop_body
                %v260 = vld [vmem:[%s258] sm:$0xff]
                %261 = vst [vmem:[%s259] sm:$0xff] %v260
                %v262 = vld [vmem:[%s258 + $0x8] sm:$0xff]
                %263 = vst [vmem:[%s259 + $0x8] sm:$0xff] %v262
                %v264 = vld [vmem:[%s258 + $0x20] sm:$0xff]
                %265 = vst [vmem:[%s259 + $0x10] sm:$0xff] %v264
                %v266 = vld [vmem:[%s258 + $0x28] sm:$0xff]
                %267 = vst [vmem:[%s259 + $0x18] sm:$0xff] %v266
              $region68: #{siamrpn_forward.14} parent=62 // loop_footer
                %s257 = sadd.s32 1, %s253
              $region69: #{siamrpn_forward.14} parent=62 // loop_footer_branch
                %252 = sbr.rel target = $region65
              $region70: #{siamrpn_forward.14} parent=62 // loop_exit
                _
            $region63: #{siamrpn_forward.14} parent=58 // pred_fallthru
              _
            // Predicated region
            $region71: #{siamrpn_forward.14} parent=58 // pred_check
              _
            $region72: #{siamrpn_forward.14} parent=58 // pred_check_branch
              %269 = sbr.rel target = $region74
            $region73: #{siamrpn_forward.14} parent=58 // pred_region
              _
            $region74: #{siamrpn_forward.14} parent=58 // pred_fallthru
              _
          $region59: #{siamrpn_forward.14} parent=54 // pred_fallthru
            _
          %270 = vnop
        $region55: #{siamrpn_forward.14} parent=27 // pred_fallthru
          _
      $region28: #{siamrpn_forward.14} parent=5 // pred_fallthru
        _
      %p271 = scmp.le.s32.totalorder 1, %s11
      %p272 = scmp.lt.s32.totalorder %s11, 3
      %p273 = pnand %p271, %p272
      %p274 = pneg %p273
      // Predicated region
      $region75: #{siamrpn_forward.14} parent=5 // pred_check
        _
      $region76: #{siamrpn_forward.14} parent=5 // pred_check_branch
        %276 = sbr.rel (%p273) target = $region78
      $region77: #{siamrpn_forward.14} parent=5 // pred_region
        %s277 = ssub.s32 %s11, 1
        %s278 = sand.u32 %s38, 1
        %s279 = sand.u32 %s38, 1
        %s280 = smul.addr %s279, 32
        %s281 = scalar_lea.vmem [#allocation2], %s280
        // Predicated region
        $region79: #{siamrpn_forward.14} parent=77 // pred_check
          %p282 = pneg %p51
        $region80: #{siamrpn_forward.14} parent=77 // pred_check_branch
          %284 = sbr.rel (%p282) target = $region82
        $region81: #{siamrpn_forward.14} parent=77 // pred_region
          _
        $region82: #{siamrpn_forward.14} parent=77 // pred_fallthru
          _
        %s285 = sand.u32 %s68, 1
        %s286 = sand.u32 %s68, 1
        %s287 = smul.addr %s286, 32
        %s288 = scalar_lea.vmem [#allocation3], %s287
        // Predicated region
        $region83: #{siamrpn_forward.14} parent=77 // pred_check
          %p289 = pneg %p81
        $region84: #{siamrpn_forward.14} parent=77 // pred_check_branch
          %291 = sbr.rel (%p289) target = $region86
        $region85: #{siamrpn_forward.14} parent=77 // pred_region
          _
        $region86: #{siamrpn_forward.14} parent=77 // pred_fallthru
          _
        %s292 = sand.u32 %s38, 1
        %s293 = sand.u32 %s38, 1
        %s294 = smul.addr %s293, 32
        %s295 = scalar_lea.vmem [#allocation2], %s294
        %p296 = pneg %p51
        %p297 = pneg %p48
        %s298 = sand.u32 %s68, 1
        %s299 = sand.u32 %s68, 1
        %s300 = smul.addr %s299, 32
        %s301 = scalar_lea.vmem [#allocation3], %s300
        %p302 = pneg %p81
        %p303 = pneg %p78
        %p304 = pneg %p102
        %p305 = pneg %p99
        %p306 = pneg %p123
        %p307 = pneg %p120
        %p308 = pneg %p144
        %p309 = pneg %p141
        %p310 = pneg %p172
        %p311 = pneg %p169
        %s312 = sand.u32 %s159, 1
        %s313 = sand.u32 %s159, 1
        %s314 = smul.addr %s313, 32
        %s315 = scalar_lea.vmem [#allocation4], %s314
        %s316 = smul.u32 4, %s21
        %s317 = sadd.s32 %s21, 1
        %s318 = smul.u32 4, %s317
        %s319 = smul.u32 4, %s21
        %v321 = vld [vmem:[%s281] sm:$0xff]
        %v322 = vld [vmem:[%s281 + $0x8] sm:$0xff]
        %v323 = vld [vmem:[%s281 + $0x10] sm:$0xff]
        %v324 = vld [vmem:[%s281 + $0x18] sm:$0xff]
        %v325 = vld [vmem:[%s288] sm:$0xff]
        %v326 = vld [vmem:[%s288 + $0x10] sm:$0xff]
        %v331 = vunpack.c.l.b16 %v321
        %v332 = vunpack.c.h.b16 %v321
        %v333 = vunpack.c.l.b16 %v322
        %v334 = vunpack.c.h.b16 %v322
        %v335 = vunpack.c.l.b16 %v323
        %v336 = vunpack.c.h.b16 %v323
        %v337 = vunpack.c.l.b16 %v324
        %v338 = vunpack.c.h.b16 %v324
        %v339 = vpack.c.b16 %v335, %v331
        %v340 = vpack.c.b16 %v336, %v332
        %v341 = vpack.c.b16 %v337, %v333
        %v342 = vpack.c.b16 %v338, %v334
        %v349 = vunpack.c.l.b16 %v325
        %v350 = vunpack.c.l.b16 %v326
        %v351 = vpack.c.b16 %v350, %v349
        %352 = vrot.lane.b32.xlu0 %v339, 127
        %v353 = vpop.permute.xlu0 %352
        %354 = vrot.lane.b32.xlu0 %v340, 127
        %v355 = vpop.permute.xlu0 %354
        %356 = vrot.lane.b32.xlu0 %v341, 127
        %v357 = vpop.permute.xlu0 %356
        %358 = vrot.lane.b32.xlu0 %v342, 127
        %v359 = vpop.permute.xlu0 %358
        %360 = vrot.lane.b32.xlu0 %v351, 127
        %v361 = vpop.permute.xlu0 %360
        %vm362 = vcmask 1039360
        %v363 = vsel %vm362, %v353, %v355
        %v364 = vsel %vm362, %v355, %v357
        %v365 = vsel %vm362, %v357, %v359
        %v366 = vsel %vm362, %v359, %v361
        %371 = vrot.lane.b32.xlu0 %v339, 126
        %v372 = vpop.permute.xlu0 %371
        %373 = vrot.lane.b32.xlu0 %v340, 126
        %v374 = vpop.permute.xlu0 %373
        %375 = vrot.lane.b32.xlu0 %v341, 126
        %v376 = vpop.permute.xlu0 %375
        %377 = vrot.lane.b32.xlu0 %v342, 126
        %v378 = vpop.permute.xlu0 %377
        %379 = vrot.lane.b32.xlu0 %v351, 126
        %v380 = vpop.permute.xlu0 %379
        %vm381 = vcmask 1031168
        %v382 = vsel %vm381, %v372, %v374
        %v383 = vsel %vm381, %v374, %v376
        %v384 = vsel %vm381, %v376, %v378
        %v385 = vsel %vm381, %v378, %v380
        %390 = vrot.lane.b32.xlu0 %v339, 114
        %v391 = vpop.permute.xlu0 %390
        %392 = vrot.lane.b32.xlu0 %v340, 114
        %v393 = vpop.permute.xlu0 %392
        %394 = vrot.lane.b32.xlu0 %v341, 114
        %v395 = vpop.permute.xlu0 %394
        %396 = vrot.lane.b32.xlu0 %v342, 114
        %v397 = vpop.permute.xlu0 %396
        %398 = vrot.lane.b32.xlu0 %v351, 114
        %v399 = vpop.permute.xlu0 %398
        %vm400 = vcmask 932864
        %v401 = vsel %vm400, %v391, %v393
        %v402 = vsel %vm400, %v393, %v395
        %v403 = vsel %vm400, %v395, %v397
        %v404 = vsel %vm400, %v397, %v399
        %409 = vrot.lane.b32.xlu0 %v339, 113
        %v410 = vpop.permute.xlu0 %409
        %411 = vrot.lane.b32.xlu0 %v340, 113
        %v412 = vpop.permute.xlu0 %411
        %413 = vrot.lane.b32.xlu0 %v341, 113
        %v414 = vpop.permute.xlu0 %413
        %415 = vrot.lane.b32.xlu0 %v342, 113
        %v416 = vpop.permute.xlu0 %415
        %417 = vrot.lane.b32.xlu0 %v351, 113
        %v418 = vpop.permute.xlu0 %417
        %vm419 = vcmask 924672
        %v420 = vsel %vm419, %v410, %v412
        %v421 = vsel %vm419, %v412, %v414
        %v422 = vsel %vm419, %v414, %v416
        %v423 = vsel %vm419, %v416, %v418
        %428 = vrot.lane.b32.xlu0 %v339, 112
        %v429 = vpop.permute.xlu0 %428
        %430 = vrot.lane.b32.xlu0 %v340, 112
        %v431 = vpop.permute.xlu0 %430
        %432 = vrot.lane.b32.xlu0 %v341, 112
        %v433 = vpop.permute.xlu0 %432
        %434 = vrot.lane.b32.xlu0 %v342, 112
        %v435 = vpop.permute.xlu0 %434
        %436 = vrot.lane.b32.xlu0 %v351, 112
        %v437 = vpop.permute.xlu0 %436
        %vm438 = vcmask 916480
        %v439 = vsel %vm438, %v429, %v431
        %v440 = vsel %vm438, %v431, %v433
        %v441 = vsel %vm438, %v433, %v435
        %v442 = vsel %vm438, %v435, %v437
        %447 = vrot.lane.b32.xlu0 %v339, 100
        %v448 = vpop.permute.xlu0 %447
        %449 = vrot.lane.b32.xlu0 %v340, 100
        %v450 = vpop.permute.xlu0 %449
        %451 = vrot.lane.b32.xlu0 %v341, 100
        %v452 = vpop.permute.xlu0 %451
        %453 = vrot.lane.b32.xlu0 %v342, 100
        %v454 = vpop.permute.xlu0 %453
        %455 = vrot.lane.b32.xlu0 %v351, 100
        %v456 = vpop.permute.xlu0 %455
        %vm457 = vcmask 818176
        %v458 = vsel %vm457, %v448, %v450
        %v459 = vsel %vm457, %v450, %v452
        %v460 = vsel %vm457, %v452, %v454
        %v461 = vsel %vm457, %v454, %v456
        %466 = vrot.lane.b32.xlu0 %v339, 99
        %v467 = vpop.permute.xlu0 %466
        %468 = vrot.lane.b32.xlu0 %v340, 99
        %v469 = vpop.permute.xlu0 %468
        %470 = vrot.lane.b32.xlu0 %v341, 99
        %v471 = vpop.permute.xlu0 %470
        %472 = vrot.lane.b32.xlu0 %v342, 99
        %v473 = vpop.permute.xlu0 %472
        %474 = vrot.lane.b32.xlu0 %v351, 99
        %v475 = vpop.permute.xlu0 %474
        %vm476 = vcmask 809984
        %v477 = vsel %vm476, %v467, %v469
        %v478 = vsel %vm476, %v469, %v471
        %v479 = vsel %vm476, %v471, %v473
        %v480 = vsel %vm476, %v473, %v475
        %485 = vrot.lane.b32.xlu0 %v339, 98
        %v486 = vpop.permute.xlu0 %485
        %487 = vrot.lane.b32.xlu0 %v340, 98
        %v488 = vpop.permute.xlu0 %487
        %489 = vrot.lane.b32.xlu0 %v341, 98
        %v490 = vpop.permute.xlu0 %489
        %491 = vrot.lane.b32.xlu0 %v342, 98
        %v492 = vpop.permute.xlu0 %491
        %493 = vrot.lane.b32.xlu0 %v351, 98
        %v494 = vpop.permute.xlu0 %493
        %vm495 = vcmask 801792
        %v496 = vsel %vm495, %v486, %v488
        %v497 = vsel %vm495, %v488, %v490
        %v498 = vsel %vm495, %v490, %v492
        %v499 = vsel %vm495, %v492, %v494
        %v504 = vld [vmem:[%s2] sm:$0xff]
        %v505 = vld [vmem:[%s2 + $0x8] sm:$0xff]
        %v508 = vunpack.c.l.b16 %v504
        %v509 = vunpack.c.h.b16 %v504
        %v510 = vunpack.c.l.b16 %v505
        %v511 = vunpack.c.h.b16 %v505
        %v512 = vpack.c.b16 %v510, %v508
        %v513 = vpack.c.b16 %v511, %v509
        %vm515 = vcmask 130048
        %v517 = vsel %vm515, %v513, 0
        %519 = vmatprep.subr.bf16.mxu0 %v340
        %520 = vmatpush1.bf16.msra.mxu0 %v339
        %521 = vmatprep.subr.bf16.mxu0 %v364
        %522 = vmatpush1.bf16.msra.mxu0 %v363
        %523 = vmatprep.subr.bf16.mxu0 %v383
        %524 = vmatpush1.bf16.msra.mxu0 %v382
        %525 = vmatprep.subr.bf16.mxu0 %v402
        %526 = vmatpush1.bf16.msra.mxu0 %v401
        %527 = vmatprep.subr.bf16.mxu0 %v421
        %528 = vmatpush1.bf16.msra.mxu0 %v420
        %529 = vmatprep.subr.bf16.mxu0 %v440
        %530 = vmatpush1.bf16.msra.mxu0 %v439
        %531 = vmatprep.subr.bf16.mxu0 %v459
        %532 = vmatpush1.bf16.msra.mxu0 %v458
        %533 = vmatprep.subr.bf16.mxu0 %v478
        %534 = vmatpush1.bf16.msra.mxu0 %v477
        %535 = vmatprep.subr.bf16.mxu0 %v497
        %536 = vmatpush1.bf16.msra.mxu0 %v496
        %537 = vmatprep.subr.bf16.mxu0 0
        %538 = vmatpush1.bf16.msra.mxu0 0
        %539 = vmatprep.subr.bf16.mxu0 0
        %540 = vmatpush1.bf16.msra.mxu0 0
        %541 = vmatprep.subr.bf16.mxu0 0
        %542 = vmatpush1.bf16.msra.mxu0 0
        %543 = vmatprep.subr.bf16.mxu0 0
        %544 = vmatpush1.bf16.msra.mxu0 0
        %545 = vmatprep.subr.bf16.mxu0 0
        %546 = vmatpush1.bf16.msra.mxu0 0
        %547 = vmatprep.subr.bf16.mxu0 0
        %548 = vmatpush1.bf16.msra.mxu0 0
        %549 = vmatprep.subr.bf16.mxu0 0
        %550 = vmatpush1.bf16.msra.mxu0 0
        %551 = vmatprep.mubr.bf16.mxu0 %v517
        %552 = vmatmul.mubr.bf16.gmra.mrb[0].mxu0 %v512
        %v553 = vpop.f32.mrb[0].mxu0
        %v554 = vadd.f32 0.0, %v553
        %v555 = vpop.f32.mrb[0].mxu0
        %v556 = vadd.f32 0.0, %v555
        %v557 = vpop.f32.mrb[0].mxu0
        %v558 = vadd.f32 0.0, %v557
        %v559 = vpop.f32.mrb[0].mxu0
        %v560 = vadd.f32 0.0, %v559
        %561 = vdwg.mxu0
        %562 = vmatprep.subr.bf16.mxu0 %v342
        %563 = vmatpush1.bf16.msra.mxu0 %v341
        %564 = vmatprep.subr.bf16.mxu0 %v366
        %565 = vmatpush1.bf16.msra.mxu0 %v365
        %566 = vmatprep.subr.bf16.mxu0 %v385
        %567 = vmatpush1.bf16.msra.mxu0 %v384
        %568 = vmatprep.subr.bf16.mxu0 %v404
        %569 = vmatpush1.bf16.msra.mxu0 %v403
        %570 = vmatprep.subr.bf16.mxu0 %v423
        %571 = vmatpush1.bf16.msra.mxu0 %v422
        %572 = vmatprep.subr.bf16.mxu0 %v442
        %573 = vmatpush1.bf16.msra.mxu0 %v441
        %574 = vmatprep.subr.bf16.mxu0 %v461
        %575 = vmatpush1.bf16.msra.mxu0 %v460
        %576 = vmatprep.subr.bf16.mxu0 %v480
        %577 = vmatpush1.bf16.msra.mxu0 %v479
        %578 = vmatprep.subr.bf16.mxu0 %v499
        %579 = vmatpush1.bf16.msra.mxu0 %v498
        %580 = vmatprep.subr.bf16.mxu0 0
        %581 = vmatpush1.bf16.msra.mxu0 0
        %582 = vmatprep.subr.bf16.mxu0 0
        %583 = vmatpush1.bf16.msra.mxu0 0
        %584 = vmatprep.subr.bf16.mxu0 0
        %585 = vmatpush1.bf16.msra.mxu0 0
        %586 = vmatprep.subr.bf16.mxu0 0
        %587 = vmatpush1.bf16.msra.mxu0 0
        %588 = vmatprep.subr.bf16.mxu0 0
        %589 = vmatpush1.bf16.msra.mxu0 0
        %590 = vmatprep.subr.bf16.mxu0 0
        %591 = vmatpush1.bf16.msra.mxu0 0
        %592 = vmatprep.subr.bf16.mxu0 0
        %593 = vmatpush1.bf16.msra.mxu0 0
        %594 = vmatprep.mubr.bf16.mxu0 %v517
        %595 = vmatmul.mubr.bf16.gmra.mrb[0].mxu0 %v512
        %v596 = vpop.f32.mrb[0].mxu0
        %v597 = vadd.f32 0.0, %v596
        %v598 = vpop.f32.mrb[0].mxu0
        %v599 = vadd.f32 0.0, %v598
        %v600 = vpop.f32.mrb[0].mxu0
        %v601 = vadd.f32 0.0, %v600
        %v602 = vpop.f32.mrb[0].mxu0
        %v603 = vadd.f32 0.0, %v602
        %604 = vdwg.mxu0
        %v605 = vld [vmem:[%s3] sm:$0xff]
        %v606 = vld [vmem:[%s3 + $0x8] sm:$0xff]
        %608 = vset.pattern.permute.xlu0 0
        %609 = vperm.xlu0 %608, %v605
        %v610 = vpop.permute.xlu0 %609
        %613 = vset.pattern.permute.xlu0 0
        %614 = vperm.xlu0 %613, %v606
        %v615 = vpop.permute.xlu0 %614
        %v617 = vmul.f32 %v554, %v610
        %v618 = vmul.f32 %v556, %v610
        %v619 = vmul.f32 %v597, %v610
        %v620 = vmul.f32 %v599, %v610
        %v621 = vmul.f32 %v558, %v615
        %v622 = vmul.f32 %v560, %v615
        %v623 = vmul.f32 %v601, %v615
        %v624 = vmul.f32 %v603, %v615
        %v625 = vld [vmem:[%s4] sm:$0xff]
        %v626 = vld [vmem:[%s4 + $0x8] sm:$0xff]
        %628 = vset.pattern.permute.xlu0 0
        %629 = vperm.xlu0 %628, %v625
        %v630 = vpop.permute.xlu0 %629
        %633 = vset.pattern.permute.xlu0 0
        %634 = vperm.xlu0 %633, %v626
        %v635 = vpop.permute.xlu0 %634
        %v637 = vadd.f32 %v617, %v630
        %v638 = vadd.f32 %v618, %v630
        %v639 = vadd.f32 %v619, %v630
        %v640 = vadd.f32 %v620, %v630
        %v641 = vadd.f32 %v621, %v635
        %v642 = vadd.f32 %v622, %v635
        %v643 = vadd.f32 %v623, %v635
        %v644 = vadd.f32 %v624, %v635
        %v645 = vpack.c.bf16 %v641, %v637
        %v646 = vpack.c.bf16 %v642, %v638
        %v647 = vpack.c.bf16 %v643, %v639
        %v648 = vpack.c.bf16 %v644, %v640
        %v653 = vunpack.c.l.b16 %v645
        %v654 = vunpack.c.l.b16 %v646
        %v655 = vunpack.c.l.b16 %v647
        %v656 = vunpack.c.l.b16 %v648
        %v657 = vunpack.c.h.b16 %v645
        %v658 = vunpack.c.h.b16 %v646
        %v659 = vunpack.c.h.b16 %v647
        %v660 = vunpack.c.h.b16 %v648
        %v661 = vpack.c.b16 %v654, %v653
        %v662 = vpack.c.b16 %v656, %v655
        %v663 = vpack.c.b16 %v658, %v657
        %v664 = vpack.c.b16 %v660, %v659
        %669 = vst [vmem:[%s315] sm:$0xff] %v661
        %670 = vst [vmem:[%s315 + $0x8] sm:$0xff] %v662
        %671 = vst [vmem:[%s315 + $0x10] sm:$0xff] %v663
        %672 = vst [vmem:[%s315 + $0x18] sm:$0xff] %v664
        %s673 = sand.u32 %s159, 1
        %s674 = sand.u32 %s159, 1
        %s675 = smul.addr %s674, 32
        %s676 = scalar_lea.vmem [#allocation4], %s675
        // Predicated region
        $region87: #{siamrpn_forward.14} parent=77 // pred_check
          %p677 = pneg %p169
        $region88: #{siamrpn_forward.14} parent=77 // pred_check_branch
          %679 = sbr.rel (%p677) target = $region90
        $region89: #{siamrpn_forward.14} parent=77 // pred_region
          %s680 = smul.u32 4, %s21
          %s681 = smul.addr %s20, 16
          %s682 = sadd.s32 %s680, %s681
          %s683 = smul.addr %s682, 4
          %s684 = scalar_lea.vmem %s5, %s683
          // Predicated region
          $region91: #{siamrpn_forward.14} parent=89 // pred_check
            _
          $region92: #{siamrpn_forward.14} parent=89 // pred_check_branch
            %686 = sbr.rel (0) target = $region94
          $region93: #{siamrpn_forward.14} parent=89 // pred_region
            // Predicated region
            $region95: #{siamrpn_forward.14} parent=93 // pred_check
              _
            $region96: #{siamrpn_forward.14} parent=93 // pred_check_branch
              %688 = sbr.rel (0) target = $region98
            $region97: #{siamrpn_forward.14} parent=93 // pred_region
              loop: start=0, step=1, limit=1
              $region99: #{siamrpn_forward.14} parent=97 // loop_pre_header
                _
              $region100: #{siamrpn_forward.14} parent=97 // loop_header
                %s690 = sphi 0, %s694
                %p691 = scmp.ge.s32.totalorder %s690, 1
                %s695 = sphi %s676, %s676
                %s696 = sphi %s684, %s684
              $region101: #{siamrpn_forward.14} parent=97 // loop_header_branch
                %693 = sbr.rel (%p691) target = $region105
              $region102: #{siamrpn_forward.14} parent=97 // loop_body
                %v697 = vld [vmem:[%s695] sm:$0xff]
                %698 = vst [vmem:[%s696] sm:$0xff] %v697
                %v699 = vld [vmem:[%s695 + $0x8] sm:$0xff]
                %700 = vst [vmem:[%s696 + $0x8] sm:$0xff] %v699
                %v701 = vld [vmem:[%s695 + $0x10] sm:$0xff]
                %702 = vst [vmem:[%s696 + $0x20] sm:$0xff] %v701
                %v703 = vld [vmem:[%s695 + $0x18] sm:$0xff]
                %704 = vst [vmem:[%s696 + $0x28] sm:$0xff] %v703
              $region103: #{siamrpn_forward.14} parent=97 // loop_footer
                %s694 = sadd.s32 1, %s690
              $region104: #{siamrpn_forward.14} parent=97 // loop_footer_branch
                %689 = sbr.rel target = $region100
              $region105: #{siamrpn_forward.14} parent=97 // loop_exit
                _
            $region98: #{siamrpn_forward.14} parent=93 // pred_fallthru
              _
            // Predicated region
            $region106: #{siamrpn_forward.14} parent=93 // pred_check
              _
            $region107: #{siamrpn_forward.14} parent=93 // pred_check_branch
              %706 = sbr.rel target = $region109
            $region108: #{siamrpn_forward.14} parent=93 // pred_region
              _
            $region109: #{siamrpn_forward.14} parent=93 // pred_fallthru
              _
          $region94: #{siamrpn_forward.14} parent=89 // pred_fallthru
            _
          %707 = vnop
        $region90: #{siamrpn_forward.14} parent=77 // pred_fallthru
          _
      $region78: #{siamrpn_forward.14} parent=5 // pred_fallthru
        _
      %p708 = scmp.le.s32.totalorder 2, %s11
      // Predicated region
      $region110: #{siamrpn_forward.14} parent=5 // pred_check
        %p709 = pneg %p708
      $region111: #{siamrpn_forward.14} parent=5 // pred_check_branch
        %711 = sbr.rel (%p709) target = $region113
      $region112: #{siamrpn_forward.14} parent=5 // pred_region
        %s712 = ssub.s32 %s11, 2
        // Predicated region
        $region114: #{siamrpn_forward.14} parent=112 // pred_check
          %p713 = pneg %p175
        $region115: #{siamrpn_forward.14} parent=112 // pred_check_branch
          %715 = sbr.rel (%p713) target = $region117
        $region116: #{siamrpn_forward.14} parent=112 // pred_region
          %s716 = sand.u32 %s160, 1
          %s717 = sand.u32 %s160, 1
          %s718 = smul.addr %s717, 32
          %s719 = scalar_lea.vmem [#allocation4], %s718
        $region117: #{siamrpn_forward.14} parent=112 // pred_fallthru
          _
      $region113: #{siamrpn_forward.14} parent=5 // pred_fallthru
        _
    $region6: #{siamrpn_forward.14} parent=1 // loop_footer
      %s15 = sadd.s32 1, %s11
    $region7: #{siamrpn_forward.14} parent=1 // loop_footer_branch
      %10 = sbr.rel target = $region3
    $region8: #{siamrpn_forward.14} parent=1 // loop_exit
      _

// kernel: siamrpn_forward.15
$region0: #{siamrpn_forward.15}
  #allocation0 [shape = 'u32[]', space=smem, size = 0x4, offset = 0x4, fixed_abs, tag = 'smem constant byte address 0x4 - core index']
  #allocation1 [shape = 'u32[144,128]{1,0:T(1,128)}', space=vmem, size = 0x12000, scoped, tag = 'internal scratch']
  %s0 = inlined_call_operand.vmem [shape: bf16[2,16,1024], index: 0, kind: input, shape index: {}, may-alias: {0,1}]
  %s1 = inlined_call_operand.vmem [shape: bf16[2,16,1024], index: 1, kind: input, shape index: {}, may-alias: {0,1}]
  %s2 = inlined_call_operand.vmem [shape: bf16[32,144], index: 2, kind: input, shape index: {}]
  %s3 = inlined_call_operand.vmem [shape: f32[32,1], index: 3, kind: input, shape index: {}]
  %s4 = inlined_call_operand.vmem [shape: f32[32,1], index: 4, kind: input, shape index: {}]
  %s5 = inlined_call_operand.vmem [shape: f32[2,32,512], index: 5, kind: output, shape index: {}]
  %s6 = sld [smem:[#allocation0]]
  $region99: #{siamrpn_forward.15} parent=0
    _
  %s8 = ssub.s32 1, %s6
  %s9 = scalar_select 0, %s8, %s6
  $region1: #{siamrpn_forward.15} parent=0
    #allocation2 [shape = 'u8[32768]{0}', space=vmem, size = 0x8000, scoped, tag = 'input window, operand 0']
    #allocation3 [shape = 'u8[32768]{0}', space=vmem, size = 0x8000, scoped, tag = 'input window, operand 1']
    loop: start=0, step=1, limit=4
    $region2: #{siamrpn_forward.15} parent=1 // loop_pre_header
      _
    $region3: #{siamrpn_forward.15} parent=1 // loop_header
      %s11 = sphi 0, %s15
      %p12 = scmp.ge.s32.totalorder %s11, 4
      %s18 = sphi 0, %s30
      %s19 = sphi 0, %s26
      %s20 = sphi 0, %s18
      %s21 = sphi 0, %s19
      %s22 = sphi 0, %s20
      %s23 = sphi 0, %s21
      %s35 = sphi 0, %s37
      %s38 = sphi 0, %s35
      %s39 = sphi 0, %s38
      %s55 = sphi 0, %s39
      %s65 = sphi 0, %s67
      %s68 = sphi 0, %s65
      %s69 = sphi 0, %s68
      %s85 = sphi 0, %s69
      %s89 = sphi 0, %s89
      %s91 = sphi 0, %s89
      %s92 = sphi 0, %s91
      %s106 = sphi 0, %s92
      %s110 = sphi 0, %s110
      %s112 = sphi 0, %s110
      %s113 = sphi 0, %s112
      %s127 = sphi 0, %s113
      %s131 = sphi 0, %s131
      %s133 = sphi 0, %s131
      %s134 = sphi 0, %s133
      %s148 = sphi 0, %s134
      %s156 = sphi 0, %s158
      %s159 = sphi 0, %s156
      %s160 = sphi 0, %s159
      %s176 = sphi 0, %s160
    $region4: #{siamrpn_forward.15} parent=1 // loop_header_branch
      %14 = sbr.rel (%p12) target = $region8
    $region5: #{siamrpn_forward.15} parent=1 // loop_body
      %s16 = ssub.s32 %s11, 1
      %s17 = ssub.s32 %s11, 2
      %s24 = sadd.s32 1, %s19
      %p25 = scmp.ge.s32.totalorder %s24, 1
      %s26 = scalar_select %p25, 0, %s24
      %s27 = sadd.s32 1, %s18
      %s28 = scalar_select %p25, %s27, %s18
      %p29 = scmp.ge.s32.totalorder %s28, 2
      %s30 = scalar_select %p29, 0, %s28
      %s31 = ssub.s32 %s18, %s30
      %s32 = ssub.s32 %s19, %s26
      %s33 = sor.u32 %s31, %s32
      %p34 = scmp.eq.s32.totalorder %s33, 0
      %s36 = sadd.s32 %s35, 1
      %s37 = scalar_select %p34, %s35, %s36
      %p40 = pneg %p34
      %p41 = scmp.eq.s32.totalorder %s11, 1
      %p42 = por %p40, %p41
      %p43 = scmp.ne.s32.totalorder %s35, %s38
      %p44 = scmp.eq.s32.totalorder %s11, 0
      %p45 = por %p43, %p44
      %p46 = scmp.ne.s32.totalorder %s35, %s38
      %p47 = scmp.eq.s32.totalorder %s16, 1
      %p48 = por %p46, %p47
      %p49 = scmp.ne.s32.totalorder %s38, %s39
      %p50 = scmp.eq.s32.totalorder %s16, 0
      %p51 = por %p49, %p50
      %p52 = scmp.ne.s32.totalorder %s38, %s39
      %p53 = scmp.eq.s32.totalorder %s17, 1
      %p54 = por %p52, %p53
      %p56 = scmp.ne.s32.totalorder %s39, %s55
      %p57 = scmp.eq.s32.totalorder %s17, 0
      %p58 = por %p56, %p57
      %s59 = sadd.s32 %s19, 1
      %s60 = sadd.s32 %s26, 1
      %s61 = ssub.s32 %s18, %s30
      %s62 = ssub.s32 %s59, %s60
      %s63 = sor.u32 %s61, %s62
      %p64 = scmp.eq.s32.totalorder %s63, 0
      %s66 = sadd.s32 %s65, 1
      %s67 = scalar_select %p64, %s65, %s66
      %p70 = pneg %p64
      %p71 = scmp.eq.s32.totalorder %s11, 1
      %p72 = por %p70, %p71
      %p73 = scmp.ne.s32.totalorder %s65, %s68
      %p74 = scmp.eq.s32.totalorder %s11, 0
      %p75 = por %p73, %p74
      %p76 = scmp.ne.s32.totalorder %s65, %s68
      %p77 = scmp.eq.s32.totalorder %s16, 1
      %p78 = por %p76, %p77
      %p79 = scmp.ne.s32.totalorder %s68, %s69
      %p80 = scmp.eq.s32.totalorder %s16, 0
      %p81 = por %p79, %p80
      %p82 = scmp.ne.s32.totalorder %s68, %s69
      %p83 = scmp.eq.s32.totalorder %s17, 1
      %p84 = por %p82, %p83
      %p86 = scmp.ne.s32.totalorder %s69, %s85
      %p87 = scmp.eq.s32.totalorder %s17, 0
      %p88 = por %p86, %p87
      %s90 = sadd.s32 %s89, 1
      %p93 = scmp.eq.s32.totalorder %s11, 1
      %p94 = scmp.ne.s32.totalorder %s89, %s91
      %p95 = scmp.eq.s32.totalorder %s11, 0
      %p96 = por %p94, %p95
      %p97 = scmp.ne.s32.totalorder %s89, %s91
      %p98 = scmp.eq.s32.totalorder %s16, 1
      %p99 = por %p97, %p98
      %p100 = scmp.ne.s32.totalorder %s91, %s92
      %p101 = scmp.eq.s32.totalorder %s16, 0
      %p102 = por %p100, %p101
      %p103 = scmp.ne.s32.totalorder %s91, %s92
      %p104 = scmp.eq.s32.totalorder %s17, 1
      %p105 = por %p103, %p104
      %p107 = scmp.ne.s32.totalorder %s92, %s106
      %p108 = scmp.eq.s32.totalorder %s17, 0
      %p109 = por %p107, %p108
      %s111 = sadd.s32 %s110, 1
      %p114 = scmp.eq.s32.totalorder %s11, 1
      %p115 = scmp.ne.s32.totalorder %s110, %s112
      %p116 = scmp.eq.s32.totalorder %s11, 0
      %p117 = por %p115, %p116
      %p118 = scmp.ne.s32.totalorder %s110, %s112
      %p119 = scmp.eq.s32.totalorder %s16, 1
      %p120 = por %p118, %p119
      %p121 = scmp.ne.s32.totalorder %s112, %s113
      %p122 = scmp.eq.s32.totalorder %s16, 0
      %p123 = por %p121, %p122
      %p124 = scmp.ne.s32.totalorder %s112, %s113
      %p125 = scmp.eq.s32.totalorder %s17, 1
      %p126 = por %p124, %p125
      %p128 = scmp.ne.s32.totalorder %s113, %s127
      %p129 = scmp.eq.s32.totalorder %s17, 0
      %p130 = por %p128, %p129
      %s132 = sadd.s32 %s131, 1
      %p135 = scmp.eq.s32.totalorder %s11, 1
      %p136 = scmp.ne.s32.totalorder %s131, %s133
      %p137 = scmp.eq.s32.totalorder %s11, 0
      %p138 = por %p136, %p137
      %p139 = scmp.ne.s32.totalorder %s131, %s133
      %p140 = scmp.eq.s32.totalorder %s16, 1
      %p141 = por %p139, %p140
      %p142 = scmp.ne.s32.totalorder %s133, %s134
      %p143 = scmp.eq.s32.totalorder %s16, 0
      %p144 = por %p142, %p143
      %p145 = scmp.ne.s32.totalorder %s133, %s134
      %p146 = scmp.eq.s32.totalorder %s17, 1
      %p147 = por %p145, %p146
      %p149 = scmp.ne.s32.totalorder %s134, %s148
      %p150 = scmp.eq.s32.totalorder %s17, 0
      %p151 = por %p149, %p150
      %s152 = ssub.s32 %s18, %s30
      %s153 = ssub.s32 %s19, %s26
      %s154 = sor.u32 %s152, %s153
      %p155 = scmp.eq.s32.totalorder %s154, 0
      %s157 = sadd.s32 %s156, 1
      %s158 = scalar_select %p155, %s156, %s157
      %p161 = pneg %p155
      %p162 = scmp.eq.s32.totalorder %s11, 1
      %p163 = por %p161, %p162
      %p164 = scmp.ne.s32.totalorder %s156, %s159
      %p165 = scmp.eq.s32.totalorder %s11, 0
      %p166 = por %p164, %p165
      %p167 = scmp.ne.s32.totalorder %s156, %s159
      %p168 = scmp.eq.s32.totalorder %s16, 1
      %p169 = por %p167, %p168
      %p170 = scmp.ne.s32.totalorder %s159, %s160
      %p171 = scmp.eq.s32.totalorder %s16, 0
      %p172 = por %p170, %p171
      %p173 = scmp.ne.s32.totalorder %s159, %s160
      %p174 = scmp.eq.s32.totalorder %s17, 1
      %p175 = por %p173, %p174
      %p177 = scmp.ne.s32.totalorder %s160, %s176
      %p178 = scmp.eq.s32.totalorder %s17, 0
      %p179 = por %p177, %p178
      %p180 = scmp.le.s32.totalorder 1, %s11
      %p181 = scmp.lt.s32.totalorder %s11, 3
      %p182 = pnand %p180, %p181
      %p183 = pneg %p182
      // Predicated region
      $region9: #{siamrpn_forward.15} parent=5 // pred_check
        _
      $region10: #{siamrpn_forward.15} parent=5 // pred_check_branch
        %185 = sbr.rel (%p182) target = $region12
      $region11: #{siamrpn_forward.15} parent=5 // pred_region
        %s186 = ssub.s32 %s11, 1
        // Predicated region
        $region13: #{siamrpn_forward.15} parent=11 // pred_check
          %p187 = pneg %p102
        $region14: #{siamrpn_forward.15} parent=11 // pred_check_branch
          %189 = sbr.rel (%p187) target = $region16
        $region15: #{siamrpn_forward.15} parent=11 // pred_region
          _
        $region16: #{siamrpn_forward.15} parent=11 // pred_fallthru
          _
        // Predicated region
        $region17: #{siamrpn_forward.15} parent=11 // pred_check
          %p190 = pneg %p123
        $region18: #{siamrpn_forward.15} parent=11 // pred_check_branch
          %192 = sbr.rel (%p190) target = $region20
        $region19: #{siamrpn_forward.15} parent=11 // pred_region
          _
        $region20: #{siamrpn_forward.15} parent=11 // pred_fallthru
          _
        // Predicated region
        $region21: #{siamrpn_forward.15} parent=11 // pred_check
          %p193 = pneg %p144
        $region22: #{siamrpn_forward.15} parent=11 // pred_check_branch
          %195 = sbr.rel (%p193) target = $region24
        $region23: #{siamrpn_forward.15} parent=11 // pred_region
          _
        $region24: #{siamrpn_forward.15} parent=11 // pred_fallthru
          _
      $region12: #{siamrpn_forward.15} parent=5 // pred_fallthru
        _
      %p196 = scmp.lt.s32.totalorder %s11, 2
      // Predicated region
      $region25: #{siamrpn_forward.15} parent=5 // pred_check
        %p197 = pneg %p196
      $region26: #{siamrpn_forward.15} parent=5 // pred_check_branch
        %199 = sbr.rel (%p197) target = $region28
      $region27: #{siamrpn_forward.15} parent=5 // pred_region
        // Predicated region
        $region29: #{siamrpn_forward.15} parent=27 // pred_check
          %p200 = pneg %p45
        $region30: #{siamrpn_forward.15} parent=27 // pred_check_branch
          %202 = sbr.rel (%p200) target = $region32
        $region31: #{siamrpn_forward.15} parent=27 // pred_region
          %s203 = sand.u32 %s35, 1
          %s204 = sand.u32 %s35, 1
          %s205 = smul.addr %s204, 32
          %s206 = scalar_lea.vmem [#allocation2], %s205
          %s207 = smul.u32 4, %s19
          %s208 = smul.addr %s18, 16
          %s209 = sadd.s32 %s207, %s208
          %s210 = smul.addr %s209, 4
          %s211 = scalar_lea.vmem %s0, %s210
          // Predicated region
          $region33: #{siamrpn_forward.15} parent=31 // pred_check
            _
          $region34: #{siamrpn_forward.15} parent=31 // pred_check_branch
            %213 = sbr.rel (0) target = $region36
          $region35: #{siamrpn_forward.15} parent=31 // pred_region
            // Predicated region
            $region37: #{siamrpn_forward.15} parent=35 // pred_check
              _
            $region38: #{siamrpn_forward.15} parent=35 // pred_check_branch
              %215 = sbr.rel (0) target = $region40
            $region39: #{siamrpn_forward.15} parent=35 // pred_region
              loop: start=0, step=1, limit=1
              $region41: #{siamrpn_forward.15} parent=39 // loop_pre_header
                _
              $region42: #{siamrpn_forward.15} parent=39 // loop_header
                %s217 = sphi 0, %s221
                %p218 = scmp.ge.s32.totalorder %s217, 1
                %s222 = sphi %s211, %s211
                %s223 = sphi %s206, %s206
              $region43: #{siamrpn_forward.15} parent=39 // loop_header_branch
                %220 = sbr.rel (%p218) target = $region47
              $region44: #{siamrpn_forward.15} parent=39 // loop_body
                %v224 = vld [vmem:[%s222] sm:$0xff]
                %225 = vst [vmem:[%s223] sm:$0xff] %v224
                %v226 = vld [vmem:[%s222 + $0x8] sm:$0xff]
                %227 = vst [vmem:[%s223 + $0x8] sm:$0xff] %v226
                %v228 = vld [vmem:[%s222 + $0x20] sm:$0xff]
                %229 = vst [vmem:[%s223 + $0x10] sm:$0xff] %v228
                %v230 = vld [vmem:[%s222 + $0x28] sm:$0xff]
                %231 = vst [vmem:[%s223 + $0x18] sm:$0xff] %v230
              $region45: #{siamrpn_forward.15} parent=39 // loop_footer
                %s221 = sadd.s32 1, %s217
              $region46: #{siamrpn_forward.15} parent=39 // loop_footer_branch
                %216 = sbr.rel target = $region42
              $region47: #{siamrpn_forward.15} parent=39 // loop_exit
                _
            $region40: #{siamrpn_forward.15} parent=35 // pred_fallthru
              _
            // Predicated region
            $region48: #{siamrpn_forward.15} parent=35 // pred_check
              _
            $region49: #{siamrpn_forward.15} parent=35 // pred_check_branch
              %233 = sbr.rel target = $region51
            $region50: #{siamrpn_forward.15} parent=35 // pred_region
              _
            $region51: #{siamrpn_forward.15} parent=35 // pred_fallthru
              _
          $region36: #{siamrpn_forward.15} parent=31 // pred_fallthru
            _
          %234 = vnop
        $region32: #{siamrpn_forward.15} parent=27 // pred_fallthru
          _
        // Predicated region
        $region52: #{siamrpn_forward.15} parent=27 // pred_check
          %p235 = pneg %p75
        $region53: #{siamrpn_forward.15} parent=27 // pred_check_branch
          %237 = sbr.rel (%p235) target = $region55
        $region54: #{siamrpn_forward.15} parent=27 // pred_region
          %s238 = sand.u32 %s65, 1
          %s239 = sand.u32 %s65, 1
          %s240 = smul.addr %s239, 32
          %s241 = scalar_lea.vmem [#allocation3], %s240
          %s242 = sadd.s32 %s19, 1
          %s243 = smul.u32 4, %s242
          %s244 = smul.addr %s18, 16
          %s245 = sadd.s32 %s243, %s244
          %s246 = smul.addr %s245, 4
          %s247 = scalar_lea.vmem %s1, %s246
          // Predicated region
          $region56: #{siamrpn_forward.15} parent=54 // pred_check
            _
          $region57: #{siamrpn_forward.15} parent=54 // pred_check_branch
            %249 = sbr.rel (0) target = $region59
          $region58: #{siamrpn_forward.15} parent=54 // pred_region
            // Predicated region
            $region60: #{siamrpn_forward.15} parent=58 // pred_check
              _
            $region61: #{siamrpn_forward.15} parent=58 // pred_check_branch
              %251 = sbr.rel (0) target = $region63
            $region62: #{siamrpn_forward.15} parent=58 // pred_region
              loop: start=0, step=1, limit=1
              $region64: #{siamrpn_forward.15} parent=62 // loop_pre_header
                _
              $region65: #{siamrpn_forward.15} parent=62 // loop_header
                %s253 = sphi 0, %s257
                %p254 = scmp.ge.s32.totalorder %s253, 1
                %s258 = sphi %s247, %s247
                %s259 = sphi %s241, %s241
              $region66: #{siamrpn_forward.15} parent=62 // loop_header_branch
                %256 = sbr.rel (%p254) target = $region70
              $region67: #{siamrpn_forward.15} parent=62 // loop_body
                %v260 = vld [vmem:[%s258] sm:$0xff]
                %261 = vst [vmem:[%s259] sm:$0xff] %v260
                %v262 = vld [vmem:[%s258 + $0x8] sm:$0xff]
                %263 = vst [vmem:[%s259 + $0x8] sm:$0xff] %v262
                %v264 = vld [vmem:[%s258 + $0x20] sm:$0xff]
                %265 = vst [vmem:[%s259 + $0x10] sm:$0xff] %v264
                %v266 = vld [vmem:[%s258 + $0x28] sm:$0xff]
                %267 = vst [vmem:[%s259 + $0x18] sm:$0xff] %v266
              $region68: #{siamrpn_forward.15} parent=62 // loop_footer
                %s257 = sadd.s32 1, %s253
              $region69: #{siamrpn_forward.15} parent=62 // loop_footer_branch
                %252 = sbr.rel target = $region65
              $region70: #{siamrpn_forward.15} parent=62 // loop_exit
                _
            $region63: #{siamrpn_forward.15} parent=58 // pred_fallthru
              _
            // Predicated region
            $region71: #{siamrpn_forward.15} parent=58 // pred_check
              _
            $region72: #{siamrpn_forward.15} parent=58 // pred_check_branch
              %269 = sbr.rel target = $region74
            $region73: #{siamrpn_forward.15} parent=58 // pred_region
              _
            $region74: #{siamrpn_forward.15} parent=58 // pred_fallthru
              _
          $region59: #{siamrpn_forward.15} parent=54 // pred_fallthru
            _
          %270 = vnop
        $region55: #{siamrpn_forward.15} parent=27 // pred_fallthru
          _
      $region28: #{siamrpn_forward.15} parent=5 // pred_fallthru
        _
      %p271 = scmp.le.s32.totalorder 1, %s11
      %p272 = scmp.lt.s32.totalorder %s11, 3
      %p273 = pnand %p271, %p272
      %p274 = pneg %p273
      // Predicated region
      $region75: #{siamrpn_forward.15} parent=5 // pred_check
        _
      $region76: #{siamrpn_forward.15} parent=5 // pred_check_branch
        %276 = sbr.rel (%p273) target = $region78
      $region77: #{siamrpn_forward.15} parent=5 // pred_region
        %s277 = ssub.s32 %s11, 1
        %s278 = sand.u32 %s38, 1
        %s279 = sand.u32 %s38, 1
        %s280 = smul.addr %s279, 32
        %s281 = scalar_lea.vmem [#allocation2], %s280
        // Predicated region
        $region79: #{siamrpn_forward.15} parent=77 // pred_check
          %p282 = pneg %p51
        $region80: #{siamrpn_forward.15} parent=77 // pred_check_branch
          %284 = sbr.rel (%p282) target = $region82
        $region81: #{siamrpn_forward.15} parent=77 // pred_region
          _
        $region82: #{siamrpn_forward.15} parent=77 // pred_fallthru
          _
        %s285 = sand.u32 %s68, 1
        %s286 = sand.u32 %s68, 1
        %s287 = smul.addr %s286, 32
        %s288 = scalar_lea.vmem [#allocation3], %s287
        // Predicated region
        $region83: #{siamrpn_forward.15} parent=77 // pred_check
          %p289 = pneg %p81
        $region84: #{siamrpn_forward.15} parent=77 // pred_check_branch
          %291 = sbr.rel (%p289) target = $region86
        $region85: #{siamrpn_forward.15} parent=77 // pred_region
          _
        $region86: #{siamrpn_forward.15} parent=77 // pred_fallthru
          _
        %s292 = sand.u32 %s38, 1
        %s293 = sand.u32 %s38, 1
        %s294 = smul.addr %s293, 32
        %s295 = scalar_lea.vmem [#allocation2], %s294
        %p296 = pneg %p51
        %p297 = pneg %p48
        %s298 = sand.u32 %s68, 1
        %s299 = sand.u32 %s68, 1
        %s300 = smul.addr %s299, 32
        %s301 = scalar_lea.vmem [#allocation3], %s300
        %p302 = pneg %p81
        %p303 = pneg %p78
        %p304 = pneg %p102
        %p305 = pneg %p99
        %p306 = pneg %p123
        %p307 = pneg %p120
        %p308 = pneg %p144
        %p309 = pneg %p141
        %p310 = pneg %p172
        %p311 = pneg %p169
        %s312 = smul.u32 4, %s21
        %p313 = scmp.lt.s32.totalorder %s20, 1
        %s314 = scalar_select %p313, %s20, 1
        %p315 = scmp.lt.s32.totalorder %s312, 3
        %s316 = scalar_select %p315, %s312, 3
        %s317 = smul.addr %s314, 16
        %s318 = sadd.s32 %s316, %s317
        %s319 = smul.addr %s318, 8
        %s320 = scalar_lea.vmem %s5, %s319
        %s321 = smul.u32 4, %s21
        %s322 = sadd.s32 %s21, 1
        %s323 = smul.u32 4, %s322
        %s324 = smul.u32 4, %s21
        %p325 = scmp.lt.s32.totalorder %s20, 1
        %s326 = scalar_select %p325, %s20, 1
        %p327 = scmp.lt.s32.totalorder %s324, 3
        %s328 = scalar_select %p327, %s324, 3
        %s329 = smul.addr %s326, 16
        %s330 = sadd.s32 %s328, %s329
        %s331 = smul.addr %s330, 8
        %s332 = scalar_lea.vmem %s5, %s331
        %s333 = smul.u32 4, %s21
        %v335 = vld [vmem:[%s281] sm:$0xff]
        %v336 = vld [vmem:[%s281 + $0x8] sm:$0xff]
        %v337 = vld [vmem:[%s281 + $0x10] sm:$0xff]
        %v338 = vld [vmem:[%s281 + $0x18] sm:$0xff]
        %v339 = vld [vmem:[%s288] sm:$0xff]
        %v340 = vld [vmem:[%s288 + $0x10] sm:$0xff]
        %v345 = vunpack.c.l.b16 %v335
        %v346 = vunpack.c.h.b16 %v335
        %v347 = vunpack.c.l.b16 %v336
        %v348 = vunpack.c.h.b16 %v336
        %v349 = vunpack.c.l.b16 %v337
        %v350 = vunpack.c.h.b16 %v337
        %v351 = vunpack.c.l.b16 %v338
        %v352 = vunpack.c.h.b16 %v338
        %v353 = vpack.c.b16 %v349, %v345
        %v354 = vpack.c.b16 %v350, %v346
        %v355 = vpack.c.b16 %v351, %v347
        %v356 = vpack.c.b16 %v352, %v348
        %v363 = vunpack.c.l.b16 %v339
        %v364 = vunpack.c.l.b16 %v340
        %v365 = vpack.c.b16 %v364, %v363
        %366 = vrot.lane.b32.xlu0 %v353, 127
        %v367 = vpop.permute.xlu0 %366
        %368 = vrot.lane.b32.xlu0 %v354, 127
        %v369 = vpop.permute.xlu0 %368
        %370 = vrot.lane.b32.xlu0 %v355, 127
        %v371 = vpop.permute.xlu0 %370
        %372 = vrot.lane.b32.xlu0 %v356, 127
        %v373 = vpop.permute.xlu0 %372
        %374 = vrot.lane.b32.xlu0 %v365, 127
        %v375 = vpop.permute.xlu0 %374
        %vm376 = vcmask 1039360
        %v377 = vsel %vm376, %v367, %v369
        %v378 = vsel %vm376, %v369, %v371
        %v379 = vsel %vm376, %v371, %v373
        %v380 = vsel %vm376, %v373, %v375
        %385 = vrot.lane.b32.xlu0 %v353, 126
        %v386 = vpop.permute.xlu0 %385
        %387 = vrot.lane.b32.xlu0 %v354, 126
        %v388 = vpop.permute.xlu0 %387
        %389 = vrot.lane.b32.xlu0 %v355, 126
        %v390 = vpop.permute.xlu0 %389
        %391 = vrot.lane.b32.xlu0 %v356, 126
        %v392 = vpop.permute.xlu0 %391
        %393 = vrot.lane.b32.xlu0 %v365, 126
        %v394 = vpop.permute.xlu0 %393
        %vm395 = vcmask 1031168
        %v396 = vsel %vm395, %v386, %v388
        %v397 = vsel %vm395, %v388, %v390
        %v398 = vsel %vm395, %v390, %v392
        %v399 = vsel %vm395, %v392, %v394
        %404 = vrot.lane.b32.xlu0 %v353, 114
        %v405 = vpop.permute.xlu0 %404
        %406 = vrot.lane.b32.xlu0 %v354, 114
        %v407 = vpop.permute.xlu0 %406
        %408 = vrot.lane.b32.xlu0 %v355, 114
        %v409 = vpop.permute.xlu0 %408
        %410 = vrot.lane.b32.xlu0 %v356, 114
        %v411 = vpop.permute.xlu0 %410
        %412 = vrot.lane.b32.xlu0 %v365, 114
        %v413 = vpop.permute.xlu0 %412
        %vm414 = vcmask 932864
        %v415 = vsel %vm414, %v405, %v407
        %v416 = vsel %vm414, %v407, %v409
        %v417 = vsel %vm414, %v409, %v411
        %v418 = vsel %vm414, %v411, %v413
        %423 = vrot.lane.b32.xlu0 %v353, 113
        %v424 = vpop.permute.xlu0 %423
        %425 = vrot.lane.b32.xlu0 %v354, 113
        %v426 = vpop.permute.xlu0 %425
        %427 = vrot.lane.b32.xlu0 %v355, 113
        %v428 = vpop.permute.xlu0 %427
        %429 = vrot.lane.b32.xlu0 %v356, 113
        %v430 = vpop.permute.xlu0 %429
        %431 = vrot.lane.b32.xlu0 %v365, 113
        %v432 = vpop.permute.xlu0 %431
        %vm433 = vcmask 924672
        %v434 = vsel %vm433, %v424, %v426
        %v435 = vsel %vm433, %v426, %v428
        %v436 = vsel %vm433, %v428, %v430
        %v437 = vsel %vm433, %v430, %v432
        %442 = vrot.lane.b32.xlu0 %v353, 112
        %v443 = vpop.permute.xlu0 %442
        %444 = vrot.lane.b32.xlu0 %v354, 112
        %v445 = vpop.permute.xlu0 %444
        %446 = vrot.lane.b32.xlu0 %v355, 112
        %v447 = vpop.permute.xlu0 %446
        %448 = vrot.lane.b32.xlu0 %v356, 112
        %v449 = vpop.permute.xlu0 %448
        %450 = vrot.lane.b32.xlu0 %v365, 112
        %v451 = vpop.permute.xlu0 %450
        %vm452 = vcmask 916480
        %v453 = vsel %vm452, %v443, %v445
        %v454 = vsel %vm452, %v445, %v447
        %v455 = vsel %vm452, %v447, %v449
        %v456 = vsel %vm452, %v449, %v451
        %461 = vrot.lane.b32.xlu0 %v353, 100
        %v462 = vpop.permute.xlu0 %461
        %463 = vrot.lane.b32.xlu0 %v354, 100
        %v464 = vpop.permute.xlu0 %463
        %465 = vrot.lane.b32.xlu0 %v355, 100
        %v466 = vpop.permute.xlu0 %465
        %467 = vrot.lane.b32.xlu0 %v356, 100
        %v468 = vpop.permute.xlu0 %467
        %469 = vrot.lane.b32.xlu0 %v365, 100
        %v470 = vpop.permute.xlu0 %469
        %vm471 = vcmask 818176
        %v472 = vsel %vm471, %v462, %v464
        %v473 = vsel %vm471, %v464, %v466
        %v474 = vsel %vm471, %v466, %v468
        %v475 = vsel %vm471, %v468, %v470
        %480 = vrot.lane.b32.xlu0 %v353, 99
        %v481 = vpop.permute.xlu0 %480
        %482 = vrot.lane.b32.xlu0 %v354, 99
        %v483 = vpop.permute.xlu0 %482
        %484 = vrot.lane.b32.xlu0 %v355, 99
        %v485 = vpop.permute.xlu0 %484
        %486 = vrot.lane.b32.xlu0 %v356, 99
        %v487 = vpop.permute.xlu0 %486
        %488 = vrot.lane.b32.xlu0 %v365, 99
        %v489 = vpop.permute.xlu0 %488
        %vm490 = vcmask 809984
        %v491 = vsel %vm490, %v481, %v483
        %v492 = vsel %vm490, %v483, %v485
        %v493 = vsel %vm490, %v485, %v487
        %v494 = vsel %vm490, %v487, %v489
        %499 = vrot.lane.b32.xlu0 %v353, 98
        %v500 = vpop.permute.xlu0 %499
        %501 = vrot.lane.b32.xlu0 %v354, 98
        %v502 = vpop.permute.xlu0 %501
        %503 = vrot.lane.b32.xlu0 %v355, 98
        %v504 = vpop.permute.xlu0 %503
        %505 = vrot.lane.b32.xlu0 %v356, 98
        %v506 = vpop.permute.xlu0 %505
        %507 = vrot.lane.b32.xlu0 %v365, 98
        %v508 = vpop.permute.xlu0 %507
        %vm509 = vcmask 801792
        %v510 = vsel %vm509, %v500, %v502
        %v511 = vsel %vm509, %v502, %v504
        %v512 = vsel %vm509, %v504, %v506
        %v513 = vsel %vm509, %v506, %v508
        %v518 = vld [vmem:[%s2] sm:$0xff]
        %v519 = vld [vmem:[%s2 + $0x8] sm:$0xff]
        %v520 = vld [vmem:[%s2 + $0x10] sm:$0xff]
        %v521 = vld [vmem:[%s2 + $0x18] sm:$0xff]
        %v526 = vunpack.c.l.b16 %v518
        %v527 = vunpack.c.h.b16 %v518
        %v528 = vunpack.c.l.b16 %v519
        %v529 = vunpack.c.h.b16 %v519
        %v530 = vunpack.c.l.b16 %v520
        %v531 = vunpack.c.h.b16 %v520
        %v532 = vunpack.c.l.b16 %v521
        %v533 = vunpack.c.h.b16 %v521
        %v534 = vpack.c.b16 %v528, %v526
        %v535 = vpack.c.b16 %v529, %v527
        %v536 = vpack.c.b16 %v532, %v530
        %v537 = vpack.c.b16 %v533, %v531
        %vm540 = vcmask 130048
        %v542 = vsel %vm540, %v535, 0
        %v545 = vsel %vm540, %v537, 0
        %547 = vmatprep.subr.bf16.mxu0 %v354
        %548 = vmatpush1.bf16.msra.mxu0 %v353
        %549 = vmatprep.subr.bf16.mxu0 %v378
        %550 = vmatpush1.bf16.msra.mxu0 %v377
        %551 = vmatprep.subr.bf16.mxu0 %v397
        %552 = vmatpush1.bf16.msra.mxu0 %v396
        %553 = vmatprep.subr.bf16.mxu0 %v416
        %554 = vmatpush1.bf16.msra.mxu0 %v415
        %555 = vmatprep.subr.bf16.mxu0 %v435
        %556 = vmatpush1.bf16.msra.mxu0 %v434
        %557 = vmatprep.subr.bf16.mxu0 %v454
        %558 = vmatpush1.bf16.msra.mxu0 %v453
        %559 = vmatprep.subr.bf16.mxu0 %v473
        %560 = vmatpush1.bf16.msra.mxu0 %v472
        %561 = vmatprep.subr.bf16.mxu0 %v492
        %562 = vmatpush1.bf16.msra.mxu0 %v491
        %563 = vmatprep.subr.bf16.mxu0 %v511
        %564 = vmatpush1.bf16.msra.mxu0 %v510
        %565 = vmatprep.subr.bf16.mxu0 0
        %566 = vmatpush1.bf16.msra.mxu0 0
        %567 = vmatprep.subr.bf16.mxu0 0
        %568 = vmatpush1.bf16.msra.mxu0 0
        %569 = vmatprep.subr.bf16.mxu0 0
        %570 = vmatpush1.bf16.msra.mxu0 0
        %571 = vmatprep.subr.bf16.mxu0 0
        %572 = vmatpush1.bf16.msra.mxu0 0
        %573 = vmatprep.subr.bf16.mxu0 0
        %574 = vmatpush1.bf16.msra.mxu0 0
        %575 = vmatprep.subr.bf16.mxu0 0
        %576 = vmatpush1.bf16.msra.mxu0 0
        %577 = vmatprep.subr.bf16.mxu0 0
        %578 = vmatpush1.bf16.msra.mxu0 0
        %579 = vmatprep.mubr.bf16.mxu0 %v542
        %580 = vmatmul.mubr.bf16.gmra.mrb[0].mxu0 %v534
        %v581 = vpop.f32.mrb[0].mxu0
        %v582 = vadd.f32 0.0, %v581
        %v583 = vpop.f32.mrb[0].mxu0
        %v584 = vadd.f32 0.0, %v583
        %v585 = vpop.f32.mrb[0].mxu0
        %v586 = vadd.f32 0.0, %v585
        %v587 = vpop.f32.mrb[0].mxu0
        %v588 = vadd.f32 0.0, %v587
        %589 = vmatprep.mubr.bf16.mxu0 %v545
        %590 = vmatmul.mubr.bf16.gmra.mrb[0].mxu0 %v536
        %v591 = vpop.f32.mrb[0].mxu0
        %v592 = vadd.f32 0.0, %v591
        %v593 = vpop.f32.mrb[0].mxu0
        %v594 = vadd.f32 0.0, %v593
        %v595 = vpop.f32.mrb[0].mxu0
        %v596 = vadd.f32 0.0, %v595
        %v597 = vpop.f32.mrb[0].mxu0
        %v598 = vadd.f32 0.0, %v597
        %599 = vdwg.mxu0
        %600 = vmatprep.subr.bf16.mxu0 %v356
        %601 = vmatpush1.bf16.msra.mxu0 %v355
        %602 = vmatprep.subr.bf16.mxu0 %v380
        %603 = vmatpush1.bf16.msra.mxu0 %v379
        %604 = vmatprep.subr.bf16.mxu0 %v399
        %605 = vmatpush1.bf16.msra.mxu0 %v398
        %606 = vmatprep.subr.bf16.mxu0 %v418
        %607 = vmatpush1.bf16.msra.mxu0 %v417
        %608 = vmatprep.subr.bf16.mxu0 %v437
        %609 = vmatpush1.bf16.msra.mxu0 %v436
        %610 = vmatprep.subr.bf16.mxu0 %v456
        %611 = vmatpush1.bf16.msra.mxu0 %v455
        %612 = vmatprep.subr.bf16.mxu0 %v475
        %613 = vmatpush1.bf16.msra.mxu0 %v474
        %614 = vmatprep.subr.bf16.mxu0 %v494
        %615 = vmatpush1.bf16.msra.mxu0 %v493
        %616 = vmatprep.subr.bf16.mxu0 %v513
        %617 = vmatpush1.bf16.msra.mxu0 %v512
        %618 = vmatprep.subr.bf16.mxu0 0
        %619 = vmatpush1.bf16.msra.mxu0 0
        %620 = vmatprep.subr.bf16.mxu0 0
        %621 = vmatpush1.bf16.msra.mxu0 0
        %622 = vmatprep.subr.bf16.mxu0 0
        %623 = vmatpush1.bf16.msra.mxu0 0
        %624 = vmatprep.subr.bf16.mxu0 0
        %625 = vmatpush1.bf16.msra.mxu0 0
        %626 = vmatprep.subr.bf16.mxu0 0
        %627 = vmatpush1.bf16.msra.mxu0 0
        %628 = vmatprep.subr.bf16.mxu0 0
        %629 = vmatpush1.bf16.msra.mxu0 0
        %630 = vmatprep.subr.bf16.mxu0 0
        %631 = vmatpush1.bf16.msra.mxu0 0
        %632 = vmatprep.mubr.bf16.mxu0 %v542
        %633 = vmatmul.mubr.bf16.gmra.mrb[0].mxu0 %v534
        %v634 = vpop.f32.mrb[0].mxu0
        %v635 = vadd.f32 0.0, %v634
        %v636 = vpop.f32.mrb[0].mxu0
        %v637 = vadd.f32 0.0, %v636
        %v638 = vpop.f32.mrb[0].mxu0
        %v639 = vadd.f32 0.0, %v638
        %v640 = vpop.f32.mrb[0].mxu0
        %v641 = vadd.f32 0.0, %v640
        %642 = vmatprep.mubr.bf16.mxu0 %v545
        %643 = vmatmul.mubr.bf16.gmra.mrb[0].mxu0 %v536
        %v644 = vpop.f32.mrb[0].mxu0
        %v645 = vadd.f32 0.0, %v644
        %v646 = vpop.f32.mrb[0].mxu0
        %v647 = vadd.f32 0.0, %v646
        %v648 = vpop.f32.mrb[0].mxu0
        %v649 = vadd.f32 0.0, %v648
        %v650 = vpop.f32.mrb[0].mxu0
        %v651 = vadd.f32 0.0, %v650
        %652 = vdwg.mxu0
        %v653 = vld [vmem:[%s3] sm:$0xff]
        %v654 = vld [vmem:[%s3 + $0x8] sm:$0xff]
        %v655 = vld [vmem:[%s3 + $0x10] sm:$0xff]
        %v656 = vld [vmem:[%s3 + $0x18] sm:$0xff]
        %658 = vset.pattern.permute.xlu0 0
        %659 = vperm.xlu0 %658, %v653
        %v660 = vpop.permute.xlu0 %659
        %663 = vset.pattern.permute.xlu0 0
        %664 = vperm.xlu0 %663, %v654
        %v665 = vpop.permute.xlu0 %664
        %668 = vset.pattern.permute.xlu0 0
        %669 = vperm.xlu0 %668, %v655
        %v670 = vpop.permute.xlu0 %669
        %673 = vset.pattern.permute.xlu0 0
        %674 = vperm.xlu0 %673, %v656
        %v675 = vpop.permute.xlu0 %674
        %v677 = vmul.f32 %v582, %v660
        %v678 = vmul.f32 %v584, %v660
        %v679 = vmul.f32 %v635, %v660
        %v680 = vmul.f32 %v637, %v660
        %v681 = vmul.f32 %v586, %v665
        %v682 = vmul.f32 %v588, %v665
        %v683 = vmul.f32 %v639, %v665
        %v684 = vmul.f32 %v641, %v665
        %v685 = vmul.f32 %v592, %v670
        %v686 = vmul.f32 %v594, %v670
        %v687 = vmul.f32 %v645, %v670
        %v688 = vmul.f32 %v647, %v670
        %v689 = vmul.f32 %v596, %v675
        %v690 = vmul.f32 %v598, %v675
        %v691 = vmul.f32 %v649, %v675
        %v692 = vmul.f32 %v651, %v675
        %v693 = vld [vmem:[%s4] sm:$0xff]
        %v694 = vld [vmem:[%s4 + $0x8] sm:$0xff]
        %v695 = vld [vmem:[%s4 + $0x10] sm:$0xff]
        %v696 = vld [vmem:[%s4 + $0x18] sm:$0xff]
        %698 = vset.pattern.permute.xlu0 0
        %699 = vperm.xlu0 %698, %v693
        %v700 = vpop.permute.xlu0 %699
        %703 = vset.pattern.permute.xlu0 0
        %704 = vperm.xlu0 %703, %v694
        %v705 = vpop.permute.xlu0 %704
        %708 = vset.pattern.permute.xlu0 0
        %709 = vperm.xlu0 %708, %v695
        %v710 = vpop.permute.xlu0 %709
        %713 = vset.pattern.permute.xlu0 0
        %714 = vperm.xlu0 %713, %v696
        %v715 = vpop.permute.xlu0 %714
        %v717 = vadd.f32 %v677, %v700
        %v718 = vadd.f32 %v678, %v700
        %v719 = vadd.f32 %v679, %v700
        %v720 = vadd.f32 %v680, %v700
        %v721 = vadd.f32 %v681, %v705
        %v722 = vadd.f32 %v682, %v705
        %v723 = vadd.f32 %v683, %v705
        %v724 = vadd.f32 %v684, %v705
        %v725 = vadd.f32 %v685, %v710
        %v726 = vadd.f32 %v686, %v710
        %v727 = vadd.f32 %v687, %v710
        %v728 = vadd.f32 %v688, %v710
        %v729 = vadd.f32 %v689, %v715
        %v730 = vadd.f32 %v690, %v715
        %v731 = vadd.f32 %v691, %v715
        %v732 = vadd.f32 %v692, %v715
        %733 = vst [vmem:[%s332] sm:$0xff] %v717
        %734 = vst [vmem:[%s332 + $0x8] sm:$0xff] %v718
        %735 = vst [vmem:[%s332 + $0x10] sm:$0xff] %v719
        %736 = vst [vmem:[%s332 + $0x18] sm:$0xff] %v720
        %737 = vst [vmem:[%s332 + $0x20] sm:$0xff] %v721
        %738 = vst [vmem:[%s332 + $0x28] sm:$0xff] %v722
        %739 = vst [vmem:[%s332 + $0x30] sm:$0xff] %v723
        %740 = vst [vmem:[%s332 + $0x38] sm:$0xff] %v724
        %741 = vst [vmem:[%s332 + $0x40] sm:$0xff] %v725
        %742 = vst [vmem:[%s332 + $0x48] sm:$0xff] %v726
        %743 = vst [vmem:[%s332 + $0x50] sm:$0xff] %v727
        %744 = vst [vmem:[%s332 + $0x58] sm:$0xff] %v728
        %745 = vst [vmem:[%s332 + $0x60] sm:$0xff] %v729
        %746 = vst [vmem:[%s332 + $0x68] sm:$0xff] %v730
        %747 = vst [vmem:[%s332 + $0x70] sm:$0xff] %v731
        %748 = vst [vmem:[%s332 + $0x78] sm:$0xff] %v732
        %s749 = smul.u32 4, %s21
        %p750 = scmp.lt.s32.totalorder %s20, 1
        %s751 = scalar_select %p750, %s20, 1
        %p752 = scmp.lt.s32.totalorder %s749, 3
        %s753 = scalar_select %p752, %s749, 3
        %s754 = smul.addr %s751, 16
        %s755 = sadd.s32 %s753, %s754
        %s756 = smul.addr %s755, 8
        %s757 = scalar_lea.vmem %s5, %s756
        // Predicated region
        $region87: #{siamrpn_forward.15} parent=77 // pred_check
          %p758 = pneg %p169
        $region88: #{siamrpn_forward.15} parent=77 // pred_check_branch
          %760 = sbr.rel (%p758) target = $region90
        $region89: #{siamrpn_forward.15} parent=77 // pred_region
          %s761 = smul.u32 4, %s21
        $region90: #{siamrpn_forward.15} parent=77 // pred_fallthru
          _
      $region78: #{siamrpn_forward.15} parent=5 // pred_fallthru
        _
      %p762 = scmp.le.s32.totalorder 2, %s11
      // Predicated region
      $region91: #{siamrpn_forward.15} parent=5 // pred_check
        %p763 = pneg %p762
      $region92: #{siamrpn_forward.15} parent=5 // pred_check_branch
        %765 = sbr.rel (%p763) target = $region94
      $region93: #{siamrpn_forward.15} parent=5 // pred_region
        %s766 = ssub.s32 %s11, 2
        // Predicated region
        $region95: #{siamrpn_forward.15} parent=93 // pred_check
          %p767 = pneg %p175
        $region96: #{siamrpn_forward.15} parent=93 // pred_check_branch
          %769 = sbr.rel (%p767) target = $region98
        $region97: #{siamrpn_forward.15} parent=93 // pred_region
          %s770 = smul.u32 4, %s23
          %p771 = scmp.lt.s32.totalorder %s22, 1
          %s772 = scalar_select %p771, %s22, 1
          %p773 = scmp.lt.s32.totalorder %s770, 3
          %s774 = scalar_select %p773, %s770, 3
          %s775 = smul.addr %s772, 16
          %s776 = sadd.s32 %s774, %s775
          %s777 = smul.addr %s776, 8
          %s778 = scalar_lea.vmem %s5, %s777
        $region98: #{siamrpn_forward.15} parent=93 // pred_fallthru
          _
      $region94: #{siamrpn_forward.15} parent=5 // pred_fallthru
        _
    $region6: #{siamrpn_forward.15} parent=1 // loop_footer
      %s15 = sadd.s32 1, %s11
    $region7: #{siamrpn_forward.15} parent=1 // loop_footer_branch
      %10 = sbr.rel target = $region3
    $region8: #{siamrpn_forward.15} parent=1 // loop_exit
      _

</llo_original>
